<compile_context>
chip_gen: v7x
topology: tpu7x:2x2x1
jax: 0.10.0
libtpu: 0.0.40
codegen_flags: <defaults>
</compile_context>

<pallas_src>
import jax
import jax.numpy as jnp
from jax import lax
from jax.experimental import pallas as pl
from jax.experimental.pallas import tpu as pltpu

D = 768                              # hidden / head size (num_heads = 1)
VMEM_LIMIT = 48 * 1024 * 1024        # <= v7x physical VMEM (64 MiB); fine on v5e/v6e too.


# ---------------------------------------------------------------------------
# Fused kernel.  Grid: (B, S // tq); batch axis parallel, q-tile axis arbitrary.
#   x_ref : (1, S, D) bf16   whole sequence of batch b (constant across qi -> DMA'd once/b)
#   w*_ref: (D, D)  bf16     resident weights (constant block index)
#   b*_ref: (1, D)  f32      biases
#   o_ref : (1, tq, D)       output tile
#   k_sc / v_sc : (S, D) bf16 VMEM scratch holding the projected K / V of batch b
# ---------------------------------------------------------------------------
def _fused_attention_kernel(x_ref, wq_ref, wk_ref, wv_ref, wd_ref,
                            bq_ref, bk_ref, bv_ref, bd_ref,
                            o_ref, k_sc, v_sc):
    qi = pl.program_id(1)
    tq = o_ref.shape[1]

    x = x_ref[0]                                                      # (S, D) bf16

    # Project K/V for the WHOLE sequence once per batch (qi == 0) into VMEM scratch.
    # Separate (D, D) dots -> no (S, 3D) f32 intermediate is ever materialized.
    @pl.when(qi == 0)
    def _():
        k = jnp.dot(x, wk_ref[...], preferred_element_type=jnp.float32) + bk_ref[...]
        k_sc[...] = k.astype(k_sc.dtype)
        v = jnp.dot(x, wv_ref[...], preferred_element_type=jnp.float32) + bv_ref[...]
        v_sc[...] = v.astype(v_sc.dtype)

    # Project only this tile's Q rows (sublane-aligned slice of the resident x block).
    q_start = pl.multiple_of(qi * tq, tq)
    xq = x_ref[0, pl.ds(q_start, tq), :]                              # (tq, D) bf16
    q = (jnp.dot(xq, wq_ref[...], preferred_element_type=jnp.float32)
         + bq_ref[...]).astype(jnp.bfloat16)                          # (tq, D) bf16

    # Attention scores: contract the last dims of q and K (no transpose materialized).
    # NOTE: no 1/sqrt(D) scaling, matching the PyTorch module.
    s = lax.dot_general(q, k_sc[...], (((1,), (1,)), ((), ())),
                        preferred_element_type=jnp.float32)           # (tq, S) f32

    # Exact one-shot softmax over the full sequence (K/V are resident -> no online
    # softmax machinery / per-step rescale).  Normalize via EUP reciprocal.
    m = jnp.max(s, axis=-1, keepdims=True)
    p = jnp.exp(s - m)
    denom = jnp.sum(p, axis=-1, keepdims=True)
    p = p * pl.reciprocal(denom, approx=True)

    ctx = jnp.dot(p.astype(jnp.bfloat16), v_sc[...],
                  preferred_element_type=jnp.float32)                 # (tq, D) f32
    out = jnp.dot(ctx.astype(jnp.bfloat16), wd_ref[...],
                  preferred_element_type=jnp.float32) + bd_ref[...]   # dense projection
    o_ref[0] = out.astype(o_ref.dtype)


def gathered_attention(hidden_states, params, *, tq=256):
    """hidden_states: (B, S, D) float32. params: dict of (D, D) weights and (1, D) biases."""
    B, S, d = hidden_states.shape
    assert d == D
    tq = min(tq, S)
    assert S % tq == 0, "TODO(synk): pad S when it is not a multiple of the q tile"

    bf16 = jnp.bfloat16
    x = hidden_states.astype(bf16)                                    # (B, S, D) bf16
    wq = params["wq"].astype(bf16)
    wk = params["wk"].astype(bf16)
    wv = params["wv"].astype(bf16)
    wd = params["wd"].astype(bf16)
    bq, bk, bv, bd = params["bq"], params["bk"], params["bv"], params["bd"]

    # Rough VMEM budget for the fused path (double-buffered x block, resident K/V scratch,
    # double-buffered weights, f32 projection/score intermediates, output tile).
    est_vmem = (2 * S * D * 2            # x block (bf16) x2 buffers
                + 2 * S * D * 2          # K/V scratch (bf16)
                + 2 * 4 * D * D * 2      # 4 weights (bf16) x2 buffers
                + 2 * S * D * 4          # f32 K/V projection intermediates
                + tq * S * 4             # f32 score tile
                + 4 * tq * D * 4)        # f32 ctx/out + double-buffered output tile
    assert est_vmem < VMEM_LIMIT, (
        "TODO(synk): fall back to a kv-tiled flash path when whole-sequence K/V "
        "no longer fit VMEM")

    cost = pl.CostEstimate(
        # 4 dense (D,D) projections + QK^T + PV.
        flops=2 * B * S * D * D * 4 + 4 * B * S * S * D,
        transcendentals=B * S * S + B * S,
        # K/V never round-trip HBM: x read once, weights once, output written once.
        bytes_accessed=B * S * D * 2 + 4 * D * D * 2 + 4 * D * 4 + B * S * D * 4)

    const2 = lambda b, qi: (0, 0)
    out = pl.pallas_call(
        _fused_attention_kernel,
        out_shape=jax.ShapeDtypeStruct((B, S, D), hidden_states.dtype),
        grid_spec=pltpu.PrefetchScalarGridSpec(
            num_scalar_prefetch=0,
            grid=(B, S // tq),
            in_specs=[
                pl.BlockSpec((1, S, D), lambda b, qi: (b, 0, 0)),     # whole sequence of b
                pl.BlockSpec((D, D), const2),                         # wq
                pl.BlockSpec((D, D), const2),                         # wk
                pl.BlockSpec((D, D), const2),                         # wv
                pl.BlockSpec((D, D), const2),                         # wd (dense)
                pl.BlockSpec((1, D), const2),                         # bq
                pl.BlockSpec((1, D), const2),                         # bk
                pl.BlockSpec((1, D), const2),                         # bv
                pl.BlockSpec((1, D), const2),                         # bd (dense)
            ],
            out_specs=pl.BlockSpec((1, tq, D), lambda b, qi: (b, qi, 0)),
            scratch_shapes=[
                pltpu.VMEM((S, D), bf16),    # projected K for the current batch
                pltpu.VMEM((S, D), bf16),    # projected V for the current batch
            ],
        ),
        compiler_params=pltpu.CompilerParams(
            dimension_semantics=("parallel", "arbitrary"),
            vmem_limit_bytes=VMEM_LIMIT),
        cost_estimate=cost,
    )(x, wq, wk, wv, wd, bq, bk, bv, bd)
    return out


def _reference(hidden_states, params):
    """Pure-JAX reference mirroring the PyTorch forward with the same precision policy
    as the kernel (bf16 operands into the MXU, f32 accumulation, f32 softmax)."""
    bf16, f32 = jnp.bfloat16, jnp.float32
    x = hidden_states.astype(bf16)

    def linear(inp, w, b):
        y = jnp.einsum("bsd,de->bse", inp, w.astype(bf16), preferred_element_type=f32)
        return y + b[0]

    q = linear(x, params["wq"], params["bq"]).astype(bf16)
    k = linear(x, params["wk"], params["bk"]).astype(bf16)
    v = linear(x, params["wv"], params["bv"]).astype(bf16)
    s = jnp.einsum("bqd,bkd->bqk", q, k, preferred_element_type=f32)  # no 1/sqrt(d), as in module
    p = jax.nn.softmax(s, axis=-1)
    ctx = jnp.einsum("bqk,bkd->bqd", p.astype(bf16), v, preferred_element_type=f32)
    return linear(ctx.astype(bf16), params["wd"], params["bd"])


def _init_params(key):
    """Deterministic init; shapes match nn.Linear(768, 768) with weights pre-transposed."""
    ks = jax.random.split(key, 8)
    scale = 1.0 / jnp.sqrt(jnp.float32(D))

    def w(k):
        return jax.random.uniform(k, (D, D), jnp.float32, -scale, scale)

    def b(k):
        return jax.random.uniform(k, (1, D), jnp.float32, -scale, scale)

    return {
        "wq": w(ks[0]), "bq": b(ks[1]),
        "wk": w(ks[2]), "bk": b(ks[3]),
        "wv": w(ks[4]), "bv": b(ks[5]),
        "wd": w(ks[6]), "bd": b(ks[7]),
    }


if __name__ == "__main__":
    key = jax.random.PRNGKey(0)
    k_param, k_x = jax.random.split(key)

    B, S = 2, 8
    params = _init_params(k_param)
    hidden_states = jax.random.normal(k_x, (B, S, D), jnp.float32)

    out = jax.jit(gathered_attention)(hidden_states, params)
    out = jax.block_until_ready(out)

    ref = _reference(hidden_states, params)
    assert out.shape == (B, S, D)
    max_err = float(jnp.max(jnp.abs(out - ref)))
    assert jnp.allclose(out, ref, atol=2e-2, rtol=2e-2), f"mismatch vs reference (max abs err {max_err})"

    print("KERNEL_OK")
</pallas_src>

<mosaic_0001>
module attributes {stable_mosaic.version = 11 : i64} {
  func.func @_fused_attention_kernel(%arg0: i32, %arg1: i32, %arg2: memref<1x8x768xbf16, #tpu.memory_space<vmem>>, %arg3: memref<768x768xbf16, #tpu.memory_space<vmem>>, %arg4: memref<768x768xbf16, #tpu.memory_space<vmem>>, %arg5: memref<768x768xbf16, #tpu.memory_space<vmem>>, %arg6: memref<768x768xbf16, #tpu.memory_space<vmem>>, %arg7: memref<1x768xf32, #tpu.memory_space<vmem>>, %arg8: memref<1x768xf32, #tpu.memory_space<vmem>>, %arg9: memref<1x768xf32, #tpu.memory_space<vmem>>, %arg10: memref<1x768xf32, #tpu.memory_space<vmem>>, %arg11: memref<1x8x768xf32, #tpu.memory_space<vmem>>, %arg12: memref<8x768xbf16, #tpu.memory_space<vmem>>, %arg13: memref<8x768xbf16, #tpu.memory_space<vmem>>) attributes {dimension_semantics = [#tpu.dimension_semantics<parallel>, #tpu.dimension_semantics<arbitrary>], iteration_bounds = array<i64: 2, 1>, scalar_prefetch = 0 : i64, scratch_operands = 2 : i64, tpu.core_type = #tpu.core_type<tc>, window_params = [{transform_indices = @transform_0, window_bounds = array<i64: 1, 8, 768>}, {pipeline_mode = #tpu.pipeline_mode<synchronous>, transform_indices = @transform_1, window_bounds = array<i64: 768, 768>}, {pipeline_mode = #tpu.pipeline_mode<synchronous>, transform_indices = @transform_2, window_bounds = array<i64: 768, 768>}, {pipeline_mode = #tpu.pipeline_mode<synchronous>, transform_indices = @transform_3, window_bounds = array<i64: 768, 768>}, {pipeline_mode = #tpu.pipeline_mode<synchronous>, transform_indices = @transform_4, window_bounds = array<i64: 768, 768>}, {pipeline_mode = #tpu.pipeline_mode<synchronous>, transform_indices = @transform_5, window_bounds = array<i64: 1, 768>}, {pipeline_mode = #tpu.pipeline_mode<synchronous>, transform_indices = @transform_6, window_bounds = array<i64: 1, 768>}, {pipeline_mode = #tpu.pipeline_mode<synchronous>, transform_indices = @transform_7, window_bounds = array<i64: 1, 768>}, {pipeline_mode = #tpu.pipeline_mode<synchronous>, transform_indices = @transform_8, window_bounds = array<i64: 1, 768>}, {transform_indices = @transform_9, window_bounds = array<i64: 1, 8, 768>}]} {
    %c0 = arith.constant 0 : index
    %c0_0 = arith.constant 0 : index
    %c0_1 = arith.constant 0 : index
    %0 = vector.load %arg2[%c0, %c0_0, %c0_1] : memref<1x8x768xbf16, #tpu.memory_space<vmem>>, vector<1x8x768xbf16>
    %1 = vector.shape_cast %0 : vector<1x8x768xbf16> to vector<8x768xbf16>
    %c0_i32 = arith.constant 0 : i32
    %2 = arith.cmpi eq, %arg1, %c0_i32 : i32
    %3 = arith.extui %2 : i1 to i32
    %c0_i32_2 = arith.constant 0 : i32
    %4 = arith.cmpi ne, %3, %c0_i32_2 : i32
    scf.if %4 {
      %c0_25 = arith.constant 0 : index
      %c0_26 = arith.constant 0 : index
      %40 = vector.load %arg4[%c0_25, %c0_26] : memref<768x768xbf16, #tpu.memory_space<vmem>>, vector<768x768xbf16>
      %cst_27 = arith.constant dense<0.000000e+00> : vector<8x768xf32>
      %41 = tpu.matmul %1, %40, %cst_27 {dimension_numbers = #tpu.dot_dimension_numbers<[1], [0], [0], [1], [0, 0, 1, 1], [], []>} : vector<8x768xbf16>, vector<768x768xbf16>, vector<8x768xf32> -> vector<8x768xf32>
      %c0_28 = arith.constant 0 : index
      %c0_29 = arith.constant 0 : index
      %42 = vector.load %arg8[%c0_28, %c0_29] : memref<1x768xf32, #tpu.memory_space<vmem>>, vector<1x768xf32>
      %43 = vector.broadcast %42 : vector<1x768xf32> to vector<8x768xf32>
      %44 = arith.addf %41, %43 : vector<8x768xf32>
      %45 = arith.truncf %44 : vector<8x768xf32> to vector<8x768xbf16>
      %c0_30 = arith.constant 0 : index
      %c0_31 = arith.constant 0 : index
      %46 = vector.load %arg12[%c0_30, %c0_31] : memref<8x768xbf16, #tpu.memory_space<vmem>>, vector<8x768xbf16>
      tpu.vector_store %arg12[%c0_30, %c0_31], %45 {strides = array<i32>} : memref<8x768xbf16, #tpu.memory_space<vmem>>, vector<8x768xbf16>,
      %c0_32 = arith.constant 0 : index
      %c0_33 = arith.constant 0 : index
      %47 = vector.load %arg5[%c0_32, %c0_33] : memref<768x768xbf16, #tpu.memory_space<vmem>>, vector<768x768xbf16>
      %cst_34 = arith.constant dense<0.000000e+00> : vector<8x768xf32>
      %48 = tpu.matmul %1, %47, %cst_34 {dimension_numbers = #tpu.dot_dimension_numbers<[1], [0], [0], [1], [0, 0, 1, 1], [], []>} : vector<8x768xbf16>, vector<768x768xbf16>, vector<8x768xf32> -> vector<8x768xf32>
      %c0_35 = arith.constant 0 : index
      %c0_36 = arith.constant 0 : index
      %49 = vector.load %arg9[%c0_35, %c0_36] : memref<1x768xf32, #tpu.memory_space<vmem>>, vector<1x768xf32>
      %50 = vector.broadcast %49 : vector<1x768xf32> to vector<8x768xf32>
      %51 = arith.addf %48, %50 : vector<8x768xf32>
      %52 = arith.truncf %51 : vector<8x768xf32> to vector<8x768xbf16>
      %c0_37 = arith.constant 0 : index
      %c0_38 = arith.constant 0 : index
      %53 = vector.load %arg13[%c0_37, %c0_38] : memref<8x768xbf16, #tpu.memory_space<vmem>>, vector<8x768xbf16>
      tpu.vector_store %arg13[%c0_37, %c0_38], %52 {strides = array<i32>} : memref<8x768xbf16, #tpu.memory_space<vmem>>, vector<8x768xbf16>,
    } else {
    }
    %c8_i32 = arith.constant 8 : i32
    %5 = arith.muli %arg1, %c8_i32 : i32
    %6 = tpu.assume_multiple %5, 8 : i32
    %c0_3 = arith.constant 0 : index
    %7 = arith.index_cast %6 : i32 to index
    %c0_4 = arith.constant 0 : index
    %8 = vector.load %arg2[%c0_3, %7, %c0_4] : memref<1x8x768xbf16, #tpu.memory_space<vmem>>, vector<1x8x768xbf16>
    %9 = vector.shape_cast %8 : vector<1x8x768xbf16> to vector<8x768xbf16>
    %c0_5 = arith.constant 0 : index
    %c0_6 = arith.constant 0 : index
    %10 = vector.load %arg3[%c0_5, %c0_6] : memref<768x768xbf16, #tpu.memory_space<vmem>>, vector<768x768xbf16>
    %cst = arith.constant dense<0.000000e+00> : vector<8x768xf32>
    %11 = tpu.matmul %9, %10, %cst {dimension_numbers = #tpu.dot_dimension_numbers<[1], [0], [0], [1], [0, 0, 1, 1], [], []>} : vector<8x768xbf16>, vector<768x768xbf16>, vector<8x768xf32> -> vector<8x768xf32>
    %c0_7 = arith.constant 0 : index
    %c0_8 = arith.constant 0 : index
    %12 = vector.load %arg7[%c0_7, %c0_8] : memref<1x768xf32, #tpu.memory_space<vmem>>, vector<1x768xf32>
    %13 = vector.broadcast %12 : vector<1x768xf32> to vector<8x768xf32>
    %14 = arith.addf %11, %13 : vector<8x768xf32>
    %15 = arith.truncf %14 : vector<8x768xf32> to vector<8x768xbf16>
    %c0_9 = arith.constant 0 : index
    %c0_10 = arith.constant 0 : index
    %16 = vector.load %arg12[%c0_9, %c0_10] : memref<8x768xbf16, #tpu.memory_space<vmem>>, vector<8x768xbf16>
    %cst_11 = arith.constant dense<0.000000e+00> : vector<8x8xf32>
    %17 = tpu.matmul %15, %16, %cst_11 {dimension_numbers = #tpu.dot_dimension_numbers<[1], [1], [0], [0], [0, 0, 1, 0], [], []>} : vector<8x768xbf16>, vector<8x768xbf16>, vector<8x8xf32> -> vector<8x8xf32>
    %cst_12 = arith.constant dense<0xFF800000> : vector<8xf32>
    %18 = vector.multi_reduction <maximumf>, %17, %cst_12 [1] : vector<8x8xf32> to vector<8xf32>
    %19 = vector.shape_cast %18 : vector<8xf32> to vector<8x1xf32>
    %20 = vector.broadcast %19 : vector<8x1xf32> to vector<8x8xf32>
    %21 = arith.subf %17, %20 : vector<8x8xf32>
    %22 = math.exp %21 : vector<8x8xf32>
    %cst_13 = arith.constant dense<0.000000e+00> : vector<8xf32>
    %23 = vector.multi_reduction <add>, %22, %cst_13 [1] : vector<8x8xf32> to vector<8xf32>
    %24 = vector.shape_cast %23 : vector<8xf32> to vector<8x1xf32>
    %25 = tpu.reciprocal %24 {approx = true} : vector<8x1xf32> -> vector<8x1xf32>
    %26 = vector.broadcast %25 : vector<8x1xf32> to vector<8x8xf32>
    %27 = arith.mulf %22, %26 : vector<8x8xf32>
    %28 = arith.truncf %27 : vector<8x8xf32> to vector<8x8xbf16>
    %c0_14 = arith.constant 0 : index
    %c0_15 = arith.constant 0 : index
    %29 = vector.load %arg13[%c0_14, %c0_15] : memref<8x768xbf16, #tpu.memory_space<vmem>>, vector<8x768xbf16>
    %cst_16 = arith.constant dense<0.000000e+00> : vector<8x768xf32>
    %30 = tpu.matmul %28, %29, %cst_16 {dimension_numbers = #tpu.dot_dimension_numbers<[1], [0], [0], [1], [0, 0, 1, 1], [], []>} : vector<8x8xbf16>, vector<8x768xbf16>, vector<8x768xf32> -> vector<8x768xf32>
    %31 = arith.truncf %30 : vector<8x768xf32> to vector<8x768xbf16>
    %c0_17 = arith.constant 0 : index
    %c0_18 = arith.constant 0 : index
    %32 = vector.load %arg6[%c0_17, %c0_18] : memref<768x768xbf16, #tpu.memory_space<vmem>>, vector<768x768xbf16>
    %cst_19 = arith.constant dense<0.000000e+00> : vector<8x768xf32>
    %33 = tpu.matmul %31, %32, %cst_19 {dimension_numbers = #tpu.dot_dimension_numbers<[1], [0], [0], [1], [0, 0, 1, 1], [], []>} : vector<8x768xbf16>, vector<768x768xbf16>, vector<8x768xf32> -> vector<8x768xf32>
    %c0_20 = arith.constant 0 : index
    %c0_21 = arith.constant 0 : index
    %34 = vector.load %arg10[%c0_20, %c0_21] : memref<1x768xf32, #tpu.memory_space<vmem>>, vector<1x768xf32>
    %35 = vector.broadcast %34 : vector<1x768xf32> to vector<8x768xf32>
    %36 = arith.addf %33, %35 : vector<8x768xf32>
    %c0_22 = arith.constant 0 : index
    %c0_23 = arith.constant 0 : index
    %c0_24 = arith.constant 0 : index
    %37 = vector.load %arg11[%c0_22, %c0_23, %c0_24] : memref<1x8x768xf32, #tpu.memory_space<vmem>>, vector<1x8x768xf32>
    %38 = vector.shape_cast %37 : vector<1x8x768xf32> to vector<8x768xf32>
    %39 = vector.shape_cast %36 : vector<8x768xf32> to vector<1x8x768xf32>
    tpu.vector_store %arg11[%c0_22, %c0_23, %c0_24], %39 {strides = array<i32>} : memref<1x8x768xf32, #tpu.memory_space<vmem>>, vector<1x8x768xf32>,
    return
  }
  func.func @transform_0(%arg0: i32, %arg1: i32) -> (i32, i32, i32) {
    %c0_i32 = arith.constant 0 : i32
    %c0_i32_0 = arith.constant 0 : i32
    %c0_i32_1 = arith.constant 0 : i32
    return %arg0, %c0_i32, %c0_i32_0 : i32, i32, i32
  }
  func.func @transform_1(%arg0: i32, %arg1: i32) -> (i32, i32) {
    %c0_i32 = arith.constant 0 : i32
    %c0_i32_0 = arith.constant 0 : i32
    %c0_i32_1 = arith.constant 0 : i32
    return %c0_i32, %c0_i32_0 : i32, i32
  }
  func.func @transform_2(%arg0: i32, %arg1: i32) -> (i32, i32) {
    %c0_i32 = arith.constant 0 : i32
    %c0_i32_0 = arith.constant 0 : i32
    %c0_i32_1 = arith.constant 0 : i32
    return %c0_i32, %c0_i32_0 : i32, i32
  }
  func.func @transform_3(%arg0: i32, %arg1: i32) -> (i32, i32) {
    %c0_i32 = arith.constant 0 : i32
    %c0_i32_0 = arith.constant 0 : i32
    %c0_i32_1 = arith.constant 0 : i32
    return %c0_i32, %c0_i32_0 : i32, i32
  }
  func.func @transform_4(%arg0: i32, %arg1: i32) -> (i32, i32) {
    %c0_i32 = arith.constant 0 : i32
    %c0_i32_0 = arith.constant 0 : i32
    %c0_i32_1 = arith.constant 0 : i32
    return %c0_i32, %c0_i32_0 : i32, i32
  }
  func.func @transform_5(%arg0: i32, %arg1: i32) -> (i32, i32) {
    %c0_i32 = arith.constant 0 : i32
    %c0_i32_0 = arith.constant 0 : i32
    %c0_i32_1 = arith.constant 0 : i32
    return %c0_i32, %c0_i32_0 : i32, i32
  }
  func.func @transform_6(%arg0: i32, %arg1: i32) -> (i32, i32) {
    %c0_i32 = arith.constant 0 : i32
    %c0_i32_0 = arith.constant 0 : i32
    %c0_i32_1 = arith.constant 0 : i32
    return %c0_i32, %c0_i32_0 : i32, i32
  }
  func.func @transform_7(%arg0: i32, %arg1: i32) -> (i32, i32) {
    %c0_i32 = arith.constant 0 : i32
    %c0_i32_0 = arith.constant 0 : i32
    %c0_i32_1 = arith.constant 0 : i32
    return %c0_i32, %c0_i32_0 : i32, i32
  }
  func.func @transform_8(%arg0: i32, %arg1: i32) -> (i32, i32) {
    %c0_i32 = arith.constant 0 : i32
    %c0_i32_0 = arith.constant 0 : i32
    %c0_i32_1 = arith.constant 0 : i32
    return %c0_i32, %c0_i32_0 : i32, i32
  }
  func.func @transform_9(%arg0: i32, %arg1: i32) -> (i32, i32, i32) {
    %c0_i32 = arith.constant 0 : i32
    %c0_i32_0 = arith.constant 0 : i32
    return %arg0, %arg1, %c0_i32 : i32, i32, i32
  }
}

</mosaic_0001>

<llo_original>
// kernel: gathered_attention.1
$region0: #{gathered_attention.1}
  #allocation0 [shape = 'u32[]', space=smem, size = 0x4, offset = 0x4, fixed_abs, tag = 'smem constant byte address 0x4 - core index']
  #allocation1 [shape = 'u32[144,128]{1,0:T(1,128)}', space=vmem, size = 0x12000, scoped, tag = 'internal scratch']
  #allocation2 [shape = 'bf16[8,768]{1,0:T(8,128)(2,1)}', space=vmem, size = 0x3000, scoped, tag = 'scratch operand']
  #allocation3 [shape = 'bf16[8,768]{1,0:T(8,128)(2,1)}', space=vmem, size = 0x3000, scoped, tag = 'scratch operand']
  %s0 = inlined_call_operand.vmem [shape: bf16[2,8,768], index: 0, kind: input, shape index: {}]
  %s1 = inlined_call_operand.vmem [shape: bf16[768,768], index: 1, kind: input, shape index: {}]
  %s2 = inlined_call_operand.vmem [shape: bf16[768,768], index: 2, kind: input, shape index: {}]
  %s3 = inlined_call_operand.vmem [shape: bf16[768,768], index: 3, kind: input, shape index: {}]
  %s4 = inlined_call_operand.vmem [shape: bf16[768,768], index: 4, kind: input, shape index: {}]
  %s5 = inlined_call_operand.vmem [shape: f32[1,768], index: 5, kind: input, shape index: {}]
  %s6 = inlined_call_operand.vmem [shape: f32[1,768], index: 6, kind: input, shape index: {}]
  %s7 = inlined_call_operand.vmem [shape: f32[1,768], index: 7, kind: input, shape index: {}]
  %s8 = inlined_call_operand.vmem [shape: f32[1,768], index: 8, kind: input, shape index: {}]
  %s9 = inlined_call_operand.hbm [shape: f32[2,8,768], index: 9, kind: output, shape index: {}]
  %s10 = sld [smem:[#allocation0]]
  $region73: #{gathered_attention.1} parent=0
    _
  %s12 = ssub.s32 1, %s10
  %s13 = scalar_select 0, %s12, %s10
  $region1: #{gathered_attention.1} parent=0
    #allocation4 [shape = 'u8[49152]{0}', space=vmem, size = 0xc000, scoped, tag = 'output window, operand 0']
    #allocation5 [shape = 's32[2]{0}', space=sflag, size = 0x8, scoped, tag = 'scoped memory for gathered_attention.1']
    %14 = vsyncpa [#allocation5], 0
    %s15 = scalar_lea.sflag [#allocation5], 1
    %16 = vsyncpa %s15, 0
    loop: start=0, step=1, limit=4
    $region2: #{gathered_attention.1} parent=1 // loop_pre_header
      _
    $region3: #{gathered_attention.1} parent=1 // loop_header
      %s18 = sphi 0, %s22
      %p19 = scmp.ge.s32.totalorder %s18, 4
      %s25 = sphi 0, %s37
      %s26 = sphi 0, %s33
      %s27 = sphi 0, %s25
      %s28 = sphi 0, %s26
      %s29 = sphi 0, %s27
      %s30 = sphi 0, %s28
      %s40 = sphi 0, %s42
      %s43 = sphi 0, %s40
      %s44 = sphi 0, %s43
      %s60 = sphi 0, %s44
      %s64 = sphi 0, %s64
      %s66 = sphi 0, %s64
      %s67 = sphi 0, %s66
      %s81 = sphi 0, %s67
      %s85 = sphi 0, %s85
      %s87 = sphi 0, %s85
      %s88 = sphi 0, %s87
      %s102 = sphi 0, %s88
      %s106 = sphi 0, %s106
      %s108 = sphi 0, %s106
      %s109 = sphi 0, %s108
      %s123 = sphi 0, %s109
      %s127 = sphi 0, %s127
      %s129 = sphi 0, %s127
      %s130 = sphi 0, %s129
      %s144 = sphi 0, %s130
      %s148 = sphi 0, %s148
      %s150 = sphi 0, %s148
      %s151 = sphi 0, %s150
      %s165 = sphi 0, %s151
      %s169 = sphi 0, %s169
      %s171 = sphi 0, %s169
      %s172 = sphi 0, %s171
      %s186 = sphi 0, %s172
      %s190 = sphi 0, %s190
      %s192 = sphi 0, %s190
      %s193 = sphi 0, %s192
      %s207 = sphi 0, %s193
      %s211 = sphi 0, %s211
      %s213 = sphi 0, %s211
      %s214 = sphi 0, %s213
      %s228 = sphi 0, %s214
      %s236 = sphi 0, %s238
      %s239 = sphi 0, %s236
      %s240 = sphi 0, %s239
      %s256 = sphi 0, %s240
    $region4: #{gathered_attention.1} parent=1 // loop_header_branch
      %21 = sbr.rel (%p19) target = $region8
    $region5: #{gathered_attention.1} parent=1 // loop_body
      %s23 = ssub.s32 %s18, 1
      %s24 = ssub.s32 %s18, 2
      %s31 = sadd.s32 1, %s26
      %p32 = scmp.ge.s32.totalorder %s31, 1
      %s33 = scalar_select %p32, 0, %s31
      %s34 = sadd.s32 1, %s25
      %s35 = scalar_select %p32, %s34, %s25
      %p36 = scmp.ge.s32.totalorder %s35, 2
      %s37 = scalar_select %p36, 0, %s35
      %s38 = ssub.s32 %s25, %s37
      %p39 = scmp.eq.s32.totalorder %s38, 0
      %s41 = sadd.s32 %s40, 1
      %s42 = scalar_select %p39, %s40, %s41
      %p45 = pneg %p39
      %p46 = scmp.eq.s32.totalorder %s18, 1
      %p47 = por %p45, %p46
      %p48 = scmp.ne.s32.totalorder %s40, %s43
      %p49 = scmp.eq.s32.totalorder %s18, 0
      %p50 = por %p48, %p49
      %p51 = scmp.ne.s32.totalorder %s40, %s43
      %p52 = scmp.eq.s32.totalorder %s23, 1
      %p53 = por %p51, %p52
      %p54 = scmp.ne.s32.totalorder %s43, %s44
      %p55 = scmp.eq.s32.totalorder %s23, 0
      %p56 = por %p54, %p55
      %p57 = scmp.ne.s32.totalorder %s43, %s44
      %p58 = scmp.eq.s32.totalorder %s24, 1
      %p59 = por %p57, %p58
      %p61 = scmp.ne.s32.totalorder %s44, %s60
      %p62 = scmp.eq.s32.totalorder %s24, 0
      %p63 = por %p61, %p62
      %s65 = sadd.s32 %s64, 1
      %p68 = scmp.eq.s32.totalorder %s18, 1
      %p69 = scmp.ne.s32.totalorder %s64, %s66
      %p70 = scmp.eq.s32.totalorder %s18, 0
      %p71 = por %p69, %p70
      %p72 = scmp.ne.s32.totalorder %s64, %s66
      %p73 = scmp.eq.s32.totalorder %s23, 1
      %p74 = por %p72, %p73
      %p75 = scmp.ne.s32.totalorder %s66, %s67
      %p76 = scmp.eq.s32.totalorder %s23, 0
      %p77 = por %p75, %p76
      %p78 = scmp.ne.s32.totalorder %s66, %s67
      %p79 = scmp.eq.s32.totalorder %s24, 1
      %p80 = por %p78, %p79
      %p82 = scmp.ne.s32.totalorder %s67, %s81
      %p83 = scmp.eq.s32.totalorder %s24, 0
      %p84 = por %p82, %p83
      %s86 = sadd.s32 %s85, 1
      %p89 = scmp.eq.s32.totalorder %s18, 1
      %p90 = scmp.ne.s32.totalorder %s85, %s87
      %p91 = scmp.eq.s32.totalorder %s18, 0
      %p92 = por %p90, %p91
      %p93 = scmp.ne.s32.totalorder %s85, %s87
      %p94 = scmp.eq.s32.totalorder %s23, 1
      %p95 = por %p93, %p94
      %p96 = scmp.ne.s32.totalorder %s87, %s88
      %p97 = scmp.eq.s32.totalorder %s23, 0
      %p98 = por %p96, %p97
      %p99 = scmp.ne.s32.totalorder %s87, %s88
      %p100 = scmp.eq.s32.totalorder %s24, 1
      %p101 = por %p99, %p100
      %p103 = scmp.ne.s32.totalorder %s88, %s102
      %p104 = scmp.eq.s32.totalorder %s24, 0
      %p105 = por %p103, %p104
      %s107 = sadd.s32 %s106, 1
      %p110 = scmp.eq.s32.totalorder %s18, 1
      %p111 = scmp.ne.s32.totalorder %s106, %s108
      %p112 = scmp.eq.s32.totalorder %s18, 0
      %p113 = por %p111, %p112
      %p114 = scmp.ne.s32.totalorder %s106, %s108
      %p115 = scmp.eq.s32.totalorder %s23, 1
      %p116 = por %p114, %p115
      %p117 = scmp.ne.s32.totalorder %s108, %s109
      %p118 = scmp.eq.s32.totalorder %s23, 0
      %p119 = por %p117, %p118
      %p120 = scmp.ne.s32.totalorder %s108, %s109
      %p121 = scmp.eq.s32.totalorder %s24, 1
      %p122 = por %p120, %p121
      %p124 = scmp.ne.s32.totalorder %s109, %s123
      %p125 = scmp.eq.s32.totalorder %s24, 0
      %p126 = por %p124, %p125
      %s128 = sadd.s32 %s127, 1
      %p131 = scmp.eq.s32.totalorder %s18, 1
      %p132 = scmp.ne.s32.totalorder %s127, %s129
      %p133 = scmp.eq.s32.totalorder %s18, 0
      %p134 = por %p132, %p133
      %p135 = scmp.ne.s32.totalorder %s127, %s129
      %p136 = scmp.eq.s32.totalorder %s23, 1
      %p137 = por %p135, %p136
      %p138 = scmp.ne.s32.totalorder %s129, %s130
      %p139 = scmp.eq.s32.totalorder %s23, 0
      %p140 = por %p138, %p139
      %p141 = scmp.ne.s32.totalorder %s129, %s130
      %p142 = scmp.eq.s32.totalorder %s24, 1
      %p143 = por %p141, %p142
      %p145 = scmp.ne.s32.totalorder %s130, %s144
      %p146 = scmp.eq.s32.totalorder %s24, 0
      %p147 = por %p145, %p146
      %s149 = sadd.s32 %s148, 1
      %p152 = scmp.eq.s32.totalorder %s18, 1
      %p153 = scmp.ne.s32.totalorder %s148, %s150
      %p154 = scmp.eq.s32.totalorder %s18, 0
      %p155 = por %p153, %p154
      %p156 = scmp.ne.s32.totalorder %s148, %s150
      %p157 = scmp.eq.s32.totalorder %s23, 1
      %p158 = por %p156, %p157
      %p159 = scmp.ne.s32.totalorder %s150, %s151
      %p160 = scmp.eq.s32.totalorder %s23, 0
      %p161 = por %p159, %p160
      %p162 = scmp.ne.s32.totalorder %s150, %s151
      %p163 = scmp.eq.s32.totalorder %s24, 1
      %p164 = por %p162, %p163
      %p166 = scmp.ne.s32.totalorder %s151, %s165
      %p167 = scmp.eq.s32.totalorder %s24, 0
      %p168 = por %p166, %p167
      %s170 = sadd.s32 %s169, 1
      %p173 = scmp.eq.s32.totalorder %s18, 1
      %p174 = scmp.ne.s32.totalorder %s169, %s171
      %p175 = scmp.eq.s32.totalorder %s18, 0
      %p176 = por %p174, %p175
      %p177 = scmp.ne.s32.totalorder %s169, %s171
      %p178 = scmp.eq.s32.totalorder %s23, 1
      %p179 = por %p177, %p178
      %p180 = scmp.ne.s32.totalorder %s171, %s172
      %p181 = scmp.eq.s32.totalorder %s23, 0
      %p182 = por %p180, %p181
      %p183 = scmp.ne.s32.totalorder %s171, %s172
      %p184 = scmp.eq.s32.totalorder %s24, 1
      %p185 = por %p183, %p184
      %p187 = scmp.ne.s32.totalorder %s172, %s186
      %p188 = scmp.eq.s32.totalorder %s24, 0
      %p189 = por %p187, %p188
      %s191 = sadd.s32 %s190, 1
      %p194 = scmp.eq.s32.totalorder %s18, 1
      %p195 = scmp.ne.s32.totalorder %s190, %s192
      %p196 = scmp.eq.s32.totalorder %s18, 0
      %p197 = por %p195, %p196
      %p198 = scmp.ne.s32.totalorder %s190, %s192
      %p199 = scmp.eq.s32.totalorder %s23, 1
      %p200 = por %p198, %p199
      %p201 = scmp.ne.s32.totalorder %s192, %s193
      %p202 = scmp.eq.s32.totalorder %s23, 0
      %p203 = por %p201, %p202
      %p204 = scmp.ne.s32.totalorder %s192, %s193
      %p205 = scmp.eq.s32.totalorder %s24, 1
      %p206 = por %p204, %p205
      %p208 = scmp.ne.s32.totalorder %s193, %s207
      %p209 = scmp.eq.s32.totalorder %s24, 0
      %p210 = por %p208, %p209
      %s212 = sadd.s32 %s211, 1
      %p215 = scmp.eq.s32.totalorder %s18, 1
      %p216 = scmp.ne.s32.totalorder %s211, %s213
      %p217 = scmp.eq.s32.totalorder %s18, 0
      %p218 = por %p216, %p217
      %p219 = scmp.ne.s32.totalorder %s211, %s213
      %p220 = scmp.eq.s32.totalorder %s23, 1
      %p221 = por %p219, %p220
      %p222 = scmp.ne.s32.totalorder %s213, %s214
      %p223 = scmp.eq.s32.totalorder %s23, 0
      %p224 = por %p222, %p223
      %p225 = scmp.ne.s32.totalorder %s213, %s214
      %p226 = scmp.eq.s32.totalorder %s24, 1
      %p227 = por %p225, %p226
      %p229 = scmp.ne.s32.totalorder %s214, %s228
      %p230 = scmp.eq.s32.totalorder %s24, 0
      %p231 = por %p229, %p230
      %s232 = ssub.s32 %s25, %s37
      %s233 = ssub.s32 %s26, %s33
      %s234 = sor.u32 %s232, %s233
      %p235 = scmp.eq.s32.totalorder %s234, 0
      %s237 = sadd.s32 %s236, 1
      %s238 = scalar_select %p235, %s236, %s237
      %p241 = pneg %p235
      %p242 = scmp.eq.s32.totalorder %s18, 1
      %p243 = por %p241, %p242
      %p244 = scmp.ne.s32.totalorder %s236, %s239
      %p245 = scmp.eq.s32.totalorder %s18, 0
      %p246 = por %p244, %p245
      %p247 = scmp.ne.s32.totalorder %s236, %s239
      %p248 = scmp.eq.s32.totalorder %s23, 1
      %p249 = por %p247, %p248
      %p250 = scmp.ne.s32.totalorder %s239, %s240
      %p251 = scmp.eq.s32.totalorder %s23, 0
      %p252 = por %p250, %p251
      %p253 = scmp.ne.s32.totalorder %s239, %s240
      %p254 = scmp.eq.s32.totalorder %s24, 1
      %p255 = por %p253, %p254
      %p257 = scmp.ne.s32.totalorder %s240, %s256
      %p258 = scmp.eq.s32.totalorder %s24, 0
      %p259 = por %p257, %p258
      %p260 = scmp.le.s32.totalorder 1, %s18
      %p261 = scmp.lt.s32.totalorder %s18, 3
      %p262 = pnand %p260, %p261
      %p263 = pneg %p262
      // Predicated region
      $region9: #{gathered_attention.1} parent=5 // pred_check
        _
      $region10: #{gathered_attention.1} parent=5 // pred_check_branch
        %265 = sbr.rel (%p262) target = $region12
      $region11: #{gathered_attention.1} parent=5 // pred_region
        %s266 = ssub.s32 %s18, 1
        // Predicated region
        $region13: #{gathered_attention.1} parent=11 // pred_check
          %p267 = pneg %p77
        $region14: #{gathered_attention.1} parent=11 // pred_check_branch
          %269 = sbr.rel (%p267) target = $region16
        $region15: #{gathered_attention.1} parent=11 // pred_region
          _
        $region16: #{gathered_attention.1} parent=11 // pred_fallthru
          _
        // Predicated region
        $region17: #{gathered_attention.1} parent=11 // pred_check
          %p270 = pneg %p98
        $region18: #{gathered_attention.1} parent=11 // pred_check_branch
          %272 = sbr.rel (%p270) target = $region20
        $region19: #{gathered_attention.1} parent=11 // pred_region
          _
        $region20: #{gathered_attention.1} parent=11 // pred_fallthru
          _
        // Predicated region
        $region21: #{gathered_attention.1} parent=11 // pred_check
          %p273 = pneg %p119
        $region22: #{gathered_attention.1} parent=11 // pred_check_branch
          %275 = sbr.rel (%p273) target = $region24
        $region23: #{gathered_attention.1} parent=11 // pred_region
          _
        $region24: #{gathered_attention.1} parent=11 // pred_fallthru
          _
        // Predicated region
        $region25: #{gathered_attention.1} parent=11 // pred_check
          %p276 = pneg %p140
        $region26: #{gathered_attention.1} parent=11 // pred_check_branch
          %278 = sbr.rel (%p276) target = $region28
        $region27: #{gathered_attention.1} parent=11 // pred_region
          _
        $region28: #{gathered_attention.1} parent=11 // pred_fallthru
          _
        // Predicated region
        $region29: #{gathered_attention.1} parent=11 // pred_check
          %p279 = pneg %p161
        $region30: #{gathered_attention.1} parent=11 // pred_check_branch
          %281 = sbr.rel (%p279) target = $region32
        $region31: #{gathered_attention.1} parent=11 // pred_region
          _
        $region32: #{gathered_attention.1} parent=11 // pred_fallthru
          _
        // Predicated region
        $region33: #{gathered_attention.1} parent=11 // pred_check
          %p282 = pneg %p182
        $region34: #{gathered_attention.1} parent=11 // pred_check_branch
          %284 = sbr.rel (%p282) target = $region36
        $region35: #{gathered_attention.1} parent=11 // pred_region
          _
        $region36: #{gathered_attention.1} parent=11 // pred_fallthru
          _
        // Predicated region
        $region37: #{gathered_attention.1} parent=11 // pred_check
          %p285 = pneg %p203
        $region38: #{gathered_attention.1} parent=11 // pred_check_branch
          %287 = sbr.rel (%p285) target = $region40
        $region39: #{gathered_attention.1} parent=11 // pred_region
          _
        $region40: #{gathered_attention.1} parent=11 // pred_fallthru
          _
        // Predicated region
        $region41: #{gathered_attention.1} parent=11 // pred_check
          %p288 = pneg %p224
        $region42: #{gathered_attention.1} parent=11 // pred_check_branch
          %290 = sbr.rel (%p288) target = $region44
        $region43: #{gathered_attention.1} parent=11 // pred_region
          _
        $region44: #{gathered_attention.1} parent=11 // pred_fallthru
          _
      $region12: #{gathered_attention.1} parent=5 // pred_fallthru
        _
      %p291 = scmp.lt.s32.totalorder %s18, 2
      // Predicated region
      $region45: #{gathered_attention.1} parent=5 // pred_check
        %p292 = pneg %p291
      $region46: #{gathered_attention.1} parent=5 // pred_check_branch
        %294 = sbr.rel (%p292) target = $region48
      $region47: #{gathered_attention.1} parent=5 // pred_region
        // Predicated region
        $region49: #{gathered_attention.1} parent=47 // pred_check
          %p295 = pneg %p50
        $region50: #{gathered_attention.1} parent=47 // pred_check_branch
          %297 = sbr.rel (%p295) target = $region52
        $region51: #{gathered_attention.1} parent=47 // pred_region
          %p298 = scmp.lt.s32.totalorder %s25, 1
          %s299 = scalar_select %p298, %s25, 1
          %s300 = smul.addr %s299, 6
          %s301 = smul.addr %s300, 4
          %s302 = scalar_lea.vmem %s0, %s301
        $region52: #{gathered_attention.1} parent=47 // pred_fallthru
          _
      $region48: #{gathered_attention.1} parent=5 // pred_fallthru
        _
      %p303 = scmp.le.s32.totalorder 1, %s18
      %p304 = scmp.lt.s32.totalorder %s18, 3
      %p305 = pnand %p303, %p304
      %p306 = pneg %p305
      // Predicated region
      $region53: #{gathered_attention.1} parent=5 // pred_check
        _
      $region54: #{gathered_attention.1} parent=5 // pred_check_branch
        %308 = sbr.rel (%p305) target = $region56
      $region55: #{gathered_attention.1} parent=5 // pred_region
        %s309 = ssub.s32 %s18, 1
        %p310 = scmp.lt.s32.totalorder %s27, 1
        %s311 = scalar_select %p310, %s27, 1
        %s312 = smul.addr %s311, 6
        %s313 = smul.addr %s312, 4
        %s314 = scalar_lea.vmem %s0, %s313
        %p315 = pneg %p56
        %p316 = pneg %p53
        %p317 = pneg %p77
        %p318 = pneg %p74
        %p319 = pneg %p98
        %p320 = pneg %p95
        %p321 = pneg %p119
        %p322 = pneg %p116
        %p323 = pneg %p140
        %p324 = pneg %p137
        %p325 = pneg %p161
        %p326 = pneg %p158
        %p327 = pneg %p182
        %p328 = pneg %p179
        %p329 = pneg %p203
        %p330 = pneg %p200
        %p331 = pneg %p224
        %p332 = pneg %p221
        %p333 = pneg %p252
        %p334 = pneg %p249
        %s335 = sand.u32 %s239, 1
        %s336 = scalar_lea.sflag [#allocation5], %s335
        %s337 = sand.u32 %s239, 1
        %s338 = smul.addr %s337, 48
        %s339 = scalar_lea.vmem [#allocation4], %s338
        %p340 = scmp.lt.s32.totalorder %s27, 1
        %s341 = scalar_select %p340, %s27, 1
        %s342 = smul.addr %s341, 6
        %s343 = smul.addr %s342, 4
        %s344 = scalar_lea.vmem %s0, %s343
        %v346 = vld [vmem:[%s344] sm:$0xff]
        %v347 = vld [vmem:[%s344 + $0x8] sm:$0xff]
        %v348 = vld [vmem:[%s344 + $0x10] sm:$0xff]
        %p349 = scmp.eq.s32.totalorder %s28, 0
        // Predicated region
        $region57: #{gathered_attention.1} parent=55 // pred_check
          %p350 = pneg %p349
        $region58: #{gathered_attention.1} parent=55 // pred_check_branch
          %352 = sbr.rel (%p350) target = $region60
        $region59: #{gathered_attention.1} parent=55 // pred_region
          %v353 = vld [vmem:[%s2] sm:$0xff]
          %v354 = vld [vmem:[%s2 + $0x8] sm:$0xff]
          %v355 = vld [vmem:[%s2 + $0x10] sm:$0xff]
          %v356 = vld [vmem:[%s2 + $0x18] sm:$0xff]
          %v357 = vld [vmem:[%s2 + $0x20] sm:$0xff]
          %v358 = vld [vmem:[%s2 + $0x28] sm:$0xff]
          %v359 = vld [vmem:[%s2 + $0x30] sm:$0xff]
          %v360 = vld [vmem:[%s2 + $0x38] sm:$0xff]
          %v361 = vld [vmem:[%s2 + $0x40] sm:$0xff]
          %v362 = vld [vmem:[%s2 + $0x48] sm:$0xff]
          %v363 = vld [vmem:[%s2 + $0x50] sm:$0xff]
          %v364 = vld [vmem:[%s2 + $0x58] sm:$0xff]
          %v365 = vld [vmem:[%s2 + $0x60] sm:$0xff]
          %v366 = vld [vmem:[%s2 + $0x68] sm:$0xff]
          %v367 = vld [vmem:[%s2 + $0x70] sm:$0xff]
          %v368 = vld [vmem:[%s2 + $0x78] sm:$0xff]
          %v369 = vld [vmem:[%s2 + $0x80] sm:$0xff]
          %v370 = vld [vmem:[%s2 + $0x88] sm:$0xff]
          %v371 = vld [vmem:[%s2 + $0x90] sm:$0xff]
          %v372 = vld [vmem:[%s2 + $0x98] sm:$0xff]
          %v373 = vld [vmem:[%s2 + $0xa0] sm:$0xff]
          %v374 = vld [vmem:[%s2 + $0xa8] sm:$0xff]
          %v375 = vld [vmem:[%s2 + $0xb0] sm:$0xff]
          %v376 = vld [vmem:[%s2 + $0xb8] sm:$0xff]
          %v377 = vld [vmem:[%s2 + $0xc0] sm:$0xff]
          %v378 = vld [vmem:[%s2 + $0xc8] sm:$0xff]
          %v379 = vld [vmem:[%s2 + $0xd0] sm:$0xff]
          %v380 = vld [vmem:[%s2 + $0xd8] sm:$0xff]
          %v381 = vld [vmem:[%s2 + $0xe0] sm:$0xff]
          %v382 = vld [vmem:[%s2 + $0xe8] sm:$0xff]
          %v383 = vld [vmem:[%s2 + $0xf0] sm:$0xff]
          %v384 = vld [vmem:[%s2 + $0xf8] sm:$0xff]
          %v385 = vld [vmem:[%s2 + $0x100] sm:$0xff]
          %v386 = vld [vmem:[%s2 + $0x108] sm:$0xff]
          %v387 = vld [vmem:[%s2 + $0x110] sm:$0xff]
          %v388 = vld [vmem:[%s2 + $0x118] sm:$0xff]
          %v389 = vld [vmem:[%s2 + $0x120] sm:$0xff]
          %v390 = vld [vmem:[%s2 + $0x128] sm:$0xff]
          %v391 = vld [vmem:[%s2 + $0x130] sm:$0xff]
          %v392 = vld [vmem:[%s2 + $0x138] sm:$0xff]
          %v393 = vld [vmem:[%s2 + $0x140] sm:$0xff]
          %v394 = vld [vmem:[%s2 + $0x148] sm:$0xff]
          %v395 = vld [vmem:[%s2 + $0x150] sm:$0xff]
          %v396 = vld [vmem:[%s2 + $0x158] sm:$0xff]
          %v397 = vld [vmem:[%s2 + $0x160] sm:$0xff]
          %v398 = vld [vmem:[%s2 + $0x168] sm:$0xff]
          %v399 = vld [vmem:[%s2 + $0x170] sm:$0xff]
          %v400 = vld [vmem:[%s2 + $0x178] sm:$0xff]
          %v401 = vld [vmem:[%s2 + $0x180] sm:$0xff]
          %v402 = vld [vmem:[%s2 + $0x188] sm:$0xff]
          %v403 = vld [vmem:[%s2 + $0x190] sm:$0xff]
          %v404 = vld [vmem:[%s2 + $0x198] sm:$0xff]
          %v405 = vld [vmem:[%s2 + $0x1a0] sm:$0xff]
          %v406 = vld [vmem:[%s2 + $0x1a8] sm:$0xff]
          %v407 = vld [vmem:[%s2 + $0x1b0] sm:$0xff]
          %v408 = vld [vmem:[%s2 + $0x1b8] sm:$0xff]
          %v409 = vld [vmem:[%s2 + $0x1c0] sm:$0xff]
          %v410 = vld [vmem:[%s2 + $0x1c8] sm:$0xff]
          %v411 = vld [vmem:[%s2 + $0x1d0] sm:$0xff]
          %v412 = vld [vmem:[%s2 + $0x1d8] sm:$0xff]
          %v413 = vld [vmem:[%s2 + $0x1e0] sm:$0xff]
          %v414 = vld [vmem:[%s2 + $0x1e8] sm:$0xff]
          %v415 = vld [vmem:[%s2 + $0x1f0] sm:$0xff]
          %v416 = vld [vmem:[%s2 + $0x1f8] sm:$0xff]
          %v417 = vld [vmem:[%s2 + $0x200] sm:$0xff]
          %v418 = vld [vmem:[%s2 + $0x208] sm:$0xff]
          %v419 = vld [vmem:[%s2 + $0x210] sm:$0xff]
          %v420 = vld [vmem:[%s2 + $0x218] sm:$0xff]
          %v421 = vld [vmem:[%s2 + $0x220] sm:$0xff]
          %v422 = vld [vmem:[%s2 + $0x228] sm:$0xff]
          %v423 = vld [vmem:[%s2 + $0x230] sm:$0xff]
          %v424 = vld [vmem:[%s2 + $0x238] sm:$0xff]
          %v425 = vld [vmem:[%s2 + $0x240] sm:$0xff]
          %v426 = vld [vmem:[%s2 + $0x248] sm:$0xff]
          %v427 = vld [vmem:[%s2 + $0x250] sm:$0xff]
          %v428 = vld [vmem:[%s2 + $0x258] sm:$0xff]
          %v429 = vld [vmem:[%s2 + $0x260] sm:$0xff]
          %v430 = vld [vmem:[%s2 + $0x268] sm:$0xff]
          %v431 = vld [vmem:[%s2 + $0x270] sm:$0xff]
          %v432 = vld [vmem:[%s2 + $0x278] sm:$0xff]
          %v433 = vld [vmem:[%s2 + $0x280] sm:$0xff]
          %v434 = vld [vmem:[%s2 + $0x288] sm:$0xff]
          %v435 = vld [vmem:[%s2 + $0x290] sm:$0xff]
          %v436 = vld [vmem:[%s2 + $0x298] sm:$0xff]
          %v437 = vld [vmem:[%s2 + $0x2a0] sm:$0xff]
          %v438 = vld [vmem:[%s2 + $0x2a8] sm:$0xff]
          %v439 = vld [vmem:[%s2 + $0x2b0] sm:$0xff]
          %v440 = vld [vmem:[%s2 + $0x2b8] sm:$0xff]
          %v441 = vld [vmem:[%s2 + $0x2c0] sm:$0xff]
          %v442 = vld [vmem:[%s2 + $0x2c8] sm:$0xff]
          %v443 = vld [vmem:[%s2 + $0x2d0] sm:$0xff]
          %v444 = vld [vmem:[%s2 + $0x2d8] sm:$0xff]
          %v445 = vld [vmem:[%s2 + $0x2e0] sm:$0xff]
          %v446 = vld [vmem:[%s2 + $0x2e8] sm:$0xff]
          %v447 = vld [vmem:[%s2 + $0x2f0] sm:$0xff]
          %v448 = vld [vmem:[%s2 + $0x2f8] sm:$0xff]
          %v449 = vld [vmem:[%s2 + $0x300] sm:$0xff]
          %v450 = vld [vmem:[%s2 + $0x308] sm:$0xff]
          %v451 = vld [vmem:[%s2 + $0x310] sm:$0xff]
          %v452 = vld [vmem:[%s2 + $0x318] sm:$0xff]
          %v453 = vld [vmem:[%s2 + $0x320] sm:$0xff]
          %v454 = vld [vmem:[%s2 + $0x328] sm:$0xff]
          %v455 = vld [vmem:[%s2 + $0x330] sm:$0xff]
          %v456 = vld [vmem:[%s2 + $0x338] sm:$0xff]
          %v457 = vld [vmem:[%s2 + $0x340] sm:$0xff]
          %v458 = vld [vmem:[%s2 + $0x348] sm:$0xff]
          %v459 = vld [vmem:[%s2 + $0x350] sm:$0xff]
          %v460 = vld [vmem:[%s2 + $0x358] sm:$0xff]
          %v461 = vld [vmem:[%s2 + $0x360] sm:$0xff]
          %v462 = vld [vmem:[%s2 + $0x368] sm:$0xff]
          %v463 = vld [vmem:[%s2 + $0x370] sm:$0xff]
          %v464 = vld [vmem:[%s2 + $0x378] sm:$0xff]
          %v465 = vld [vmem:[%s2 + $0x380] sm:$0xff]
          %v466 = vld [vmem:[%s2 + $0x388] sm:$0xff]
          %v467 = vld [vmem:[%s2 + $0x390] sm:$0xff]
          %v468 = vld [vmem:[%s2 + $0x398] sm:$0xff]
          %v469 = vld [vmem:[%s2 + $0x3a0] sm:$0xff]
          %v470 = vld [vmem:[%s2 + $0x3a8] sm:$0xff]
          %v471 = vld [vmem:[%s2 + $0x3b0] sm:$0xff]
          %v472 = vld [vmem:[%s2 + $0x3b8] sm:$0xff]
          %v473 = vld [vmem:[%s2 + $0x3c0] sm:$0xff]
          %v474 = vld [vmem:[%s2 + $0x3c8] sm:$0xff]
          %v475 = vld [vmem:[%s2 + $0x3d0] sm:$0xff]
          %v476 = vld [vmem:[%s2 + $0x3d8] sm:$0xff]
          %v477 = vld [vmem:[%s2 + $0x3e0] sm:$0xff]
          %v478 = vld [vmem:[%s2 + $0x3e8] sm:$0xff]
          %v479 = vld [vmem:[%s2 + $0x3f0] sm:$0xff]
          %v480 = vld [vmem:[%s2 + $0x3f8] sm:$0xff]
          %v481 = vld [vmem:[%s2 + $0x400] sm:$0xff]
          %v482 = vld [vmem:[%s2 + $0x408] sm:$0xff]
          %v483 = vld [vmem:[%s2 + $0x410] sm:$0xff]
          %v484 = vld [vmem:[%s2 + $0x418] sm:$0xff]
          %v485 = vld [vmem:[%s2 + $0x420] sm:$0xff]
          %v486 = vld [vmem:[%s2 + $0x428] sm:$0xff]
          %v487 = vld [vmem:[%s2 + $0x430] sm:$0xff]
          %v488 = vld [vmem:[%s2 + $0x438] sm:$0xff]
          %v489 = vld [vmem:[%s2 + $0x440] sm:$0xff]
          %v490 = vld [vmem:[%s2 + $0x448] sm:$0xff]
          %v491 = vld [vmem:[%s2 + $0x450] sm:$0xff]
          %v492 = vld [vmem:[%s2 + $0x458] sm:$0xff]
          %v493 = vld [vmem:[%s2 + $0x460] sm:$0xff]
          %v494 = vld [vmem:[%s2 + $0x468] sm:$0xff]
          %v495 = vld [vmem:[%s2 + $0x470] sm:$0xff]
          %v496 = vld [vmem:[%s2 + $0x478] sm:$0xff]
          %v497 = vld [vmem:[%s2 + $0x480] sm:$0xff]
          %v498 = vld [vmem:[%s2 + $0x488] sm:$0xff]
          %v499 = vld [vmem:[%s2 + $0x490] sm:$0xff]
          %v500 = vld [vmem:[%s2 + $0x498] sm:$0xff]
          %v501 = vld [vmem:[%s2 + $0x4a0] sm:$0xff]
          %v502 = vld [vmem:[%s2 + $0x4a8] sm:$0xff]
          %v503 = vld [vmem:[%s2 + $0x4b0] sm:$0xff]
          %v504 = vld [vmem:[%s2 + $0x4b8] sm:$0xff]
          %v505 = vld [vmem:[%s2 + $0x4c0] sm:$0xff]
          %v506 = vld [vmem:[%s2 + $0x4c8] sm:$0xff]
          %v507 = vld [vmem:[%s2 + $0x4d0] sm:$0xff]
          %v508 = vld [vmem:[%s2 + $0x4d8] sm:$0xff]
          %v509 = vld [vmem:[%s2 + $0x4e0] sm:$0xff]
          %v510 = vld [vmem:[%s2 + $0x4e8] sm:$0xff]
          %v511 = vld [vmem:[%s2 + $0x4f0] sm:$0xff]
          %v512 = vld [vmem:[%s2 + $0x4f8] sm:$0xff]
          %v513 = vld [vmem:[%s2 + $0x500] sm:$0xff]
          %v514 = vld [vmem:[%s2 + $0x508] sm:$0xff]
          %v515 = vld [vmem:[%s2 + $0x510] sm:$0xff]
          %v516 = vld [vmem:[%s2 + $0x518] sm:$0xff]
          %v517 = vld [vmem:[%s2 + $0x520] sm:$0xff]
          %v518 = vld [vmem:[%s2 + $0x528] sm:$0xff]
          %v519 = vld [vmem:[%s2 + $0x530] sm:$0xff]
          %v520 = vld [vmem:[%s2 + $0x538] sm:$0xff]
          %v521 = vld [vmem:[%s2 + $0x540] sm:$0xff]
          %v522 = vld [vmem:[%s2 + $0x548] sm:$0xff]
          %v523 = vld [vmem:[%s2 + $0x550] sm:$0xff]
          %v524 = vld [vmem:[%s2 + $0x558] sm:$0xff]
          %v525 = vld [vmem:[%s2 + $0x560] sm:$0xff]
          %v526 = vld [vmem:[%s2 + $0x568] sm:$0xff]
          %v527 = vld [vmem:[%s2 + $0x570] sm:$0xff]
          %v528 = vld [vmem:[%s2 + $0x578] sm:$0xff]
          %v529 = vld [vmem:[%s2 + $0x580] sm:$0xff]
          %v530 = vld [vmem:[%s2 + $0x588] sm:$0xff]
          %v531 = vld [vmem:[%s2 + $0x590] sm:$0xff]
          %v532 = vld [vmem:[%s2 + $0x598] sm:$0xff]
          %v533 = vld [vmem:[%s2 + $0x5a0] sm:$0xff]
          %v534 = vld [vmem:[%s2 + $0x5a8] sm:$0xff]
          %v535 = vld [vmem:[%s2 + $0x5b0] sm:$0xff]
          %v536 = vld [vmem:[%s2 + $0x5b8] sm:$0xff]
          %v537 = vld [vmem:[%s2 + $0x5c0] sm:$0xff]
          %v538 = vld [vmem:[%s2 + $0x5c8] sm:$0xff]
          %v539 = vld [vmem:[%s2 + $0x5d0] sm:$0xff]
          %v540 = vld [vmem:[%s2 + $0x5d8] sm:$0xff]
          %v541 = vld [vmem:[%s2 + $0x5e0] sm:$0xff]
          %v542 = vld [vmem:[%s2 + $0x5e8] sm:$0xff]
          %v543 = vld [vmem:[%s2 + $0x5f0] sm:$0xff]
          %v544 = vld [vmem:[%s2 + $0x5f8] sm:$0xff]
          %v545 = vld [vmem:[%s2 + $0x600] sm:$0xff]
          %v546 = vld [vmem:[%s2 + $0x608] sm:$0xff]
          %v547 = vld [vmem:[%s2 + $0x610] sm:$0xff]
          %v548 = vld [vmem:[%s2 + $0x618] sm:$0xff]
          %v549 = vld [vmem:[%s2 + $0x620] sm:$0xff]
          %v550 = vld [vmem:[%s2 + $0x628] sm:$0xff]
          %v551 = vld [vmem:[%s2 + $0x630] sm:$0xff]
          %v552 = vld [vmem:[%s2 + $0x638] sm:$0xff]
          %v553 = vld [vmem:[%s2 + $0x640] sm:$0xff]
          %v554 = vld [vmem:[%s2 + $0x648] sm:$0xff]
          %v555 = vld [vmem:[%s2 + $0x650] sm:$0xff]
          %v556 = vld [vmem:[%s2 + $0x658] sm:$0xff]
          %v557 = vld [vmem:[%s2 + $0x660] sm:$0xff]
          %v558 = vld [vmem:[%s2 + $0x668] sm:$0xff]
          %v559 = vld [vmem:[%s2 + $0x670] sm:$0xff]
          %v560 = vld [vmem:[%s2 + $0x678] sm:$0xff]
          %v561 = vld [vmem:[%s2 + $0x680] sm:$0xff]
          %v562 = vld [vmem:[%s2 + $0x688] sm:$0xff]
          %v563 = vld [vmem:[%s2 + $0x690] sm:$0xff]
          %v564 = vld [vmem:[%s2 + $0x698] sm:$0xff]
          %v565 = vld [vmem:[%s2 + $0x6a0] sm:$0xff]
          %v566 = vld [vmem:[%s2 + $0x6a8] sm:$0xff]
          %v567 = vld [vmem:[%s2 + $0x6b0] sm:$0xff]
          %v568 = vld [vmem:[%s2 + $0x6b8] sm:$0xff]
          %v569 = vld [vmem:[%s2 + $0x6c0] sm:$0xff]
          %v570 = vld [vmem:[%s2 + $0x6c8] sm:$0xff]
          %v571 = vld [vmem:[%s2 + $0x6d0] sm:$0xff]
          %v572 = vld [vmem:[%s2 + $0x6d8] sm:$0xff]
          %v573 = vld [vmem:[%s2 + $0x6e0] sm:$0xff]
          %v574 = vld [vmem:[%s2 + $0x6e8] sm:$0xff]
          %v575 = vld [vmem:[%s2 + $0x6f0] sm:$0xff]
          %v576 = vld [vmem:[%s2 + $0x6f8] sm:$0xff]
          %v577 = vld [vmem:[%s2 + $0x700] sm:$0xff]
          %v578 = vld [vmem:[%s2 + $0x708] sm:$0xff]
          %v579 = vld [vmem:[%s2 + $0x710] sm:$0xff]
          %v580 = vld [vmem:[%s2 + $0x718] sm:$0xff]
          %v581 = vld [vmem:[%s2 + $0x720] sm:$0xff]
          %v582 = vld [vmem:[%s2 + $0x728] sm:$0xff]
          %v583 = vld [vmem:[%s2 + $0x730] sm:$0xff]
          %v584 = vld [vmem:[%s2 + $0x738] sm:$0xff]
          %v585 = vld [vmem:[%s2 + $0x740] sm:$0xff]
          %v586 = vld [vmem:[%s2 + $0x748] sm:$0xff]
          %v587 = vld [vmem:[%s2 + $0x750] sm:$0xff]
          %v588 = vld [vmem:[%s2 + $0x758] sm:$0xff]
          %v589 = vld [vmem:[%s2 + $0x760] sm:$0xff]
          %v590 = vld [vmem:[%s2 + $0x768] sm:$0xff]
          %v591 = vld [vmem:[%s2 + $0x770] sm:$0xff]
          %v592 = vld [vmem:[%s2 + $0x778] sm:$0xff]
          %v593 = vld [vmem:[%s2 + $0x780] sm:$0xff]
          %v594 = vld [vmem:[%s2 + $0x788] sm:$0xff]
          %v595 = vld [vmem:[%s2 + $0x790] sm:$0xff]
          %v596 = vld [vmem:[%s2 + $0x798] sm:$0xff]
          %v597 = vld [vmem:[%s2 + $0x7a0] sm:$0xff]
          %v598 = vld [vmem:[%s2 + $0x7a8] sm:$0xff]
          %v599 = vld [vmem:[%s2 + $0x7b0] sm:$0xff]
          %v600 = vld [vmem:[%s2 + $0x7b8] sm:$0xff]
          %v601 = vld [vmem:[%s2 + $0x7c0] sm:$0xff]
          %v602 = vld [vmem:[%s2 + $0x7c8] sm:$0xff]
          %v603 = vld [vmem:[%s2 + $0x7d0] sm:$0xff]
          %v604 = vld [vmem:[%s2 + $0x7d8] sm:$0xff]
          %v605 = vld [vmem:[%s2 + $0x7e0] sm:$0xff]
          %v606 = vld [vmem:[%s2 + $0x7e8] sm:$0xff]
          %v607 = vld [vmem:[%s2 + $0x7f0] sm:$0xff]
          %v608 = vld [vmem:[%s2 + $0x7f8] sm:$0xff]
          %v609 = vld [vmem:[%s2 + $0x800] sm:$0xff]
          %v610 = vld [vmem:[%s2 + $0x808] sm:$0xff]
          %v611 = vld [vmem:[%s2 + $0x810] sm:$0xff]
          %v612 = vld [vmem:[%s2 + $0x818] sm:$0xff]
          %v613 = vld [vmem:[%s2 + $0x820] sm:$0xff]
          %v614 = vld [vmem:[%s2 + $0x828] sm:$0xff]
          %v615 = vld [vmem:[%s2 + $0x830] sm:$0xff]
          %v616 = vld [vmem:[%s2 + $0x838] sm:$0xff]
          %v617 = vld [vmem:[%s2 + $0x840] sm:$0xff]
          %v618 = vld [vmem:[%s2 + $0x848] sm:$0xff]
          %v619 = vld [vmem:[%s2 + $0x850] sm:$0xff]
          %v620 = vld [vmem:[%s2 + $0x858] sm:$0xff]
          %v621 = vld [vmem:[%s2 + $0x860] sm:$0xff]
          %v622 = vld [vmem:[%s2 + $0x868] sm:$0xff]
          %v623 = vld [vmem:[%s2 + $0x870] sm:$0xff]
          %v624 = vld [vmem:[%s2 + $0x878] sm:$0xff]
          %v625 = vld [vmem:[%s2 + $0x880] sm:$0xff]
          %v626 = vld [vmem:[%s2 + $0x888] sm:$0xff]
          %v627 = vld [vmem:[%s2 + $0x890] sm:$0xff]
          %v628 = vld [vmem:[%s2 + $0x898] sm:$0xff]
          %v629 = vld [vmem:[%s2 + $0x8a0] sm:$0xff]
          %v630 = vld [vmem:[%s2 + $0x8a8] sm:$0xff]
          %v631 = vld [vmem:[%s2 + $0x8b0] sm:$0xff]
          %v632 = vld [vmem:[%s2 + $0x8b8] sm:$0xff]
          %v633 = vld [vmem:[%s2 + $0x8c0] sm:$0xff]
          %v634 = vld [vmem:[%s2 + $0x8c8] sm:$0xff]
          %v635 = vld [vmem:[%s2 + $0x8d0] sm:$0xff]
          %v636 = vld [vmem:[%s2 + $0x8d8] sm:$0xff]
          %v637 = vld [vmem:[%s2 + $0x8e0] sm:$0xff]
          %v638 = vld [vmem:[%s2 + $0x8e8] sm:$0xff]
          %v639 = vld [vmem:[%s2 + $0x8f0] sm:$0xff]
          %v640 = vld [vmem:[%s2 + $0x8f8] sm:$0xff]
          %v641 = vld [vmem:[%s6] sm:$0x3f]
          %v643 = vlaneseq
          %v644 = vshrl.u32 %v643, 7
          %v645 = vsub.s32 0, %v644
          %v646 = vrot.slane %v641, %v645
          %v647 = vlaneseq
          %v648 = vshrl.u32 %v647, 7
          %v649 = vsub.s32 1, %v648
          %v650 = vrot.slane %v641, %v649
          %v651 = vlaneseq
          %v652 = vshrl.u32 %v651, 7
          %v653 = vsub.s32 2, %v652
          %v654 = vrot.slane %v641, %v653
          %v655 = vlaneseq
          %v656 = vshrl.u32 %v655, 7
          %v657 = vsub.s32 3, %v656
          %v658 = vrot.slane %v641, %v657
          %v659 = vlaneseq
          %v660 = vshrl.u32 %v659, 7
          %v661 = vsub.s32 4, %v660
          %v662 = vrot.slane %v641, %v661
          %v663 = vlaneseq
          %v664 = vshrl.u32 %v663, 7
          %v665 = vsub.s32 5, %v664
          %v666 = vrot.slane %v641, %v665
          %v676 = vunpack.c.l.b16 %v346
          %v677 = vunpack.c.h.b16 %v346
          %v678 = vunpack.c.l.b16 %v347
          %v679 = vunpack.c.h.b16 %v347
          %v680 = vunpack.c.l.b16 %v348
          %v681 = vunpack.c.h.b16 %v348
          %v682 = vpack.c.b16 %v676, %v676
          %v683 = vpack.c.b16 %v677, %v677
          %v684 = vpack.c.b16 %v678, %v678
          %v685 = vpack.c.b16 %v679, %v679
          %v686 = vpack.c.b16 %v680, %v680
          %v687 = vpack.c.b16 %v681, %v681
          %v982 = vunpack.c.l.b16 %v353
          %v983 = vunpack.c.h.b16 %v353
          %v984 = vunpack.c.l.b16 %v354
          %v985 = vunpack.c.h.b16 %v354
          %v986 = vunpack.c.l.b16 %v355
          %v987 = vunpack.c.h.b16 %v355
          %v988 = vunpack.c.l.b16 %v356
          %v989 = vunpack.c.h.b16 %v356
          %v990 = vunpack.c.l.b16 %v357
          %v991 = vunpack.c.h.b16 %v357
          %v992 = vunpack.c.l.b16 %v358
          %v993 = vunpack.c.h.b16 %v358
          %v994 = vunpack.c.l.b16 %v359
          %v995 = vunpack.c.h.b16 %v359
          %v996 = vunpack.c.l.b16 %v360
          %v997 = vunpack.c.h.b16 %v360
          %v998 = vunpack.c.l.b16 %v361
          %v999 = vunpack.c.h.b16 %v361
          %v1000 = vunpack.c.l.b16 %v362
          %v1001 = vunpack.c.h.b16 %v362
          %v1002 = vunpack.c.l.b16 %v363
          %v1003 = vunpack.c.h.b16 %v363
          %v1004 = vunpack.c.l.b16 %v364
          %v1005 = vunpack.c.h.b16 %v364
          %v1006 = vunpack.c.l.b16 %v365
          %v1007 = vunpack.c.h.b16 %v365
          %v1008 = vunpack.c.l.b16 %v366
          %v1009 = vunpack.c.h.b16 %v366
          %v1010 = vunpack.c.l.b16 %v367
          %v1011 = vunpack.c.h.b16 %v367
          %v1012 = vunpack.c.l.b16 %v368
          %v1013 = vunpack.c.h.b16 %v368
          %v1014 = vunpack.c.l.b16 %v369
          %v1015 = vunpack.c.h.b16 %v369
          %v1016 = vunpack.c.l.b16 %v370
          %v1017 = vunpack.c.h.b16 %v370
          %v1018 = vunpack.c.l.b16 %v371
          %v1019 = vunpack.c.h.b16 %v371
          %v1020 = vunpack.c.l.b16 %v372
          %v1021 = vunpack.c.h.b16 %v372
          %v1022 = vunpack.c.l.b16 %v373
          %v1023 = vunpack.c.h.b16 %v373
          %v1024 = vunpack.c.l.b16 %v374
          %v1025 = vunpack.c.h.b16 %v374
          %v1026 = vunpack.c.l.b16 %v375
          %v1027 = vunpack.c.h.b16 %v375
          %v1028 = vunpack.c.l.b16 %v376
          %v1029 = vunpack.c.h.b16 %v376
          %v1030 = vunpack.c.l.b16 %v377
          %v1031 = vunpack.c.h.b16 %v377
          %v1032 = vunpack.c.l.b16 %v378
          %v1033 = vunpack.c.h.b16 %v378
          %v1034 = vunpack.c.l.b16 %v379
          %v1035 = vunpack.c.h.b16 %v379
          %v1036 = vunpack.c.l.b16 %v380
          %v1037 = vunpack.c.h.b16 %v380
          %v1038 = vunpack.c.l.b16 %v381
          %v1039 = vunpack.c.h.b16 %v381
          %v1040 = vunpack.c.l.b16 %v382
          %v1041 = vunpack.c.h.b16 %v382
          %v1042 = vunpack.c.l.b16 %v383
          %v1043 = vunpack.c.h.b16 %v383
          %v1044 = vunpack.c.l.b16 %v384
          %v1045 = vunpack.c.h.b16 %v384
          %v1046 = vunpack.c.l.b16 %v385
          %v1047 = vunpack.c.h.b16 %v385
          %v1048 = vunpack.c.l.b16 %v386
          %v1049 = vunpack.c.h.b16 %v386
          %v1050 = vunpack.c.l.b16 %v387
          %v1051 = vunpack.c.h.b16 %v387
          %v1052 = vunpack.c.l.b16 %v388
          %v1053 = vunpack.c.h.b16 %v388
          %v1054 = vunpack.c.l.b16 %v389
          %v1055 = vunpack.c.h.b16 %v389
          %v1056 = vunpack.c.l.b16 %v390
          %v1057 = vunpack.c.h.b16 %v390
          %v1058 = vunpack.c.l.b16 %v391
          %v1059 = vunpack.c.h.b16 %v391
          %v1060 = vunpack.c.l.b16 %v392
          %v1061 = vunpack.c.h.b16 %v392
          %v1062 = vunpack.c.l.b16 %v393
          %v1063 = vunpack.c.h.b16 %v393
          %v1064 = vunpack.c.l.b16 %v394
          %v1065 = vunpack.c.h.b16 %v394
          %v1066 = vunpack.c.l.b16 %v395
          %v1067 = vunpack.c.h.b16 %v395
          %v1068 = vunpack.c.l.b16 %v396
          %v1069 = vunpack.c.h.b16 %v396
          %v1070 = vunpack.c.l.b16 %v397
          %v1071 = vunpack.c.h.b16 %v397
          %v1072 = vunpack.c.l.b16 %v398
          %v1073 = vunpack.c.h.b16 %v398
          %v1074 = vunpack.c.l.b16 %v399
          %v1075 = vunpack.c.h.b16 %v399
          %v1076 = vunpack.c.l.b16 %v400
          %v1077 = vunpack.c.h.b16 %v400
          %v1078 = vunpack.c.l.b16 %v401
          %v1079 = vunpack.c.h.b16 %v401
          %v1080 = vunpack.c.l.b16 %v402
          %v1081 = vunpack.c.h.b16 %v402
          %v1082 = vunpack.c.l.b16 %v403
          %v1083 = vunpack.c.h.b16 %v403
          %v1084 = vunpack.c.l.b16 %v404
          %v1085 = vunpack.c.h.b16 %v404
          %v1086 = vunpack.c.l.b16 %v405
          %v1087 = vunpack.c.h.b16 %v405
          %v1088 = vunpack.c.l.b16 %v406
          %v1089 = vunpack.c.h.b16 %v406
          %v1090 = vunpack.c.l.b16 %v407
          %v1091 = vunpack.c.h.b16 %v407
          %v1092 = vunpack.c.l.b16 %v408
          %v1093 = vunpack.c.h.b16 %v408
          %v1094 = vunpack.c.l.b16 %v409
          %v1095 = vunpack.c.h.b16 %v409
          %v1096 = vunpack.c.l.b16 %v410
          %v1097 = vunpack.c.h.b16 %v410
          %v1098 = vunpack.c.l.b16 %v411
          %v1099 = vunpack.c.h.b16 %v411
          %v1100 = vunpack.c.l.b16 %v412
          %v1101 = vunpack.c.h.b16 %v412
          %v1102 = vunpack.c.l.b16 %v413
          %v1103 = vunpack.c.h.b16 %v413
          %v1104 = vunpack.c.l.b16 %v414
          %v1105 = vunpack.c.h.b16 %v414
          %v1106 = vunpack.c.l.b16 %v415
          %v1107 = vunpack.c.h.b16 %v415
          %v1108 = vunpack.c.l.b16 %v416
          %v1109 = vunpack.c.h.b16 %v416
          %v1110 = vunpack.c.l.b16 %v417
          %v1111 = vunpack.c.h.b16 %v417
          %v1112 = vunpack.c.l.b16 %v418
          %v1113 = vunpack.c.h.b16 %v418
          %v1114 = vunpack.c.l.b16 %v419
          %v1115 = vunpack.c.h.b16 %v419
          %v1116 = vunpack.c.l.b16 %v420
          %v1117 = vunpack.c.h.b16 %v420
          %v1118 = vunpack.c.l.b16 %v421
          %v1119 = vunpack.c.h.b16 %v421
          %v1120 = vunpack.c.l.b16 %v422
          %v1121 = vunpack.c.h.b16 %v422
          %v1122 = vunpack.c.l.b16 %v423
          %v1123 = vunpack.c.h.b16 %v423
          %v1124 = vunpack.c.l.b16 %v424
          %v1125 = vunpack.c.h.b16 %v424
          %v1126 = vunpack.c.l.b16 %v425
          %v1127 = vunpack.c.h.b16 %v425
          %v1128 = vunpack.c.l.b16 %v426
          %v1129 = vunpack.c.h.b16 %v426
          %v1130 = vunpack.c.l.b16 %v427
          %v1131 = vunpack.c.h.b16 %v427
          %v1132 = vunpack.c.l.b16 %v428
          %v1133 = vunpack.c.h.b16 %v428
          %v1134 = vunpack.c.l.b16 %v429
          %v1135 = vunpack.c.h.b16 %v429
          %v1136 = vunpack.c.l.b16 %v430
          %v1137 = vunpack.c.h.b16 %v430
          %v1138 = vunpack.c.l.b16 %v431
          %v1139 = vunpack.c.h.b16 %v431
          %v1140 = vunpack.c.l.b16 %v432
          %v1141 = vunpack.c.h.b16 %v432
          %v1142 = vunpack.c.l.b16 %v433
          %v1143 = vunpack.c.h.b16 %v433
          %v1144 = vunpack.c.l.b16 %v434
          %v1145 = vunpack.c.h.b16 %v434
          %v1146 = vunpack.c.l.b16 %v435
          %v1147 = vunpack.c.h.b16 %v435
          %v1148 = vunpack.c.l.b16 %v436
          %v1149 = vunpack.c.h.b16 %v436
          %v1150 = vunpack.c.l.b16 %v437
          %v1151 = vunpack.c.h.b16 %v437
          %v1152 = vunpack.c.l.b16 %v438
          %v1153 = vunpack.c.h.b16 %v438
          %v1154 = vunpack.c.l.b16 %v439
          %v1155 = vunpack.c.h.b16 %v439
          %v1156 = vunpack.c.l.b16 %v440
          %v1157 = vunpack.c.h.b16 %v440
          %v1158 = vunpack.c.l.b16 %v441
          %v1159 = vunpack.c.h.b16 %v441
          %v1160 = vunpack.c.l.b16 %v442
          %v1161 = vunpack.c.h.b16 %v442
          %v1162 = vunpack.c.l.b16 %v443
          %v1163 = vunpack.c.h.b16 %v443
          %v1164 = vunpack.c.l.b16 %v444
          %v1165 = vunpack.c.h.b16 %v444
          %v1166 = vunpack.c.l.b16 %v445
          %v1167 = vunpack.c.h.b16 %v445
          %v1168 = vunpack.c.l.b16 %v446
          %v1169 = vunpack.c.h.b16 %v446
          %v1170 = vunpack.c.l.b16 %v447
          %v1171 = vunpack.c.h.b16 %v447
          %v1172 = vunpack.c.l.b16 %v448
          %v1173 = vunpack.c.h.b16 %v448
          %v1174 = vunpack.c.l.b16 %v449
          %v1175 = vunpack.c.h.b16 %v449
          %v1176 = vunpack.c.l.b16 %v450
          %v1177 = vunpack.c.h.b16 %v450
          %v1178 = vunpack.c.l.b16 %v451
          %v1179 = vunpack.c.h.b16 %v451
          %v1180 = vunpack.c.l.b16 %v452
          %v1181 = vunpack.c.h.b16 %v452
          %v1182 = vunpack.c.l.b16 %v453
          %v1183 = vunpack.c.h.b16 %v453
          %v1184 = vunpack.c.l.b16 %v454
          %v1185 = vunpack.c.h.b16 %v454
          %v1186 = vunpack.c.l.b16 %v455
          %v1187 = vunpack.c.h.b16 %v455
          %v1188 = vunpack.c.l.b16 %v456
          %v1189 = vunpack.c.h.b16 %v456
          %v1190 = vunpack.c.l.b16 %v457
          %v1191 = vunpack.c.h.b16 %v457
          %v1192 = vunpack.c.l.b16 %v458
          %v1193 = vunpack.c.h.b16 %v458
          %v1194 = vunpack.c.l.b16 %v459
          %v1195 = vunpack.c.h.b16 %v459
          %v1196 = vunpack.c.l.b16 %v460
          %v1197 = vunpack.c.h.b16 %v460
          %v1198 = vunpack.c.l.b16 %v461
          %v1199 = vunpack.c.h.b16 %v461
          %v1200 = vunpack.c.l.b16 %v462
          %v1201 = vunpack.c.h.b16 %v462
          %v1202 = vunpack.c.l.b16 %v463
          %v1203 = vunpack.c.h.b16 %v463
          %v1204 = vunpack.c.l.b16 %v464
          %v1205 = vunpack.c.h.b16 %v464
          %v1206 = vunpack.c.l.b16 %v465
          %v1207 = vunpack.c.h.b16 %v465
          %v1208 = vunpack.c.l.b16 %v466
          %v1209 = vunpack.c.h.b16 %v466
          %v1210 = vunpack.c.l.b16 %v467
          %v1211 = vunpack.c.h.b16 %v467
          %v1212 = vunpack.c.l.b16 %v468
          %v1213 = vunpack.c.h.b16 %v468
          %v1214 = vunpack.c.l.b16 %v469
          %v1215 = vunpack.c.h.b16 %v469
          %v1216 = vunpack.c.l.b16 %v470
          %v1217 = vunpack.c.h.b16 %v470
          %v1218 = vunpack.c.l.b16 %v471
          %v1219 = vunpack.c.h.b16 %v471
          %v1220 = vunpack.c.l.b16 %v472
          %v1221 = vunpack.c.h.b16 %v472
          %v1222 = vunpack.c.l.b16 %v473
          %v1223 = vunpack.c.h.b16 %v473
          %v1224 = vunpack.c.l.b16 %v474
          %v1225 = vunpack.c.h.b16 %v474
          %v1226 = vunpack.c.l.b16 %v475
          %v1227 = vunpack.c.h.b16 %v475
          %v1228 = vunpack.c.l.b16 %v476
          %v1229 = vunpack.c.h.b16 %v476
          %v1230 = vunpack.c.l.b16 %v477
          %v1231 = vunpack.c.h.b16 %v477
          %v1232 = vunpack.c.l.b16 %v478
          %v1233 = vunpack.c.h.b16 %v478
          %v1234 = vunpack.c.l.b16 %v479
          %v1235 = vunpack.c.h.b16 %v479
          %v1236 = vunpack.c.l.b16 %v480
          %v1237 = vunpack.c.h.b16 %v480
          %v1238 = vunpack.c.l.b16 %v481
          %v1239 = vunpack.c.h.b16 %v481
          %v1240 = vunpack.c.l.b16 %v482
          %v1241 = vunpack.c.h.b16 %v482
          %v1242 = vunpack.c.l.b16 %v483
          %v1243 = vunpack.c.h.b16 %v483
          %v1244 = vunpack.c.l.b16 %v484
          %v1245 = vunpack.c.h.b16 %v484
          %v1246 = vunpack.c.l.b16 %v485
          %v1247 = vunpack.c.h.b16 %v485
          %v1248 = vunpack.c.l.b16 %v486
          %v1249 = vunpack.c.h.b16 %v486
          %v1250 = vunpack.c.l.b16 %v487
          %v1251 = vunpack.c.h.b16 %v487
          %v1252 = vunpack.c.l.b16 %v488
          %v1253 = vunpack.c.h.b16 %v488
          %v1254 = vunpack.c.l.b16 %v489
          %v1255 = vunpack.c.h.b16 %v489
          %v1256 = vunpack.c.l.b16 %v490
          %v1257 = vunpack.c.h.b16 %v490
          %v1258 = vunpack.c.l.b16 %v491
          %v1259 = vunpack.c.h.b16 %v491
          %v1260 = vunpack.c.l.b16 %v492
          %v1261 = vunpack.c.h.b16 %v492
          %v1262 = vunpack.c.l.b16 %v493
          %v1263 = vunpack.c.h.b16 %v493
          %v1264 = vunpack.c.l.b16 %v494
          %v1265 = vunpack.c.h.b16 %v494
          %v1266 = vunpack.c.l.b16 %v495
          %v1267 = vunpack.c.h.b16 %v495
          %v1268 = vunpack.c.l.b16 %v496
          %v1269 = vunpack.c.h.b16 %v496
          %v1270 = vunpack.c.l.b16 %v497
          %v1271 = vunpack.c.h.b16 %v497
          %v1272 = vunpack.c.l.b16 %v498
          %v1273 = vunpack.c.h.b16 %v498
          %v1274 = vunpack.c.l.b16 %v499
          %v1275 = vunpack.c.h.b16 %v499
          %v1276 = vunpack.c.l.b16 %v500
          %v1277 = vunpack.c.h.b16 %v500
          %v1278 = vunpack.c.l.b16 %v501
          %v1279 = vunpack.c.h.b16 %v501
          %v1280 = vunpack.c.l.b16 %v502
          %v1281 = vunpack.c.h.b16 %v502
          %v1282 = vunpack.c.l.b16 %v503
          %v1283 = vunpack.c.h.b16 %v503
          %v1284 = vunpack.c.l.b16 %v504
          %v1285 = vunpack.c.h.b16 %v504
          %v1286 = vunpack.c.l.b16 %v505
          %v1287 = vunpack.c.h.b16 %v505
          %v1288 = vunpack.c.l.b16 %v506
          %v1289 = vunpack.c.h.b16 %v506
          %v1290 = vunpack.c.l.b16 %v507
          %v1291 = vunpack.c.h.b16 %v507
          %v1292 = vunpack.c.l.b16 %v508
          %v1293 = vunpack.c.h.b16 %v508
          %v1294 = vunpack.c.l.b16 %v509
          %v1295 = vunpack.c.h.b16 %v509
          %v1296 = vunpack.c.l.b16 %v510
          %v1297 = vunpack.c.h.b16 %v510
          %v1298 = vunpack.c.l.b16 %v511
          %v1299 = vunpack.c.h.b16 %v511
          %v1300 = vunpack.c.l.b16 %v512
          %v1301 = vunpack.c.h.b16 %v512
          %v1302 = vunpack.c.l.b16 %v513
          %v1303 = vunpack.c.h.b16 %v513
          %v1304 = vunpack.c.l.b16 %v514
          %v1305 = vunpack.c.h.b16 %v514
          %v1306 = vunpack.c.l.b16 %v515
          %v1307 = vunpack.c.h.b16 %v515
          %v1308 = vunpack.c.l.b16 %v516
          %v1309 = vunpack.c.h.b16 %v516
          %v1310 = vunpack.c.l.b16 %v517
          %v1311 = vunpack.c.h.b16 %v517
          %v1312 = vunpack.c.l.b16 %v518
          %v1313 = vunpack.c.h.b16 %v518
          %v1314 = vunpack.c.l.b16 %v519
          %v1315 = vunpack.c.h.b16 %v519
          %v1316 = vunpack.c.l.b16 %v520
          %v1317 = vunpack.c.h.b16 %v520
          %v1318 = vunpack.c.l.b16 %v521
          %v1319 = vunpack.c.h.b16 %v521
          %v1320 = vunpack.c.l.b16 %v522
          %v1321 = vunpack.c.h.b16 %v522
          %v1322 = vunpack.c.l.b16 %v523
          %v1323 = vunpack.c.h.b16 %v523
          %v1324 = vunpack.c.l.b16 %v524
          %v1325 = vunpack.c.h.b16 %v524
          %v1326 = vunpack.c.l.b16 %v525
          %v1327 = vunpack.c.h.b16 %v525
          %v1328 = vunpack.c.l.b16 %v526
          %v1329 = vunpack.c.h.b16 %v526
          %v1330 = vunpack.c.l.b16 %v527
          %v1331 = vunpack.c.h.b16 %v527
          %v1332 = vunpack.c.l.b16 %v528
          %v1333 = vunpack.c.h.b16 %v528
          %v1334 = vunpack.c.l.b16 %v529
          %v1335 = vunpack.c.h.b16 %v529
          %v1336 = vunpack.c.l.b16 %v530
          %v1337 = vunpack.c.h.b16 %v530
          %v1338 = vunpack.c.l.b16 %v531
          %v1339 = vunpack.c.h.b16 %v531
          %v1340 = vunpack.c.l.b16 %v532
          %v1341 = vunpack.c.h.b16 %v532
          %v1342 = vunpack.c.l.b16 %v533
          %v1343 = vunpack.c.h.b16 %v533
          %v1344 = vunpack.c.l.b16 %v534
          %v1345 = vunpack.c.h.b16 %v534
          %v1346 = vunpack.c.l.b16 %v535
          %v1347 = vunpack.c.h.b16 %v535
          %v1348 = vunpack.c.l.b16 %v536
          %v1349 = vunpack.c.h.b16 %v536
          %v1350 = vunpack.c.l.b16 %v537
          %v1351 = vunpack.c.h.b16 %v537
          %v1352 = vunpack.c.l.b16 %v538
          %v1353 = vunpack.c.h.b16 %v538
          %v1354 = vunpack.c.l.b16 %v539
          %v1355 = vunpack.c.h.b16 %v539
          %v1356 = vunpack.c.l.b16 %v540
          %v1357 = vunpack.c.h.b16 %v540
          %v1358 = vunpack.c.l.b16 %v541
          %v1359 = vunpack.c.h.b16 %v541
          %v1360 = vunpack.c.l.b16 %v542
          %v1361 = vunpack.c.h.b16 %v542
          %v1362 = vunpack.c.l.b16 %v543
          %v1363 = vunpack.c.h.b16 %v543
          %v1364 = vunpack.c.l.b16 %v544
          %v1365 = vunpack.c.h.b16 %v544
          %v1366 = vunpack.c.l.b16 %v545
          %v1367 = vunpack.c.h.b16 %v545
          %v1368 = vunpack.c.l.b16 %v546
          %v1369 = vunpack.c.h.b16 %v546
          %v1370 = vunpack.c.l.b16 %v547
          %v1371 = vunpack.c.h.b16 %v547
          %v1372 = vunpack.c.l.b16 %v548
          %v1373 = vunpack.c.h.b16 %v548
          %v1374 = vunpack.c.l.b16 %v549
          %v1375 = vunpack.c.h.b16 %v549
          %v1376 = vunpack.c.l.b16 %v550
          %v1377 = vunpack.c.h.b16 %v550
          %v1378 = vunpack.c.l.b16 %v551
          %v1379 = vunpack.c.h.b16 %v551
          %v1380 = vunpack.c.l.b16 %v552
          %v1381 = vunpack.c.h.b16 %v552
          %v1382 = vunpack.c.l.b16 %v553
          %v1383 = vunpack.c.h.b16 %v553
          %v1384 = vunpack.c.l.b16 %v554
          %v1385 = vunpack.c.h.b16 %v554
          %v1386 = vunpack.c.l.b16 %v555
          %v1387 = vunpack.c.h.b16 %v555
          %v1388 = vunpack.c.l.b16 %v556
          %v1389 = vunpack.c.h.b16 %v556
          %v1390 = vunpack.c.l.b16 %v557
          %v1391 = vunpack.c.h.b16 %v557
          %v1392 = vunpack.c.l.b16 %v558
          %v1393 = vunpack.c.h.b16 %v558
          %v1394 = vunpack.c.l.b16 %v559
          %v1395 = vunpack.c.h.b16 %v559
          %v1396 = vunpack.c.l.b16 %v560
          %v1397 = vunpack.c.h.b16 %v560
          %v1398 = vunpack.c.l.b16 %v561
          %v1399 = vunpack.c.h.b16 %v561
          %v1400 = vunpack.c.l.b16 %v562
          %v1401 = vunpack.c.h.b16 %v562
          %v1402 = vunpack.c.l.b16 %v563
          %v1403 = vunpack.c.h.b16 %v563
          %v1404 = vunpack.c.l.b16 %v564
          %v1405 = vunpack.c.h.b16 %v564
          %v1406 = vunpack.c.l.b16 %v565
          %v1407 = vunpack.c.h.b16 %v565
          %v1408 = vunpack.c.l.b16 %v566
          %v1409 = vunpack.c.h.b16 %v566
          %v1410 = vunpack.c.l.b16 %v567
          %v1411 = vunpack.c.h.b16 %v567
          %v1412 = vunpack.c.l.b16 %v568
          %v1413 = vunpack.c.h.b16 %v568
          %v1414 = vunpack.c.l.b16 %v569
          %v1415 = vunpack.c.h.b16 %v569
          %v1416 = vunpack.c.l.b16 %v570
          %v1417 = vunpack.c.h.b16 %v570
          %v1418 = vunpack.c.l.b16 %v571
          %v1419 = vunpack.c.h.b16 %v571
          %v1420 = vunpack.c.l.b16 %v572
          %v1421 = vunpack.c.h.b16 %v572
          %v1422 = vunpack.c.l.b16 %v573
          %v1423 = vunpack.c.h.b16 %v573
          %v1424 = vunpack.c.l.b16 %v574
          %v1425 = vunpack.c.h.b16 %v574
          %v1426 = vunpack.c.l.b16 %v575
          %v1427 = vunpack.c.h.b16 %v575
          %v1428 = vunpack.c.l.b16 %v576
          %v1429 = vunpack.c.h.b16 %v576
          %v1430 = vunpack.c.l.b16 %v577
          %v1431 = vunpack.c.h.b16 %v577
          %v1432 = vunpack.c.l.b16 %v578
          %v1433 = vunpack.c.h.b16 %v578
          %v1434 = vunpack.c.l.b16 %v579
          %v1435 = vunpack.c.h.b16 %v579
          %v1436 = vunpack.c.l.b16 %v580
          %v1437 = vunpack.c.h.b16 %v580
          %v1438 = vunpack.c.l.b16 %v581
          %v1439 = vunpack.c.h.b16 %v581
          %v1440 = vunpack.c.l.b16 %v582
          %v1441 = vunpack.c.h.b16 %v582
          %v1442 = vunpack.c.l.b16 %v583
          %v1443 = vunpack.c.h.b16 %v583
          %v1444 = vunpack.c.l.b16 %v584
          %v1445 = vunpack.c.h.b16 %v584
          %v1446 = vunpack.c.l.b16 %v585
          %v1447 = vunpack.c.h.b16 %v585
          %v1448 = vunpack.c.l.b16 %v586
          %v1449 = vunpack.c.h.b16 %v586
          %v1450 = vunpack.c.l.b16 %v587
          %v1451 = vunpack.c.h.b16 %v587
          %v1452 = vunpack.c.l.b16 %v588
          %v1453 = vunpack.c.h.b16 %v588
          %v1454 = vunpack.c.l.b16 %v589
          %v1455 = vunpack.c.h.b16 %v589
          %v1456 = vunpack.c.l.b16 %v590
          %v1457 = vunpack.c.h.b16 %v590
          %v1458 = vunpack.c.l.b16 %v591
          %v1459 = vunpack.c.h.b16 %v591
          %v1460 = vunpack.c.l.b16 %v592
          %v1461 = vunpack.c.h.b16 %v592
          %v1462 = vunpack.c.l.b16 %v593
          %v1463 = vunpack.c.h.b16 %v593
          %v1464 = vunpack.c.l.b16 %v594
          %v1465 = vunpack.c.h.b16 %v594
          %v1466 = vunpack.c.l.b16 %v595
          %v1467 = vunpack.c.h.b16 %v595
          %v1468 = vunpack.c.l.b16 %v596
          %v1469 = vunpack.c.h.b16 %v596
          %v1470 = vunpack.c.l.b16 %v597
          %v1471 = vunpack.c.h.b16 %v597
          %v1472 = vunpack.c.l.b16 %v598
          %v1473 = vunpack.c.h.b16 %v598
          %v1474 = vunpack.c.l.b16 %v599
          %v1475 = vunpack.c.h.b16 %v599
          %v1476 = vunpack.c.l.b16 %v600
          %v1477 = vunpack.c.h.b16 %v600
          %v1478 = vunpack.c.l.b16 %v601
          %v1479 = vunpack.c.h.b16 %v601
          %v1480 = vunpack.c.l.b16 %v602
          %v1481 = vunpack.c.h.b16 %v602
          %v1482 = vunpack.c.l.b16 %v603
          %v1483 = vunpack.c.h.b16 %v603
          %v1484 = vunpack.c.l.b16 %v604
          %v1485 = vunpack.c.h.b16 %v604
          %v1486 = vunpack.c.l.b16 %v605
          %v1487 = vunpack.c.h.b16 %v605
          %v1488 = vunpack.c.l.b16 %v606
          %v1489 = vunpack.c.h.b16 %v606
          %v1490 = vunpack.c.l.b16 %v607
          %v1491 = vunpack.c.h.b16 %v607
          %v1492 = vunpack.c.l.b16 %v608
          %v1493 = vunpack.c.h.b16 %v608
          %v1494 = vunpack.c.l.b16 %v609
          %v1495 = vunpack.c.h.b16 %v609
          %v1496 = vunpack.c.l.b16 %v610
          %v1497 = vunpack.c.h.b16 %v610
          %v1498 = vunpack.c.l.b16 %v611
          %v1499 = vunpack.c.h.b16 %v611
          %v1500 = vunpack.c.l.b16 %v612
          %v1501 = vunpack.c.h.b16 %v612
          %v1502 = vunpack.c.l.b16 %v613
          %v1503 = vunpack.c.h.b16 %v613
          %v1504 = vunpack.c.l.b16 %v614
          %v1505 = vunpack.c.h.b16 %v614
          %v1506 = vunpack.c.l.b16 %v615
          %v1507 = vunpack.c.h.b16 %v615
          %v1508 = vunpack.c.l.b16 %v616
          %v1509 = vunpack.c.h.b16 %v616
          %v1510 = vunpack.c.l.b16 %v617
          %v1511 = vunpack.c.h.b16 %v617
          %v1512 = vunpack.c.l.b16 %v618
          %v1513 = vunpack.c.h.b16 %v618
          %v1514 = vunpack.c.l.b16 %v619
          %v1515 = vunpack.c.h.b16 %v619
          %v1516 = vunpack.c.l.b16 %v620
          %v1517 = vunpack.c.h.b16 %v620
          %v1518 = vunpack.c.l.b16 %v621
          %v1519 = vunpack.c.h.b16 %v621
          %v1520 = vunpack.c.l.b16 %v622
          %v1521 = vunpack.c.h.b16 %v622
          %v1522 = vunpack.c.l.b16 %v623
          %v1523 = vunpack.c.h.b16 %v623
          %v1524 = vunpack.c.l.b16 %v624
          %v1525 = vunpack.c.h.b16 %v624
          %v1526 = vunpack.c.l.b16 %v625
          %v1527 = vunpack.c.h.b16 %v625
          %v1528 = vunpack.c.l.b16 %v626
          %v1529 = vunpack.c.h.b16 %v626
          %v1530 = vunpack.c.l.b16 %v627
          %v1531 = vunpack.c.h.b16 %v627
          %v1532 = vunpack.c.l.b16 %v628
          %v1533 = vunpack.c.h.b16 %v628
          %v1534 = vunpack.c.l.b16 %v629
          %v1535 = vunpack.c.h.b16 %v629
          %v1536 = vunpack.c.l.b16 %v630
          %v1537 = vunpack.c.h.b16 %v630
          %v1538 = vunpack.c.l.b16 %v631
          %v1539 = vunpack.c.h.b16 %v631
          %v1540 = vunpack.c.l.b16 %v632
          %v1541 = vunpack.c.h.b16 %v632
          %v1542 = vunpack.c.l.b16 %v633
          %v1543 = vunpack.c.h.b16 %v633
          %v1544 = vunpack.c.l.b16 %v634
          %v1545 = vunpack.c.h.b16 %v634
          %v1546 = vunpack.c.l.b16 %v635
          %v1547 = vunpack.c.h.b16 %v635
          %v1548 = vunpack.c.l.b16 %v636
          %v1549 = vunpack.c.h.b16 %v636
          %v1550 = vunpack.c.l.b16 %v637
          %v1551 = vunpack.c.h.b16 %v637
          %v1552 = vunpack.c.l.b16 %v638
          %v1553 = vunpack.c.h.b16 %v638
          %v1554 = vunpack.c.l.b16 %v639
          %v1555 = vunpack.c.h.b16 %v639
          %v1556 = vunpack.c.l.b16 %v640
          %v1557 = vunpack.c.h.b16 %v640
          %v1558 = vpack.c.b16 %v988, %v982
          %v1559 = vpack.c.b16 %v989, %v983
          %v1560 = vpack.c.b16 %v990, %v984
          %v1561 = vpack.c.b16 %v991, %v985
          %v1562 = vpack.c.b16 %v992, %v986
          %v1563 = vpack.c.b16 %v993, %v987
          %v1564 = vpack.c.b16 %v1000, %v994
          %v1565 = vpack.c.b16 %v1001, %v995
          %v1566 = vpack.c.b16 %v1002, %v996
          %v1567 = vpack.c.b16 %v1003, %v997
          %v1568 = vpack.c.b16 %v1004, %v998
          %v1569 = vpack.c.b16 %v1005, %v999
          %v1570 = vpack.c.b16 %v1012, %v1006
          %v1571 = vpack.c.b16 %v1013, %v1007
          %v1572 = vpack.c.b16 %v1014, %v1008
          %v1573 = vpack.c.b16 %v1015, %v1009
          %v1574 = vpack.c.b16 %v1016, %v1010
          %v1575 = vpack.c.b16 %v1017, %v1011
          %v1576 = vpack.c.b16 %v1024, %v1018
          %v1577 = vpack.c.b16 %v1025, %v1019
          %v1578 = vpack.c.b16 %v1026, %v1020
          %v1579 = vpack.c.b16 %v1027, %v1021
          %v1580 = vpack.c.b16 %v1028, %v1022
          %v1581 = vpack.c.b16 %v1029, %v1023
          %v1582 = vpack.c.b16 %v1036, %v1030
          %v1583 = vpack.c.b16 %v1037, %v1031
          %v1584 = vpack.c.b16 %v1038, %v1032
          %v1585 = vpack.c.b16 %v1039, %v1033
          %v1586 = vpack.c.b16 %v1040, %v1034
          %v1587 = vpack.c.b16 %v1041, %v1035
          %v1588 = vpack.c.b16 %v1048, %v1042
          %v1589 = vpack.c.b16 %v1049, %v1043
          %v1590 = vpack.c.b16 %v1050, %v1044
          %v1591 = vpack.c.b16 %v1051, %v1045
          %v1592 = vpack.c.b16 %v1052, %v1046
          %v1593 = vpack.c.b16 %v1053, %v1047
          %v1594 = vpack.c.b16 %v1060, %v1054
          %v1595 = vpack.c.b16 %v1061, %v1055
          %v1596 = vpack.c.b16 %v1062, %v1056
          %v1597 = vpack.c.b16 %v1063, %v1057
          %v1598 = vpack.c.b16 %v1064, %v1058
          %v1599 = vpack.c.b16 %v1065, %v1059
          %v1600 = vpack.c.b16 %v1072, %v1066
          %v1601 = vpack.c.b16 %v1073, %v1067
          %v1602 = vpack.c.b16 %v1074, %v1068
          %v1603 = vpack.c.b16 %v1075, %v1069
          %v1604 = vpack.c.b16 %v1076, %v1070
          %v1605 = vpack.c.b16 %v1077, %v1071
          %v1606 = vpack.c.b16 %v1084, %v1078
          %v1607 = vpack.c.b16 %v1085, %v1079
          %v1608 = vpack.c.b16 %v1086, %v1080
          %v1609 = vpack.c.b16 %v1087, %v1081
          %v1610 = vpack.c.b16 %v1088, %v1082
          %v1611 = vpack.c.b16 %v1089, %v1083
          %v1612 = vpack.c.b16 %v1096, %v1090
          %v1613 = vpack.c.b16 %v1097, %v1091
          %v1614 = vpack.c.b16 %v1098, %v1092
          %v1615 = vpack.c.b16 %v1099, %v1093
          %v1616 = vpack.c.b16 %v1100, %v1094
          %v1617 = vpack.c.b16 %v1101, %v1095
          %v1618 = vpack.c.b16 %v1108, %v1102
          %v1619 = vpack.c.b16 %v1109, %v1103
          %v1620 = vpack.c.b16 %v1110, %v1104
          %v1621 = vpack.c.b16 %v1111, %v1105
          %v1622 = vpack.c.b16 %v1112, %v1106
          %v1623 = vpack.c.b16 %v1113, %v1107
          %v1624 = vpack.c.b16 %v1120, %v1114
          %v1625 = vpack.c.b16 %v1121, %v1115
          %v1626 = vpack.c.b16 %v1122, %v1116
          %v1627 = vpack.c.b16 %v1123, %v1117
          %v1628 = vpack.c.b16 %v1124, %v1118
          %v1629 = vpack.c.b16 %v1125, %v1119
          %v1630 = vpack.c.b16 %v1132, %v1126
          %v1631 = vpack.c.b16 %v1133, %v1127
          %v1632 = vpack.c.b16 %v1134, %v1128
          %v1633 = vpack.c.b16 %v1135, %v1129
          %v1634 = vpack.c.b16 %v1136, %v1130
          %v1635 = vpack.c.b16 %v1137, %v1131
          %v1636 = vpack.c.b16 %v1144, %v1138
          %v1637 = vpack.c.b16 %v1145, %v1139
          %v1638 = vpack.c.b16 %v1146, %v1140
          %v1639 = vpack.c.b16 %v1147, %v1141
          %v1640 = vpack.c.b16 %v1148, %v1142
          %v1641 = vpack.c.b16 %v1149, %v1143
          %v1642 = vpack.c.b16 %v1156, %v1150
          %v1643 = vpack.c.b16 %v1157, %v1151
          %v1644 = vpack.c.b16 %v1158, %v1152
          %v1645 = vpack.c.b16 %v1159, %v1153
          %v1646 = vpack.c.b16 %v1160, %v1154
          %v1647 = vpack.c.b16 %v1161, %v1155
          %v1648 = vpack.c.b16 %v1168, %v1162
          %v1649 = vpack.c.b16 %v1169, %v1163
          %v1650 = vpack.c.b16 %v1170, %v1164
          %v1651 = vpack.c.b16 %v1171, %v1165
          %v1652 = vpack.c.b16 %v1172, %v1166
          %v1653 = vpack.c.b16 %v1173, %v1167
          %v1654 = vpack.c.b16 %v1180, %v1174
          %v1655 = vpack.c.b16 %v1181, %v1175
          %v1656 = vpack.c.b16 %v1182, %v1176
          %v1657 = vpack.c.b16 %v1183, %v1177
          %v1658 = vpack.c.b16 %v1184, %v1178
          %v1659 = vpack.c.b16 %v1185, %v1179
          %v1660 = vpack.c.b16 %v1192, %v1186
          %v1661 = vpack.c.b16 %v1193, %v1187
          %v1662 = vpack.c.b16 %v1194, %v1188
          %v1663 = vpack.c.b16 %v1195, %v1189
          %v1664 = vpack.c.b16 %v1196, %v1190
          %v1665 = vpack.c.b16 %v1197, %v1191
          %v1666 = vpack.c.b16 %v1204, %v1198
          %v1667 = vpack.c.b16 %v1205, %v1199
          %v1668 = vpack.c.b16 %v1206, %v1200
          %v1669 = vpack.c.b16 %v1207, %v1201
          %v1670 = vpack.c.b16 %v1208, %v1202
          %v1671 = vpack.c.b16 %v1209, %v1203
          %v1672 = vpack.c.b16 %v1216, %v1210
          %v1673 = vpack.c.b16 %v1217, %v1211
          %v1674 = vpack.c.b16 %v1218, %v1212
          %v1675 = vpack.c.b16 %v1219, %v1213
          %v1676 = vpack.c.b16 %v1220, %v1214
          %v1677 = vpack.c.b16 %v1221, %v1215
          %v1678 = vpack.c.b16 %v1228, %v1222
          %v1679 = vpack.c.b16 %v1229, %v1223
          %v1680 = vpack.c.b16 %v1230, %v1224
          %v1681 = vpack.c.b16 %v1231, %v1225
          %v1682 = vpack.c.b16 %v1232, %v1226
          %v1683 = vpack.c.b16 %v1233, %v1227
          %v1684 = vpack.c.b16 %v1240, %v1234
          %v1685 = vpack.c.b16 %v1241, %v1235
          %v1686 = vpack.c.b16 %v1242, %v1236
          %v1687 = vpack.c.b16 %v1243, %v1237
          %v1688 = vpack.c.b16 %v1244, %v1238
          %v1689 = vpack.c.b16 %v1245, %v1239
          %v1690 = vpack.c.b16 %v1252, %v1246
          %v1691 = vpack.c.b16 %v1253, %v1247
          %v1692 = vpack.c.b16 %v1254, %v1248
          %v1693 = vpack.c.b16 %v1255, %v1249
          %v1694 = vpack.c.b16 %v1256, %v1250
          %v1695 = vpack.c.b16 %v1257, %v1251
          %v1696 = vpack.c.b16 %v1264, %v1258
          %v1697 = vpack.c.b16 %v1265, %v1259
          %v1698 = vpack.c.b16 %v1266, %v1260
          %v1699 = vpack.c.b16 %v1267, %v1261
          %v1700 = vpack.c.b16 %v1268, %v1262
          %v1701 = vpack.c.b16 %v1269, %v1263
          %v1702 = vpack.c.b16 %v1276, %v1270
          %v1703 = vpack.c.b16 %v1277, %v1271
          %v1704 = vpack.c.b16 %v1278, %v1272
          %v1705 = vpack.c.b16 %v1279, %v1273
          %v1706 = vpack.c.b16 %v1280, %v1274
          %v1707 = vpack.c.b16 %v1281, %v1275
          %v1708 = vpack.c.b16 %v1288, %v1282
          %v1709 = vpack.c.b16 %v1289, %v1283
          %v1710 = vpack.c.b16 %v1290, %v1284
          %v1711 = vpack.c.b16 %v1291, %v1285
          %v1712 = vpack.c.b16 %v1292, %v1286
          %v1713 = vpack.c.b16 %v1293, %v1287
          %v1714 = vpack.c.b16 %v1300, %v1294
          %v1715 = vpack.c.b16 %v1301, %v1295
          %v1716 = vpack.c.b16 %v1302, %v1296
          %v1717 = vpack.c.b16 %v1303, %v1297
          %v1718 = vpack.c.b16 %v1304, %v1298
          %v1719 = vpack.c.b16 %v1305, %v1299
          %v1720 = vpack.c.b16 %v1312, %v1306
          %v1721 = vpack.c.b16 %v1313, %v1307
          %v1722 = vpack.c.b16 %v1314, %v1308
          %v1723 = vpack.c.b16 %v1315, %v1309
          %v1724 = vpack.c.b16 %v1316, %v1310
          %v1725 = vpack.c.b16 %v1317, %v1311
          %v1726 = vpack.c.b16 %v1324, %v1318
          %v1727 = vpack.c.b16 %v1325, %v1319
          %v1728 = vpack.c.b16 %v1326, %v1320
          %v1729 = vpack.c.b16 %v1327, %v1321
          %v1730 = vpack.c.b16 %v1328, %v1322
          %v1731 = vpack.c.b16 %v1329, %v1323
          %v1732 = vpack.c.b16 %v1336, %v1330
          %v1733 = vpack.c.b16 %v1337, %v1331
          %v1734 = vpack.c.b16 %v1338, %v1332
          %v1735 = vpack.c.b16 %v1339, %v1333
          %v1736 = vpack.c.b16 %v1340, %v1334
          %v1737 = vpack.c.b16 %v1341, %v1335
          %v1738 = vpack.c.b16 %v1348, %v1342
          %v1739 = vpack.c.b16 %v1349, %v1343
          %v1740 = vpack.c.b16 %v1350, %v1344
          %v1741 = vpack.c.b16 %v1351, %v1345
          %v1742 = vpack.c.b16 %v1352, %v1346
          %v1743 = vpack.c.b16 %v1353, %v1347
          %v1744 = vpack.c.b16 %v1360, %v1354
          %v1745 = vpack.c.b16 %v1361, %v1355
          %v1746 = vpack.c.b16 %v1362, %v1356
          %v1747 = vpack.c.b16 %v1363, %v1357
          %v1748 = vpack.c.b16 %v1364, %v1358
          %v1749 = vpack.c.b16 %v1365, %v1359
          %v1750 = vpack.c.b16 %v1372, %v1366
          %v1751 = vpack.c.b16 %v1373, %v1367
          %v1752 = vpack.c.b16 %v1374, %v1368
          %v1753 = vpack.c.b16 %v1375, %v1369
          %v1754 = vpack.c.b16 %v1376, %v1370
          %v1755 = vpack.c.b16 %v1377, %v1371
          %v1756 = vpack.c.b16 %v1384, %v1378
          %v1757 = vpack.c.b16 %v1385, %v1379
          %v1758 = vpack.c.b16 %v1386, %v1380
          %v1759 = vpack.c.b16 %v1387, %v1381
          %v1760 = vpack.c.b16 %v1388, %v1382
          %v1761 = vpack.c.b16 %v1389, %v1383
          %v1762 = vpack.c.b16 %v1396, %v1390
          %v1763 = vpack.c.b16 %v1397, %v1391
          %v1764 = vpack.c.b16 %v1398, %v1392
          %v1765 = vpack.c.b16 %v1399, %v1393
          %v1766 = vpack.c.b16 %v1400, %v1394
          %v1767 = vpack.c.b16 %v1401, %v1395
          %v1768 = vpack.c.b16 %v1408, %v1402
          %v1769 = vpack.c.b16 %v1409, %v1403
          %v1770 = vpack.c.b16 %v1410, %v1404
          %v1771 = vpack.c.b16 %v1411, %v1405
          %v1772 = vpack.c.b16 %v1412, %v1406
          %v1773 = vpack.c.b16 %v1413, %v1407
          %v1774 = vpack.c.b16 %v1420, %v1414
          %v1775 = vpack.c.b16 %v1421, %v1415
          %v1776 = vpack.c.b16 %v1422, %v1416
          %v1777 = vpack.c.b16 %v1423, %v1417
          %v1778 = vpack.c.b16 %v1424, %v1418
          %v1779 = vpack.c.b16 %v1425, %v1419
          %v1780 = vpack.c.b16 %v1432, %v1426
          %v1781 = vpack.c.b16 %v1433, %v1427
          %v1782 = vpack.c.b16 %v1434, %v1428
          %v1783 = vpack.c.b16 %v1435, %v1429
          %v1784 = vpack.c.b16 %v1436, %v1430
          %v1785 = vpack.c.b16 %v1437, %v1431
          %v1786 = vpack.c.b16 %v1444, %v1438
          %v1787 = vpack.c.b16 %v1445, %v1439
          %v1788 = vpack.c.b16 %v1446, %v1440
          %v1789 = vpack.c.b16 %v1447, %v1441
          %v1790 = vpack.c.b16 %v1448, %v1442
          %v1791 = vpack.c.b16 %v1449, %v1443
          %v1792 = vpack.c.b16 %v1456, %v1450
          %v1793 = vpack.c.b16 %v1457, %v1451
          %v1794 = vpack.c.b16 %v1458, %v1452
          %v1795 = vpack.c.b16 %v1459, %v1453
          %v1796 = vpack.c.b16 %v1460, %v1454
          %v1797 = vpack.c.b16 %v1461, %v1455
          %v1798 = vpack.c.b16 %v1468, %v1462
          %v1799 = vpack.c.b16 %v1469, %v1463
          %v1800 = vpack.c.b16 %v1470, %v1464
          %v1801 = vpack.c.b16 %v1471, %v1465
          %v1802 = vpack.c.b16 %v1472, %v1466
          %v1803 = vpack.c.b16 %v1473, %v1467
          %v1804 = vpack.c.b16 %v1480, %v1474
          %v1805 = vpack.c.b16 %v1481, %v1475
          %v1806 = vpack.c.b16 %v1482, %v1476
          %v1807 = vpack.c.b16 %v1483, %v1477
          %v1808 = vpack.c.b16 %v1484, %v1478
          %v1809 = vpack.c.b16 %v1485, %v1479
          %v1810 = vpack.c.b16 %v1492, %v1486
          %v1811 = vpack.c.b16 %v1493, %v1487
          %v1812 = vpack.c.b16 %v1494, %v1488
          %v1813 = vpack.c.b16 %v1495, %v1489
          %v1814 = vpack.c.b16 %v1496, %v1490
          %v1815 = vpack.c.b16 %v1497, %v1491
          %v1816 = vpack.c.b16 %v1504, %v1498
          %v1817 = vpack.c.b16 %v1505, %v1499
          %v1818 = vpack.c.b16 %v1506, %v1500
          %v1819 = vpack.c.b16 %v1507, %v1501
          %v1820 = vpack.c.b16 %v1508, %v1502
          %v1821 = vpack.c.b16 %v1509, %v1503
          %v1822 = vpack.c.b16 %v1516, %v1510
          %v1823 = vpack.c.b16 %v1517, %v1511
          %v1824 = vpack.c.b16 %v1518, %v1512
          %v1825 = vpack.c.b16 %v1519, %v1513
          %v1826 = vpack.c.b16 %v1520, %v1514
          %v1827 = vpack.c.b16 %v1521, %v1515
          %v1828 = vpack.c.b16 %v1528, %v1522
          %v1829 = vpack.c.b16 %v1529, %v1523
          %v1830 = vpack.c.b16 %v1530, %v1524
          %v1831 = vpack.c.b16 %v1531, %v1525
          %v1832 = vpack.c.b16 %v1532, %v1526
          %v1833 = vpack.c.b16 %v1533, %v1527
          %v1834 = vpack.c.b16 %v1540, %v1534
          %v1835 = vpack.c.b16 %v1541, %v1535
          %v1836 = vpack.c.b16 %v1542, %v1536
          %v1837 = vpack.c.b16 %v1543, %v1537
          %v1838 = vpack.c.b16 %v1544, %v1538
          %v1839 = vpack.c.b16 %v1545, %v1539
          %v1840 = vpack.c.b16 %v1552, %v1546
          %v1841 = vpack.c.b16 %v1553, %v1547
          %v1842 = vpack.c.b16 %v1554, %v1548
          %v1843 = vpack.c.b16 %v1555, %v1549
          %v1844 = vpack.c.b16 %v1556, %v1550
          %v1845 = vpack.c.b16 %v1557, %v1551
          %2134 = vmatprep.subr.bf16.mxu0 %v1559
          %2135 = vmatpush1.bf16.msra.mxu0 %v1558
          %2136 = vmatprep.subr.bf16.mxu0 %v1565
          %2137 = vmatpush1.bf16.msra.mxu0 %v1564
          %2138 = vmatprep.subr.bf16.mxu0 %v1571
          %2139 = vmatpush1.bf16.msra.mxu0 %v1570
          %2140 = vmatprep.subr.bf16.mxu0 %v1577
          %2141 = vmatpush1.bf16.msra.mxu0 %v1576
          %2142 = vmatprep.subr.bf16.mxu0 %v1583
          %2143 = vmatpush1.bf16.msra.mxu0 %v1582
          %2144 = vmatprep.subr.bf16.mxu0 %v1589
          %2145 = vmatpush1.bf16.msra.mxu0 %v1588
          %2146 = vmatprep.subr.bf16.mxu0 %v1595
          %2147 = vmatpush1.bf16.msra.mxu0 %v1594
          %2148 = vmatprep.subr.bf16.mxu0 %v1601
          %2149 = vmatpush1.bf16.msra.mxu0 %v1600
          %2150 = vmatprep.subr.bf16.mxu0 %v1607
          %2151 = vmatpush1.bf16.msra.mxu0 %v1606
          %2152 = vmatprep.subr.bf16.mxu0 %v1613
          %2153 = vmatpush1.bf16.msra.mxu0 %v1612
          %2154 = vmatprep.subr.bf16.mxu0 %v1619
          %2155 = vmatpush1.bf16.msra.mxu0 %v1618
          %2156 = vmatprep.subr.bf16.mxu0 %v1625
          %2157 = vmatpush1.bf16.msra.mxu0 %v1624
          %2158 = vmatprep.subr.bf16.mxu0 %v1631
          %2159 = vmatpush1.bf16.msra.mxu0 %v1630
          %2160 = vmatprep.subr.bf16.mxu0 %v1637
          %2161 = vmatpush1.bf16.msra.mxu0 %v1636
          %2162 = vmatprep.subr.bf16.mxu0 %v1643
          %2163 = vmatpush1.bf16.msra.mxu0 %v1642
          %2164 = vmatprep.subr.bf16.mxu0 %v1649
          %2165 = vmatpush1.bf16.msra.mxu0 %v1648
          %2166 = vmatprep.mubr.bf16.mxu0 %v683
          %2167 = vmatmul.mubr.bf16.gmra.mrb[0].mxu0 %v682
          %v2168 = vpop.f32.mrb[0].mxu0
          %v2169 = vadd.f32 %v646, %v2168
          %v2170 = vpop.f32.mrb[0].mxu0
          %v2171 = vadd.f32 %v650, %v2170
          %v2172 = vpop.f32.mrb[0].mxu0
          %v2173 = vpop.f32.mrb[0].mxu0
          %2174 = vdwg.mxu0
          %2175 = vmatprep.subr.bf16.mxu0 %v1655
          %2176 = vmatpush1.bf16.msra.mxu0 %v1654
          %2177 = vmatprep.subr.bf16.mxu0 %v1661
          %2178 = vmatpush1.bf16.msra.mxu0 %v1660
          %2179 = vmatprep.subr.bf16.mxu0 %v1667
          %2180 = vmatpush1.bf16.msra.mxu0 %v1666
          %2181 = vmatprep.subr.bf16.mxu0 %v1673
          %2182 = vmatpush1.bf16.msra.mxu0 %v1672
          %2183 = vmatprep.subr.bf16.mxu0 %v1679
          %2184 = vmatpush1.bf16.msra.mxu0 %v1678
          %2185 = vmatprep.subr.bf16.mxu0 %v1685
          %2186 = vmatpush1.bf16.msra.mxu0 %v1684
          %2187 = vmatprep.subr.bf16.mxu0 %v1691
          %2188 = vmatpush1.bf16.msra.mxu0 %v1690
          %2189 = vmatprep.subr.bf16.mxu0 %v1697
          %2190 = vmatpush1.bf16.msra.mxu0 %v1696
          %2191 = vmatprep.subr.bf16.mxu0 %v1703
          %2192 = vmatpush1.bf16.msra.mxu0 %v1702
          %2193 = vmatprep.subr.bf16.mxu0 %v1709
          %2194 = vmatpush1.bf16.msra.mxu0 %v1708
          %2195 = vmatprep.subr.bf16.mxu0 %v1715
          %2196 = vmatpush1.bf16.msra.mxu0 %v1714
          %2197 = vmatprep.subr.bf16.mxu0 %v1721
          %2198 = vmatpush1.bf16.msra.mxu0 %v1720
          %2199 = vmatprep.subr.bf16.mxu0 %v1727
          %2200 = vmatpush1.bf16.msra.mxu0 %v1726
          %2201 = vmatprep.subr.bf16.mxu0 %v1733
          %2202 = vmatpush1.bf16.msra.mxu0 %v1732
          %2203 = vmatprep.subr.bf16.mxu0 %v1739
          %2204 = vmatpush1.bf16.msra.mxu0 %v1738
          %2205 = vmatprep.subr.bf16.mxu0 %v1745
          %2206 = vmatpush1.bf16.msra.mxu0 %v1744
          %2207 = vmatprep.mubr.bf16.mxu0 %v685
          %2208 = vmatmul.mubr.bf16.gmra.mrb[0].mxu0 %v684
          %v2209 = vpop.f32.mrb[0].mxu0
          %v2210 = vadd.f32 %v2169, %v2209
          %v2211 = vpop.f32.mrb[0].mxu0
          %v2212 = vadd.f32 %v2171, %v2211
          %v2213 = vpop.f32.mrb[0].mxu0
          %v2214 = vpop.f32.mrb[0].mxu0
          %2215 = vdwg.mxu0
          %2216 = vmatprep.subr.bf16.mxu0 %v1751
          %2217 = vmatpush1.bf16.msra.mxu0 %v1750
          %2218 = vmatprep.subr.bf16.mxu0 %v1757
          %2219 = vmatpush1.bf16.msra.mxu0 %v1756
          %2220 = vmatprep.subr.bf16.mxu0 %v1763
          %2221 = vmatpush1.bf16.msra.mxu0 %v1762
          %2222 = vmatprep.subr.bf16.mxu0 %v1769
          %2223 = vmatpush1.bf16.msra.mxu0 %v1768
          %2224 = vmatprep.subr.bf16.mxu0 %v1775
          %2225 = vmatpush1.bf16.msra.mxu0 %v1774
          %2226 = vmatprep.subr.bf16.mxu0 %v1781
          %2227 = vmatpush1.bf16.msra.mxu0 %v1780
          %2228 = vmatprep.subr.bf16.mxu0 %v1787
          %2229 = vmatpush1.bf16.msra.mxu0 %v1786
          %2230 = vmatprep.subr.bf16.mxu0 %v1793
          %2231 = vmatpush1.bf16.msra.mxu0 %v1792
          %2232 = vmatprep.subr.bf16.mxu0 %v1799
          %2233 = vmatpush1.bf16.msra.mxu0 %v1798
          %2234 = vmatprep.subr.bf16.mxu0 %v1805
          %2235 = vmatpush1.bf16.msra.mxu0 %v1804
          %2236 = vmatprep.subr.bf16.mxu0 %v1811
          %2237 = vmatpush1.bf16.msra.mxu0 %v1810
          %2238 = vmatprep.subr.bf16.mxu0 %v1817
          %2239 = vmatpush1.bf16.msra.mxu0 %v1816
          %2240 = vmatprep.subr.bf16.mxu0 %v1823
          %2241 = vmatpush1.bf16.msra.mxu0 %v1822
          %2242 = vmatprep.subr.bf16.mxu0 %v1829
          %2243 = vmatpush1.bf16.msra.mxu0 %v1828
          %2244 = vmatprep.subr.bf16.mxu0 %v1835
          %2245 = vmatpush1.bf16.msra.mxu0 %v1834
          %2246 = vmatprep.subr.bf16.mxu0 %v1841
          %2247 = vmatpush1.bf16.msra.mxu0 %v1840
          %2248 = vmatprep.mubr.bf16.mxu0 %v687
          %2249 = vmatmul.mubr.bf16.gmra.mrb[0].mxu0 %v686
          %v2250 = vpop.f32.mrb[0].mxu0
          %v2251 = vadd.f32 %v2210, %v2250
          %v2252 = vpop.f32.mrb[0].mxu0
          %v2253 = vadd.f32 %v2212, %v2252
          %v2254 = vpop.f32.mrb[0].mxu0
          %v2255 = vpop.f32.mrb[0].mxu0
          %2256 = vdwg.mxu0
          %2257 = vmatprep.subr.bf16.mxu0 %v1561
          %2258 = vmatpush1.bf16.msra.mxu0 %v1560
          %2259 = vmatprep.subr.bf16.mxu0 %v1567
          %2260 = vmatpush1.bf16.msra.mxu0 %v1566
          %2261 = vmatprep.subr.bf16.mxu0 %v1573
          %2262 = vmatpush1.bf16.msra.mxu0 %v1572
          %2263 = vmatprep.subr.bf16.mxu0 %v1579
          %2264 = vmatpush1.bf16.msra.mxu0 %v1578
          %2265 = vmatprep.subr.bf16.mxu0 %v1585
          %2266 = vmatpush1.bf16.msra.mxu0 %v1584
          %2267 = vmatprep.subr.bf16.mxu0 %v1591
          %2268 = vmatpush1.bf16.msra.mxu0 %v1590
          %2269 = vmatprep.subr.bf16.mxu0 %v1597
          %2270 = vmatpush1.bf16.msra.mxu0 %v1596
          %2271 = vmatprep.subr.bf16.mxu0 %v1603
          %2272 = vmatpush1.bf16.msra.mxu0 %v1602
          %2273 = vmatprep.subr.bf16.mxu0 %v1609
          %2274 = vmatpush1.bf16.msra.mxu0 %v1608
          %2275 = vmatprep.subr.bf16.mxu0 %v1615
          %2276 = vmatpush1.bf16.msra.mxu0 %v1614
          %2277 = vmatprep.subr.bf16.mxu0 %v1621
          %2278 = vmatpush1.bf16.msra.mxu0 %v1620
          %2279 = vmatprep.subr.bf16.mxu0 %v1627
          %2280 = vmatpush1.bf16.msra.mxu0 %v1626
          %2281 = vmatprep.subr.bf16.mxu0 %v1633
          %2282 = vmatpush1.bf16.msra.mxu0 %v1632
          %2283 = vmatprep.subr.bf16.mxu0 %v1639
          %2284 = vmatpush1.bf16.msra.mxu0 %v1638
          %2285 = vmatprep.subr.bf16.mxu0 %v1645
          %2286 = vmatpush1.bf16.msra.mxu0 %v1644
          %2287 = vmatprep.subr.bf16.mxu0 %v1651
          %2288 = vmatpush1.bf16.msra.mxu0 %v1650
          %2289 = vmatprep.mubr.bf16.mxu0 %v683
          %2290 = vmatmul.mubr.bf16.gmra.mrb[0].mxu0 %v682
          %v2291 = vpop.f32.mrb[0].mxu0
          %v2292 = vadd.f32 %v654, %v2291
          %v2293 = vpop.f32.mrb[0].mxu0
          %v2294 = vadd.f32 %v658, %v2293
          %v2295 = vpop.f32.mrb[0].mxu0
          %v2296 = vpop.f32.mrb[0].mxu0
          %2297 = vdwg.mxu0
          %2298 = vmatprep.subr.bf16.mxu0 %v1657
          %2299 = vmatpush1.bf16.msra.mxu0 %v1656
          %2300 = vmatprep.subr.bf16.mxu0 %v1663
          %2301 = vmatpush1.bf16.msra.mxu0 %v1662
          %2302 = vmatprep.subr.bf16.mxu0 %v1669
          %2303 = vmatpush1.bf16.msra.mxu0 %v1668
          %2304 = vmatprep.subr.bf16.mxu0 %v1675
          %2305 = vmatpush1.bf16.msra.mxu0 %v1674
          %2306 = vmatprep.subr.bf16.mxu0 %v1681
          %2307 = vmatpush1.bf16.msra.mxu0 %v1680
          %2308 = vmatprep.subr.bf16.mxu0 %v1687
          %2309 = vmatpush1.bf16.msra.mxu0 %v1686
          %2310 = vmatprep.subr.bf16.mxu0 %v1693
          %2311 = vmatpush1.bf16.msra.mxu0 %v1692
          %2312 = vmatprep.subr.bf16.mxu0 %v1699
          %2313 = vmatpush1.bf16.msra.mxu0 %v1698
          %2314 = vmatprep.subr.bf16.mxu0 %v1705
          %2315 = vmatpush1.bf16.msra.mxu0 %v1704
          %2316 = vmatprep.subr.bf16.mxu0 %v1711
          %2317 = vmatpush1.bf16.msra.mxu0 %v1710
          %2318 = vmatprep.subr.bf16.mxu0 %v1717
          %2319 = vmatpush1.bf16.msra.mxu0 %v1716
          %2320 = vmatprep.subr.bf16.mxu0 %v1723
          %2321 = vmatpush1.bf16.msra.mxu0 %v1722
          %2322 = vmatprep.subr.bf16.mxu0 %v1729
          %2323 = vmatpush1.bf16.msra.mxu0 %v1728
          %2324 = vmatprep.subr.bf16.mxu0 %v1735
          %2325 = vmatpush1.bf16.msra.mxu0 %v1734
          %2326 = vmatprep.subr.bf16.mxu0 %v1741
          %2327 = vmatpush1.bf16.msra.mxu0 %v1740
          %2328 = vmatprep.subr.bf16.mxu0 %v1747
          %2329 = vmatpush1.bf16.msra.mxu0 %v1746
          %2330 = vmatprep.mubr.bf16.mxu0 %v685
          %2331 = vmatmul.mubr.bf16.gmra.mrb[0].mxu0 %v684
          %v2332 = vpop.f32.mrb[0].mxu0
          %v2333 = vadd.f32 %v2292, %v2332
          %v2334 = vpop.f32.mrb[0].mxu0
          %v2335 = vadd.f32 %v2294, %v2334
          %v2336 = vpop.f32.mrb[0].mxu0
          %v2337 = vpop.f32.mrb[0].mxu0
          %2338 = vdwg.mxu0
          %2339 = vmatprep.subr.bf16.mxu0 %v1753
          %2340 = vmatpush1.bf16.msra.mxu0 %v1752
          %2341 = vmatprep.subr.bf16.mxu0 %v1759
          %2342 = vmatpush1.bf16.msra.mxu0 %v1758
          %2343 = vmatprep.subr.bf16.mxu0 %v1765
          %2344 = vmatpush1.bf16.msra.mxu0 %v1764
          %2345 = vmatprep.subr.bf16.mxu0 %v1771
          %2346 = vmatpush1.bf16.msra.mxu0 %v1770
          %2347 = vmatprep.subr.bf16.mxu0 %v1777
          %2348 = vmatpush1.bf16.msra.mxu0 %v1776
          %2349 = vmatprep.subr.bf16.mxu0 %v1783
          %2350 = vmatpush1.bf16.msra.mxu0 %v1782
          %2351 = vmatprep.subr.bf16.mxu0 %v1789
          %2352 = vmatpush1.bf16.msra.mxu0 %v1788
          %2353 = vmatprep.subr.bf16.mxu0 %v1795
          %2354 = vmatpush1.bf16.msra.mxu0 %v1794
          %2355 = vmatprep.subr.bf16.mxu0 %v1801
          %2356 = vmatpush1.bf16.msra.mxu0 %v1800
          %2357 = vmatprep.subr.bf16.mxu0 %v1807
          %2358 = vmatpush1.bf16.msra.mxu0 %v1806
          %2359 = vmatprep.subr.bf16.mxu0 %v1813
          %2360 = vmatpush1.bf16.msra.mxu0 %v1812
          %2361 = vmatprep.subr.bf16.mxu0 %v1819
          %2362 = vmatpush1.bf16.msra.mxu0 %v1818
          %2363 = vmatprep.subr.bf16.mxu0 %v1825
          %2364 = vmatpush1.bf16.msra.mxu0 %v1824
          %2365 = vmatprep.subr.bf16.mxu0 %v1831
          %2366 = vmatpush1.bf16.msra.mxu0 %v1830
          %2367 = vmatprep.subr.bf16.mxu0 %v1837
          %2368 = vmatpush1.bf16.msra.mxu0 %v1836
          %2369 = vmatprep.subr.bf16.mxu0 %v1843
          %2370 = vmatpush1.bf16.msra.mxu0 %v1842
          %2371 = vmatprep.mubr.bf16.mxu0 %v687
          %2372 = vmatmul.mubr.bf16.gmra.mrb[0].mxu0 %v686
          %v2373 = vpop.f32.mrb[0].mxu0
          %v2374 = vadd.f32 %v2333, %v2373
          %v2375 = vpop.f32.mrb[0].mxu0
          %v2376 = vadd.f32 %v2335, %v2375
          %v2377 = vpop.f32.mrb[0].mxu0
          %v2378 = vpop.f32.mrb[0].mxu0
          %2379 = vdwg.mxu0
          %2380 = vmatprep.subr.bf16.mxu0 %v1563
          %2381 = vmatpush1.bf16.msra.mxu0 %v1562
          %2382 = vmatprep.subr.bf16.mxu0 %v1569
          %2383 = vmatpush1.bf16.msra.mxu0 %v1568
          %2384 = vmatprep.subr.bf16.mxu0 %v1575
          %2385 = vmatpush1.bf16.msra.mxu0 %v1574
          %2386 = vmatprep.subr.bf16.mxu0 %v1581
          %2387 = vmatpush1.bf16.msra.mxu0 %v1580
          %2388 = vmatprep.subr.bf16.mxu0 %v1587
          %2389 = vmatpush1.bf16.msra.mxu0 %v1586
          %2390 = vmatprep.subr.bf16.mxu0 %v1593
          %2391 = vmatpush1.bf16.msra.mxu0 %v1592
          %2392 = vmatprep.subr.bf16.mxu0 %v1599
          %2393 = vmatpush1.bf16.msra.mxu0 %v1598
          %2394 = vmatprep.subr.bf16.mxu0 %v1605
          %2395 = vmatpush1.bf16.msra.mxu0 %v1604
          %2396 = vmatprep.subr.bf16.mxu0 %v1611
          %2397 = vmatpush1.bf16.msra.mxu0 %v1610
          %2398 = vmatprep.subr.bf16.mxu0 %v1617
          %2399 = vmatpush1.bf16.msra.mxu0 %v1616
          %2400 = vmatprep.subr.bf16.mxu0 %v1623
          %2401 = vmatpush1.bf16.msra.mxu0 %v1622
          %2402 = vmatprep.subr.bf16.mxu0 %v1629
          %2403 = vmatpush1.bf16.msra.mxu0 %v1628
          %2404 = vmatprep.subr.bf16.mxu0 %v1635
          %2405 = vmatpush1.bf16.msra.mxu0 %v1634
          %2406 = vmatprep.subr.bf16.mxu0 %v1641
          %2407 = vmatpush1.bf16.msra.mxu0 %v1640
          %2408 = vmatprep.subr.bf16.mxu0 %v1647
          %2409 = vmatpush1.bf16.msra.mxu0 %v1646
          %2410 = vmatprep.subr.bf16.mxu0 %v1653
          %2411 = vmatpush1.bf16.msra.mxu0 %v1652
          %2412 = vmatprep.mubr.bf16.mxu0 %v683
          %2413 = vmatmul.mubr.bf16.gmra.mrb[0].mxu0 %v682
          %v2414 = vpop.f32.mrb[0].mxu0
          %v2415 = vadd.f32 %v662, %v2414
          %v2416 = vpop.f32.mrb[0].mxu0
          %v2417 = vadd.f32 %v666, %v2416
          %v2418 = vpop.f32.mrb[0].mxu0
          %v2419 = vpop.f32.mrb[0].mxu0
          %2420 = vdwg.mxu0
          %2421 = vmatprep.subr.bf16.mxu0 %v1659
          %2422 = vmatpush1.bf16.msra.mxu0 %v1658
          %2423 = vmatprep.subr.bf16.mxu0 %v1665
          %2424 = vmatpush1.bf16.msra.mxu0 %v1664
          %2425 = vmatprep.subr.bf16.mxu0 %v1671
          %2426 = vmatpush1.bf16.msra.mxu0 %v1670
          %2427 = vmatprep.subr.bf16.mxu0 %v1677
          %2428 = vmatpush1.bf16.msra.mxu0 %v1676
          %2429 = vmatprep.subr.bf16.mxu0 %v1683
          %2430 = vmatpush1.bf16.msra.mxu0 %v1682
          %2431 = vmatprep.subr.bf16.mxu0 %v1689
          %2432 = vmatpush1.bf16.msra.mxu0 %v1688
          %2433 = vmatprep.subr.bf16.mxu0 %v1695
          %2434 = vmatpush1.bf16.msra.mxu0 %v1694
          %2435 = vmatprep.subr.bf16.mxu0 %v1701
          %2436 = vmatpush1.bf16.msra.mxu0 %v1700
          %2437 = vmatprep.subr.bf16.mxu0 %v1707
          %2438 = vmatpush1.bf16.msra.mxu0 %v1706
          %2439 = vmatprep.subr.bf16.mxu0 %v1713
          %2440 = vmatpush1.bf16.msra.mxu0 %v1712
          %2441 = vmatprep.subr.bf16.mxu0 %v1719
          %2442 = vmatpush1.bf16.msra.mxu0 %v1718
          %2443 = vmatprep.subr.bf16.mxu0 %v1725
          %2444 = vmatpush1.bf16.msra.mxu0 %v1724
          %2445 = vmatprep.subr.bf16.mxu0 %v1731
          %2446 = vmatpush1.bf16.msra.mxu0 %v1730
          %2447 = vmatprep.subr.bf16.mxu0 %v1737
          %2448 = vmatpush1.bf16.msra.mxu0 %v1736
          %2449 = vmatprep.subr.bf16.mxu0 %v1743
          %2450 = vmatpush1.bf16.msra.mxu0 %v1742
          %2451 = vmatprep.subr.bf16.mxu0 %v1749
          %2452 = vmatpush1.bf16.msra.mxu0 %v1748
          %2453 = vmatprep.mubr.bf16.mxu0 %v685
          %2454 = vmatmul.mubr.bf16.gmra.mrb[0].mxu0 %v684
          %v2455 = vpop.f32.mrb[0].mxu0
          %v2456 = vadd.f32 %v2415, %v2455
          %v2457 = vpop.f32.mrb[0].mxu0
          %v2458 = vadd.f32 %v2417, %v2457
          %v2459 = vpop.f32.mrb[0].mxu0
          %v2460 = vpop.f32.mrb[0].mxu0
          %2461 = vdwg.mxu0
          %2462 = vmatprep.subr.bf16.mxu0 %v1755
          %2463 = vmatpush1.bf16.msra.mxu0 %v1754
          %2464 = vmatprep.subr.bf16.mxu0 %v1761
          %2465 = vmatpush1.bf16.msra.mxu0 %v1760
          %2466 = vmatprep.subr.bf16.mxu0 %v1767
          %2467 = vmatpush1.bf16.msra.mxu0 %v1766
          %2468 = vmatprep.subr.bf16.mxu0 %v1773
          %2469 = vmatpush1.bf16.msra.mxu0 %v1772
          %2470 = vmatprep.subr.bf16.mxu0 %v1779
          %2471 = vmatpush1.bf16.msra.mxu0 %v1778
          %2472 = vmatprep.subr.bf16.mxu0 %v1785
          %2473 = vmatpush1.bf16.msra.mxu0 %v1784
          %2474 = vmatprep.subr.bf16.mxu0 %v1791
          %2475 = vmatpush1.bf16.msra.mxu0 %v1790
          %2476 = vmatprep.subr.bf16.mxu0 %v1797
          %2477 = vmatpush1.bf16.msra.mxu0 %v1796
          %2478 = vmatprep.subr.bf16.mxu0 %v1803
          %2479 = vmatpush1.bf16.msra.mxu0 %v1802
          %2480 = vmatprep.subr.bf16.mxu0 %v1809
          %2481 = vmatpush1.bf16.msra.mxu0 %v1808
          %2482 = vmatprep.subr.bf16.mxu0 %v1815
          %2483 = vmatpush1.bf16.msra.mxu0 %v1814
          %2484 = vmatprep.subr.bf16.mxu0 %v1821
          %2485 = vmatpush1.bf16.msra.mxu0 %v1820
          %2486 = vmatprep.subr.bf16.mxu0 %v1827
          %2487 = vmatpush1.bf16.msra.mxu0 %v1826
          %2488 = vmatprep.subr.bf16.mxu0 %v1833
          %2489 = vmatpush1.bf16.msra.mxu0 %v1832
          %2490 = vmatprep.subr.bf16.mxu0 %v1839
          %2491 = vmatpush1.bf16.msra.mxu0 %v1838
          %2492 = vmatprep.subr.bf16.mxu0 %v1845
          %2493 = vmatpush1.bf16.msra.mxu0 %v1844
          %2494 = vmatprep.mubr.bf16.mxu0 %v687
          %2495 = vmatmul.mubr.bf16.gmra.mrb[0].mxu0 %v686
          %v2496 = vpop.f32.mrb[0].mxu0
          %v2497 = vadd.f32 %v2456, %v2496
          %v2498 = vpop.f32.mrb[0].mxu0
          %v2499 = vadd.f32 %v2458, %v2498
          %v2500 = vpop.f32.mrb[0].mxu0
          %v2501 = vpop.f32.mrb[0].mxu0
          %2502 = vdwg.mxu0
          %v2503 = vpack.c.bf16 %v2251, %v2251
          %v2504 = vpack.c.bf16 %v2253, %v2253
          %v2505 = vpack.c.bf16 %v2374, %v2374
          %v2506 = vpack.c.bf16 %v2376, %v2376
          %v2507 = vpack.c.bf16 %v2497, %v2497
          %v2508 = vpack.c.bf16 %v2499, %v2499
          %v2515 = vunpack.c.l.b16 %v2503
          %v2516 = vunpack.c.l.b16 %v2504
          %v2517 = vunpack.c.l.b16 %v2505
          %v2518 = vunpack.c.l.b16 %v2506
          %v2519 = vunpack.c.l.b16 %v2507
          %v2520 = vunpack.c.l.b16 %v2508
          %v2521 = vpack.c.b16 %v2516, %v2515
          %v2522 = vpack.c.b16 %v2518, %v2517
          %v2523 = vpack.c.b16 %v2520, %v2519
          %2527 = vst [vmem:[#allocation2] sm:$0xff] %v2521
          %2528 = vst [vmem:[#allocation2 + $0x8] sm:$0xff] %v2522
          %2529 = vst [vmem:[#allocation2 + $0x10] sm:$0xff] %v2523
          %v2530 = vld [vmem:[%s3] sm:$0xff]
          %v2531 = vld [vmem:[%s3 + $0x8] sm:$0xff]
          %v2532 = vld [vmem:[%s3 + $0x10] sm:$0xff]
          %v2533 = vld [vmem:[%s3 + $0x18] sm:$0xff]
          %v2534 = vld [vmem:[%s3 + $0x20] sm:$0xff]
          %v2535 = vld [vmem:[%s3 + $0x28] sm:$0xff]
          %v2536 = vld [vmem:[%s3 + $0x30] sm:$0xff]
          %v2537 = vld [vmem:[%s3 + $0x38] sm:$0xff]
          %v2538 = vld [vmem:[%s3 + $0x40] sm:$0xff]
          %v2539 = vld [vmem:[%s3 + $0x48] sm:$0xff]
          %v2540 = vld [vmem:[%s3 + $0x50] sm:$0xff]
          %v2541 = vld [vmem:[%s3 + $0x58] sm:$0xff]
          %v2542 = vld [vmem:[%s3 + $0x60] sm:$0xff]
          %v2543 = vld [vmem:[%s3 + $0x68] sm:$0xff]
          %v2544 = vld [vmem:[%s3 + $0x70] sm:$0xff]
          %v2545 = vld [vmem:[%s3 + $0x78] sm:$0xff]
          %v2546 = vld [vmem:[%s3 + $0x80] sm:$0xff]
          %v2547 = vld [vmem:[%s3 + $0x88] sm:$0xff]
          %v2548 = vld [vmem:[%s3 + $0x90] sm:$0xff]
          %v2549 = vld [vmem:[%s3 + $0x98] sm:$0xff]
          %v2550 = vld [vmem:[%s3 + $0xa0] sm:$0xff]
          %v2551 = vld [vmem:[%s3 + $0xa8] sm:$0xff]
          %v2552 = vld [vmem:[%s3 + $0xb0] sm:$0xff]
          %v2553 = vld [vmem:[%s3 + $0xb8] sm:$0xff]
          %v2554 = vld [vmem:[%s3 + $0xc0] sm:$0xff]
          %v2555 = vld [vmem:[%s3 + $0xc8] sm:$0xff]
          %v2556 = vld [vmem:[%s3 + $0xd0] sm:$0xff]
          %v2557 = vld [vmem:[%s3 + $0xd8] sm:$0xff]
          %v2558 = vld [vmem:[%s3 + $0xe0] sm:$0xff]
          %v2559 = vld [vmem:[%s3 + $0xe8] sm:$0xff]
          %v2560 = vld [vmem:[%s3 + $0xf0] sm:$0xff]
          %v2561 = vld [vmem:[%s3 + $0xf8] sm:$0xff]
          %v2562 = vld [vmem:[%s3 + $0x100] sm:$0xff]
          %v2563 = vld [vmem:[%s3 + $0x108] sm:$0xff]
          %v2564 = vld [vmem:[%s3 + $0x110] sm:$0xff]
          %v2565 = vld [vmem:[%s3 + $0x118] sm:$0xff]
          %v2566 = vld [vmem:[%s3 + $0x120] sm:$0xff]
          %v2567 = vld [vmem:[%s3 + $0x128] sm:$0xff]
          %v2568 = vld [vmem:[%s3 + $0x130] sm:$0xff]
          %v2569 = vld [vmem:[%s3 + $0x138] sm:$0xff]
          %v2570 = vld [vmem:[%s3 + $0x140] sm:$0xff]
          %v2571 = vld [vmem:[%s3 + $0x148] sm:$0xff]
          %v2572 = vld [vmem:[%s3 + $0x150] sm:$0xff]
          %v2573 = vld [vmem:[%s3 + $0x158] sm:$0xff]
          %v2574 = vld [vmem:[%s3 + $0x160] sm:$0xff]
          %v2575 = vld [vmem:[%s3 + $0x168] sm:$0xff]
          %v2576 = vld [vmem:[%s3 + $0x170] sm:$0xff]
          %v2577 = vld [vmem:[%s3 + $0x178] sm:$0xff]
          %v2578 = vld [vmem:[%s3 + $0x180] sm:$0xff]
          %v2579 = vld [vmem:[%s3 + $0x188] sm:$0xff]
          %v2580 = vld [vmem:[%s3 + $0x190] sm:$0xff]
          %v2581 = vld [vmem:[%s3 + $0x198] sm:$0xff]
          %v2582 = vld [vmem:[%s3 + $0x1a0] sm:$0xff]
          %v2583 = vld [vmem:[%s3 + $0x1a8] sm:$0xff]
          %v2584 = vld [vmem:[%s3 + $0x1b0] sm:$0xff]
          %v2585 = vld [vmem:[%s3 + $0x1b8] sm:$0xff]
          %v2586 = vld [vmem:[%s3 + $0x1c0] sm:$0xff]
          %v2587 = vld [vmem:[%s3 + $0x1c8] sm:$0xff]
          %v2588 = vld [vmem:[%s3 + $0x1d0] sm:$0xff]
          %v2589 = vld [vmem:[%s3 + $0x1d8] sm:$0xff]
          %v2590 = vld [vmem:[%s3 + $0x1e0] sm:$0xff]
          %v2591 = vld [vmem:[%s3 + $0x1e8] sm:$0xff]
          %v2592 = vld [vmem:[%s3 + $0x1f0] sm:$0xff]
          %v2593 = vld [vmem:[%s3 + $0x1f8] sm:$0xff]
          %v2594 = vld [vmem:[%s3 + $0x200] sm:$0xff]
          %v2595 = vld [vmem:[%s3 + $0x208] sm:$0xff]
          %v2596 = vld [vmem:[%s3 + $0x210] sm:$0xff]
          %v2597 = vld [vmem:[%s3 + $0x218] sm:$0xff]
          %v2598 = vld [vmem:[%s3 + $0x220] sm:$0xff]
          %v2599 = vld [vmem:[%s3 + $0x228] sm:$0xff]
          %v2600 = vld [vmem:[%s3 + $0x230] sm:$0xff]
          %v2601 = vld [vmem:[%s3 + $0x238] sm:$0xff]
          %v2602 = vld [vmem:[%s3 + $0x240] sm:$0xff]
          %v2603 = vld [vmem:[%s3 + $0x248] sm:$0xff]
          %v2604 = vld [vmem:[%s3 + $0x250] sm:$0xff]
          %v2605 = vld [vmem:[%s3 + $0x258] sm:$0xff]
          %v2606 = vld [vmem:[%s3 + $0x260] sm:$0xff]
          %v2607 = vld [vmem:[%s3 + $0x268] sm:$0xff]
          %v2608 = vld [vmem:[%s3 + $0x270] sm:$0xff]
          %v2609 = vld [vmem:[%s3 + $0x278] sm:$0xff]
          %v2610 = vld [vmem:[%s3 + $0x280] sm:$0xff]
          %v2611 = vld [vmem:[%s3 + $0x288] sm:$0xff]
          %v2612 = vld [vmem:[%s3 + $0x290] sm:$0xff]
          %v2613 = vld [vmem:[%s3 + $0x298] sm:$0xff]
          %v2614 = vld [vmem:[%s3 + $0x2a0] sm:$0xff]
          %v2615 = vld [vmem:[%s3 + $0x2a8] sm:$0xff]
          %v2616 = vld [vmem:[%s3 + $0x2b0] sm:$0xff]
          %v2617 = vld [vmem:[%s3 + $0x2b8] sm:$0xff]
          %v2618 = vld [vmem:[%s3 + $0x2c0] sm:$0xff]
          %v2619 = vld [vmem:[%s3 + $0x2c8] sm:$0xff]
          %v2620 = vld [vmem:[%s3 + $0x2d0] sm:$0xff]
          %v2621 = vld [vmem:[%s3 + $0x2d8] sm:$0xff]
          %v2622 = vld [vmem:[%s3 + $0x2e0] sm:$0xff]
          %v2623 = vld [vmem:[%s3 + $0x2e8] sm:$0xff]
          %v2624 = vld [vmem:[%s3 + $0x2f0] sm:$0xff]
          %v2625 = vld [vmem:[%s3 + $0x2f8] sm:$0xff]
          %v2626 = vld [vmem:[%s3 + $0x300] sm:$0xff]
          %v2627 = vld [vmem:[%s3 + $0x308] sm:$0xff]
          %v2628 = vld [vmem:[%s3 + $0x310] sm:$0xff]
          %v2629 = vld [vmem:[%s3 + $0x318] sm:$0xff]
          %v2630 = vld [vmem:[%s3 + $0x320] sm:$0xff]
          %v2631 = vld [vmem:[%s3 + $0x328] sm:$0xff]
          %v2632 = vld [vmem:[%s3 + $0x330] sm:$0xff]
          %v2633 = vld [vmem:[%s3 + $0x338] sm:$0xff]
          %v2634 = vld [vmem:[%s3 + $0x340] sm:$0xff]
          %v2635 = vld [vmem:[%s3 + $0x348] sm:$0xff]
          %v2636 = vld [vmem:[%s3 + $0x350] sm:$0xff]
          %v2637 = vld [vmem:[%s3 + $0x358] sm:$0xff]
          %v2638 = vld [vmem:[%s3 + $0x360] sm:$0xff]
          %v2639 = vld [vmem:[%s3 + $0x368] sm:$0xff]
          %v2640 = vld [vmem:[%s3 + $0x370] sm:$0xff]
          %v2641 = vld [vmem:[%s3 + $0x378] sm:$0xff]
          %v2642 = vld [vmem:[%s3 + $0x380] sm:$0xff]
          %v2643 = vld [vmem:[%s3 + $0x388] sm:$0xff]
          %v2644 = vld [vmem:[%s3 + $0x390] sm:$0xff]
          %v2645 = vld [vmem:[%s3 + $0x398] sm:$0xff]
          %v2646 = vld [vmem:[%s3 + $0x3a0] sm:$0xff]
          %v2647 = vld [vmem:[%s3 + $0x3a8] sm:$0xff]
          %v2648 = vld [vmem:[%s3 + $0x3b0] sm:$0xff]
          %v2649 = vld [vmem:[%s3 + $0x3b8] sm:$0xff]
          %v2650 = vld [vmem:[%s3 + $0x3c0] sm:$0xff]
          %v2651 = vld [vmem:[%s3 + $0x3c8] sm:$0xff]
          %v2652 = vld [vmem:[%s3 + $0x3d0] sm:$0xff]
          %v2653 = vld [vmem:[%s3 + $0x3d8] sm:$0xff]
          %v2654 = vld [vmem:[%s3 + $0x3e0] sm:$0xff]
          %v2655 = vld [vmem:[%s3 + $0x3e8] sm:$0xff]
          %v2656 = vld [vmem:[%s3 + $0x3f0] sm:$0xff]
          %v2657 = vld [vmem:[%s3 + $0x3f8] sm:$0xff]
          %v2658 = vld [vmem:[%s3 + $0x400] sm:$0xff]
          %v2659 = vld [vmem:[%s3 + $0x408] sm:$0xff]
          %v2660 = vld [vmem:[%s3 + $0x410] sm:$0xff]
          %v2661 = vld [vmem:[%s3 + $0x418] sm:$0xff]
          %v2662 = vld [vmem:[%s3 + $0x420] sm:$0xff]
          %v2663 = vld [vmem:[%s3 + $0x428] sm:$0xff]
          %v2664 = vld [vmem:[%s3 + $0x430] sm:$0xff]
          %v2665 = vld [vmem:[%s3 + $0x438] sm:$0xff]
          %v2666 = vld [vmem:[%s3 + $0x440] sm:$0xff]
          %v2667 = vld [vmem:[%s3 + $0x448] sm:$0xff]
          %v2668 = vld [vmem:[%s3 + $0x450] sm:$0xff]
          %v2669 = vld [vmem:[%s3 + $0x458] sm:$0xff]
          %v2670 = vld [vmem:[%s3 + $0x460] sm:$0xff]
          %v2671 = vld [vmem:[%s3 + $0x468] sm:$0xff]
          %v2672 = vld [vmem:[%s3 + $0x470] sm:$0xff]
          %v2673 = vld [vmem:[%s3 + $0x478] sm:$0xff]
          %v2674 = vld [vmem:[%s3 + $0x480] sm:$0xff]
          %v2675 = vld [vmem:[%s3 + $0x488] sm:$0xff]
          %v2676 = vld [vmem:[%s3 + $0x490] sm:$0xff]
          %v2677 = vld [vmem:[%s3 + $0x498] sm:$0xff]
          %v2678 = vld [vmem:[%s3 + $0x4a0] sm:$0xff]
          %v2679 = vld [vmem:[%s3 + $0x4a8] sm:$0xff]
          %v2680 = vld [vmem:[%s3 + $0x4b0] sm:$0xff]
          %v2681 = vld [vmem:[%s3 + $0x4b8] sm:$0xff]
          %v2682 = vld [vmem:[%s3 + $0x4c0] sm:$0xff]
          %v2683 = vld [vmem:[%s3 + $0x4c8] sm:$0xff]
          %v2684 = vld [vmem:[%s3 + $0x4d0] sm:$0xff]
          %v2685 = vld [vmem:[%s3 + $0x4d8] sm:$0xff]
          %v2686 = vld [vmem:[%s3 + $0x4e0] sm:$0xff]
          %v2687 = vld [vmem:[%s3 + $0x4e8] sm:$0xff]
          %v2688 = vld [vmem:[%s3 + $0x4f0] sm:$0xff]
          %v2689 = vld [vmem:[%s3 + $0x4f8] sm:$0xff]
          %v2690 = vld [vmem:[%s3 + $0x500] sm:$0xff]
          %v2691 = vld [vmem:[%s3 + $0x508] sm:$0xff]
          %v2692 = vld [vmem:[%s3 + $0x510] sm:$0xff]
          %v2693 = vld [vmem:[%s3 + $0x518] sm:$0xff]
          %v2694 = vld [vmem:[%s3 + $0x520] sm:$0xff]
          %v2695 = vld [vmem:[%s3 + $0x528] sm:$0xff]
          %v2696 = vld [vmem:[%s3 + $0x530] sm:$0xff]
          %v2697 = vld [vmem:[%s3 + $0x538] sm:$0xff]
          %v2698 = vld [vmem:[%s3 + $0x540] sm:$0xff]
          %v2699 = vld [vmem:[%s3 + $0x548] sm:$0xff]
          %v2700 = vld [vmem:[%s3 + $0x550] sm:$0xff]
          %v2701 = vld [vmem:[%s3 + $0x558] sm:$0xff]
          %v2702 = vld [vmem:[%s3 + $0x560] sm:$0xff]
          %v2703 = vld [vmem:[%s3 + $0x568] sm:$0xff]
          %v2704 = vld [vmem:[%s3 + $0x570] sm:$0xff]
          %v2705 = vld [vmem:[%s3 + $0x578] sm:$0xff]
          %v2706 = vld [vmem:[%s3 + $0x580] sm:$0xff]
          %v2707 = vld [vmem:[%s3 + $0x588] sm:$0xff]
          %v2708 = vld [vmem:[%s3 + $0x590] sm:$0xff]
          %v2709 = vld [vmem:[%s3 + $0x598] sm:$0xff]
          %v2710 = vld [vmem:[%s3 + $0x5a0] sm:$0xff]
          %v2711 = vld [vmem:[%s3 + $0x5a8] sm:$0xff]
          %v2712 = vld [vmem:[%s3 + $0x5b0] sm:$0xff]
          %v2713 = vld [vmem:[%s3 + $0x5b8] sm:$0xff]
          %v2714 = vld [vmem:[%s3 + $0x5c0] sm:$0xff]
          %v2715 = vld [vmem:[%s3 + $0x5c8] sm:$0xff]
          %v2716 = vld [vmem:[%s3 + $0x5d0] sm:$0xff]
          %v2717 = vld [vmem:[%s3 + $0x5d8] sm:$0xff]
          %v2718 = vld [vmem:[%s3 + $0x5e0] sm:$0xff]
          %v2719 = vld [vmem:[%s3 + $0x5e8] sm:$0xff]
          %v2720 = vld [vmem:[%s3 + $0x5f0] sm:$0xff]
          %v2721 = vld [vmem:[%s3 + $0x5f8] sm:$0xff]
          %v2722 = vld [vmem:[%s3 + $0x600] sm:$0xff]
          %v2723 = vld [vmem:[%s3 + $0x608] sm:$0xff]
          %v2724 = vld [vmem:[%s3 + $0x610] sm:$0xff]
          %v2725 = vld [vmem:[%s3 + $0x618] sm:$0xff]
          %v2726 = vld [vmem:[%s3 + $0x620] sm:$0xff]
          %v2727 = vld [vmem:[%s3 + $0x628] sm:$0xff]
          %v2728 = vld [vmem:[%s3 + $0x630] sm:$0xff]
          %v2729 = vld [vmem:[%s3 + $0x638] sm:$0xff]
          %v2730 = vld [vmem:[%s3 + $0x640] sm:$0xff]
          %v2731 = vld [vmem:[%s3 + $0x648] sm:$0xff]
          %v2732 = vld [vmem:[%s3 + $0x650] sm:$0xff]
          %v2733 = vld [vmem:[%s3 + $0x658] sm:$0xff]
          %v2734 = vld [vmem:[%s3 + $0x660] sm:$0xff]
          %v2735 = vld [vmem:[%s3 + $0x668] sm:$0xff]
          %v2736 = vld [vmem:[%s3 + $0x670] sm:$0xff]
          %v2737 = vld [vmem:[%s3 + $0x678] sm:$0xff]
          %v2738 = vld [vmem:[%s3 + $0x680] sm:$0xff]
          %v2739 = vld [vmem:[%s3 + $0x688] sm:$0xff]
          %v2740 = vld [vmem:[%s3 + $0x690] sm:$0xff]
          %v2741 = vld [vmem:[%s3 + $0x698] sm:$0xff]
          %v2742 = vld [vmem:[%s3 + $0x6a0] sm:$0xff]
          %v2743 = vld [vmem:[%s3 + $0x6a8] sm:$0xff]
          %v2744 = vld [vmem:[%s3 + $0x6b0] sm:$0xff]
          %v2745 = vld [vmem:[%s3 + $0x6b8] sm:$0xff]
          %v2746 = vld [vmem:[%s3 + $0x6c0] sm:$0xff]
          %v2747 = vld [vmem:[%s3 + $0x6c8] sm:$0xff]
          %v2748 = vld [vmem:[%s3 + $0x6d0] sm:$0xff]
          %v2749 = vld [vmem:[%s3 + $0x6d8] sm:$0xff]
          %v2750 = vld [vmem:[%s3 + $0x6e0] sm:$0xff]
          %v2751 = vld [vmem:[%s3 + $0x6e8] sm:$0xff]
          %v2752 = vld [vmem:[%s3 + $0x6f0] sm:$0xff]
          %v2753 = vld [vmem:[%s3 + $0x6f8] sm:$0xff]
          %v2754 = vld [vmem:[%s3 + $0x700] sm:$0xff]
          %v2755 = vld [vmem:[%s3 + $0x708] sm:$0xff]
          %v2756 = vld [vmem:[%s3 + $0x710] sm:$0xff]
          %v2757 = vld [vmem:[%s3 + $0x718] sm:$0xff]
          %v2758 = vld [vmem:[%s3 + $0x720] sm:$0xff]
          %v2759 = vld [vmem:[%s3 + $0x728] sm:$0xff]
          %v2760 = vld [vmem:[%s3 + $0x730] sm:$0xff]
          %v2761 = vld [vmem:[%s3 + $0x738] sm:$0xff]
          %v2762 = vld [vmem:[%s3 + $0x740] sm:$0xff]
          %v2763 = vld [vmem:[%s3 + $0x748] sm:$0xff]
          %v2764 = vld [vmem:[%s3 + $0x750] sm:$0xff]
          %v2765 = vld [vmem:[%s3 + $0x758] sm:$0xff]
          %v2766 = vld [vmem:[%s3 + $0x760] sm:$0xff]
          %v2767 = vld [vmem:[%s3 + $0x768] sm:$0xff]
          %v2768 = vld [vmem:[%s3 + $0x770] sm:$0xff]
          %v2769 = vld [vmem:[%s3 + $0x778] sm:$0xff]
          %v2770 = vld [vmem:[%s3 + $0x780] sm:$0xff]
          %v2771 = vld [vmem:[%s3 + $0x788] sm:$0xff]
          %v2772 = vld [vmem:[%s3 + $0x790] sm:$0xff]
          %v2773 = vld [vmem:[%s3 + $0x798] sm:$0xff]
          %v2774 = vld [vmem:[%s3 + $0x7a0] sm:$0xff]
          %v2775 = vld [vmem:[%s3 + $0x7a8] sm:$0xff]
          %v2776 = vld [vmem:[%s3 + $0x7b0] sm:$0xff]
          %v2777 = vld [vmem:[%s3 + $0x7b8] sm:$0xff]
          %v2778 = vld [vmem:[%s3 + $0x7c0] sm:$0xff]
          %v2779 = vld [vmem:[%s3 + $0x7c8] sm:$0xff]
          %v2780 = vld [vmem:[%s3 + $0x7d0] sm:$0xff]
          %v2781 = vld [vmem:[%s3 + $0x7d8] sm:$0xff]
          %v2782 = vld [vmem:[%s3 + $0x7e0] sm:$0xff]
          %v2783 = vld [vmem:[%s3 + $0x7e8] sm:$0xff]
          %v2784 = vld [vmem:[%s3 + $0x7f0] sm:$0xff]
          %v2785 = vld [vmem:[%s3 + $0x7f8] sm:$0xff]
          %v2786 = vld [vmem:[%s3 + $0x800] sm:$0xff]
          %v2787 = vld [vmem:[%s3 + $0x808] sm:$0xff]
          %v2788 = vld [vmem:[%s3 + $0x810] sm:$0xff]
          %v2789 = vld [vmem:[%s3 + $0x818] sm:$0xff]
          %v2790 = vld [vmem:[%s3 + $0x820] sm:$0xff]
          %v2791 = vld [vmem:[%s3 + $0x828] sm:$0xff]
          %v2792 = vld [vmem:[%s3 + $0x830] sm:$0xff]
          %v2793 = vld [vmem:[%s3 + $0x838] sm:$0xff]
          %v2794 = vld [vmem:[%s3 + $0x840] sm:$0xff]
          %v2795 = vld [vmem:[%s3 + $0x848] sm:$0xff]
          %v2796 = vld [vmem:[%s3 + $0x850] sm:$0xff]
          %v2797 = vld [vmem:[%s3 + $0x858] sm:$0xff]
          %v2798 = vld [vmem:[%s3 + $0x860] sm:$0xff]
          %v2799 = vld [vmem:[%s3 + $0x868] sm:$0xff]
          %v2800 = vld [vmem:[%s3 + $0x870] sm:$0xff]
          %v2801 = vld [vmem:[%s3 + $0x878] sm:$0xff]
          %v2802 = vld [vmem:[%s3 + $0x880] sm:$0xff]
          %v2803 = vld [vmem:[%s3 + $0x888] sm:$0xff]
          %v2804 = vld [vmem:[%s3 + $0x890] sm:$0xff]
          %v2805 = vld [vmem:[%s3 + $0x898] sm:$0xff]
          %v2806 = vld [vmem:[%s3 + $0x8a0] sm:$0xff]
          %v2807 = vld [vmem:[%s3 + $0x8a8] sm:$0xff]
          %v2808 = vld [vmem:[%s3 + $0x8b0] sm:$0xff]
          %v2809 = vld [vmem:[%s3 + $0x8b8] sm:$0xff]
          %v2810 = vld [vmem:[%s3 + $0x8c0] sm:$0xff]
          %v2811 = vld [vmem:[%s3 + $0x8c8] sm:$0xff]
          %v2812 = vld [vmem:[%s3 + $0x8d0] sm:$0xff]
          %v2813 = vld [vmem:[%s3 + $0x8d8] sm:$0xff]
          %v2814 = vld [vmem:[%s3 + $0x8e0] sm:$0xff]
          %v2815 = vld [vmem:[%s3 + $0x8e8] sm:$0xff]
          %v2816 = vld [vmem:[%s3 + $0x8f0] sm:$0xff]
          %v2817 = vld [vmem:[%s3 + $0x8f8] sm:$0xff]
          %v2818 = vld [vmem:[%s7] sm:$0x3f]
          %v2820 = vlaneseq
          %v2821 = vshrl.u32 %v2820, 7
          %v2822 = vsub.s32 0, %v2821
          %v2823 = vrot.slane %v2818, %v2822
          %v2824 = vlaneseq
          %v2825 = vshrl.u32 %v2824, 7
          %v2826 = vsub.s32 1, %v2825
          %v2827 = vrot.slane %v2818, %v2826
          %v2828 = vlaneseq
          %v2829 = vshrl.u32 %v2828, 7
          %v2830 = vsub.s32 2, %v2829
          %v2831 = vrot.slane %v2818, %v2830
          %v2832 = vlaneseq
          %v2833 = vshrl.u32 %v2832, 7
          %v2834 = vsub.s32 3, %v2833
          %v2835 = vrot.slane %v2818, %v2834
          %v2836 = vlaneseq
          %v2837 = vshrl.u32 %v2836, 7
          %v2838 = vsub.s32 4, %v2837
          %v2839 = vrot.slane %v2818, %v2838
          %v2840 = vlaneseq
          %v2841 = vshrl.u32 %v2840, 7
          %v2842 = vsub.s32 5, %v2841
          %v2843 = vrot.slane %v2818, %v2842
          %v3138 = vunpack.c.l.b16 %v2530
          %v3139 = vunpack.c.h.b16 %v2530
          %v3140 = vunpack.c.l.b16 %v2531
          %v3141 = vunpack.c.h.b16 %v2531
          %v3142 = vunpack.c.l.b16 %v2532
          %v3143 = vunpack.c.h.b16 %v2532
          %v3144 = vunpack.c.l.b16 %v2533
          %v3145 = vunpack.c.h.b16 %v2533
          %v3146 = vunpack.c.l.b16 %v2534
          %v3147 = vunpack.c.h.b16 %v2534
          %v3148 = vunpack.c.l.b16 %v2535
          %v3149 = vunpack.c.h.b16 %v2535
          %v3150 = vunpack.c.l.b16 %v2536
          %v3151 = vunpack.c.h.b16 %v2536
          %v3152 = vunpack.c.l.b16 %v2537
          %v3153 = vunpack.c.h.b16 %v2537
          %v3154 = vunpack.c.l.b16 %v2538
          %v3155 = vunpack.c.h.b16 %v2538
          %v3156 = vunpack.c.l.b16 %v2539
          %v3157 = vunpack.c.h.b16 %v2539
          %v3158 = vunpack.c.l.b16 %v2540
          %v3159 = vunpack.c.h.b16 %v2540
          %v3160 = vunpack.c.l.b16 %v2541
          %v3161 = vunpack.c.h.b16 %v2541
          %v3162 = vunpack.c.l.b16 %v2542
          %v3163 = vunpack.c.h.b16 %v2542
          %v3164 = vunpack.c.l.b16 %v2543
          %v3165 = vunpack.c.h.b16 %v2543
          %v3166 = vunpack.c.l.b16 %v2544
          %v3167 = vunpack.c.h.b16 %v2544
          %v3168 = vunpack.c.l.b16 %v2545
          %v3169 = vunpack.c.h.b16 %v2545
          %v3170 = vunpack.c.l.b16 %v2546
          %v3171 = vunpack.c.h.b16 %v2546
          %v3172 = vunpack.c.l.b16 %v2547
          %v3173 = vunpack.c.h.b16 %v2547
          %v3174 = vunpack.c.l.b16 %v2548
          %v3175 = vunpack.c.h.b16 %v2548
          %v3176 = vunpack.c.l.b16 %v2549
          %v3177 = vunpack.c.h.b16 %v2549
          %v3178 = vunpack.c.l.b16 %v2550
          %v3179 = vunpack.c.h.b16 %v2550
          %v3180 = vunpack.c.l.b16 %v2551
          %v3181 = vunpack.c.h.b16 %v2551
          %v3182 = vunpack.c.l.b16 %v2552
          %v3183 = vunpack.c.h.b16 %v2552
          %v3184 = vunpack.c.l.b16 %v2553
          %v3185 = vunpack.c.h.b16 %v2553
          %v3186 = vunpack.c.l.b16 %v2554
          %v3187 = vunpack.c.h.b16 %v2554
          %v3188 = vunpack.c.l.b16 %v2555
          %v3189 = vunpack.c.h.b16 %v2555
          %v3190 = vunpack.c.l.b16 %v2556
          %v3191 = vunpack.c.h.b16 %v2556
          %v3192 = vunpack.c.l.b16 %v2557
          %v3193 = vunpack.c.h.b16 %v2557
          %v3194 = vunpack.c.l.b16 %v2558
          %v3195 = vunpack.c.h.b16 %v2558
          %v3196 = vunpack.c.l.b16 %v2559
          %v3197 = vunpack.c.h.b16 %v2559
          %v3198 = vunpack.c.l.b16 %v2560
          %v3199 = vunpack.c.h.b16 %v2560
          %v3200 = vunpack.c.l.b16 %v2561
          %v3201 = vunpack.c.h.b16 %v2561
          %v3202 = vunpack.c.l.b16 %v2562
          %v3203 = vunpack.c.h.b16 %v2562
          %v3204 = vunpack.c.l.b16 %v2563
          %v3205 = vunpack.c.h.b16 %v2563
          %v3206 = vunpack.c.l.b16 %v2564
          %v3207 = vunpack.c.h.b16 %v2564
          %v3208 = vunpack.c.l.b16 %v2565
          %v3209 = vunpack.c.h.b16 %v2565
          %v3210 = vunpack.c.l.b16 %v2566
          %v3211 = vunpack.c.h.b16 %v2566
          %v3212 = vunpack.c.l.b16 %v2567
          %v3213 = vunpack.c.h.b16 %v2567
          %v3214 = vunpack.c.l.b16 %v2568
          %v3215 = vunpack.c.h.b16 %v2568
          %v3216 = vunpack.c.l.b16 %v2569
          %v3217 = vunpack.c.h.b16 %v2569
          %v3218 = vunpack.c.l.b16 %v2570
          %v3219 = vunpack.c.h.b16 %v2570
          %v3220 = vunpack.c.l.b16 %v2571
          %v3221 = vunpack.c.h.b16 %v2571
          %v3222 = vunpack.c.l.b16 %v2572
          %v3223 = vunpack.c.h.b16 %v2572
          %v3224 = vunpack.c.l.b16 %v2573
          %v3225 = vunpack.c.h.b16 %v2573
          %v3226 = vunpack.c.l.b16 %v2574
          %v3227 = vunpack.c.h.b16 %v2574
          %v3228 = vunpack.c.l.b16 %v2575
          %v3229 = vunpack.c.h.b16 %v2575
          %v3230 = vunpack.c.l.b16 %v2576
          %v3231 = vunpack.c.h.b16 %v2576
          %v3232 = vunpack.c.l.b16 %v2577
          %v3233 = vunpack.c.h.b16 %v2577
          %v3234 = vunpack.c.l.b16 %v2578
          %v3235 = vunpack.c.h.b16 %v2578
          %v3236 = vunpack.c.l.b16 %v2579
          %v3237 = vunpack.c.h.b16 %v2579
          %v3238 = vunpack.c.l.b16 %v2580
          %v3239 = vunpack.c.h.b16 %v2580
          %v3240 = vunpack.c.l.b16 %v2581
          %v3241 = vunpack.c.h.b16 %v2581
          %v3242 = vunpack.c.l.b16 %v2582
          %v3243 = vunpack.c.h.b16 %v2582
          %v3244 = vunpack.c.l.b16 %v2583
          %v3245 = vunpack.c.h.b16 %v2583
          %v3246 = vunpack.c.l.b16 %v2584
          %v3247 = vunpack.c.h.b16 %v2584
          %v3248 = vunpack.c.l.b16 %v2585
          %v3249 = vunpack.c.h.b16 %v2585
          %v3250 = vunpack.c.l.b16 %v2586
          %v3251 = vunpack.c.h.b16 %v2586
          %v3252 = vunpack.c.l.b16 %v2587
          %v3253 = vunpack.c.h.b16 %v2587
          %v3254 = vunpack.c.l.b16 %v2588
          %v3255 = vunpack.c.h.b16 %v2588
          %v3256 = vunpack.c.l.b16 %v2589
          %v3257 = vunpack.c.h.b16 %v2589
          %v3258 = vunpack.c.l.b16 %v2590
          %v3259 = vunpack.c.h.b16 %v2590
          %v3260 = vunpack.c.l.b16 %v2591
          %v3261 = vunpack.c.h.b16 %v2591
          %v3262 = vunpack.c.l.b16 %v2592
          %v3263 = vunpack.c.h.b16 %v2592
          %v3264 = vunpack.c.l.b16 %v2593
          %v3265 = vunpack.c.h.b16 %v2593
          %v3266 = vunpack.c.l.b16 %v2594
          %v3267 = vunpack.c.h.b16 %v2594
          %v3268 = vunpack.c.l.b16 %v2595
          %v3269 = vunpack.c.h.b16 %v2595
          %v3270 = vunpack.c.l.b16 %v2596
          %v3271 = vunpack.c.h.b16 %v2596
          %v3272 = vunpack.c.l.b16 %v2597
          %v3273 = vunpack.c.h.b16 %v2597
          %v3274 = vunpack.c.l.b16 %v2598
          %v3275 = vunpack.c.h.b16 %v2598
          %v3276 = vunpack.c.l.b16 %v2599
          %v3277 = vunpack.c.h.b16 %v2599
          %v3278 = vunpack.c.l.b16 %v2600
          %v3279 = vunpack.c.h.b16 %v2600
          %v3280 = vunpack.c.l.b16 %v2601
          %v3281 = vunpack.c.h.b16 %v2601
          %v3282 = vunpack.c.l.b16 %v2602
          %v3283 = vunpack.c.h.b16 %v2602
          %v3284 = vunpack.c.l.b16 %v2603
          %v3285 = vunpack.c.h.b16 %v2603
          %v3286 = vunpack.c.l.b16 %v2604
          %v3287 = vunpack.c.h.b16 %v2604
          %v3288 = vunpack.c.l.b16 %v2605
          %v3289 = vunpack.c.h.b16 %v2605
          %v3290 = vunpack.c.l.b16 %v2606
          %v3291 = vunpack.c.h.b16 %v2606
          %v3292 = vunpack.c.l.b16 %v2607
          %v3293 = vunpack.c.h.b16 %v2607
          %v3294 = vunpack.c.l.b16 %v2608
          %v3295 = vunpack.c.h.b16 %v2608
          %v3296 = vunpack.c.l.b16 %v2609
          %v3297 = vunpack.c.h.b16 %v2609
          %v3298 = vunpack.c.l.b16 %v2610
          %v3299 = vunpack.c.h.b16 %v2610
          %v3300 = vunpack.c.l.b16 %v2611
          %v3301 = vunpack.c.h.b16 %v2611
          %v3302 = vunpack.c.l.b16 %v2612
          %v3303 = vunpack.c.h.b16 %v2612
          %v3304 = vunpack.c.l.b16 %v2613
          %v3305 = vunpack.c.h.b16 %v2613
          %v3306 = vunpack.c.l.b16 %v2614
          %v3307 = vunpack.c.h.b16 %v2614
          %v3308 = vunpack.c.l.b16 %v2615
          %v3309 = vunpack.c.h.b16 %v2615
          %v3310 = vunpack.c.l.b16 %v2616
          %v3311 = vunpack.c.h.b16 %v2616
          %v3312 = vunpack.c.l.b16 %v2617
          %v3313 = vunpack.c.h.b16 %v2617
          %v3314 = vunpack.c.l.b16 %v2618
          %v3315 = vunpack.c.h.b16 %v2618
          %v3316 = vunpack.c.l.b16 %v2619
          %v3317 = vunpack.c.h.b16 %v2619
          %v3318 = vunpack.c.l.b16 %v2620
          %v3319 = vunpack.c.h.b16 %v2620
          %v3320 = vunpack.c.l.b16 %v2621
          %v3321 = vunpack.c.h.b16 %v2621
          %v3322 = vunpack.c.l.b16 %v2622
          %v3323 = vunpack.c.h.b16 %v2622
          %v3324 = vunpack.c.l.b16 %v2623
          %v3325 = vunpack.c.h.b16 %v2623
          %v3326 = vunpack.c.l.b16 %v2624
          %v3327 = vunpack.c.h.b16 %v2624
          %v3328 = vunpack.c.l.b16 %v2625
          %v3329 = vunpack.c.h.b16 %v2625
          %v3330 = vunpack.c.l.b16 %v2626
          %v3331 = vunpack.c.h.b16 %v2626
          %v3332 = vunpack.c.l.b16 %v2627
          %v3333 = vunpack.c.h.b16 %v2627
          %v3334 = vunpack.c.l.b16 %v2628
          %v3335 = vunpack.c.h.b16 %v2628
          %v3336 = vunpack.c.l.b16 %v2629
          %v3337 = vunpack.c.h.b16 %v2629
          %v3338 = vunpack.c.l.b16 %v2630
          %v3339 = vunpack.c.h.b16 %v2630
          %v3340 = vunpack.c.l.b16 %v2631
          %v3341 = vunpack.c.h.b16 %v2631
          %v3342 = vunpack.c.l.b16 %v2632
          %v3343 = vunpack.c.h.b16 %v2632
          %v3344 = vunpack.c.l.b16 %v2633
          %v3345 = vunpack.c.h.b16 %v2633
          %v3346 = vunpack.c.l.b16 %v2634
          %v3347 = vunpack.c.h.b16 %v2634
          %v3348 = vunpack.c.l.b16 %v2635
          %v3349 = vunpack.c.h.b16 %v2635
          %v3350 = vunpack.c.l.b16 %v2636
          %v3351 = vunpack.c.h.b16 %v2636
          %v3352 = vunpack.c.l.b16 %v2637
          %v3353 = vunpack.c.h.b16 %v2637
          %v3354 = vunpack.c.l.b16 %v2638
          %v3355 = vunpack.c.h.b16 %v2638
          %v3356 = vunpack.c.l.b16 %v2639
          %v3357 = vunpack.c.h.b16 %v2639
          %v3358 = vunpack.c.l.b16 %v2640
          %v3359 = vunpack.c.h.b16 %v2640
          %v3360 = vunpack.c.l.b16 %v2641
          %v3361 = vunpack.c.h.b16 %v2641
          %v3362 = vunpack.c.l.b16 %v2642
          %v3363 = vunpack.c.h.b16 %v2642
          %v3364 = vunpack.c.l.b16 %v2643
          %v3365 = vunpack.c.h.b16 %v2643
          %v3366 = vunpack.c.l.b16 %v2644
          %v3367 = vunpack.c.h.b16 %v2644
          %v3368 = vunpack.c.l.b16 %v2645
          %v3369 = vunpack.c.h.b16 %v2645
          %v3370 = vunpack.c.l.b16 %v2646
          %v3371 = vunpack.c.h.b16 %v2646
          %v3372 = vunpack.c.l.b16 %v2647
          %v3373 = vunpack.c.h.b16 %v2647
          %v3374 = vunpack.c.l.b16 %v2648
          %v3375 = vunpack.c.h.b16 %v2648
          %v3376 = vunpack.c.l.b16 %v2649
          %v3377 = vunpack.c.h.b16 %v2649
          %v3378 = vunpack.c.l.b16 %v2650
          %v3379 = vunpack.c.h.b16 %v2650
          %v3380 = vunpack.c.l.b16 %v2651
          %v3381 = vunpack.c.h.b16 %v2651
          %v3382 = vunpack.c.l.b16 %v2652
          %v3383 = vunpack.c.h.b16 %v2652
          %v3384 = vunpack.c.l.b16 %v2653
          %v3385 = vunpack.c.h.b16 %v2653
          %v3386 = vunpack.c.l.b16 %v2654
          %v3387 = vunpack.c.h.b16 %v2654
          %v3388 = vunpack.c.l.b16 %v2655
          %v3389 = vunpack.c.h.b16 %v2655
          %v3390 = vunpack.c.l.b16 %v2656
          %v3391 = vunpack.c.h.b16 %v2656
          %v3392 = vunpack.c.l.b16 %v2657
          %v3393 = vunpack.c.h.b16 %v2657
          %v3394 = vunpack.c.l.b16 %v2658
          %v3395 = vunpack.c.h.b16 %v2658
          %v3396 = vunpack.c.l.b16 %v2659
          %v3397 = vunpack.c.h.b16 %v2659
          %v3398 = vunpack.c.l.b16 %v2660
          %v3399 = vunpack.c.h.b16 %v2660
          %v3400 = vunpack.c.l.b16 %v2661
          %v3401 = vunpack.c.h.b16 %v2661
          %v3402 = vunpack.c.l.b16 %v2662
          %v3403 = vunpack.c.h.b16 %v2662
          %v3404 = vunpack.c.l.b16 %v2663
          %v3405 = vunpack.c.h.b16 %v2663
          %v3406 = vunpack.c.l.b16 %v2664
          %v3407 = vunpack.c.h.b16 %v2664
          %v3408 = vunpack.c.l.b16 %v2665
          %v3409 = vunpack.c.h.b16 %v2665
          %v3410 = vunpack.c.l.b16 %v2666
          %v3411 = vunpack.c.h.b16 %v2666
          %v3412 = vunpack.c.l.b16 %v2667
          %v3413 = vunpack.c.h.b16 %v2667
          %v3414 = vunpack.c.l.b16 %v2668
          %v3415 = vunpack.c.h.b16 %v2668
          %v3416 = vunpack.c.l.b16 %v2669
          %v3417 = vunpack.c.h.b16 %v2669
          %v3418 = vunpack.c.l.b16 %v2670
          %v3419 = vunpack.c.h.b16 %v2670
          %v3420 = vunpack.c.l.b16 %v2671
          %v3421 = vunpack.c.h.b16 %v2671
          %v3422 = vunpack.c.l.b16 %v2672
          %v3423 = vunpack.c.h.b16 %v2672
          %v3424 = vunpack.c.l.b16 %v2673
          %v3425 = vunpack.c.h.b16 %v2673
          %v3426 = vunpack.c.l.b16 %v2674
          %v3427 = vunpack.c.h.b16 %v2674
          %v3428 = vunpack.c.l.b16 %v2675
          %v3429 = vunpack.c.h.b16 %v2675
          %v3430 = vunpack.c.l.b16 %v2676
          %v3431 = vunpack.c.h.b16 %v2676
          %v3432 = vunpack.c.l.b16 %v2677
          %v3433 = vunpack.c.h.b16 %v2677
          %v3434 = vunpack.c.l.b16 %v2678
          %v3435 = vunpack.c.h.b16 %v2678
          %v3436 = vunpack.c.l.b16 %v2679
          %v3437 = vunpack.c.h.b16 %v2679
          %v3438 = vunpack.c.l.b16 %v2680
          %v3439 = vunpack.c.h.b16 %v2680
          %v3440 = vunpack.c.l.b16 %v2681
          %v3441 = vunpack.c.h.b16 %v2681
          %v3442 = vunpack.c.l.b16 %v2682
          %v3443 = vunpack.c.h.b16 %v2682
          %v3444 = vunpack.c.l.b16 %v2683
          %v3445 = vunpack.c.h.b16 %v2683
          %v3446 = vunpack.c.l.b16 %v2684
          %v3447 = vunpack.c.h.b16 %v2684
          %v3448 = vunpack.c.l.b16 %v2685
          %v3449 = vunpack.c.h.b16 %v2685
          %v3450 = vunpack.c.l.b16 %v2686
          %v3451 = vunpack.c.h.b16 %v2686
          %v3452 = vunpack.c.l.b16 %v2687
          %v3453 = vunpack.c.h.b16 %v2687
          %v3454 = vunpack.c.l.b16 %v2688
          %v3455 = vunpack.c.h.b16 %v2688
          %v3456 = vunpack.c.l.b16 %v2689
          %v3457 = vunpack.c.h.b16 %v2689
          %v3458 = vunpack.c.l.b16 %v2690
          %v3459 = vunpack.c.h.b16 %v2690
          %v3460 = vunpack.c.l.b16 %v2691
          %v3461 = vunpack.c.h.b16 %v2691
          %v3462 = vunpack.c.l.b16 %v2692
          %v3463 = vunpack.c.h.b16 %v2692
          %v3464 = vunpack.c.l.b16 %v2693
          %v3465 = vunpack.c.h.b16 %v2693
          %v3466 = vunpack.c.l.b16 %v2694
          %v3467 = vunpack.c.h.b16 %v2694
          %v3468 = vunpack.c.l.b16 %v2695
          %v3469 = vunpack.c.h.b16 %v2695
          %v3470 = vunpack.c.l.b16 %v2696
          %v3471 = vunpack.c.h.b16 %v2696
          %v3472 = vunpack.c.l.b16 %v2697
          %v3473 = vunpack.c.h.b16 %v2697
          %v3474 = vunpack.c.l.b16 %v2698
          %v3475 = vunpack.c.h.b16 %v2698
          %v3476 = vunpack.c.l.b16 %v2699
          %v3477 = vunpack.c.h.b16 %v2699
          %v3478 = vunpack.c.l.b16 %v2700
          %v3479 = vunpack.c.h.b16 %v2700
          %v3480 = vunpack.c.l.b16 %v2701
          %v3481 = vunpack.c.h.b16 %v2701
          %v3482 = vunpack.c.l.b16 %v2702
          %v3483 = vunpack.c.h.b16 %v2702
          %v3484 = vunpack.c.l.b16 %v2703
          %v3485 = vunpack.c.h.b16 %v2703
          %v3486 = vunpack.c.l.b16 %v2704
          %v3487 = vunpack.c.h.b16 %v2704
          %v3488 = vunpack.c.l.b16 %v2705
          %v3489 = vunpack.c.h.b16 %v2705
          %v3490 = vunpack.c.l.b16 %v2706
          %v3491 = vunpack.c.h.b16 %v2706
          %v3492 = vunpack.c.l.b16 %v2707
          %v3493 = vunpack.c.h.b16 %v2707
          %v3494 = vunpack.c.l.b16 %v2708
          %v3495 = vunpack.c.h.b16 %v2708
          %v3496 = vunpack.c.l.b16 %v2709
          %v3497 = vunpack.c.h.b16 %v2709
          %v3498 = vunpack.c.l.b16 %v2710
          %v3499 = vunpack.c.h.b16 %v2710
          %v3500 = vunpack.c.l.b16 %v2711
          %v3501 = vunpack.c.h.b16 %v2711
          %v3502 = vunpack.c.l.b16 %v2712
          %v3503 = vunpack.c.h.b16 %v2712
          %v3504 = vunpack.c.l.b16 %v2713
          %v3505 = vunpack.c.h.b16 %v2713
          %v3506 = vunpack.c.l.b16 %v2714
          %v3507 = vunpack.c.h.b16 %v2714
          %v3508 = vunpack.c.l.b16 %v2715
          %v3509 = vunpack.c.h.b16 %v2715
          %v3510 = vunpack.c.l.b16 %v2716
          %v3511 = vunpack.c.h.b16 %v2716
          %v3512 = vunpack.c.l.b16 %v2717
          %v3513 = vunpack.c.h.b16 %v2717
          %v3514 = vunpack.c.l.b16 %v2718
          %v3515 = vunpack.c.h.b16 %v2718
          %v3516 = vunpack.c.l.b16 %v2719
          %v3517 = vunpack.c.h.b16 %v2719
          %v3518 = vunpack.c.l.b16 %v2720
          %v3519 = vunpack.c.h.b16 %v2720
          %v3520 = vunpack.c.l.b16 %v2721
          %v3521 = vunpack.c.h.b16 %v2721
          %v3522 = vunpack.c.l.b16 %v2722
          %v3523 = vunpack.c.h.b16 %v2722
          %v3524 = vunpack.c.l.b16 %v2723
          %v3525 = vunpack.c.h.b16 %v2723
          %v3526 = vunpack.c.l.b16 %v2724
          %v3527 = vunpack.c.h.b16 %v2724
          %v3528 = vunpack.c.l.b16 %v2725
          %v3529 = vunpack.c.h.b16 %v2725
          %v3530 = vunpack.c.l.b16 %v2726
          %v3531 = vunpack.c.h.b16 %v2726
          %v3532 = vunpack.c.l.b16 %v2727
          %v3533 = vunpack.c.h.b16 %v2727
          %v3534 = vunpack.c.l.b16 %v2728
          %v3535 = vunpack.c.h.b16 %v2728
          %v3536 = vunpack.c.l.b16 %v2729
          %v3537 = vunpack.c.h.b16 %v2729
          %v3538 = vunpack.c.l.b16 %v2730
          %v3539 = vunpack.c.h.b16 %v2730
          %v3540 = vunpack.c.l.b16 %v2731
          %v3541 = vunpack.c.h.b16 %v2731
          %v3542 = vunpack.c.l.b16 %v2732
          %v3543 = vunpack.c.h.b16 %v2732
          %v3544 = vunpack.c.l.b16 %v2733
          %v3545 = vunpack.c.h.b16 %v2733
          %v3546 = vunpack.c.l.b16 %v2734
          %v3547 = vunpack.c.h.b16 %v2734
          %v3548 = vunpack.c.l.b16 %v2735
          %v3549 = vunpack.c.h.b16 %v2735
          %v3550 = vunpack.c.l.b16 %v2736
          %v3551 = vunpack.c.h.b16 %v2736
          %v3552 = vunpack.c.l.b16 %v2737
          %v3553 = vunpack.c.h.b16 %v2737
          %v3554 = vunpack.c.l.b16 %v2738
          %v3555 = vunpack.c.h.b16 %v2738
          %v3556 = vunpack.c.l.b16 %v2739
          %v3557 = vunpack.c.h.b16 %v2739
          %v3558 = vunpack.c.l.b16 %v2740
          %v3559 = vunpack.c.h.b16 %v2740
          %v3560 = vunpack.c.l.b16 %v2741
          %v3561 = vunpack.c.h.b16 %v2741
          %v3562 = vunpack.c.l.b16 %v2742
          %v3563 = vunpack.c.h.b16 %v2742
          %v3564 = vunpack.c.l.b16 %v2743
          %v3565 = vunpack.c.h.b16 %v2743
          %v3566 = vunpack.c.l.b16 %v2744
          %v3567 = vunpack.c.h.b16 %v2744
          %v3568 = vunpack.c.l.b16 %v2745
          %v3569 = vunpack.c.h.b16 %v2745
          %v3570 = vunpack.c.l.b16 %v2746
          %v3571 = vunpack.c.h.b16 %v2746
          %v3572 = vunpack.c.l.b16 %v2747
          %v3573 = vunpack.c.h.b16 %v2747
          %v3574 = vunpack.c.l.b16 %v2748
          %v3575 = vunpack.c.h.b16 %v2748
          %v3576 = vunpack.c.l.b16 %v2749
          %v3577 = vunpack.c.h.b16 %v2749
          %v3578 = vunpack.c.l.b16 %v2750
          %v3579 = vunpack.c.h.b16 %v2750
          %v3580 = vunpack.c.l.b16 %v2751
          %v3581 = vunpack.c.h.b16 %v2751
          %v3582 = vunpack.c.l.b16 %v2752
          %v3583 = vunpack.c.h.b16 %v2752
          %v3584 = vunpack.c.l.b16 %v2753
          %v3585 = vunpack.c.h.b16 %v2753
          %v3586 = vunpack.c.l.b16 %v2754
          %v3587 = vunpack.c.h.b16 %v2754
          %v3588 = vunpack.c.l.b16 %v2755
          %v3589 = vunpack.c.h.b16 %v2755
          %v3590 = vunpack.c.l.b16 %v2756
          %v3591 = vunpack.c.h.b16 %v2756
          %v3592 = vunpack.c.l.b16 %v2757
          %v3593 = vunpack.c.h.b16 %v2757
          %v3594 = vunpack.c.l.b16 %v2758
          %v3595 = vunpack.c.h.b16 %v2758
          %v3596 = vunpack.c.l.b16 %v2759
          %v3597 = vunpack.c.h.b16 %v2759
          %v3598 = vunpack.c.l.b16 %v2760
          %v3599 = vunpack.c.h.b16 %v2760
          %v3600 = vunpack.c.l.b16 %v2761
          %v3601 = vunpack.c.h.b16 %v2761
          %v3602 = vunpack.c.l.b16 %v2762
          %v3603 = vunpack.c.h.b16 %v2762
          %v3604 = vunpack.c.l.b16 %v2763
          %v3605 = vunpack.c.h.b16 %v2763
          %v3606 = vunpack.c.l.b16 %v2764
          %v3607 = vunpack.c.h.b16 %v2764
          %v3608 = vunpack.c.l.b16 %v2765
          %v3609 = vunpack.c.h.b16 %v2765
          %v3610 = vunpack.c.l.b16 %v2766
          %v3611 = vunpack.c.h.b16 %v2766
          %v3612 = vunpack.c.l.b16 %v2767
          %v3613 = vunpack.c.h.b16 %v2767
          %v3614 = vunpack.c.l.b16 %v2768
          %v3615 = vunpack.c.h.b16 %v2768
          %v3616 = vunpack.c.l.b16 %v2769
          %v3617 = vunpack.c.h.b16 %v2769
          %v3618 = vunpack.c.l.b16 %v2770
          %v3619 = vunpack.c.h.b16 %v2770
          %v3620 = vunpack.c.l.b16 %v2771
          %v3621 = vunpack.c.h.b16 %v2771
          %v3622 = vunpack.c.l.b16 %v2772
          %v3623 = vunpack.c.h.b16 %v2772
          %v3624 = vunpack.c.l.b16 %v2773
          %v3625 = vunpack.c.h.b16 %v2773
          %v3626 = vunpack.c.l.b16 %v2774
          %v3627 = vunpack.c.h.b16 %v2774
          %v3628 = vunpack.c.l.b16 %v2775
          %v3629 = vunpack.c.h.b16 %v2775
          %v3630 = vunpack.c.l.b16 %v2776
          %v3631 = vunpack.c.h.b16 %v2776
          %v3632 = vunpack.c.l.b16 %v2777
          %v3633 = vunpack.c.h.b16 %v2777
          %v3634 = vunpack.c.l.b16 %v2778
          %v3635 = vunpack.c.h.b16 %v2778
          %v3636 = vunpack.c.l.b16 %v2779
          %v3637 = vunpack.c.h.b16 %v2779
          %v3638 = vunpack.c.l.b16 %v2780
          %v3639 = vunpack.c.h.b16 %v2780
          %v3640 = vunpack.c.l.b16 %v2781
          %v3641 = vunpack.c.h.b16 %v2781
          %v3642 = vunpack.c.l.b16 %v2782
          %v3643 = vunpack.c.h.b16 %v2782
          %v3644 = vunpack.c.l.b16 %v2783
          %v3645 = vunpack.c.h.b16 %v2783
          %v3646 = vunpack.c.l.b16 %v2784
          %v3647 = vunpack.c.h.b16 %v2784
          %v3648 = vunpack.c.l.b16 %v2785
          %v3649 = vunpack.c.h.b16 %v2785
          %v3650 = vunpack.c.l.b16 %v2786
          %v3651 = vunpack.c.h.b16 %v2786
          %v3652 = vunpack.c.l.b16 %v2787
          %v3653 = vunpack.c.h.b16 %v2787
          %v3654 = vunpack.c.l.b16 %v2788
          %v3655 = vunpack.c.h.b16 %v2788
          %v3656 = vunpack.c.l.b16 %v2789
          %v3657 = vunpack.c.h.b16 %v2789
          %v3658 = vunpack.c.l.b16 %v2790
          %v3659 = vunpack.c.h.b16 %v2790
          %v3660 = vunpack.c.l.b16 %v2791
          %v3661 = vunpack.c.h.b16 %v2791
          %v3662 = vunpack.c.l.b16 %v2792
          %v3663 = vunpack.c.h.b16 %v2792
          %v3664 = vunpack.c.l.b16 %v2793
          %v3665 = vunpack.c.h.b16 %v2793
          %v3666 = vunpack.c.l.b16 %v2794
          %v3667 = vunpack.c.h.b16 %v2794
          %v3668 = vunpack.c.l.b16 %v2795
          %v3669 = vunpack.c.h.b16 %v2795
          %v3670 = vunpack.c.l.b16 %v2796
          %v3671 = vunpack.c.h.b16 %v2796
          %v3672 = vunpack.c.l.b16 %v2797
          %v3673 = vunpack.c.h.b16 %v2797
          %v3674 = vunpack.c.l.b16 %v2798
          %v3675 = vunpack.c.h.b16 %v2798
          %v3676 = vunpack.c.l.b16 %v2799
          %v3677 = vunpack.c.h.b16 %v2799
          %v3678 = vunpack.c.l.b16 %v2800
          %v3679 = vunpack.c.h.b16 %v2800
          %v3680 = vunpack.c.l.b16 %v2801
          %v3681 = vunpack.c.h.b16 %v2801
          %v3682 = vunpack.c.l.b16 %v2802
          %v3683 = vunpack.c.h.b16 %v2802
          %v3684 = vunpack.c.l.b16 %v2803
          %v3685 = vunpack.c.h.b16 %v2803
          %v3686 = vunpack.c.l.b16 %v2804
          %v3687 = vunpack.c.h.b16 %v2804
          %v3688 = vunpack.c.l.b16 %v2805
          %v3689 = vunpack.c.h.b16 %v2805
          %v3690 = vunpack.c.l.b16 %v2806
          %v3691 = vunpack.c.h.b16 %v2806
          %v3692 = vunpack.c.l.b16 %v2807
          %v3693 = vunpack.c.h.b16 %v2807
          %v3694 = vunpack.c.l.b16 %v2808
          %v3695 = vunpack.c.h.b16 %v2808
          %v3696 = vunpack.c.l.b16 %v2809
          %v3697 = vunpack.c.h.b16 %v2809
          %v3698 = vunpack.c.l.b16 %v2810
          %v3699 = vunpack.c.h.b16 %v2810
          %v3700 = vunpack.c.l.b16 %v2811
          %v3701 = vunpack.c.h.b16 %v2811
          %v3702 = vunpack.c.l.b16 %v2812
          %v3703 = vunpack.c.h.b16 %v2812
          %v3704 = vunpack.c.l.b16 %v2813
          %v3705 = vunpack.c.h.b16 %v2813
          %v3706 = vunpack.c.l.b16 %v2814
          %v3707 = vunpack.c.h.b16 %v2814
          %v3708 = vunpack.c.l.b16 %v2815
          %v3709 = vunpack.c.h.b16 %v2815
          %v3710 = vunpack.c.l.b16 %v2816
          %v3711 = vunpack.c.h.b16 %v2816
          %v3712 = vunpack.c.l.b16 %v2817
          %v3713 = vunpack.c.h.b16 %v2817
          %v3714 = vpack.c.b16 %v3144, %v3138
          %v3715 = vpack.c.b16 %v3145, %v3139
          %v3716 = vpack.c.b16 %v3146, %v3140
          %v3717 = vpack.c.b16 %v3147, %v3141
          %v3718 = vpack.c.b16 %v3148, %v3142
          %v3719 = vpack.c.b16 %v3149, %v3143
          %v3720 = vpack.c.b16 %v3156, %v3150
          %v3721 = vpack.c.b16 %v3157, %v3151
          %v3722 = vpack.c.b16 %v3158, %v3152
          %v3723 = vpack.c.b16 %v3159, %v3153
          %v3724 = vpack.c.b16 %v3160, %v3154
          %v3725 = vpack.c.b16 %v3161, %v3155
          %v3726 = vpack.c.b16 %v3168, %v3162
          %v3727 = vpack.c.b16 %v3169, %v3163
          %v3728 = vpack.c.b16 %v3170, %v3164
          %v3729 = vpack.c.b16 %v3171, %v3165
          %v3730 = vpack.c.b16 %v3172, %v3166
          %v3731 = vpack.c.b16 %v3173, %v3167
          %v3732 = vpack.c.b16 %v3180, %v3174
          %v3733 = vpack.c.b16 %v3181, %v3175
          %v3734 = vpack.c.b16 %v3182, %v3176
          %v3735 = vpack.c.b16 %v3183, %v3177
          %v3736 = vpack.c.b16 %v3184, %v3178
          %v3737 = vpack.c.b16 %v3185, %v3179
          %v3738 = vpack.c.b16 %v3192, %v3186
          %v3739 = vpack.c.b16 %v3193, %v3187
          %v3740 = vpack.c.b16 %v3194, %v3188
          %v3741 = vpack.c.b16 %v3195, %v3189
          %v3742 = vpack.c.b16 %v3196, %v3190
          %v3743 = vpack.c.b16 %v3197, %v3191
          %v3744 = vpack.c.b16 %v3204, %v3198
          %v3745 = vpack.c.b16 %v3205, %v3199
          %v3746 = vpack.c.b16 %v3206, %v3200
          %v3747 = vpack.c.b16 %v3207, %v3201
          %v3748 = vpack.c.b16 %v3208, %v3202
          %v3749 = vpack.c.b16 %v3209, %v3203
          %v3750 = vpack.c.b16 %v3216, %v3210
          %v3751 = vpack.c.b16 %v3217, %v3211
          %v3752 = vpack.c.b16 %v3218, %v3212
          %v3753 = vpack.c.b16 %v3219, %v3213
          %v3754 = vpack.c.b16 %v3220, %v3214
          %v3755 = vpack.c.b16 %v3221, %v3215
          %v3756 = vpack.c.b16 %v3228, %v3222
          %v3757 = vpack.c.b16 %v3229, %v3223
          %v3758 = vpack.c.b16 %v3230, %v3224
          %v3759 = vpack.c.b16 %v3231, %v3225
          %v3760 = vpack.c.b16 %v3232, %v3226
          %v3761 = vpack.c.b16 %v3233, %v3227
          %v3762 = vpack.c.b16 %v3240, %v3234
          %v3763 = vpack.c.b16 %v3241, %v3235
          %v3764 = vpack.c.b16 %v3242, %v3236
          %v3765 = vpack.c.b16 %v3243, %v3237
          %v3766 = vpack.c.b16 %v3244, %v3238
          %v3767 = vpack.c.b16 %v3245, %v3239
          %v3768 = vpack.c.b16 %v3252, %v3246
          %v3769 = vpack.c.b16 %v3253, %v3247
          %v3770 = vpack.c.b16 %v3254, %v3248
          %v3771 = vpack.c.b16 %v3255, %v3249
          %v3772 = vpack.c.b16 %v3256, %v3250
          %v3773 = vpack.c.b16 %v3257, %v3251
          %v3774 = vpack.c.b16 %v3264, %v3258
          %v3775 = vpack.c.b16 %v3265, %v3259
          %v3776 = vpack.c.b16 %v3266, %v3260
          %v3777 = vpack.c.b16 %v3267, %v3261
          %v3778 = vpack.c.b16 %v3268, %v3262
          %v3779 = vpack.c.b16 %v3269, %v3263
          %v3780 = vpack.c.b16 %v3276, %v3270
          %v3781 = vpack.c.b16 %v3277, %v3271
          %v3782 = vpack.c.b16 %v3278, %v3272
          %v3783 = vpack.c.b16 %v3279, %v3273
          %v3784 = vpack.c.b16 %v3280, %v3274
          %v3785 = vpack.c.b16 %v3281, %v3275
          %v3786 = vpack.c.b16 %v3288, %v3282
          %v3787 = vpack.c.b16 %v3289, %v3283
          %v3788 = vpack.c.b16 %v3290, %v3284
          %v3789 = vpack.c.b16 %v3291, %v3285
          %v3790 = vpack.c.b16 %v3292, %v3286
          %v3791 = vpack.c.b16 %v3293, %v3287
          %v3792 = vpack.c.b16 %v3300, %v3294
          %v3793 = vpack.c.b16 %v3301, %v3295
          %v3794 = vpack.c.b16 %v3302, %v3296
          %v3795 = vpack.c.b16 %v3303, %v3297
          %v3796 = vpack.c.b16 %v3304, %v3298
          %v3797 = vpack.c.b16 %v3305, %v3299
          %v3798 = vpack.c.b16 %v3312, %v3306
          %v3799 = vpack.c.b16 %v3313, %v3307
          %v3800 = vpack.c.b16 %v3314, %v3308
          %v3801 = vpack.c.b16 %v3315, %v3309
          %v3802 = vpack.c.b16 %v3316, %v3310
          %v3803 = vpack.c.b16 %v3317, %v3311
          %v3804 = vpack.c.b16 %v3324, %v3318
          %v3805 = vpack.c.b16 %v3325, %v3319
          %v3806 = vpack.c.b16 %v3326, %v3320
          %v3807 = vpack.c.b16 %v3327, %v3321
          %v3808 = vpack.c.b16 %v3328, %v3322
          %v3809 = vpack.c.b16 %v3329, %v3323
          %v3810 = vpack.c.b16 %v3336, %v3330
          %v3811 = vpack.c.b16 %v3337, %v3331
          %v3812 = vpack.c.b16 %v3338, %v3332
          %v3813 = vpack.c.b16 %v3339, %v3333
          %v3814 = vpack.c.b16 %v3340, %v3334
          %v3815 = vpack.c.b16 %v3341, %v3335
          %v3816 = vpack.c.b16 %v3348, %v3342
          %v3817 = vpack.c.b16 %v3349, %v3343
          %v3818 = vpack.c.b16 %v3350, %v3344
          %v3819 = vpack.c.b16 %v3351, %v3345
          %v3820 = vpack.c.b16 %v3352, %v3346
          %v3821 = vpack.c.b16 %v3353, %v3347
          %v3822 = vpack.c.b16 %v3360, %v3354
          %v3823 = vpack.c.b16 %v3361, %v3355
          %v3824 = vpack.c.b16 %v3362, %v3356
          %v3825 = vpack.c.b16 %v3363, %v3357
          %v3826 = vpack.c.b16 %v3364, %v3358
          %v3827 = vpack.c.b16 %v3365, %v3359
          %v3828 = vpack.c.b16 %v3372, %v3366
          %v3829 = vpack.c.b16 %v3373, %v3367
          %v3830 = vpack.c.b16 %v3374, %v3368
          %v3831 = vpack.c.b16 %v3375, %v3369
          %v3832 = vpack.c.b16 %v3376, %v3370
          %v3833 = vpack.c.b16 %v3377, %v3371
          %v3834 = vpack.c.b16 %v3384, %v3378
          %v3835 = vpack.c.b16 %v3385, %v3379
          %v3836 = vpack.c.b16 %v3386, %v3380
          %v3837 = vpack.c.b16 %v3387, %v3381
          %v3838 = vpack.c.b16 %v3388, %v3382
          %v3839 = vpack.c.b16 %v3389, %v3383
          %v3840 = vpack.c.b16 %v3396, %v3390
          %v3841 = vpack.c.b16 %v3397, %v3391
          %v3842 = vpack.c.b16 %v3398, %v3392
          %v3843 = vpack.c.b16 %v3399, %v3393
          %v3844 = vpack.c.b16 %v3400, %v3394
          %v3845 = vpack.c.b16 %v3401, %v3395
          %v3846 = vpack.c.b16 %v3408, %v3402
          %v3847 = vpack.c.b16 %v3409, %v3403
          %v3848 = vpack.c.b16 %v3410, %v3404
          %v3849 = vpack.c.b16 %v3411, %v3405
          %v3850 = vpack.c.b16 %v3412, %v3406
          %v3851 = vpack.c.b16 %v3413, %v3407
          %v3852 = vpack.c.b16 %v3420, %v3414
          %v3853 = vpack.c.b16 %v3421, %v3415
          %v3854 = vpack.c.b16 %v3422, %v3416
          %v3855 = vpack.c.b16 %v3423, %v3417
          %v3856 = vpack.c.b16 %v3424, %v3418
          %v3857 = vpack.c.b16 %v3425, %v3419
          %v3858 = vpack.c.b16 %v3432, %v3426
          %v3859 = vpack.c.b16 %v3433, %v3427
          %v3860 = vpack.c.b16 %v3434, %v3428
          %v3861 = vpack.c.b16 %v3435, %v3429
          %v3862 = vpack.c.b16 %v3436, %v3430
          %v3863 = vpack.c.b16 %v3437, %v3431
          %v3864 = vpack.c.b16 %v3444, %v3438
          %v3865 = vpack.c.b16 %v3445, %v3439
          %v3866 = vpack.c.b16 %v3446, %v3440
          %v3867 = vpack.c.b16 %v3447, %v3441
          %v3868 = vpack.c.b16 %v3448, %v3442
          %v3869 = vpack.c.b16 %v3449, %v3443
          %v3870 = vpack.c.b16 %v3456, %v3450
          %v3871 = vpack.c.b16 %v3457, %v3451
          %v3872 = vpack.c.b16 %v3458, %v3452
          %v3873 = vpack.c.b16 %v3459, %v3453
          %v3874 = vpack.c.b16 %v3460, %v3454
          %v3875 = vpack.c.b16 %v3461, %v3455
          %v3876 = vpack.c.b16 %v3468, %v3462
          %v3877 = vpack.c.b16 %v3469, %v3463
          %v3878 = vpack.c.b16 %v3470, %v3464
          %v3879 = vpack.c.b16 %v3471, %v3465
          %v3880 = vpack.c.b16 %v3472, %v3466
          %v3881 = vpack.c.b16 %v3473, %v3467
          %v3882 = vpack.c.b16 %v3480, %v3474
          %v3883 = vpack.c.b16 %v3481, %v3475
          %v3884 = vpack.c.b16 %v3482, %v3476
          %v3885 = vpack.c.b16 %v3483, %v3477
          %v3886 = vpack.c.b16 %v3484, %v3478
          %v3887 = vpack.c.b16 %v3485, %v3479
          %v3888 = vpack.c.b16 %v3492, %v3486
          %v3889 = vpack.c.b16 %v3493, %v3487
          %v3890 = vpack.c.b16 %v3494, %v3488
          %v3891 = vpack.c.b16 %v3495, %v3489
          %v3892 = vpack.c.b16 %v3496, %v3490
          %v3893 = vpack.c.b16 %v3497, %v3491
          %v3894 = vpack.c.b16 %v3504, %v3498
          %v3895 = vpack.c.b16 %v3505, %v3499
          %v3896 = vpack.c.b16 %v3506, %v3500
          %v3897 = vpack.c.b16 %v3507, %v3501
          %v3898 = vpack.c.b16 %v3508, %v3502
          %v3899 = vpack.c.b16 %v3509, %v3503
          %v3900 = vpack.c.b16 %v3516, %v3510
          %v3901 = vpack.c.b16 %v3517, %v3511
          %v3902 = vpack.c.b16 %v3518, %v3512
          %v3903 = vpack.c.b16 %v3519, %v3513
          %v3904 = vpack.c.b16 %v3520, %v3514
          %v3905 = vpack.c.b16 %v3521, %v3515
          %v3906 = vpack.c.b16 %v3528, %v3522
          %v3907 = vpack.c.b16 %v3529, %v3523
          %v3908 = vpack.c.b16 %v3530, %v3524
          %v3909 = vpack.c.b16 %v3531, %v3525
          %v3910 = vpack.c.b16 %v3532, %v3526
          %v3911 = vpack.c.b16 %v3533, %v3527
          %v3912 = vpack.c.b16 %v3540, %v3534
          %v3913 = vpack.c.b16 %v3541, %v3535
          %v3914 = vpack.c.b16 %v3542, %v3536
          %v3915 = vpack.c.b16 %v3543, %v3537
          %v3916 = vpack.c.b16 %v3544, %v3538
          %v3917 = vpack.c.b16 %v3545, %v3539
          %v3918 = vpack.c.b16 %v3552, %v3546
          %v3919 = vpack.c.b16 %v3553, %v3547
          %v3920 = vpack.c.b16 %v3554, %v3548
          %v3921 = vpack.c.b16 %v3555, %v3549
          %v3922 = vpack.c.b16 %v3556, %v3550
          %v3923 = vpack.c.b16 %v3557, %v3551
          %v3924 = vpack.c.b16 %v3564, %v3558
          %v3925 = vpack.c.b16 %v3565, %v3559
          %v3926 = vpack.c.b16 %v3566, %v3560
          %v3927 = vpack.c.b16 %v3567, %v3561
          %v3928 = vpack.c.b16 %v3568, %v3562
          %v3929 = vpack.c.b16 %v3569, %v3563
          %v3930 = vpack.c.b16 %v3576, %v3570
          %v3931 = vpack.c.b16 %v3577, %v3571
          %v3932 = vpack.c.b16 %v3578, %v3572
          %v3933 = vpack.c.b16 %v3579, %v3573
          %v3934 = vpack.c.b16 %v3580, %v3574
          %v3935 = vpack.c.b16 %v3581, %v3575
          %v3936 = vpack.c.b16 %v3588, %v3582
          %v3937 = vpack.c.b16 %v3589, %v3583
          %v3938 = vpack.c.b16 %v3590, %v3584
          %v3939 = vpack.c.b16 %v3591, %v3585
          %v3940 = vpack.c.b16 %v3592, %v3586
          %v3941 = vpack.c.b16 %v3593, %v3587
          %v3942 = vpack.c.b16 %v3600, %v3594
          %v3943 = vpack.c.b16 %v3601, %v3595
          %v3944 = vpack.c.b16 %v3602, %v3596
          %v3945 = vpack.c.b16 %v3603, %v3597
          %v3946 = vpack.c.b16 %v3604, %v3598
          %v3947 = vpack.c.b16 %v3605, %v3599
          %v3948 = vpack.c.b16 %v3612, %v3606
          %v3949 = vpack.c.b16 %v3613, %v3607
          %v3950 = vpack.c.b16 %v3614, %v3608
          %v3951 = vpack.c.b16 %v3615, %v3609
          %v3952 = vpack.c.b16 %v3616, %v3610
          %v3953 = vpack.c.b16 %v3617, %v3611
          %v3954 = vpack.c.b16 %v3624, %v3618
          %v3955 = vpack.c.b16 %v3625, %v3619
          %v3956 = vpack.c.b16 %v3626, %v3620
          %v3957 = vpack.c.b16 %v3627, %v3621
          %v3958 = vpack.c.b16 %v3628, %v3622
          %v3959 = vpack.c.b16 %v3629, %v3623
          %v3960 = vpack.c.b16 %v3636, %v3630
          %v3961 = vpack.c.b16 %v3637, %v3631
          %v3962 = vpack.c.b16 %v3638, %v3632
          %v3963 = vpack.c.b16 %v3639, %v3633
          %v3964 = vpack.c.b16 %v3640, %v3634
          %v3965 = vpack.c.b16 %v3641, %v3635
          %v3966 = vpack.c.b16 %v3648, %v3642
          %v3967 = vpack.c.b16 %v3649, %v3643
          %v3968 = vpack.c.b16 %v3650, %v3644
          %v3969 = vpack.c.b16 %v3651, %v3645
          %v3970 = vpack.c.b16 %v3652, %v3646
          %v3971 = vpack.c.b16 %v3653, %v3647
          %v3972 = vpack.c.b16 %v3660, %v3654
          %v3973 = vpack.c.b16 %v3661, %v3655
          %v3974 = vpack.c.b16 %v3662, %v3656
          %v3975 = vpack.c.b16 %v3663, %v3657
          %v3976 = vpack.c.b16 %v3664, %v3658
          %v3977 = vpack.c.b16 %v3665, %v3659
          %v3978 = vpack.c.b16 %v3672, %v3666
          %v3979 = vpack.c.b16 %v3673, %v3667
          %v3980 = vpack.c.b16 %v3674, %v3668
          %v3981 = vpack.c.b16 %v3675, %v3669
          %v3982 = vpack.c.b16 %v3676, %v3670
          %v3983 = vpack.c.b16 %v3677, %v3671
          %v3984 = vpack.c.b16 %v3684, %v3678
          %v3985 = vpack.c.b16 %v3685, %v3679
          %v3986 = vpack.c.b16 %v3686, %v3680
          %v3987 = vpack.c.b16 %v3687, %v3681
          %v3988 = vpack.c.b16 %v3688, %v3682
          %v3989 = vpack.c.b16 %v3689, %v3683
          %v3990 = vpack.c.b16 %v3696, %v3690
          %v3991 = vpack.c.b16 %v3697, %v3691
          %v3992 = vpack.c.b16 %v3698, %v3692
          %v3993 = vpack.c.b16 %v3699, %v3693
          %v3994 = vpack.c.b16 %v3700, %v3694
          %v3995 = vpack.c.b16 %v3701, %v3695
          %v3996 = vpack.c.b16 %v3708, %v3702
          %v3997 = vpack.c.b16 %v3709, %v3703
          %v3998 = vpack.c.b16 %v3710, %v3704
          %v3999 = vpack.c.b16 %v3711, %v3705
          %v4000 = vpack.c.b16 %v3712, %v3706
          %v4001 = vpack.c.b16 %v3713, %v3707
          %4290 = vmatprep.subr.bf16.mxu0 %v3715
          %4291 = vmatpush1.bf16.msra.mxu0 %v3714
          %4292 = vmatprep.subr.bf16.mxu0 %v3721
          %4293 = vmatpush1.bf16.msra.mxu0 %v3720
          %4294 = vmatprep.subr.bf16.mxu0 %v3727
          %4295 = vmatpush1.bf16.msra.mxu0 %v3726
          %4296 = vmatprep.subr.bf16.mxu0 %v3733
          %4297 = vmatpush1.bf16.msra.mxu0 %v3732
          %4298 = vmatprep.subr.bf16.mxu0 %v3739
          %4299 = vmatpush1.bf16.msra.mxu0 %v3738
          %4300 = vmatprep.subr.bf16.mxu0 %v3745
          %4301 = vmatpush1.bf16.msra.mxu0 %v3744
          %4302 = vmatprep.subr.bf16.mxu0 %v3751
          %4303 = vmatpush1.bf16.msra.mxu0 %v3750
          %4304 = vmatprep.subr.bf16.mxu0 %v3757
          %4305 = vmatpush1.bf16.msra.mxu0 %v3756
          %4306 = vmatprep.subr.bf16.mxu0 %v3763
          %4307 = vmatpush1.bf16.msra.mxu0 %v3762
          %4308 = vmatprep.subr.bf16.mxu0 %v3769
          %4309 = vmatpush1.bf16.msra.mxu0 %v3768
          %4310 = vmatprep.subr.bf16.mxu0 %v3775
          %4311 = vmatpush1.bf16.msra.mxu0 %v3774
          %4312 = vmatprep.subr.bf16.mxu0 %v3781
          %4313 = vmatpush1.bf16.msra.mxu0 %v3780
          %4314 = vmatprep.subr.bf16.mxu0 %v3787
          %4315 = vmatpush1.bf16.msra.mxu0 %v3786
          %4316 = vmatprep.subr.bf16.mxu0 %v3793
          %4317 = vmatpush1.bf16.msra.mxu0 %v3792
          %4318 = vmatprep.subr.bf16.mxu0 %v3799
          %4319 = vmatpush1.bf16.msra.mxu0 %v3798
          %4320 = vmatprep.subr.bf16.mxu0 %v3805
          %4321 = vmatpush1.bf16.msra.mxu0 %v3804
          %4322 = vmatprep.mubr.bf16.mxu0 %v683
          %4323 = vmatmul.mubr.bf16.gmra.mrb[0].mxu0 %v682
          %v4324 = vpop.f32.mrb[0].mxu0
          %v4325 = vadd.f32 %v2823, %v4324
          %v4326 = vpop.f32.mrb[0].mxu0
          %v4327 = vadd.f32 %v2827, %v4326
          %v4328 = vpop.f32.mrb[0].mxu0
          %v4329 = vpop.f32.mrb[0].mxu0
          %4330 = vdwg.mxu0
          %4331 = vmatprep.subr.bf16.mxu0 %v3811
          %4332 = vmatpush1.bf16.msra.mxu0 %v3810
          %4333 = vmatprep.subr.bf16.mxu0 %v3817
          %4334 = vmatpush1.bf16.msra.mxu0 %v3816
          %4335 = vmatprep.subr.bf16.mxu0 %v3823
          %4336 = vmatpush1.bf16.msra.mxu0 %v3822
          %4337 = vmatprep.subr.bf16.mxu0 %v3829
          %4338 = vmatpush1.bf16.msra.mxu0 %v3828
          %4339 = vmatprep.subr.bf16.mxu0 %v3835
          %4340 = vmatpush1.bf16.msra.mxu0 %v3834
          %4341 = vmatprep.subr.bf16.mxu0 %v3841
          %4342 = vmatpush1.bf16.msra.mxu0 %v3840
          %4343 = vmatprep.subr.bf16.mxu0 %v3847
          %4344 = vmatpush1.bf16.msra.mxu0 %v3846
          %4345 = vmatprep.subr.bf16.mxu0 %v3853
          %4346 = vmatpush1.bf16.msra.mxu0 %v3852
          %4347 = vmatprep.subr.bf16.mxu0 %v3859
          %4348 = vmatpush1.bf16.msra.mxu0 %v3858
          %4349 = vmatprep.subr.bf16.mxu0 %v3865
          %4350 = vmatpush1.bf16.msra.mxu0 %v3864
          %4351 = vmatprep.subr.bf16.mxu0 %v3871
          %4352 = vmatpush1.bf16.msra.mxu0 %v3870
          %4353 = vmatprep.subr.bf16.mxu0 %v3877
          %4354 = vmatpush1.bf16.msra.mxu0 %v3876
          %4355 = vmatprep.subr.bf16.mxu0 %v3883
          %4356 = vmatpush1.bf16.msra.mxu0 %v3882
          %4357 = vmatprep.subr.bf16.mxu0 %v3889
          %4358 = vmatpush1.bf16.msra.mxu0 %v3888
          %4359 = vmatprep.subr.bf16.mxu0 %v3895
          %4360 = vmatpush1.bf16.msra.mxu0 %v3894
          %4361 = vmatprep.subr.bf16.mxu0 %v3901
          %4362 = vmatpush1.bf16.msra.mxu0 %v3900
          %4363 = vmatprep.mubr.bf16.mxu0 %v685
          %4364 = vmatmul.mubr.bf16.gmra.mrb[0].mxu0 %v684
          %v4365 = vpop.f32.mrb[0].mxu0
          %v4366 = vadd.f32 %v4325, %v4365
          %v4367 = vpop.f32.mrb[0].mxu0
          %v4368 = vadd.f32 %v4327, %v4367
          %v4369 = vpop.f32.mrb[0].mxu0
          %v4370 = vpop.f32.mrb[0].mxu0
          %4371 = vdwg.mxu0
          %4372 = vmatprep.subr.bf16.mxu0 %v3907
          %4373 = vmatpush1.bf16.msra.mxu0 %v3906
          %4374 = vmatprep.subr.bf16.mxu0 %v3913
          %4375 = vmatpush1.bf16.msra.mxu0 %v3912
          %4376 = vmatprep.subr.bf16.mxu0 %v3919
          %4377 = vmatpush1.bf16.msra.mxu0 %v3918
          %4378 = vmatprep.subr.bf16.mxu0 %v3925
          %4379 = vmatpush1.bf16.msra.mxu0 %v3924
          %4380 = vmatprep.subr.bf16.mxu0 %v3931
          %4381 = vmatpush1.bf16.msra.mxu0 %v3930
          %4382 = vmatprep.subr.bf16.mxu0 %v3937
          %4383 = vmatpush1.bf16.msra.mxu0 %v3936
          %4384 = vmatprep.subr.bf16.mxu0 %v3943
          %4385 = vmatpush1.bf16.msra.mxu0 %v3942
          %4386 = vmatprep.subr.bf16.mxu0 %v3949
          %4387 = vmatpush1.bf16.msra.mxu0 %v3948
          %4388 = vmatprep.subr.bf16.mxu0 %v3955
          %4389 = vmatpush1.bf16.msra.mxu0 %v3954
          %4390 = vmatprep.subr.bf16.mxu0 %v3961
          %4391 = vmatpush1.bf16.msra.mxu0 %v3960
          %4392 = vmatprep.subr.bf16.mxu0 %v3967
          %4393 = vmatpush1.bf16.msra.mxu0 %v3966
          %4394 = vmatprep.subr.bf16.mxu0 %v3973
          %4395 = vmatpush1.bf16.msra.mxu0 %v3972
          %4396 = vmatprep.subr.bf16.mxu0 %v3979
          %4397 = vmatpush1.bf16.msra.mxu0 %v3978
          %4398 = vmatprep.subr.bf16.mxu0 %v3985
          %4399 = vmatpush1.bf16.msra.mxu0 %v3984
          %4400 = vmatprep.subr.bf16.mxu0 %v3991
          %4401 = vmatpush1.bf16.msra.mxu0 %v3990
          %4402 = vmatprep.subr.bf16.mxu0 %v3997
          %4403 = vmatpush1.bf16.msra.mxu0 %v3996
          %4404 = vmatprep.mubr.bf16.mxu0 %v687
          %4405 = vmatmul.mubr.bf16.gmra.mrb[0].mxu0 %v686
          %v4406 = vpop.f32.mrb[0].mxu0
          %v4407 = vadd.f32 %v4366, %v4406
          %v4408 = vpop.f32.mrb[0].mxu0
          %v4409 = vadd.f32 %v4368, %v4408
          %v4410 = vpop.f32.mrb[0].mxu0
          %v4411 = vpop.f32.mrb[0].mxu0
          %4412 = vdwg.mxu0
          %4413 = vmatprep.subr.bf16.mxu0 %v3717
          %4414 = vmatpush1.bf16.msra.mxu0 %v3716
          %4415 = vmatprep.subr.bf16.mxu0 %v3723
          %4416 = vmatpush1.bf16.msra.mxu0 %v3722
          %4417 = vmatprep.subr.bf16.mxu0 %v3729
          %4418 = vmatpush1.bf16.msra.mxu0 %v3728
          %4419 = vmatprep.subr.bf16.mxu0 %v3735
          %4420 = vmatpush1.bf16.msra.mxu0 %v3734
          %4421 = vmatprep.subr.bf16.mxu0 %v3741
          %4422 = vmatpush1.bf16.msra.mxu0 %v3740
          %4423 = vmatprep.subr.bf16.mxu0 %v3747
          %4424 = vmatpush1.bf16.msra.mxu0 %v3746
          %4425 = vmatprep.subr.bf16.mxu0 %v3753
          %4426 = vmatpush1.bf16.msra.mxu0 %v3752
          %4427 = vmatprep.subr.bf16.mxu0 %v3759
          %4428 = vmatpush1.bf16.msra.mxu0 %v3758
          %4429 = vmatprep.subr.bf16.mxu0 %v3765
          %4430 = vmatpush1.bf16.msra.mxu0 %v3764
          %4431 = vmatprep.subr.bf16.mxu0 %v3771
          %4432 = vmatpush1.bf16.msra.mxu0 %v3770
          %4433 = vmatprep.subr.bf16.mxu0 %v3777
          %4434 = vmatpush1.bf16.msra.mxu0 %v3776
          %4435 = vmatprep.subr.bf16.mxu0 %v3783
          %4436 = vmatpush1.bf16.msra.mxu0 %v3782
          %4437 = vmatprep.subr.bf16.mxu0 %v3789
          %4438 = vmatpush1.bf16.msra.mxu0 %v3788
          %4439 = vmatprep.subr.bf16.mxu0 %v3795
          %4440 = vmatpush1.bf16.msra.mxu0 %v3794
          %4441 = vmatprep.subr.bf16.mxu0 %v3801
          %4442 = vmatpush1.bf16.msra.mxu0 %v3800
          %4443 = vmatprep.subr.bf16.mxu0 %v3807
          %4444 = vmatpush1.bf16.msra.mxu0 %v3806
          %4445 = vmatprep.mubr.bf16.mxu0 %v683
          %4446 = vmatmul.mubr.bf16.gmra.mrb[0].mxu0 %v682
          %v4447 = vpop.f32.mrb[0].mxu0
          %v4448 = vadd.f32 %v2831, %v4447
          %v4449 = vpop.f32.mrb[0].mxu0
          %v4450 = vadd.f32 %v2835, %v4449
          %v4451 = vpop.f32.mrb[0].mxu0
          %v4452 = vpop.f32.mrb[0].mxu0
          %4453 = vdwg.mxu0
          %4454 = vmatprep.subr.bf16.mxu0 %v3813
          %4455 = vmatpush1.bf16.msra.mxu0 %v3812
          %4456 = vmatprep.subr.bf16.mxu0 %v3819
          %4457 = vmatpush1.bf16.msra.mxu0 %v3818
          %4458 = vmatprep.subr.bf16.mxu0 %v3825
          %4459 = vmatpush1.bf16.msra.mxu0 %v3824
          %4460 = vmatprep.subr.bf16.mxu0 %v3831
          %4461 = vmatpush1.bf16.msra.mxu0 %v3830
          %4462 = vmatprep.subr.bf16.mxu0 %v3837
          %4463 = vmatpush1.bf16.msra.mxu0 %v3836
          %4464 = vmatprep.subr.bf16.mxu0 %v3843
          %4465 = vmatpush1.bf16.msra.mxu0 %v3842
          %4466 = vmatprep.subr.bf16.mxu0 %v3849
          %4467 = vmatpush1.bf16.msra.mxu0 %v3848
          %4468 = vmatprep.subr.bf16.mxu0 %v3855
          %4469 = vmatpush1.bf16.msra.mxu0 %v3854
          %4470 = vmatprep.subr.bf16.mxu0 %v3861
          %4471 = vmatpush1.bf16.msra.mxu0 %v3860
          %4472 = vmatprep.subr.bf16.mxu0 %v3867
          %4473 = vmatpush1.bf16.msra.mxu0 %v3866
          %4474 = vmatprep.subr.bf16.mxu0 %v3873
          %4475 = vmatpush1.bf16.msra.mxu0 %v3872
          %4476 = vmatprep.subr.bf16.mxu0 %v3879
          %4477 = vmatpush1.bf16.msra.mxu0 %v3878
          %4478 = vmatprep.subr.bf16.mxu0 %v3885
          %4479 = vmatpush1.bf16.msra.mxu0 %v3884
          %4480 = vmatprep.subr.bf16.mxu0 %v3891
          %4481 = vmatpush1.bf16.msra.mxu0 %v3890
          %4482 = vmatprep.subr.bf16.mxu0 %v3897
          %4483 = vmatpush1.bf16.msra.mxu0 %v3896
          %4484 = vmatprep.subr.bf16.mxu0 %v3903
          %4485 = vmatpush1.bf16.msra.mxu0 %v3902
          %4486 = vmatprep.mubr.bf16.mxu0 %v685
          %4487 = vmatmul.mubr.bf16.gmra.mrb[0].mxu0 %v684
          %v4488 = vpop.f32.mrb[0].mxu0
          %v4489 = vadd.f32 %v4448, %v4488
          %v4490 = vpop.f32.mrb[0].mxu0
          %v4491 = vadd.f32 %v4450, %v4490
          %v4492 = vpop.f32.mrb[0].mxu0
          %v4493 = vpop.f32.mrb[0].mxu0
          %4494 = vdwg.mxu0
          %4495 = vmatprep.subr.bf16.mxu0 %v3909
          %4496 = vmatpush1.bf16.msra.mxu0 %v3908
          %4497 = vmatprep.subr.bf16.mxu0 %v3915
          %4498 = vmatpush1.bf16.msra.mxu0 %v3914
          %4499 = vmatprep.subr.bf16.mxu0 %v3921
          %4500 = vmatpush1.bf16.msra.mxu0 %v3920
          %4501 = vmatprep.subr.bf16.mxu0 %v3927
          %4502 = vmatpush1.bf16.msra.mxu0 %v3926
          %4503 = vmatprep.subr.bf16.mxu0 %v3933
          %4504 = vmatpush1.bf16.msra.mxu0 %v3932
          %4505 = vmatprep.subr.bf16.mxu0 %v3939
          %4506 = vmatpush1.bf16.msra.mxu0 %v3938
          %4507 = vmatprep.subr.bf16.mxu0 %v3945
          %4508 = vmatpush1.bf16.msra.mxu0 %v3944
          %4509 = vmatprep.subr.bf16.mxu0 %v3951
          %4510 = vmatpush1.bf16.msra.mxu0 %v3950
          %4511 = vmatprep.subr.bf16.mxu0 %v3957
          %4512 = vmatpush1.bf16.msra.mxu0 %v3956
          %4513 = vmatprep.subr.bf16.mxu0 %v3963
          %4514 = vmatpush1.bf16.msra.mxu0 %v3962
          %4515 = vmatprep.subr.bf16.mxu0 %v3969
          %4516 = vmatpush1.bf16.msra.mxu0 %v3968
          %4517 = vmatprep.subr.bf16.mxu0 %v3975
          %4518 = vmatpush1.bf16.msra.mxu0 %v3974
          %4519 = vmatprep.subr.bf16.mxu0 %v3981
          %4520 = vmatpush1.bf16.msra.mxu0 %v3980
          %4521 = vmatprep.subr.bf16.mxu0 %v3987
          %4522 = vmatpush1.bf16.msra.mxu0 %v3986
          %4523 = vmatprep.subr.bf16.mxu0 %v3993
          %4524 = vmatpush1.bf16.msra.mxu0 %v3992
          %4525 = vmatprep.subr.bf16.mxu0 %v3999
          %4526 = vmatpush1.bf16.msra.mxu0 %v3998
          %4527 = vmatprep.mubr.bf16.mxu0 %v687
          %4528 = vmatmul.mubr.bf16.gmra.mrb[0].mxu0 %v686
          %v4529 = vpop.f32.mrb[0].mxu0
          %v4530 = vadd.f32 %v4489, %v4529
          %v4531 = vpop.f32.mrb[0].mxu0
          %v4532 = vadd.f32 %v4491, %v4531
          %v4533 = vpop.f32.mrb[0].mxu0
          %v4534 = vpop.f32.mrb[0].mxu0
          %4535 = vdwg.mxu0
          %4536 = vmatprep.subr.bf16.mxu0 %v3719
          %4537 = vmatpush1.bf16.msra.mxu0 %v3718
          %4538 = vmatprep.subr.bf16.mxu0 %v3725
          %4539 = vmatpush1.bf16.msra.mxu0 %v3724
          %4540 = vmatprep.subr.bf16.mxu0 %v3731
          %4541 = vmatpush1.bf16.msra.mxu0 %v3730
          %4542 = vmatprep.subr.bf16.mxu0 %v3737
          %4543 = vmatpush1.bf16.msra.mxu0 %v3736
          %4544 = vmatprep.subr.bf16.mxu0 %v3743
          %4545 = vmatpush1.bf16.msra.mxu0 %v3742
          %4546 = vmatprep.subr.bf16.mxu0 %v3749
          %4547 = vmatpush1.bf16.msra.mxu0 %v3748
          %4548 = vmatprep.subr.bf16.mxu0 %v3755
          %4549 = vmatpush1.bf16.msra.mxu0 %v3754
          %4550 = vmatprep.subr.bf16.mxu0 %v3761
          %4551 = vmatpush1.bf16.msra.mxu0 %v3760
          %4552 = vmatprep.subr.bf16.mxu0 %v3767
          %4553 = vmatpush1.bf16.msra.mxu0 %v3766
          %4554 = vmatprep.subr.bf16.mxu0 %v3773
          %4555 = vmatpush1.bf16.msra.mxu0 %v3772
          %4556 = vmatprep.subr.bf16.mxu0 %v3779
          %4557 = vmatpush1.bf16.msra.mxu0 %v3778
          %4558 = vmatprep.subr.bf16.mxu0 %v3785
          %4559 = vmatpush1.bf16.msra.mxu0 %v3784
          %4560 = vmatprep.subr.bf16.mxu0 %v3791
          %4561 = vmatpush1.bf16.msra.mxu0 %v3790
          %4562 = vmatprep.subr.bf16.mxu0 %v3797
          %4563 = vmatpush1.bf16.msra.mxu0 %v3796
          %4564 = vmatprep.subr.bf16.mxu0 %v3803
          %4565 = vmatpush1.bf16.msra.mxu0 %v3802
          %4566 = vmatprep.subr.bf16.mxu0 %v3809
          %4567 = vmatpush1.bf16.msra.mxu0 %v3808
          %4568 = vmatprep.mubr.bf16.mxu0 %v683
          %4569 = vmatmul.mubr.bf16.gmra.mrb[0].mxu0 %v682
          %v4570 = vpop.f32.mrb[0].mxu0
          %v4571 = vadd.f32 %v2839, %v4570
          %v4572 = vpop.f32.mrb[0].mxu0
          %v4573 = vadd.f32 %v2843, %v4572
          %v4574 = vpop.f32.mrb[0].mxu0
          %v4575 = vpop.f32.mrb[0].mxu0
          %4576 = vdwg.mxu0
          %4577 = vmatprep.subr.bf16.mxu0 %v3815
          %4578 = vmatpush1.bf16.msra.mxu0 %v3814
          %4579 = vmatprep.subr.bf16.mxu0 %v3821
          %4580 = vmatpush1.bf16.msra.mxu0 %v3820
          %4581 = vmatprep.subr.bf16.mxu0 %v3827
          %4582 = vmatpush1.bf16.msra.mxu0 %v3826
          %4583 = vmatprep.subr.bf16.mxu0 %v3833
          %4584 = vmatpush1.bf16.msra.mxu0 %v3832
          %4585 = vmatprep.subr.bf16.mxu0 %v3839
          %4586 = vmatpush1.bf16.msra.mxu0 %v3838
          %4587 = vmatprep.subr.bf16.mxu0 %v3845
          %4588 = vmatpush1.bf16.msra.mxu0 %v3844
          %4589 = vmatprep.subr.bf16.mxu0 %v3851
          %4590 = vmatpush1.bf16.msra.mxu0 %v3850
          %4591 = vmatprep.subr.bf16.mxu0 %v3857
          %4592 = vmatpush1.bf16.msra.mxu0 %v3856
          %4593 = vmatprep.subr.bf16.mxu0 %v3863
          %4594 = vmatpush1.bf16.msra.mxu0 %v3862
          %4595 = vmatprep.subr.bf16.mxu0 %v3869
          %4596 = vmatpush1.bf16.msra.mxu0 %v3868
          %4597 = vmatprep.subr.bf16.mxu0 %v3875
          %4598 = vmatpush1.bf16.msra.mxu0 %v3874
          %4599 = vmatprep.subr.bf16.mxu0 %v3881
          %4600 = vmatpush1.bf16.msra.mxu0 %v3880
          %4601 = vmatprep.subr.bf16.mxu0 %v3887
          %4602 = vmatpush1.bf16.msra.mxu0 %v3886
          %4603 = vmatprep.subr.bf16.mxu0 %v3893
          %4604 = vmatpush1.bf16.msra.mxu0 %v3892
          %4605 = vmatprep.subr.bf16.mxu0 %v3899
          %4606 = vmatpush1.bf16.msra.mxu0 %v3898
          %4607 = vmatprep.subr.bf16.mxu0 %v3905
          %4608 = vmatpush1.bf16.msra.mxu0 %v3904
          %4609 = vmatprep.mubr.bf16.mxu0 %v685
          %4610 = vmatmul.mubr.bf16.gmra.mrb[0].mxu0 %v684
          %v4611 = vpop.f32.mrb[0].mxu0
          %v4612 = vadd.f32 %v4571, %v4611
          %v4613 = vpop.f32.mrb[0].mxu0
          %v4614 = vadd.f32 %v4573, %v4613
          %v4615 = vpop.f32.mrb[0].mxu0
          %v4616 = vpop.f32.mrb[0].mxu0
          %4617 = vdwg.mxu0
          %4618 = vmatprep.subr.bf16.mxu0 %v3911
          %4619 = vmatpush1.bf16.msra.mxu0 %v3910
          %4620 = vmatprep.subr.bf16.mxu0 %v3917
          %4621 = vmatpush1.bf16.msra.mxu0 %v3916
          %4622 = vmatprep.subr.bf16.mxu0 %v3923
          %4623 = vmatpush1.bf16.msra.mxu0 %v3922
          %4624 = vmatprep.subr.bf16.mxu0 %v3929
          %4625 = vmatpush1.bf16.msra.mxu0 %v3928
          %4626 = vmatprep.subr.bf16.mxu0 %v3935
          %4627 = vmatpush1.bf16.msra.mxu0 %v3934
          %4628 = vmatprep.subr.bf16.mxu0 %v3941
          %4629 = vmatpush1.bf16.msra.mxu0 %v3940
          %4630 = vmatprep.subr.bf16.mxu0 %v3947
          %4631 = vmatpush1.bf16.msra.mxu0 %v3946
          %4632 = vmatprep.subr.bf16.mxu0 %v3953
          %4633 = vmatpush1.bf16.msra.mxu0 %v3952
          %4634 = vmatprep.subr.bf16.mxu0 %v3959
          %4635 = vmatpush1.bf16.msra.mxu0 %v3958
          %4636 = vmatprep.subr.bf16.mxu0 %v3965
          %4637 = vmatpush1.bf16.msra.mxu0 %v3964
          %4638 = vmatprep.subr.bf16.mxu0 %v3971
          %4639 = vmatpush1.bf16.msra.mxu0 %v3970
          %4640 = vmatprep.subr.bf16.mxu0 %v3977
          %4641 = vmatpush1.bf16.msra.mxu0 %v3976
          %4642 = vmatprep.subr.bf16.mxu0 %v3983
          %4643 = vmatpush1.bf16.msra.mxu0 %v3982
          %4644 = vmatprep.subr.bf16.mxu0 %v3989
          %4645 = vmatpush1.bf16.msra.mxu0 %v3988
          %4646 = vmatprep.subr.bf16.mxu0 %v3995
          %4647 = vmatpush1.bf16.msra.mxu0 %v3994
          %4648 = vmatprep.subr.bf16.mxu0 %v4001
          %4649 = vmatpush1.bf16.msra.mxu0 %v4000
          %4650 = vmatprep.mubr.bf16.mxu0 %v687
          %4651 = vmatmul.mubr.bf16.gmra.mrb[0].mxu0 %v686
          %v4652 = vpop.f32.mrb[0].mxu0
          %v4653 = vadd.f32 %v4612, %v4652
          %v4654 = vpop.f32.mrb[0].mxu0
          %v4655 = vadd.f32 %v4614, %v4654
          %v4656 = vpop.f32.mrb[0].mxu0
          %v4657 = vpop.f32.mrb[0].mxu0
          %4658 = vdwg.mxu0
          %v4659 = vpack.c.bf16 %v4407, %v4407
          %v4660 = vpack.c.bf16 %v4409, %v4409
          %v4661 = vpack.c.bf16 %v4530, %v4530
          %v4662 = vpack.c.bf16 %v4532, %v4532
          %v4663 = vpack.c.bf16 %v4653, %v4653
          %v4664 = vpack.c.bf16 %v4655, %v4655
          %v4671 = vunpack.c.l.b16 %v4659
          %v4672 = vunpack.c.l.b16 %v4660
          %v4673 = vunpack.c.l.b16 %v4661
          %v4674 = vunpack.c.l.b16 %v4662
          %v4675 = vunpack.c.l.b16 %v4663
          %v4676 = vunpack.c.l.b16 %v4664
          %v4677 = vpack.c.b16 %v4672, %v4671
          %v4678 = vpack.c.b16 %v4674, %v4673
          %v4679 = vpack.c.b16 %v4676, %v4675
          %4683 = vst [vmem:[#allocation3] sm:$0xff] %v4677
          %4684 = vst [vmem:[#allocation3 + $0x8] sm:$0xff] %v4678
          %4685 = vst [vmem:[#allocation3 + $0x10] sm:$0xff] %v4679
        $region60: #{gathered_attention.1} parent=55 // pred_fallthru
          _
        %s4686 = smul.u32 %s28, 8
        %s4687 = sshra.s32 %s4686, 3
        %s4688 = sand.u32 %s4686, 7
        %s4689 = smul.u32 %s4687, 6
        %s4690 = smul.addr %s4689, 4
        %s4691 = scalar_lea.vmem %s344, %s4690
        %v4692 = vld [vmem:[%s4691] sm:$0xff]
        %v4693 = vld [vmem:[%s4691 + $0x8] sm:$0xff]
        %v4694 = vld [vmem:[%s4691 + $0x10] sm:$0xff]
        %v4695 = vld [vmem:[%s1] sm:$0xff]
        %v4696 = vld [vmem:[%s1 + $0x8] sm:$0xff]
        %v4697 = vld [vmem:[%s1 + $0x10] sm:$0xff]
        %v4698 = vld [vmem:[%s1 + $0x18] sm:$0xff]
        %v4699 = vld [vmem:[%s1 + $0x20] sm:$0xff]
        %v4700 = vld [vmem:[%s1 + $0x28] sm:$0xff]
        %v4701 = vld [vmem:[%s1 + $0x30] sm:$0xff]
        %v4702 = vld [vmem:[%s1 + $0x38] sm:$0xff]
        %v4703 = vld [vmem:[%s1 + $0x40] sm:$0xff]
        %v4704 = vld [vmem:[%s1 + $0x48] sm:$0xff]
        %v4705 = vld [vmem:[%s1 + $0x50] sm:$0xff]
        %v4706 = vld [vmem:[%s1 + $0x58] sm:$0xff]
        %v4707 = vld [vmem:[%s1 + $0x60] sm:$0xff]
        %v4708 = vld [vmem:[%s1 + $0x68] sm:$0xff]
        %v4709 = vld [vmem:[%s1 + $0x70] sm:$0xff]
        %v4710 = vld [vmem:[%s1 + $0x78] sm:$0xff]
        %v4711 = vld [vmem:[%s1 + $0x80] sm:$0xff]
        %v4712 = vld [vmem:[%s1 + $0x88] sm:$0xff]
        %v4713 = vld [vmem:[%s1 + $0x90] sm:$0xff]
        %v4714 = vld [vmem:[%s1 + $0x98] sm:$0xff]
        %v4715 = vld [vmem:[%s1 + $0xa0] sm:$0xff]
        %v4716 = vld [vmem:[%s1 + $0xa8] sm:$0xff]
        %v4717 = vld [vmem:[%s1 + $0xb0] sm:$0xff]
        %v4718 = vld [vmem:[%s1 + $0xb8] sm:$0xff]
        %v4719 = vld [vmem:[%s1 + $0xc0] sm:$0xff]
        %v4720 = vld [vmem:[%s1 + $0xc8] sm:$0xff]
        %v4721 = vld [vmem:[%s1 + $0xd0] sm:$0xff]
        %v4722 = vld [vmem:[%s1 + $0xd8] sm:$0xff]
        %v4723 = vld [vmem:[%s1 + $0xe0] sm:$0xff]
        %v4724 = vld [vmem:[%s1 + $0xe8] sm:$0xff]
        %v4725 = vld [vmem:[%s1 + $0xf0] sm:$0xff]
        %v4726 = vld [vmem:[%s1 + $0xf8] sm:$0xff]
        %v4727 = vld [vmem:[%s1 + $0x100] sm:$0xff]
        %v4728 = vld [vmem:[%s1 + $0x108] sm:$0xff]
        %v4729 = vld [vmem:[%s1 + $0x110] sm:$0xff]
        %v4730 = vld [vmem:[%s1 + $0x118] sm:$0xff]
        %v4731 = vld [vmem:[%s1 + $0x120] sm:$0xff]
        %v4732 = vld [vmem:[%s1 + $0x128] sm:$0xff]
        %v4733 = vld [vmem:[%s1 + $0x130] sm:$0xff]
        %v4734 = vld [vmem:[%s1 + $0x138] sm:$0xff]
        %v4735 = vld [vmem:[%s1 + $0x140] sm:$0xff]
        %v4736 = vld [vmem:[%s1 + $0x148] sm:$0xff]
        %v4737 = vld [vmem:[%s1 + $0x150] sm:$0xff]
        %v4738 = vld [vmem:[%s1 + $0x158] sm:$0xff]
        %v4739 = vld [vmem:[%s1 + $0x160] sm:$0xff]
        %v4740 = vld [vmem:[%s1 + $0x168] sm:$0xff]
        %v4741 = vld [vmem:[%s1 + $0x170] sm:$0xff]
        %v4742 = vld [vmem:[%s1 + $0x178] sm:$0xff]
        %v4743 = vld [vmem:[%s1 + $0x180] sm:$0xff]
        %v4744 = vld [vmem:[%s1 + $0x188] sm:$0xff]
        %v4745 = vld [vmem:[%s1 + $0x190] sm:$0xff]
        %v4746 = vld [vmem:[%s1 + $0x198] sm:$0xff]
        %v4747 = vld [vmem:[%s1 + $0x1a0] sm:$0xff]
        %v4748 = vld [vmem:[%s1 + $0x1a8] sm:$0xff]
        %v4749 = vld [vmem:[%s1 + $0x1b0] sm:$0xff]
        %v4750 = vld [vmem:[%s1 + $0x1b8] sm:$0xff]
        %v4751 = vld [vmem:[%s1 + $0x1c0] sm:$0xff]
        %v4752 = vld [vmem:[%s1 + $0x1c8] sm:$0xff]
        %v4753 = vld [vmem:[%s1 + $0x1d0] sm:$0xff]
        %v4754 = vld [vmem:[%s1 + $0x1d8] sm:$0xff]
        %v4755 = vld [vmem:[%s1 + $0x1e0] sm:$0xff]
        %v4756 = vld [vmem:[%s1 + $0x1e8] sm:$0xff]
        %v4757 = vld [vmem:[%s1 + $0x1f0] sm:$0xff]
        %v4758 = vld [vmem:[%s1 + $0x1f8] sm:$0xff]
        %v4759 = vld [vmem:[%s1 + $0x200] sm:$0xff]
        %v4760 = vld [vmem:[%s1 + $0x208] sm:$0xff]
        %v4761 = vld [vmem:[%s1 + $0x210] sm:$0xff]
        %v4762 = vld [vmem:[%s1 + $0x218] sm:$0xff]
        %v4763 = vld [vmem:[%s1 + $0x220] sm:$0xff]
        %v4764 = vld [vmem:[%s1 + $0x228] sm:$0xff]
        %v4765 = vld [vmem:[%s1 + $0x230] sm:$0xff]
        %v4766 = vld [vmem:[%s1 + $0x238] sm:$0xff]
        %v4767 = vld [vmem:[%s1 + $0x240] sm:$0xff]
        %v4768 = vld [vmem:[%s1 + $0x248] sm:$0xff]
        %v4769 = vld [vmem:[%s1 + $0x250] sm:$0xff]
        %v4770 = vld [vmem:[%s1 + $0x258] sm:$0xff]
        %v4771 = vld [vmem:[%s1 + $0x260] sm:$0xff]
        %v4772 = vld [vmem:[%s1 + $0x268] sm:$0xff]
        %v4773 = vld [vmem:[%s1 + $0x270] sm:$0xff]
        %v4774 = vld [vmem:[%s1 + $0x278] sm:$0xff]
        %v4775 = vld [vmem:[%s1 + $0x280] sm:$0xff]
        %v4776 = vld [vmem:[%s1 + $0x288] sm:$0xff]
        %v4777 = vld [vmem:[%s1 + $0x290] sm:$0xff]
        %v4778 = vld [vmem:[%s1 + $0x298] sm:$0xff]
        %v4779 = vld [vmem:[%s1 + $0x2a0] sm:$0xff]
        %v4780 = vld [vmem:[%s1 + $0x2a8] sm:$0xff]
        %v4781 = vld [vmem:[%s1 + $0x2b0] sm:$0xff]
        %v4782 = vld [vmem:[%s1 + $0x2b8] sm:$0xff]
        %v4783 = vld [vmem:[%s1 + $0x2c0] sm:$0xff]
        %v4784 = vld [vmem:[%s1 + $0x2c8] sm:$0xff]
        %v4785 = vld [vmem:[%s1 + $0x2d0] sm:$0xff]
        %v4786 = vld [vmem:[%s1 + $0x2d8] sm:$0xff]
        %v4787 = vld [vmem:[%s1 + $0x2e0] sm:$0xff]
        %v4788 = vld [vmem:[%s1 + $0x2e8] sm:$0xff]
        %v4789 = vld [vmem:[%s1 + $0x2f0] sm:$0xff]
        %v4790 = vld [vmem:[%s1 + $0x2f8] sm:$0xff]
        %v4791 = vld [vmem:[%s1 + $0x300] sm:$0xff]
        %v4792 = vld [vmem:[%s1 + $0x308] sm:$0xff]
        %v4793 = vld [vmem:[%s1 + $0x310] sm:$0xff]
        %v4794 = vld [vmem:[%s1 + $0x318] sm:$0xff]
        %v4795 = vld [vmem:[%s1 + $0x320] sm:$0xff]
        %v4796 = vld [vmem:[%s1 + $0x328] sm:$0xff]
        %v4797 = vld [vmem:[%s1 + $0x330] sm:$0xff]
        %v4798 = vld [vmem:[%s1 + $0x338] sm:$0xff]
        %v4799 = vld [vmem:[%s1 + $0x340] sm:$0xff]
        %v4800 = vld [vmem:[%s1 + $0x348] sm:$0xff]
        %v4801 = vld [vmem:[%s1 + $0x350] sm:$0xff]
        %v4802 = vld [vmem:[%s1 + $0x358] sm:$0xff]
        %v4803 = vld [vmem:[%s1 + $0x360] sm:$0xff]
        %v4804 = vld [vmem:[%s1 + $0x368] sm:$0xff]
        %v4805 = vld [vmem:[%s1 + $0x370] sm:$0xff]
        %v4806 = vld [vmem:[%s1 + $0x378] sm:$0xff]
        %v4807 = vld [vmem:[%s1 + $0x380] sm:$0xff]
        %v4808 = vld [vmem:[%s1 + $0x388] sm:$0xff]
        %v4809 = vld [vmem:[%s1 + $0x390] sm:$0xff]
        %v4810 = vld [vmem:[%s1 + $0x398] sm:$0xff]
        %v4811 = vld [vmem:[%s1 + $0x3a0] sm:$0xff]
        %v4812 = vld [vmem:[%s1 + $0x3a8] sm:$0xff]
        %v4813 = vld [vmem:[%s1 + $0x3b0] sm:$0xff]
        %v4814 = vld [vmem:[%s1 + $0x3b8] sm:$0xff]
        %v4815 = vld [vmem:[%s1 + $0x3c0] sm:$0xff]
        %v4816 = vld [vmem:[%s1 + $0x3c8] sm:$0xff]
        %v4817 = vld [vmem:[%s1 + $0x3d0] sm:$0xff]
        %v4818 = vld [vmem:[%s1 + $0x3d8] sm:$0xff]
        %v4819 = vld [vmem:[%s1 + $0x3e0] sm:$0xff]
        %v4820 = vld [vmem:[%s1 + $0x3e8] sm:$0xff]
        %v4821 = vld [vmem:[%s1 + $0x3f0] sm:$0xff]
        %v4822 = vld [vmem:[%s1 + $0x3f8] sm:$0xff]
        %v4823 = vld [vmem:[%s1 + $0x400] sm:$0xff]
        %v4824 = vld [vmem:[%s1 + $0x408] sm:$0xff]
        %v4825 = vld [vmem:[%s1 + $0x410] sm:$0xff]
        %v4826 = vld [vmem:[%s1 + $0x418] sm:$0xff]
        %v4827 = vld [vmem:[%s1 + $0x420] sm:$0xff]
        %v4828 = vld [vmem:[%s1 + $0x428] sm:$0xff]
        %v4829 = vld [vmem:[%s1 + $0x430] sm:$0xff]
        %v4830 = vld [vmem:[%s1 + $0x438] sm:$0xff]
        %v4831 = vld [vmem:[%s1 + $0x440] sm:$0xff]
        %v4832 = vld [vmem:[%s1 + $0x448] sm:$0xff]
        %v4833 = vld [vmem:[%s1 + $0x450] sm:$0xff]
        %v4834 = vld [vmem:[%s1 + $0x458] sm:$0xff]
        %v4835 = vld [vmem:[%s1 + $0x460] sm:$0xff]
        %v4836 = vld [vmem:[%s1 + $0x468] sm:$0xff]
        %v4837 = vld [vmem:[%s1 + $0x470] sm:$0xff]
        %v4838 = vld [vmem:[%s1 + $0x478] sm:$0xff]
        %v4839 = vld [vmem:[%s1 + $0x480] sm:$0xff]
        %v4840 = vld [vmem:[%s1 + $0x488] sm:$0xff]
        %v4841 = vld [vmem:[%s1 + $0x490] sm:$0xff]
        %v4842 = vld [vmem:[%s1 + $0x498] sm:$0xff]
        %v4843 = vld [vmem:[%s1 + $0x4a0] sm:$0xff]
        %v4844 = vld [vmem:[%s1 + $0x4a8] sm:$0xff]
        %v4845 = vld [vmem:[%s1 + $0x4b0] sm:$0xff]
        %v4846 = vld [vmem:[%s1 + $0x4b8] sm:$0xff]
        %v4847 = vld [vmem:[%s1 + $0x4c0] sm:$0xff]
        %v4848 = vld [vmem:[%s1 + $0x4c8] sm:$0xff]
        %v4849 = vld [vmem:[%s1 + $0x4d0] sm:$0xff]
        %v4850 = vld [vmem:[%s1 + $0x4d8] sm:$0xff]
        %v4851 = vld [vmem:[%s1 + $0x4e0] sm:$0xff]
        %v4852 = vld [vmem:[%s1 + $0x4e8] sm:$0xff]
        %v4853 = vld [vmem:[%s1 + $0x4f0] sm:$0xff]
        %v4854 = vld [vmem:[%s1 + $0x4f8] sm:$0xff]
        %v4855 = vld [vmem:[%s1 + $0x500] sm:$0xff]
        %v4856 = vld [vmem:[%s1 + $0x508] sm:$0xff]
        %v4857 = vld [vmem:[%s1 + $0x510] sm:$0xff]
        %v4858 = vld [vmem:[%s1 + $0x518] sm:$0xff]
        %v4859 = vld [vmem:[%s1 + $0x520] sm:$0xff]
        %v4860 = vld [vmem:[%s1 + $0x528] sm:$0xff]
        %v4861 = vld [vmem:[%s1 + $0x530] sm:$0xff]
        %v4862 = vld [vmem:[%s1 + $0x538] sm:$0xff]
        %v4863 = vld [vmem:[%s1 + $0x540] sm:$0xff]
        %v4864 = vld [vmem:[%s1 + $0x548] sm:$0xff]
        %v4865 = vld [vmem:[%s1 + $0x550] sm:$0xff]
        %v4866 = vld [vmem:[%s1 + $0x558] sm:$0xff]
        %v4867 = vld [vmem:[%s1 + $0x560] sm:$0xff]
        %v4868 = vld [vmem:[%s1 + $0x568] sm:$0xff]
        %v4869 = vld [vmem:[%s1 + $0x570] sm:$0xff]
        %v4870 = vld [vmem:[%s1 + $0x578] sm:$0xff]
        %v4871 = vld [vmem:[%s1 + $0x580] sm:$0xff]
        %v4872 = vld [vmem:[%s1 + $0x588] sm:$0xff]
        %v4873 = vld [vmem:[%s1 + $0x590] sm:$0xff]
        %v4874 = vld [vmem:[%s1 + $0x598] sm:$0xff]
        %v4875 = vld [vmem:[%s1 + $0x5a0] sm:$0xff]
        %v4876 = vld [vmem:[%s1 + $0x5a8] sm:$0xff]
        %v4877 = vld [vmem:[%s1 + $0x5b0] sm:$0xff]
        %v4878 = vld [vmem:[%s1 + $0x5b8] sm:$0xff]
        %v4879 = vld [vmem:[%s1 + $0x5c0] sm:$0xff]
        %v4880 = vld [vmem:[%s1 + $0x5c8] sm:$0xff]
        %v4881 = vld [vmem:[%s1 + $0x5d0] sm:$0xff]
        %v4882 = vld [vmem:[%s1 + $0x5d8] sm:$0xff]
        %v4883 = vld [vmem:[%s1 + $0x5e0] sm:$0xff]
        %v4884 = vld [vmem:[%s1 + $0x5e8] sm:$0xff]
        %v4885 = vld [vmem:[%s1 + $0x5f0] sm:$0xff]
        %v4886 = vld [vmem:[%s1 + $0x5f8] sm:$0xff]
        %v4887 = vld [vmem:[%s1 + $0x600] sm:$0xff]
        %v4888 = vld [vmem:[%s1 + $0x608] sm:$0xff]
        %v4889 = vld [vmem:[%s1 + $0x610] sm:$0xff]
        %v4890 = vld [vmem:[%s1 + $0x618] sm:$0xff]
        %v4891 = vld [vmem:[%s1 + $0x620] sm:$0xff]
        %v4892 = vld [vmem:[%s1 + $0x628] sm:$0xff]
        %v4893 = vld [vmem:[%s1 + $0x630] sm:$0xff]
        %v4894 = vld [vmem:[%s1 + $0x638] sm:$0xff]
        %v4895 = vld [vmem:[%s1 + $0x640] sm:$0xff]
        %v4896 = vld [vmem:[%s1 + $0x648] sm:$0xff]
        %v4897 = vld [vmem:[%s1 + $0x650] sm:$0xff]
        %v4898 = vld [vmem:[%s1 + $0x658] sm:$0xff]
        %v4899 = vld [vmem:[%s1 + $0x660] sm:$0xff]
        %v4900 = vld [vmem:[%s1 + $0x668] sm:$0xff]
        %v4901 = vld [vmem:[%s1 + $0x670] sm:$0xff]
        %v4902 = vld [vmem:[%s1 + $0x678] sm:$0xff]
        %v4903 = vld [vmem:[%s1 + $0x680] sm:$0xff]
        %v4904 = vld [vmem:[%s1 + $0x688] sm:$0xff]
        %v4905 = vld [vmem:[%s1 + $0x690] sm:$0xff]
        %v4906 = vld [vmem:[%s1 + $0x698] sm:$0xff]
        %v4907 = vld [vmem:[%s1 + $0x6a0] sm:$0xff]
        %v4908 = vld [vmem:[%s1 + $0x6a8] sm:$0xff]
        %v4909 = vld [vmem:[%s1 + $0x6b0] sm:$0xff]
        %v4910 = vld [vmem:[%s1 + $0x6b8] sm:$0xff]
        %v4911 = vld [vmem:[%s1 + $0x6c0] sm:$0xff]
        %v4912 = vld [vmem:[%s1 + $0x6c8] sm:$0xff]
        %v4913 = vld [vmem:[%s1 + $0x6d0] sm:$0xff]
        %v4914 = vld [vmem:[%s1 + $0x6d8] sm:$0xff]
        %v4915 = vld [vmem:[%s1 + $0x6e0] sm:$0xff]
        %v4916 = vld [vmem:[%s1 + $0x6e8] sm:$0xff]
        %v4917 = vld [vmem:[%s1 + $0x6f0] sm:$0xff]
        %v4918 = vld [vmem:[%s1 + $0x6f8] sm:$0xff]
        %v4919 = vld [vmem:[%s1 + $0x700] sm:$0xff]
        %v4920 = vld [vmem:[%s1 + $0x708] sm:$0xff]
        %v4921 = vld [vmem:[%s1 + $0x710] sm:$0xff]
        %v4922 = vld [vmem:[%s1 + $0x718] sm:$0xff]
        %v4923 = vld [vmem:[%s1 + $0x720] sm:$0xff]
        %v4924 = vld [vmem:[%s1 + $0x728] sm:$0xff]
        %v4925 = vld [vmem:[%s1 + $0x730] sm:$0xff]
        %v4926 = vld [vmem:[%s1 + $0x738] sm:$0xff]
        %v4927 = vld [vmem:[%s1 + $0x740] sm:$0xff]
        %v4928 = vld [vmem:[%s1 + $0x748] sm:$0xff]
        %v4929 = vld [vmem:[%s1 + $0x750] sm:$0xff]
        %v4930 = vld [vmem:[%s1 + $0x758] sm:$0xff]
        %v4931 = vld [vmem:[%s1 + $0x760] sm:$0xff]
        %v4932 = vld [vmem:[%s1 + $0x768] sm:$0xff]
        %v4933 = vld [vmem:[%s1 + $0x770] sm:$0xff]
        %v4934 = vld [vmem:[%s1 + $0x778] sm:$0xff]
        %v4935 = vld [vmem:[%s1 + $0x780] sm:$0xff]
        %v4936 = vld [vmem:[%s1 + $0x788] sm:$0xff]
        %v4937 = vld [vmem:[%s1 + $0x790] sm:$0xff]
        %v4938 = vld [vmem:[%s1 + $0x798] sm:$0xff]
        %v4939 = vld [vmem:[%s1 + $0x7a0] sm:$0xff]
        %v4940 = vld [vmem:[%s1 + $0x7a8] sm:$0xff]
        %v4941 = vld [vmem:[%s1 + $0x7b0] sm:$0xff]
        %v4942 = vld [vmem:[%s1 + $0x7b8] sm:$0xff]
        %v4943 = vld [vmem:[%s1 + $0x7c0] sm:$0xff]
        %v4944 = vld [vmem:[%s1 + $0x7c8] sm:$0xff]
        %v4945 = vld [vmem:[%s1 + $0x7d0] sm:$0xff]
        %v4946 = vld [vmem:[%s1 + $0x7d8] sm:$0xff]
        %v4947 = vld [vmem:[%s1 + $0x7e0] sm:$0xff]
        %v4948 = vld [vmem:[%s1 + $0x7e8] sm:$0xff]
        %v4949 = vld [vmem:[%s1 + $0x7f0] sm:$0xff]
        %v4950 = vld [vmem:[%s1 + $0x7f8] sm:$0xff]
        %v4951 = vld [vmem:[%s1 + $0x800] sm:$0xff]
        %v4952 = vld [vmem:[%s1 + $0x808] sm:$0xff]
        %v4953 = vld [vmem:[%s1 + $0x810] sm:$0xff]
        %v4954 = vld [vmem:[%s1 + $0x818] sm:$0xff]
        %v4955 = vld [vmem:[%s1 + $0x820] sm:$0xff]
        %v4956 = vld [vmem:[%s1 + $0x828] sm:$0xff]
        %v4957 = vld [vmem:[%s1 + $0x830] sm:$0xff]
        %v4958 = vld [vmem:[%s1 + $0x838] sm:$0xff]
        %v4959 = vld [vmem:[%s1 + $0x840] sm:$0xff]
        %v4960 = vld [vmem:[%s1 + $0x848] sm:$0xff]
        %v4961 = vld [vmem:[%s1 + $0x850] sm:$0xff]
        %v4962 = vld [vmem:[%s1 + $0x858] sm:$0xff]
        %v4963 = vld [vmem:[%s1 + $0x860] sm:$0xff]
        %v4964 = vld [vmem:[%s1 + $0x868] sm:$0xff]
        %v4965 = vld [vmem:[%s1 + $0x870] sm:$0xff]
        %v4966 = vld [vmem:[%s1 + $0x878] sm:$0xff]
        %v4967 = vld [vmem:[%s1 + $0x880] sm:$0xff]
        %v4968 = vld [vmem:[%s1 + $0x888] sm:$0xff]
        %v4969 = vld [vmem:[%s1 + $0x890] sm:$0xff]
        %v4970 = vld [vmem:[%s1 + $0x898] sm:$0xff]
        %v4971 = vld [vmem:[%s1 + $0x8a0] sm:$0xff]
        %v4972 = vld [vmem:[%s1 + $0x8a8] sm:$0xff]
        %v4973 = vld [vmem:[%s1 + $0x8b0] sm:$0xff]
        %v4974 = vld [vmem:[%s1 + $0x8b8] sm:$0xff]
        %v4975 = vld [vmem:[%s1 + $0x8c0] sm:$0xff]
        %v4976 = vld [vmem:[%s1 + $0x8c8] sm:$0xff]
        %v4977 = vld [vmem:[%s1 + $0x8d0] sm:$0xff]
        %v4978 = vld [vmem:[%s1 + $0x8d8] sm:$0xff]
        %v4979 = vld [vmem:[%s1 + $0x8e0] sm:$0xff]
        %v4980 = vld [vmem:[%s1 + $0x8e8] sm:$0xff]
        %v4981 = vld [vmem:[%s1 + $0x8f0] sm:$0xff]
        %v4982 = vld [vmem:[%s1 + $0x8f8] sm:$0xff]
        %v4983 = vld [vmem:[%s5] sm:$0x3f]
        %v4985 = vlaneseq
        %v4986 = vshrl.u32 %v4985, 7
        %v4987 = vsub.s32 0, %v4986
        %v4988 = vrot.slane %v4983, %v4987
        %v4989 = vlaneseq
        %v4990 = vshrl.u32 %v4989, 7
        %v4991 = vsub.s32 1, %v4990
        %v4992 = vrot.slane %v4983, %v4991
        %v4993 = vlaneseq
        %v4994 = vshrl.u32 %v4993, 7
        %v4995 = vsub.s32 2, %v4994
        %v4996 = vrot.slane %v4983, %v4995
        %v4997 = vlaneseq
        %v4998 = vshrl.u32 %v4997, 7
        %v4999 = vsub.s32 3, %v4998
        %v5000 = vrot.slane %v4983, %v4999
        %v5001 = vlaneseq
        %v5002 = vshrl.u32 %v5001, 7
        %v5003 = vsub.s32 4, %v5002
        %v5004 = vrot.slane %v4983, %v5003
        %v5005 = vlaneseq
        %v5006 = vshrl.u32 %v5005, 7
        %v5007 = vsub.s32 5, %v5006
        %v5008 = vrot.slane %v4983, %v5007
        %v5018 = vunpack.c.l.b16 %v4692
        %v5019 = vunpack.c.h.b16 %v4692
        %v5020 = vunpack.c.l.b16 %v4693
        %v5021 = vunpack.c.h.b16 %v4693
        %v5022 = vunpack.c.l.b16 %v4694
        %v5023 = vunpack.c.h.b16 %v4694
        %v5024 = vpack.c.b16 %v5018, %v5018
        %v5025 = vpack.c.b16 %v5019, %v5019
        %v5026 = vpack.c.b16 %v5020, %v5020
        %v5027 = vpack.c.b16 %v5021, %v5021
        %v5028 = vpack.c.b16 %v5022, %v5022
        %v5029 = vpack.c.b16 %v5023, %v5023
        %v5324 = vunpack.c.l.b16 %v4695
        %v5325 = vunpack.c.h.b16 %v4695
        %v5326 = vunpack.c.l.b16 %v4696
        %v5327 = vunpack.c.h.b16 %v4696
        %v5328 = vunpack.c.l.b16 %v4697
        %v5329 = vunpack.c.h.b16 %v4697
        %v5330 = vunpack.c.l.b16 %v4698
        %v5331 = vunpack.c.h.b16 %v4698
        %v5332 = vunpack.c.l.b16 %v4699
        %v5333 = vunpack.c.h.b16 %v4699
        %v5334 = vunpack.c.l.b16 %v4700
        %v5335 = vunpack.c.h.b16 %v4700
        %v5336 = vunpack.c.l.b16 %v4701
        %v5337 = vunpack.c.h.b16 %v4701
        %v5338 = vunpack.c.l.b16 %v4702
        %v5339 = vunpack.c.h.b16 %v4702
        %v5340 = vunpack.c.l.b16 %v4703
        %v5341 = vunpack.c.h.b16 %v4703
        %v5342 = vunpack.c.l.b16 %v4704
        %v5343 = vunpack.c.h.b16 %v4704
        %v5344 = vunpack.c.l.b16 %v4705
        %v5345 = vunpack.c.h.b16 %v4705
        %v5346 = vunpack.c.l.b16 %v4706
        %v5347 = vunpack.c.h.b16 %v4706
        %v5348 = vunpack.c.l.b16 %v4707
        %v5349 = vunpack.c.h.b16 %v4707
        %v5350 = vunpack.c.l.b16 %v4708
        %v5351 = vunpack.c.h.b16 %v4708
        %v5352 = vunpack.c.l.b16 %v4709
        %v5353 = vunpack.c.h.b16 %v4709
        %v5354 = vunpack.c.l.b16 %v4710
        %v5355 = vunpack.c.h.b16 %v4710
        %v5356 = vunpack.c.l.b16 %v4711
        %v5357 = vunpack.c.h.b16 %v4711
        %v5358 = vunpack.c.l.b16 %v4712
        %v5359 = vunpack.c.h.b16 %v4712
        %v5360 = vunpack.c.l.b16 %v4713
        %v5361 = vunpack.c.h.b16 %v4713
        %v5362 = vunpack.c.l.b16 %v4714
        %v5363 = vunpack.c.h.b16 %v4714
        %v5364 = vunpack.c.l.b16 %v4715
        %v5365 = vunpack.c.h.b16 %v4715
        %v5366 = vunpack.c.l.b16 %v4716
        %v5367 = vunpack.c.h.b16 %v4716
        %v5368 = vunpack.c.l.b16 %v4717
        %v5369 = vunpack.c.h.b16 %v4717
        %v5370 = vunpack.c.l.b16 %v4718
        %v5371 = vunpack.c.h.b16 %v4718
        %v5372 = vunpack.c.l.b16 %v4719
        %v5373 = vunpack.c.h.b16 %v4719
        %v5374 = vunpack.c.l.b16 %v4720
        %v5375 = vunpack.c.h.b16 %v4720
        %v5376 = vunpack.c.l.b16 %v4721
        %v5377 = vunpack.c.h.b16 %v4721
        %v5378 = vunpack.c.l.b16 %v4722
        %v5379 = vunpack.c.h.b16 %v4722
        %v5380 = vunpack.c.l.b16 %v4723
        %v5381 = vunpack.c.h.b16 %v4723
        %v5382 = vunpack.c.l.b16 %v4724
        %v5383 = vunpack.c.h.b16 %v4724
        %v5384 = vunpack.c.l.b16 %v4725
        %v5385 = vunpack.c.h.b16 %v4725
        %v5386 = vunpack.c.l.b16 %v4726
        %v5387 = vunpack.c.h.b16 %v4726
        %v5388 = vunpack.c.l.b16 %v4727
        %v5389 = vunpack.c.h.b16 %v4727
        %v5390 = vunpack.c.l.b16 %v4728
        %v5391 = vunpack.c.h.b16 %v4728
        %v5392 = vunpack.c.l.b16 %v4729
        %v5393 = vunpack.c.h.b16 %v4729
        %v5394 = vunpack.c.l.b16 %v4730
        %v5395 = vunpack.c.h.b16 %v4730
        %v5396 = vunpack.c.l.b16 %v4731
        %v5397 = vunpack.c.h.b16 %v4731
        %v5398 = vunpack.c.l.b16 %v4732
        %v5399 = vunpack.c.h.b16 %v4732
        %v5400 = vunpack.c.l.b16 %v4733
        %v5401 = vunpack.c.h.b16 %v4733
        %v5402 = vunpack.c.l.b16 %v4734
        %v5403 = vunpack.c.h.b16 %v4734
        %v5404 = vunpack.c.l.b16 %v4735
        %v5405 = vunpack.c.h.b16 %v4735
        %v5406 = vunpack.c.l.b16 %v4736
        %v5407 = vunpack.c.h.b16 %v4736
        %v5408 = vunpack.c.l.b16 %v4737
        %v5409 = vunpack.c.h.b16 %v4737
        %v5410 = vunpack.c.l.b16 %v4738
        %v5411 = vunpack.c.h.b16 %v4738
        %v5412 = vunpack.c.l.b16 %v4739
        %v5413 = vunpack.c.h.b16 %v4739
        %v5414 = vunpack.c.l.b16 %v4740
        %v5415 = vunpack.c.h.b16 %v4740
        %v5416 = vunpack.c.l.b16 %v4741
        %v5417 = vunpack.c.h.b16 %v4741
        %v5418 = vunpack.c.l.b16 %v4742
        %v5419 = vunpack.c.h.b16 %v4742
        %v5420 = vunpack.c.l.b16 %v4743
        %v5421 = vunpack.c.h.b16 %v4743
        %v5422 = vunpack.c.l.b16 %v4744
        %v5423 = vunpack.c.h.b16 %v4744
        %v5424 = vunpack.c.l.b16 %v4745
        %v5425 = vunpack.c.h.b16 %v4745
        %v5426 = vunpack.c.l.b16 %v4746
        %v5427 = vunpack.c.h.b16 %v4746
        %v5428 = vunpack.c.l.b16 %v4747
        %v5429 = vunpack.c.h.b16 %v4747
        %v5430 = vunpack.c.l.b16 %v4748
        %v5431 = vunpack.c.h.b16 %v4748
        %v5432 = vunpack.c.l.b16 %v4749
        %v5433 = vunpack.c.h.b16 %v4749
        %v5434 = vunpack.c.l.b16 %v4750
        %v5435 = vunpack.c.h.b16 %v4750
        %v5436 = vunpack.c.l.b16 %v4751
        %v5437 = vunpack.c.h.b16 %v4751
        %v5438 = vunpack.c.l.b16 %v4752
        %v5439 = vunpack.c.h.b16 %v4752
        %v5440 = vunpack.c.l.b16 %v4753
        %v5441 = vunpack.c.h.b16 %v4753
        %v5442 = vunpack.c.l.b16 %v4754
        %v5443 = vunpack.c.h.b16 %v4754
        %v5444 = vunpack.c.l.b16 %v4755
        %v5445 = vunpack.c.h.b16 %v4755
        %v5446 = vunpack.c.l.b16 %v4756
        %v5447 = vunpack.c.h.b16 %v4756
        %v5448 = vunpack.c.l.b16 %v4757
        %v5449 = vunpack.c.h.b16 %v4757
        %v5450 = vunpack.c.l.b16 %v4758
        %v5451 = vunpack.c.h.b16 %v4758
        %v5452 = vunpack.c.l.b16 %v4759
        %v5453 = vunpack.c.h.b16 %v4759
        %v5454 = vunpack.c.l.b16 %v4760
        %v5455 = vunpack.c.h.b16 %v4760
        %v5456 = vunpack.c.l.b16 %v4761
        %v5457 = vunpack.c.h.b16 %v4761
        %v5458 = vunpack.c.l.b16 %v4762
        %v5459 = vunpack.c.h.b16 %v4762
        %v5460 = vunpack.c.l.b16 %v4763
        %v5461 = vunpack.c.h.b16 %v4763
        %v5462 = vunpack.c.l.b16 %v4764
        %v5463 = vunpack.c.h.b16 %v4764
        %v5464 = vunpack.c.l.b16 %v4765
        %v5465 = vunpack.c.h.b16 %v4765
        %v5466 = vunpack.c.l.b16 %v4766
        %v5467 = vunpack.c.h.b16 %v4766
        %v5468 = vunpack.c.l.b16 %v4767
        %v5469 = vunpack.c.h.b16 %v4767
        %v5470 = vunpack.c.l.b16 %v4768
        %v5471 = vunpack.c.h.b16 %v4768
        %v5472 = vunpack.c.l.b16 %v4769
        %v5473 = vunpack.c.h.b16 %v4769
        %v5474 = vunpack.c.l.b16 %v4770
        %v5475 = vunpack.c.h.b16 %v4770
        %v5476 = vunpack.c.l.b16 %v4771
        %v5477 = vunpack.c.h.b16 %v4771
        %v5478 = vunpack.c.l.b16 %v4772
        %v5479 = vunpack.c.h.b16 %v4772
        %v5480 = vunpack.c.l.b16 %v4773
        %v5481 = vunpack.c.h.b16 %v4773
        %v5482 = vunpack.c.l.b16 %v4774
        %v5483 = vunpack.c.h.b16 %v4774
        %v5484 = vunpack.c.l.b16 %v4775
        %v5485 = vunpack.c.h.b16 %v4775
        %v5486 = vunpack.c.l.b16 %v4776
        %v5487 = vunpack.c.h.b16 %v4776
        %v5488 = vunpack.c.l.b16 %v4777
        %v5489 = vunpack.c.h.b16 %v4777
        %v5490 = vunpack.c.l.b16 %v4778
        %v5491 = vunpack.c.h.b16 %v4778
        %v5492 = vunpack.c.l.b16 %v4779
        %v5493 = vunpack.c.h.b16 %v4779
        %v5494 = vunpack.c.l.b16 %v4780
        %v5495 = vunpack.c.h.b16 %v4780
        %v5496 = vunpack.c.l.b16 %v4781
        %v5497 = vunpack.c.h.b16 %v4781
        %v5498 = vunpack.c.l.b16 %v4782
        %v5499 = vunpack.c.h.b16 %v4782
        %v5500 = vunpack.c.l.b16 %v4783
        %v5501 = vunpack.c.h.b16 %v4783
        %v5502 = vunpack.c.l.b16 %v4784
        %v5503 = vunpack.c.h.b16 %v4784
        %v5504 = vunpack.c.l.b16 %v4785
        %v5505 = vunpack.c.h.b16 %v4785
        %v5506 = vunpack.c.l.b16 %v4786
        %v5507 = vunpack.c.h.b16 %v4786
        %v5508 = vunpack.c.l.b16 %v4787
        %v5509 = vunpack.c.h.b16 %v4787
        %v5510 = vunpack.c.l.b16 %v4788
        %v5511 = vunpack.c.h.b16 %v4788
        %v5512 = vunpack.c.l.b16 %v4789
        %v5513 = vunpack.c.h.b16 %v4789
        %v5514 = vunpack.c.l.b16 %v4790
        %v5515 = vunpack.c.h.b16 %v4790
        %v5516 = vunpack.c.l.b16 %v4791
        %v5517 = vunpack.c.h.b16 %v4791
        %v5518 = vunpack.c.l.b16 %v4792
        %v5519 = vunpack.c.h.b16 %v4792
        %v5520 = vunpack.c.l.b16 %v4793
        %v5521 = vunpack.c.h.b16 %v4793
        %v5522 = vunpack.c.l.b16 %v4794
        %v5523 = vunpack.c.h.b16 %v4794
        %v5524 = vunpack.c.l.b16 %v4795
        %v5525 = vunpack.c.h.b16 %v4795
        %v5526 = vunpack.c.l.b16 %v4796
        %v5527 = vunpack.c.h.b16 %v4796
        %v5528 = vunpack.c.l.b16 %v4797
        %v5529 = vunpack.c.h.b16 %v4797
        %v5530 = vunpack.c.l.b16 %v4798
        %v5531 = vunpack.c.h.b16 %v4798
        %v5532 = vunpack.c.l.b16 %v4799
        %v5533 = vunpack.c.h.b16 %v4799
        %v5534 = vunpack.c.l.b16 %v4800
        %v5535 = vunpack.c.h.b16 %v4800
        %v5536 = vunpack.c.l.b16 %v4801
        %v5537 = vunpack.c.h.b16 %v4801
        %v5538 = vunpack.c.l.b16 %v4802
        %v5539 = vunpack.c.h.b16 %v4802
        %v5540 = vunpack.c.l.b16 %v4803
        %v5541 = vunpack.c.h.b16 %v4803
        %v5542 = vunpack.c.l.b16 %v4804
        %v5543 = vunpack.c.h.b16 %v4804
        %v5544 = vunpack.c.l.b16 %v4805
        %v5545 = vunpack.c.h.b16 %v4805
        %v5546 = vunpack.c.l.b16 %v4806
        %v5547 = vunpack.c.h.b16 %v4806
        %v5548 = vunpack.c.l.b16 %v4807
        %v5549 = vunpack.c.h.b16 %v4807
        %v5550 = vunpack.c.l.b16 %v4808
        %v5551 = vunpack.c.h.b16 %v4808
        %v5552 = vunpack.c.l.b16 %v4809
        %v5553 = vunpack.c.h.b16 %v4809
        %v5554 = vunpack.c.l.b16 %v4810
        %v5555 = vunpack.c.h.b16 %v4810
        %v5556 = vunpack.c.l.b16 %v4811
        %v5557 = vunpack.c.h.b16 %v4811
        %v5558 = vunpack.c.l.b16 %v4812
        %v5559 = vunpack.c.h.b16 %v4812
        %v5560 = vunpack.c.l.b16 %v4813
        %v5561 = vunpack.c.h.b16 %v4813
        %v5562 = vunpack.c.l.b16 %v4814
        %v5563 = vunpack.c.h.b16 %v4814
        %v5564 = vunpack.c.l.b16 %v4815
        %v5565 = vunpack.c.h.b16 %v4815
        %v5566 = vunpack.c.l.b16 %v4816
        %v5567 = vunpack.c.h.b16 %v4816
        %v5568 = vunpack.c.l.b16 %v4817
        %v5569 = vunpack.c.h.b16 %v4817
        %v5570 = vunpack.c.l.b16 %v4818
        %v5571 = vunpack.c.h.b16 %v4818
        %v5572 = vunpack.c.l.b16 %v4819
        %v5573 = vunpack.c.h.b16 %v4819
        %v5574 = vunpack.c.l.b16 %v4820
        %v5575 = vunpack.c.h.b16 %v4820
        %v5576 = vunpack.c.l.b16 %v4821
        %v5577 = vunpack.c.h.b16 %v4821
        %v5578 = vunpack.c.l.b16 %v4822
        %v5579 = vunpack.c.h.b16 %v4822
        %v5580 = vunpack.c.l.b16 %v4823
        %v5581 = vunpack.c.h.b16 %v4823
        %v5582 = vunpack.c.l.b16 %v4824
        %v5583 = vunpack.c.h.b16 %v4824
        %v5584 = vunpack.c.l.b16 %v4825
        %v5585 = vunpack.c.h.b16 %v4825
        %v5586 = vunpack.c.l.b16 %v4826
        %v5587 = vunpack.c.h.b16 %v4826
        %v5588 = vunpack.c.l.b16 %v4827
        %v5589 = vunpack.c.h.b16 %v4827
        %v5590 = vunpack.c.l.b16 %v4828
        %v5591 = vunpack.c.h.b16 %v4828
        %v5592 = vunpack.c.l.b16 %v4829
        %v5593 = vunpack.c.h.b16 %v4829
        %v5594 = vunpack.c.l.b16 %v4830
        %v5595 = vunpack.c.h.b16 %v4830
        %v5596 = vunpack.c.l.b16 %v4831
        %v5597 = vunpack.c.h.b16 %v4831
        %v5598 = vunpack.c.l.b16 %v4832
        %v5599 = vunpack.c.h.b16 %v4832
        %v5600 = vunpack.c.l.b16 %v4833
        %v5601 = vunpack.c.h.b16 %v4833
        %v5602 = vunpack.c.l.b16 %v4834
        %v5603 = vunpack.c.h.b16 %v4834
        %v5604 = vunpack.c.l.b16 %v4835
        %v5605 = vunpack.c.h.b16 %v4835
        %v5606 = vunpack.c.l.b16 %v4836
        %v5607 = vunpack.c.h.b16 %v4836
        %v5608 = vunpack.c.l.b16 %v4837
        %v5609 = vunpack.c.h.b16 %v4837
        %v5610 = vunpack.c.l.b16 %v4838
        %v5611 = vunpack.c.h.b16 %v4838
        %v5612 = vunpack.c.l.b16 %v4839
        %v5613 = vunpack.c.h.b16 %v4839
        %v5614 = vunpack.c.l.b16 %v4840
        %v5615 = vunpack.c.h.b16 %v4840
        %v5616 = vunpack.c.l.b16 %v4841
        %v5617 = vunpack.c.h.b16 %v4841
        %v5618 = vunpack.c.l.b16 %v4842
        %v5619 = vunpack.c.h.b16 %v4842
        %v5620 = vunpack.c.l.b16 %v4843
        %v5621 = vunpack.c.h.b16 %v4843
        %v5622 = vunpack.c.l.b16 %v4844
        %v5623 = vunpack.c.h.b16 %v4844
        %v5624 = vunpack.c.l.b16 %v4845
        %v5625 = vunpack.c.h.b16 %v4845
        %v5626 = vunpack.c.l.b16 %v4846
        %v5627 = vunpack.c.h.b16 %v4846
        %v5628 = vunpack.c.l.b16 %v4847
        %v5629 = vunpack.c.h.b16 %v4847
        %v5630 = vunpack.c.l.b16 %v4848
        %v5631 = vunpack.c.h.b16 %v4848
        %v5632 = vunpack.c.l.b16 %v4849
        %v5633 = vunpack.c.h.b16 %v4849
        %v5634 = vunpack.c.l.b16 %v4850
        %v5635 = vunpack.c.h.b16 %v4850
        %v5636 = vunpack.c.l.b16 %v4851
        %v5637 = vunpack.c.h.b16 %v4851
        %v5638 = vunpack.c.l.b16 %v4852
        %v5639 = vunpack.c.h.b16 %v4852
        %v5640 = vunpack.c.l.b16 %v4853
        %v5641 = vunpack.c.h.b16 %v4853
        %v5642 = vunpack.c.l.b16 %v4854
        %v5643 = vunpack.c.h.b16 %v4854
        %v5644 = vunpack.c.l.b16 %v4855
        %v5645 = vunpack.c.h.b16 %v4855
        %v5646 = vunpack.c.l.b16 %v4856
        %v5647 = vunpack.c.h.b16 %v4856
        %v5648 = vunpack.c.l.b16 %v4857
        %v5649 = vunpack.c.h.b16 %v4857
        %v5650 = vunpack.c.l.b16 %v4858
        %v5651 = vunpack.c.h.b16 %v4858
        %v5652 = vunpack.c.l.b16 %v4859
        %v5653 = vunpack.c.h.b16 %v4859
        %v5654 = vunpack.c.l.b16 %v4860
        %v5655 = vunpack.c.h.b16 %v4860
        %v5656 = vunpack.c.l.b16 %v4861
        %v5657 = vunpack.c.h.b16 %v4861
        %v5658 = vunpack.c.l.b16 %v4862
        %v5659 = vunpack.c.h.b16 %v4862
        %v5660 = vunpack.c.l.b16 %v4863
        %v5661 = vunpack.c.h.b16 %v4863
        %v5662 = vunpack.c.l.b16 %v4864
        %v5663 = vunpack.c.h.b16 %v4864
        %v5664 = vunpack.c.l.b16 %v4865
        %v5665 = vunpack.c.h.b16 %v4865
        %v5666 = vunpack.c.l.b16 %v4866
        %v5667 = vunpack.c.h.b16 %v4866
        %v5668 = vunpack.c.l.b16 %v4867
        %v5669 = vunpack.c.h.b16 %v4867
        %v5670 = vunpack.c.l.b16 %v4868
        %v5671 = vunpack.c.h.b16 %v4868
        %v5672 = vunpack.c.l.b16 %v4869
        %v5673 = vunpack.c.h.b16 %v4869
        %v5674 = vunpack.c.l.b16 %v4870
        %v5675 = vunpack.c.h.b16 %v4870
        %v5676 = vunpack.c.l.b16 %v4871
        %v5677 = vunpack.c.h.b16 %v4871
        %v5678 = vunpack.c.l.b16 %v4872
        %v5679 = vunpack.c.h.b16 %v4872
        %v5680 = vunpack.c.l.b16 %v4873
        %v5681 = vunpack.c.h.b16 %v4873
        %v5682 = vunpack.c.l.b16 %v4874
        %v5683 = vunpack.c.h.b16 %v4874
        %v5684 = vunpack.c.l.b16 %v4875
        %v5685 = vunpack.c.h.b16 %v4875
        %v5686 = vunpack.c.l.b16 %v4876
        %v5687 = vunpack.c.h.b16 %v4876
        %v5688 = vunpack.c.l.b16 %v4877
        %v5689 = vunpack.c.h.b16 %v4877
        %v5690 = vunpack.c.l.b16 %v4878
        %v5691 = vunpack.c.h.b16 %v4878
        %v5692 = vunpack.c.l.b16 %v4879
        %v5693 = vunpack.c.h.b16 %v4879
        %v5694 = vunpack.c.l.b16 %v4880
        %v5695 = vunpack.c.h.b16 %v4880
        %v5696 = vunpack.c.l.b16 %v4881
        %v5697 = vunpack.c.h.b16 %v4881
        %v5698 = vunpack.c.l.b16 %v4882
        %v5699 = vunpack.c.h.b16 %v4882
        %v5700 = vunpack.c.l.b16 %v4883
        %v5701 = vunpack.c.h.b16 %v4883
        %v5702 = vunpack.c.l.b16 %v4884
        %v5703 = vunpack.c.h.b16 %v4884
        %v5704 = vunpack.c.l.b16 %v4885
        %v5705 = vunpack.c.h.b16 %v4885
        %v5706 = vunpack.c.l.b16 %v4886
        %v5707 = vunpack.c.h.b16 %v4886
        %v5708 = vunpack.c.l.b16 %v4887
        %v5709 = vunpack.c.h.b16 %v4887
        %v5710 = vunpack.c.l.b16 %v4888
        %v5711 = vunpack.c.h.b16 %v4888
        %v5712 = vunpack.c.l.b16 %v4889
        %v5713 = vunpack.c.h.b16 %v4889
        %v5714 = vunpack.c.l.b16 %v4890
        %v5715 = vunpack.c.h.b16 %v4890
        %v5716 = vunpack.c.l.b16 %v4891
        %v5717 = vunpack.c.h.b16 %v4891
        %v5718 = vunpack.c.l.b16 %v4892
        %v5719 = vunpack.c.h.b16 %v4892
        %v5720 = vunpack.c.l.b16 %v4893
        %v5721 = vunpack.c.h.b16 %v4893
        %v5722 = vunpack.c.l.b16 %v4894
        %v5723 = vunpack.c.h.b16 %v4894
        %v5724 = vunpack.c.l.b16 %v4895
        %v5725 = vunpack.c.h.b16 %v4895
        %v5726 = vunpack.c.l.b16 %v4896
        %v5727 = vunpack.c.h.b16 %v4896
        %v5728 = vunpack.c.l.b16 %v4897
        %v5729 = vunpack.c.h.b16 %v4897
        %v5730 = vunpack.c.l.b16 %v4898
        %v5731 = vunpack.c.h.b16 %v4898
        %v5732 = vunpack.c.l.b16 %v4899
        %v5733 = vunpack.c.h.b16 %v4899
        %v5734 = vunpack.c.l.b16 %v4900
        %v5735 = vunpack.c.h.b16 %v4900
        %v5736 = vunpack.c.l.b16 %v4901
        %v5737 = vunpack.c.h.b16 %v4901
        %v5738 = vunpack.c.l.b16 %v4902
        %v5739 = vunpack.c.h.b16 %v4902
        %v5740 = vunpack.c.l.b16 %v4903
        %v5741 = vunpack.c.h.b16 %v4903
        %v5742 = vunpack.c.l.b16 %v4904
        %v5743 = vunpack.c.h.b16 %v4904
        %v5744 = vunpack.c.l.b16 %v4905
        %v5745 = vunpack.c.h.b16 %v4905
        %v5746 = vunpack.c.l.b16 %v4906
        %v5747 = vunpack.c.h.b16 %v4906
        %v5748 = vunpack.c.l.b16 %v4907
        %v5749 = vunpack.c.h.b16 %v4907
        %v5750 = vunpack.c.l.b16 %v4908
        %v5751 = vunpack.c.h.b16 %v4908
        %v5752 = vunpack.c.l.b16 %v4909
        %v5753 = vunpack.c.h.b16 %v4909
        %v5754 = vunpack.c.l.b16 %v4910
        %v5755 = vunpack.c.h.b16 %v4910
        %v5756 = vunpack.c.l.b16 %v4911
        %v5757 = vunpack.c.h.b16 %v4911
        %v5758 = vunpack.c.l.b16 %v4912
        %v5759 = vunpack.c.h.b16 %v4912
        %v5760 = vunpack.c.l.b16 %v4913
        %v5761 = vunpack.c.h.b16 %v4913
        %v5762 = vunpack.c.l.b16 %v4914
        %v5763 = vunpack.c.h.b16 %v4914
        %v5764 = vunpack.c.l.b16 %v4915
        %v5765 = vunpack.c.h.b16 %v4915
        %v5766 = vunpack.c.l.b16 %v4916
        %v5767 = vunpack.c.h.b16 %v4916
        %v5768 = vunpack.c.l.b16 %v4917
        %v5769 = vunpack.c.h.b16 %v4917
        %v5770 = vunpack.c.l.b16 %v4918
        %v5771 = vunpack.c.h.b16 %v4918
        %v5772 = vunpack.c.l.b16 %v4919
        %v5773 = vunpack.c.h.b16 %v4919
        %v5774 = vunpack.c.l.b16 %v4920
        %v5775 = vunpack.c.h.b16 %v4920
        %v5776 = vunpack.c.l.b16 %v4921
        %v5777 = vunpack.c.h.b16 %v4921
        %v5778 = vunpack.c.l.b16 %v4922
        %v5779 = vunpack.c.h.b16 %v4922
        %v5780 = vunpack.c.l.b16 %v4923
        %v5781 = vunpack.c.h.b16 %v4923
        %v5782 = vunpack.c.l.b16 %v4924
        %v5783 = vunpack.c.h.b16 %v4924
        %v5784 = vunpack.c.l.b16 %v4925
        %v5785 = vunpack.c.h.b16 %v4925
        %v5786 = vunpack.c.l.b16 %v4926
        %v5787 = vunpack.c.h.b16 %v4926
        %v5788 = vunpack.c.l.b16 %v4927
        %v5789 = vunpack.c.h.b16 %v4927
        %v5790 = vunpack.c.l.b16 %v4928
        %v5791 = vunpack.c.h.b16 %v4928
        %v5792 = vunpack.c.l.b16 %v4929
        %v5793 = vunpack.c.h.b16 %v4929
        %v5794 = vunpack.c.l.b16 %v4930
        %v5795 = vunpack.c.h.b16 %v4930
        %v5796 = vunpack.c.l.b16 %v4931
        %v5797 = vunpack.c.h.b16 %v4931
        %v5798 = vunpack.c.l.b16 %v4932
        %v5799 = vunpack.c.h.b16 %v4932
        %v5800 = vunpack.c.l.b16 %v4933
        %v5801 = vunpack.c.h.b16 %v4933
        %v5802 = vunpack.c.l.b16 %v4934
        %v5803 = vunpack.c.h.b16 %v4934
        %v5804 = vunpack.c.l.b16 %v4935
        %v5805 = vunpack.c.h.b16 %v4935
        %v5806 = vunpack.c.l.b16 %v4936
        %v5807 = vunpack.c.h.b16 %v4936
        %v5808 = vunpack.c.l.b16 %v4937
        %v5809 = vunpack.c.h.b16 %v4937
        %v5810 = vunpack.c.l.b16 %v4938
        %v5811 = vunpack.c.h.b16 %v4938
        %v5812 = vunpack.c.l.b16 %v4939
        %v5813 = vunpack.c.h.b16 %v4939
        %v5814 = vunpack.c.l.b16 %v4940
        %v5815 = vunpack.c.h.b16 %v4940
        %v5816 = vunpack.c.l.b16 %v4941
        %v5817 = vunpack.c.h.b16 %v4941
        %v5818 = vunpack.c.l.b16 %v4942
        %v5819 = vunpack.c.h.b16 %v4942
        %v5820 = vunpack.c.l.b16 %v4943
        %v5821 = vunpack.c.h.b16 %v4943
        %v5822 = vunpack.c.l.b16 %v4944
        %v5823 = vunpack.c.h.b16 %v4944
        %v5824 = vunpack.c.l.b16 %v4945
        %v5825 = vunpack.c.h.b16 %v4945
        %v5826 = vunpack.c.l.b16 %v4946
        %v5827 = vunpack.c.h.b16 %v4946
        %v5828 = vunpack.c.l.b16 %v4947
        %v5829 = vunpack.c.h.b16 %v4947
        %v5830 = vunpack.c.l.b16 %v4948
        %v5831 = vunpack.c.h.b16 %v4948
        %v5832 = vunpack.c.l.b16 %v4949
        %v5833 = vunpack.c.h.b16 %v4949
        %v5834 = vunpack.c.l.b16 %v4950
        %v5835 = vunpack.c.h.b16 %v4950
        %v5836 = vunpack.c.l.b16 %v4951
        %v5837 = vunpack.c.h.b16 %v4951
        %v5838 = vunpack.c.l.b16 %v4952
        %v5839 = vunpack.c.h.b16 %v4952
        %v5840 = vunpack.c.l.b16 %v4953
        %v5841 = vunpack.c.h.b16 %v4953
        %v5842 = vunpack.c.l.b16 %v4954
        %v5843 = vunpack.c.h.b16 %v4954
        %v5844 = vunpack.c.l.b16 %v4955
        %v5845 = vunpack.c.h.b16 %v4955
        %v5846 = vunpack.c.l.b16 %v4956
        %v5847 = vunpack.c.h.b16 %v4956
        %v5848 = vunpack.c.l.b16 %v4957
        %v5849 = vunpack.c.h.b16 %v4957
        %v5850 = vunpack.c.l.b16 %v4958
        %v5851 = vunpack.c.h.b16 %v4958
        %v5852 = vunpack.c.l.b16 %v4959
        %v5853 = vunpack.c.h.b16 %v4959
        %v5854 = vunpack.c.l.b16 %v4960
        %v5855 = vunpack.c.h.b16 %v4960
        %v5856 = vunpack.c.l.b16 %v4961
        %v5857 = vunpack.c.h.b16 %v4961
        %v5858 = vunpack.c.l.b16 %v4962
        %v5859 = vunpack.c.h.b16 %v4962
        %v5860 = vunpack.c.l.b16 %v4963
        %v5861 = vunpack.c.h.b16 %v4963
        %v5862 = vunpack.c.l.b16 %v4964
        %v5863 = vunpack.c.h.b16 %v4964
        %v5864 = vunpack.c.l.b16 %v4965
        %v5865 = vunpack.c.h.b16 %v4965
        %v5866 = vunpack.c.l.b16 %v4966
        %v5867 = vunpack.c.h.b16 %v4966
        %v5868 = vunpack.c.l.b16 %v4967
        %v5869 = vunpack.c.h.b16 %v4967
        %v5870 = vunpack.c.l.b16 %v4968
        %v5871 = vunpack.c.h.b16 %v4968
        %v5872 = vunpack.c.l.b16 %v4969
        %v5873 = vunpack.c.h.b16 %v4969
        %v5874 = vunpack.c.l.b16 %v4970
        %v5875 = vunpack.c.h.b16 %v4970
        %v5876 = vunpack.c.l.b16 %v4971
        %v5877 = vunpack.c.h.b16 %v4971
        %v5878 = vunpack.c.l.b16 %v4972
        %v5879 = vunpack.c.h.b16 %v4972
        %v5880 = vunpack.c.l.b16 %v4973
        %v5881 = vunpack.c.h.b16 %v4973
        %v5882 = vunpack.c.l.b16 %v4974
        %v5883 = vunpack.c.h.b16 %v4974
        %v5884 = vunpack.c.l.b16 %v4975
        %v5885 = vunpack.c.h.b16 %v4975
        %v5886 = vunpack.c.l.b16 %v4976
        %v5887 = vunpack.c.h.b16 %v4976
        %v5888 = vunpack.c.l.b16 %v4977
        %v5889 = vunpack.c.h.b16 %v4977
        %v5890 = vunpack.c.l.b16 %v4978
        %v5891 = vunpack.c.h.b16 %v4978
        %v5892 = vunpack.c.l.b16 %v4979
        %v5893 = vunpack.c.h.b16 %v4979
        %v5894 = vunpack.c.l.b16 %v4980
        %v5895 = vunpack.c.h.b16 %v4980
        %v5896 = vunpack.c.l.b16 %v4981
        %v5897 = vunpack.c.h.b16 %v4981
        %v5898 = vunpack.c.l.b16 %v4982
        %v5899 = vunpack.c.h.b16 %v4982
        %v5900 = vpack.c.b16 %v5330, %v5324
        %v5901 = vpack.c.b16 %v5331, %v5325
        %v5902 = vpack.c.b16 %v5332, %v5326
        %v5903 = vpack.c.b16 %v5333, %v5327
        %v5904 = vpack.c.b16 %v5334, %v5328
        %v5905 = vpack.c.b16 %v5335, %v5329
        %v5906 = vpack.c.b16 %v5342, %v5336
        %v5907 = vpack.c.b16 %v5343, %v5337
        %v5908 = vpack.c.b16 %v5344, %v5338
        %v5909 = vpack.c.b16 %v5345, %v5339
        %v5910 = vpack.c.b16 %v5346, %v5340
        %v5911 = vpack.c.b16 %v5347, %v5341
        %v5912 = vpack.c.b16 %v5354, %v5348
        %v5913 = vpack.c.b16 %v5355, %v5349
        %v5914 = vpack.c.b16 %v5356, %v5350
        %v5915 = vpack.c.b16 %v5357, %v5351
        %v5916 = vpack.c.b16 %v5358, %v5352
        %v5917 = vpack.c.b16 %v5359, %v5353
        %v5918 = vpack.c.b16 %v5366, %v5360
        %v5919 = vpack.c.b16 %v5367, %v5361
        %v5920 = vpack.c.b16 %v5368, %v5362
        %v5921 = vpack.c.b16 %v5369, %v5363
        %v5922 = vpack.c.b16 %v5370, %v5364
        %v5923 = vpack.c.b16 %v5371, %v5365
        %v5924 = vpack.c.b16 %v5378, %v5372
        %v5925 = vpack.c.b16 %v5379, %v5373
        %v5926 = vpack.c.b16 %v5380, %v5374
        %v5927 = vpack.c.b16 %v5381, %v5375
        %v5928 = vpack.c.b16 %v5382, %v5376
        %v5929 = vpack.c.b16 %v5383, %v5377
        %v5930 = vpack.c.b16 %v5390, %v5384
        %v5931 = vpack.c.b16 %v5391, %v5385
        %v5932 = vpack.c.b16 %v5392, %v5386
        %v5933 = vpack.c.b16 %v5393, %v5387
        %v5934 = vpack.c.b16 %v5394, %v5388
        %v5935 = vpack.c.b16 %v5395, %v5389
        %v5936 = vpack.c.b16 %v5402, %v5396
        %v5937 = vpack.c.b16 %v5403, %v5397
        %v5938 = vpack.c.b16 %v5404, %v5398
        %v5939 = vpack.c.b16 %v5405, %v5399
        %v5940 = vpack.c.b16 %v5406, %v5400
        %v5941 = vpack.c.b16 %v5407, %v5401
        %v5942 = vpack.c.b16 %v5414, %v5408
        %v5943 = vpack.c.b16 %v5415, %v5409
        %v5944 = vpack.c.b16 %v5416, %v5410
        %v5945 = vpack.c.b16 %v5417, %v5411
        %v5946 = vpack.c.b16 %v5418, %v5412
        %v5947 = vpack.c.b16 %v5419, %v5413
        %v5948 = vpack.c.b16 %v5426, %v5420
        %v5949 = vpack.c.b16 %v5427, %v5421
        %v5950 = vpack.c.b16 %v5428, %v5422
        %v5951 = vpack.c.b16 %v5429, %v5423
        %v5952 = vpack.c.b16 %v5430, %v5424
        %v5953 = vpack.c.b16 %v5431, %v5425
        %v5954 = vpack.c.b16 %v5438, %v5432
        %v5955 = vpack.c.b16 %v5439, %v5433
        %v5956 = vpack.c.b16 %v5440, %v5434
        %v5957 = vpack.c.b16 %v5441, %v5435
        %v5958 = vpack.c.b16 %v5442, %v5436
        %v5959 = vpack.c.b16 %v5443, %v5437
        %v5960 = vpack.c.b16 %v5450, %v5444
        %v5961 = vpack.c.b16 %v5451, %v5445
        %v5962 = vpack.c.b16 %v5452, %v5446
        %v5963 = vpack.c.b16 %v5453, %v5447
        %v5964 = vpack.c.b16 %v5454, %v5448
        %v5965 = vpack.c.b16 %v5455, %v5449
        %v5966 = vpack.c.b16 %v5462, %v5456
        %v5967 = vpack.c.b16 %v5463, %v5457
        %v5968 = vpack.c.b16 %v5464, %v5458
        %v5969 = vpack.c.b16 %v5465, %v5459
        %v5970 = vpack.c.b16 %v5466, %v5460
        %v5971 = vpack.c.b16 %v5467, %v5461
        %v5972 = vpack.c.b16 %v5474, %v5468
        %v5973 = vpack.c.b16 %v5475, %v5469
        %v5974 = vpack.c.b16 %v5476, %v5470
        %v5975 = vpack.c.b16 %v5477, %v5471
        %v5976 = vpack.c.b16 %v5478, %v5472
        %v5977 = vpack.c.b16 %v5479, %v5473
        %v5978 = vpack.c.b16 %v5486, %v5480
        %v5979 = vpack.c.b16 %v5487, %v5481
        %v5980 = vpack.c.b16 %v5488, %v5482
        %v5981 = vpack.c.b16 %v5489, %v5483
        %v5982 = vpack.c.b16 %v5490, %v5484
        %v5983 = vpack.c.b16 %v5491, %v5485
        %v5984 = vpack.c.b16 %v5498, %v5492
        %v5985 = vpack.c.b16 %v5499, %v5493
        %v5986 = vpack.c.b16 %v5500, %v5494
        %v5987 = vpack.c.b16 %v5501, %v5495
        %v5988 = vpack.c.b16 %v5502, %v5496
        %v5989 = vpack.c.b16 %v5503, %v5497
        %v5990 = vpack.c.b16 %v5510, %v5504
        %v5991 = vpack.c.b16 %v5511, %v5505
        %v5992 = vpack.c.b16 %v5512, %v5506
        %v5993 = vpack.c.b16 %v5513, %v5507
        %v5994 = vpack.c.b16 %v5514, %v5508
        %v5995 = vpack.c.b16 %v5515, %v5509
        %v5996 = vpack.c.b16 %v5522, %v5516
        %v5997 = vpack.c.b16 %v5523, %v5517
        %v5998 = vpack.c.b16 %v5524, %v5518
        %v5999 = vpack.c.b16 %v5525, %v5519
        %v6000 = vpack.c.b16 %v5526, %v5520
        %v6001 = vpack.c.b16 %v5527, %v5521
        %v6002 = vpack.c.b16 %v5534, %v5528
        %v6003 = vpack.c.b16 %v5535, %v5529
        %v6004 = vpack.c.b16 %v5536, %v5530
        %v6005 = vpack.c.b16 %v5537, %v5531
        %v6006 = vpack.c.b16 %v5538, %v5532
        %v6007 = vpack.c.b16 %v5539, %v5533
        %v6008 = vpack.c.b16 %v5546, %v5540
        %v6009 = vpack.c.b16 %v5547, %v5541
        %v6010 = vpack.c.b16 %v5548, %v5542
        %v6011 = vpack.c.b16 %v5549, %v5543
        %v6012 = vpack.c.b16 %v5550, %v5544
        %v6013 = vpack.c.b16 %v5551, %v5545
        %v6014 = vpack.c.b16 %v5558, %v5552
        %v6015 = vpack.c.b16 %v5559, %v5553
        %v6016 = vpack.c.b16 %v5560, %v5554
        %v6017 = vpack.c.b16 %v5561, %v5555
        %v6018 = vpack.c.b16 %v5562, %v5556
        %v6019 = vpack.c.b16 %v5563, %v5557
        %v6020 = vpack.c.b16 %v5570, %v5564
        %v6021 = vpack.c.b16 %v5571, %v5565
        %v6022 = vpack.c.b16 %v5572, %v5566
        %v6023 = vpack.c.b16 %v5573, %v5567
        %v6024 = vpack.c.b16 %v5574, %v5568
        %v6025 = vpack.c.b16 %v5575, %v5569
        %v6026 = vpack.c.b16 %v5582, %v5576
        %v6027 = vpack.c.b16 %v5583, %v5577
        %v6028 = vpack.c.b16 %v5584, %v5578
        %v6029 = vpack.c.b16 %v5585, %v5579
        %v6030 = vpack.c.b16 %v5586, %v5580
        %v6031 = vpack.c.b16 %v5587, %v5581
        %v6032 = vpack.c.b16 %v5594, %v5588
        %v6033 = vpack.c.b16 %v5595, %v5589
        %v6034 = vpack.c.b16 %v5596, %v5590
        %v6035 = vpack.c.b16 %v5597, %v5591
        %v6036 = vpack.c.b16 %v5598, %v5592
        %v6037 = vpack.c.b16 %v5599, %v5593
        %v6038 = vpack.c.b16 %v5606, %v5600
        %v6039 = vpack.c.b16 %v5607, %v5601
        %v6040 = vpack.c.b16 %v5608, %v5602
        %v6041 = vpack.c.b16 %v5609, %v5603
        %v6042 = vpack.c.b16 %v5610, %v5604
        %v6043 = vpack.c.b16 %v5611, %v5605
        %v6044 = vpack.c.b16 %v5618, %v5612
        %v6045 = vpack.c.b16 %v5619, %v5613
        %v6046 = vpack.c.b16 %v5620, %v5614
        %v6047 = vpack.c.b16 %v5621, %v5615
        %v6048 = vpack.c.b16 %v5622, %v5616
        %v6049 = vpack.c.b16 %v5623, %v5617
        %v6050 = vpack.c.b16 %v5630, %v5624
        %v6051 = vpack.c.b16 %v5631, %v5625
        %v6052 = vpack.c.b16 %v5632, %v5626
        %v6053 = vpack.c.b16 %v5633, %v5627
        %v6054 = vpack.c.b16 %v5634, %v5628
        %v6055 = vpack.c.b16 %v5635, %v5629
        %v6056 = vpack.c.b16 %v5642, %v5636
        %v6057 = vpack.c.b16 %v5643, %v5637
        %v6058 = vpack.c.b16 %v5644, %v5638
        %v6059 = vpack.c.b16 %v5645, %v5639
        %v6060 = vpack.c.b16 %v5646, %v5640
        %v6061 = vpack.c.b16 %v5647, %v5641
        %v6062 = vpack.c.b16 %v5654, %v5648
        %v6063 = vpack.c.b16 %v5655, %v5649
        %v6064 = vpack.c.b16 %v5656, %v5650
        %v6065 = vpack.c.b16 %v5657, %v5651
        %v6066 = vpack.c.b16 %v5658, %v5652
        %v6067 = vpack.c.b16 %v5659, %v5653
        %v6068 = vpack.c.b16 %v5666, %v5660
        %v6069 = vpack.c.b16 %v5667, %v5661
        %v6070 = vpack.c.b16 %v5668, %v5662
        %v6071 = vpack.c.b16 %v5669, %v5663
        %v6072 = vpack.c.b16 %v5670, %v5664
        %v6073 = vpack.c.b16 %v5671, %v5665
        %v6074 = vpack.c.b16 %v5678, %v5672
        %v6075 = vpack.c.b16 %v5679, %v5673
        %v6076 = vpack.c.b16 %v5680, %v5674
        %v6077 = vpack.c.b16 %v5681, %v5675
        %v6078 = vpack.c.b16 %v5682, %v5676
        %v6079 = vpack.c.b16 %v5683, %v5677
        %v6080 = vpack.c.b16 %v5690, %v5684
        %v6081 = vpack.c.b16 %v5691, %v5685
        %v6082 = vpack.c.b16 %v5692, %v5686
        %v6083 = vpack.c.b16 %v5693, %v5687
        %v6084 = vpack.c.b16 %v5694, %v5688
        %v6085 = vpack.c.b16 %v5695, %v5689
        %v6086 = vpack.c.b16 %v5702, %v5696
        %v6087 = vpack.c.b16 %v5703, %v5697
        %v6088 = vpack.c.b16 %v5704, %v5698
        %v6089 = vpack.c.b16 %v5705, %v5699
        %v6090 = vpack.c.b16 %v5706, %v5700
        %v6091 = vpack.c.b16 %v5707, %v5701
        %v6092 = vpack.c.b16 %v5714, %v5708
        %v6093 = vpack.c.b16 %v5715, %v5709
        %v6094 = vpack.c.b16 %v5716, %v5710
        %v6095 = vpack.c.b16 %v5717, %v5711
        %v6096 = vpack.c.b16 %v5718, %v5712
        %v6097 = vpack.c.b16 %v5719, %v5713
        %v6098 = vpack.c.b16 %v5726, %v5720
        %v6099 = vpack.c.b16 %v5727, %v5721
        %v6100 = vpack.c.b16 %v5728, %v5722
        %v6101 = vpack.c.b16 %v5729, %v5723
        %v6102 = vpack.c.b16 %v5730, %v5724
        %v6103 = vpack.c.b16 %v5731, %v5725
        %v6104 = vpack.c.b16 %v5738, %v5732
        %v6105 = vpack.c.b16 %v5739, %v5733
        %v6106 = vpack.c.b16 %v5740, %v5734
        %v6107 = vpack.c.b16 %v5741, %v5735
        %v6108 = vpack.c.b16 %v5742, %v5736
        %v6109 = vpack.c.b16 %v5743, %v5737
        %v6110 = vpack.c.b16 %v5750, %v5744
        %v6111 = vpack.c.b16 %v5751, %v5745
        %v6112 = vpack.c.b16 %v5752, %v5746
        %v6113 = vpack.c.b16 %v5753, %v5747
        %v6114 = vpack.c.b16 %v5754, %v5748
        %v6115 = vpack.c.b16 %v5755, %v5749
        %v6116 = vpack.c.b16 %v5762, %v5756
        %v6117 = vpack.c.b16 %v5763, %v5757
        %v6118 = vpack.c.b16 %v5764, %v5758
        %v6119 = vpack.c.b16 %v5765, %v5759
        %v6120 = vpack.c.b16 %v5766, %v5760
        %v6121 = vpack.c.b16 %v5767, %v5761
        %v6122 = vpack.c.b16 %v5774, %v5768
        %v6123 = vpack.c.b16 %v5775, %v5769
        %v6124 = vpack.c.b16 %v5776, %v5770
        %v6125 = vpack.c.b16 %v5777, %v5771
        %v6126 = vpack.c.b16 %v5778, %v5772
        %v6127 = vpack.c.b16 %v5779, %v5773
        %v6128 = vpack.c.b16 %v5786, %v5780
        %v6129 = vpack.c.b16 %v5787, %v5781
        %v6130 = vpack.c.b16 %v5788, %v5782
        %v6131 = vpack.c.b16 %v5789, %v5783
        %v6132 = vpack.c.b16 %v5790, %v5784
        %v6133 = vpack.c.b16 %v5791, %v5785
        %v6134 = vpack.c.b16 %v5798, %v5792
        %v6135 = vpack.c.b16 %v5799, %v5793
        %v6136 = vpack.c.b16 %v5800, %v5794
        %v6137 = vpack.c.b16 %v5801, %v5795
        %v6138 = vpack.c.b16 %v5802, %v5796
        %v6139 = vpack.c.b16 %v5803, %v5797
        %v6140 = vpack.c.b16 %v5810, %v5804
        %v6141 = vpack.c.b16 %v5811, %v5805
        %v6142 = vpack.c.b16 %v5812, %v5806
        %v6143 = vpack.c.b16 %v5813, %v5807
        %v6144 = vpack.c.b16 %v5814, %v5808
        %v6145 = vpack.c.b16 %v5815, %v5809
        %v6146 = vpack.c.b16 %v5822, %v5816
        %v6147 = vpack.c.b16 %v5823, %v5817
        %v6148 = vpack.c.b16 %v5824, %v5818
        %v6149 = vpack.c.b16 %v5825, %v5819
        %v6150 = vpack.c.b16 %v5826, %v5820
        %v6151 = vpack.c.b16 %v5827, %v5821
        %v6152 = vpack.c.b16 %v5834, %v5828
        %v6153 = vpack.c.b16 %v5835, %v5829
        %v6154 = vpack.c.b16 %v5836, %v5830
        %v6155 = vpack.c.b16 %v5837, %v5831
        %v6156 = vpack.c.b16 %v5838, %v5832
        %v6157 = vpack.c.b16 %v5839, %v5833
        %v6158 = vpack.c.b16 %v5846, %v5840
        %v6159 = vpack.c.b16 %v5847, %v5841
        %v6160 = vpack.c.b16 %v5848, %v5842
        %v6161 = vpack.c.b16 %v5849, %v5843
        %v6162 = vpack.c.b16 %v5850, %v5844
        %v6163 = vpack.c.b16 %v5851, %v5845
        %v6164 = vpack.c.b16 %v5858, %v5852
        %v6165 = vpack.c.b16 %v5859, %v5853
        %v6166 = vpack.c.b16 %v5860, %v5854
        %v6167 = vpack.c.b16 %v5861, %v5855
        %v6168 = vpack.c.b16 %v5862, %v5856
        %v6169 = vpack.c.b16 %v5863, %v5857
        %v6170 = vpack.c.b16 %v5870, %v5864
        %v6171 = vpack.c.b16 %v5871, %v5865
        %v6172 = vpack.c.b16 %v5872, %v5866
        %v6173 = vpack.c.b16 %v5873, %v5867
        %v6174 = vpack.c.b16 %v5874, %v5868
        %v6175 = vpack.c.b16 %v5875, %v5869
        %v6176 = vpack.c.b16 %v5882, %v5876
        %v6177 = vpack.c.b16 %v5883, %v5877
        %v6178 = vpack.c.b16 %v5884, %v5878
        %v6179 = vpack.c.b16 %v5885, %v5879
        %v6180 = vpack.c.b16 %v5886, %v5880
        %v6181 = vpack.c.b16 %v5887, %v5881
        %v6182 = vpack.c.b16 %v5894, %v5888
        %v6183 = vpack.c.b16 %v5895, %v5889
        %v6184 = vpack.c.b16 %v5896, %v5890
        %v6185 = vpack.c.b16 %v5897, %v5891
        %v6186 = vpack.c.b16 %v5898, %v5892
        %v6187 = vpack.c.b16 %v5899, %v5893
        %6476 = vmatprep.subr.bf16.mxu0 %v5901
        %6477 = vmatpush1.bf16.msra.mxu0 %v5900
        %6478 = vmatprep.subr.bf16.mxu0 %v5907
        %6479 = vmatpush1.bf16.msra.mxu0 %v5906
        %6480 = vmatprep.subr.bf16.mxu0 %v5913
        %6481 = vmatpush1.bf16.msra.mxu0 %v5912
        %6482 = vmatprep.subr.bf16.mxu0 %v5919
        %6483 = vmatpush1.bf16.msra.mxu0 %v5918
        %6484 = vmatprep.subr.bf16.mxu0 %v5925
        %6485 = vmatpush1.bf16.msra.mxu0 %v5924
        %6486 = vmatprep.subr.bf16.mxu0 %v5931
        %6487 = vmatpush1.bf16.msra.mxu0 %v5930
        %6488 = vmatprep.subr.bf16.mxu0 %v5937
        %6489 = vmatpush1.bf16.msra.mxu0 %v5936
        %6490 = vmatprep.subr.bf16.mxu0 %v5943
        %6491 = vmatpush1.bf16.msra.mxu0 %v5942
        %6492 = vmatprep.subr.bf16.mxu0 %v5949
        %6493 = vmatpush1.bf16.msra.mxu0 %v5948
        %6494 = vmatprep.subr.bf16.mxu0 %v5955
        %6495 = vmatpush1.bf16.msra.mxu0 %v5954
        %6496 = vmatprep.subr.bf16.mxu0 %v5961
        %6497 = vmatpush1.bf16.msra.mxu0 %v5960
        %6498 = vmatprep.subr.bf16.mxu0 %v5967
        %6499 = vmatpush1.bf16.msra.mxu0 %v5966
        %6500 = vmatprep.subr.bf16.mxu0 %v5973
        %6501 = vmatpush1.bf16.msra.mxu0 %v5972
        %6502 = vmatprep.subr.bf16.mxu0 %v5979
        %6503 = vmatpush1.bf16.msra.mxu0 %v5978
        %6504 = vmatprep.subr.bf16.mxu0 %v5985
        %6505 = vmatpush1.bf16.msra.mxu0 %v5984
        %6506 = vmatprep.subr.bf16.mxu0 %v5991
        %6507 = vmatpush1.bf16.msra.mxu0 %v5990
        %6508 = vmatprep.mubr.bf16.mxu0 %v5025
        %6509 = vmatmul.mubr.bf16.gmra.mrb[0].mxu0 %v5024
        %v6510 = vpop.f32.mrb[0].mxu0
        %v6511 = vadd.f32 %v4988, %v6510
        %v6512 = vpop.f32.mrb[0].mxu0
        %v6513 = vadd.f32 %v4992, %v6512
        %v6514 = vpop.f32.mrb[0].mxu0
        %v6515 = vpop.f32.mrb[0].mxu0
        %6516 = vdwg.mxu0
        %6517 = vmatprep.subr.bf16.mxu0 %v5997
        %6518 = vmatpush1.bf16.msra.mxu0 %v5996
        %6519 = vmatprep.subr.bf16.mxu0 %v6003
        %6520 = vmatpush1.bf16.msra.mxu0 %v6002
        %6521 = vmatprep.subr.bf16.mxu0 %v6009
        %6522 = vmatpush1.bf16.msra.mxu0 %v6008
        %6523 = vmatprep.subr.bf16.mxu0 %v6015
        %6524 = vmatpush1.bf16.msra.mxu0 %v6014
        %6525 = vmatprep.subr.bf16.mxu0 %v6021
        %6526 = vmatpush1.bf16.msra.mxu0 %v6020
        %6527 = vmatprep.subr.bf16.mxu0 %v6027
        %6528 = vmatpush1.bf16.msra.mxu0 %v6026
        %6529 = vmatprep.subr.bf16.mxu0 %v6033
        %6530 = vmatpush1.bf16.msra.mxu0 %v6032
        %6531 = vmatprep.subr.bf16.mxu0 %v6039
        %6532 = vmatpush1.bf16.msra.mxu0 %v6038
        %6533 = vmatprep.subr.bf16.mxu0 %v6045
        %6534 = vmatpush1.bf16.msra.mxu0 %v6044
        %6535 = vmatprep.subr.bf16.mxu0 %v6051
        %6536 = vmatpush1.bf16.msra.mxu0 %v6050
        %6537 = vmatprep.subr.bf16.mxu0 %v6057
        %6538 = vmatpush1.bf16.msra.mxu0 %v6056
        %6539 = vmatprep.subr.bf16.mxu0 %v6063
        %6540 = vmatpush1.bf16.msra.mxu0 %v6062
        %6541 = vmatprep.subr.bf16.mxu0 %v6069
        %6542 = vmatpush1.bf16.msra.mxu0 %v6068
        %6543 = vmatprep.subr.bf16.mxu0 %v6075
        %6544 = vmatpush1.bf16.msra.mxu0 %v6074
        %6545 = vmatprep.subr.bf16.mxu0 %v6081
        %6546 = vmatpush1.bf16.msra.mxu0 %v6080
        %6547 = vmatprep.subr.bf16.mxu0 %v6087
        %6548 = vmatpush1.bf16.msra.mxu0 %v6086
        %6549 = vmatprep.mubr.bf16.mxu0 %v5027
        %6550 = vmatmul.mubr.bf16.gmra.mrb[0].mxu0 %v5026
        %v6551 = vpop.f32.mrb[0].mxu0
        %v6552 = vadd.f32 %v6511, %v6551
        %v6553 = vpop.f32.mrb[0].mxu0
        %v6554 = vadd.f32 %v6513, %v6553
        %v6555 = vpop.f32.mrb[0].mxu0
        %v6556 = vpop.f32.mrb[0].mxu0
        %6557 = vdwg.mxu0
        %6558 = vmatprep.subr.bf16.mxu0 %v6093
        %6559 = vmatpush1.bf16.msra.mxu0 %v6092
        %6560 = vmatprep.subr.bf16.mxu0 %v6099
        %6561 = vmatpush1.bf16.msra.mxu0 %v6098
        %6562 = vmatprep.subr.bf16.mxu0 %v6105
        %6563 = vmatpush1.bf16.msra.mxu0 %v6104
        %6564 = vmatprep.subr.bf16.mxu0 %v6111
        %6565 = vmatpush1.bf16.msra.mxu0 %v6110
        %6566 = vmatprep.subr.bf16.mxu0 %v6117
        %6567 = vmatpush1.bf16.msra.mxu0 %v6116
        %6568 = vmatprep.subr.bf16.mxu0 %v6123
        %6569 = vmatpush1.bf16.msra.mxu0 %v6122
        %6570 = vmatprep.subr.bf16.mxu0 %v6129
        %6571 = vmatpush1.bf16.msra.mxu0 %v6128
        %6572 = vmatprep.subr.bf16.mxu0 %v6135
        %6573 = vmatpush1.bf16.msra.mxu0 %v6134
        %6574 = vmatprep.subr.bf16.mxu0 %v6141
        %6575 = vmatpush1.bf16.msra.mxu0 %v6140
        %6576 = vmatprep.subr.bf16.mxu0 %v6147
        %6577 = vmatpush1.bf16.msra.mxu0 %v6146
        %6578 = vmatprep.subr.bf16.mxu0 %v6153
        %6579 = vmatpush1.bf16.msra.mxu0 %v6152
        %6580 = vmatprep.subr.bf16.mxu0 %v6159
        %6581 = vmatpush1.bf16.msra.mxu0 %v6158
        %6582 = vmatprep.subr.bf16.mxu0 %v6165
        %6583 = vmatpush1.bf16.msra.mxu0 %v6164
        %6584 = vmatprep.subr.bf16.mxu0 %v6171
        %6585 = vmatpush1.bf16.msra.mxu0 %v6170
        %6586 = vmatprep.subr.bf16.mxu0 %v6177
        %6587 = vmatpush1.bf16.msra.mxu0 %v6176
        %6588 = vmatprep.subr.bf16.mxu0 %v6183
        %6589 = vmatpush1.bf16.msra.mxu0 %v6182
        %6590 = vmatprep.mubr.bf16.mxu0 %v5029
        %6591 = vmatmul.mubr.bf16.gmra.mrb[0].mxu0 %v5028
        %v6592 = vpop.f32.mrb[0].mxu0
        %v6593 = vadd.f32 %v6552, %v6592
        %v6594 = vpop.f32.mrb[0].mxu0
        %v6595 = vadd.f32 %v6554, %v6594
        %v6596 = vpop.f32.mrb[0].mxu0
        %v6597 = vpop.f32.mrb[0].mxu0
        %6598 = vdwg.mxu0
        %6599 = vmatprep.subr.bf16.mxu0 %v5903
        %6600 = vmatpush1.bf16.msra.mxu0 %v5902
        %6601 = vmatprep.subr.bf16.mxu0 %v5909
        %6602 = vmatpush1.bf16.msra.mxu0 %v5908
        %6603 = vmatprep.subr.bf16.mxu0 %v5915
        %6604 = vmatpush1.bf16.msra.mxu0 %v5914
        %6605 = vmatprep.subr.bf16.mxu0 %v5921
        %6606 = vmatpush1.bf16.msra.mxu0 %v5920
        %6607 = vmatprep.subr.bf16.mxu0 %v5927
        %6608 = vmatpush1.bf16.msra.mxu0 %v5926
        %6609 = vmatprep.subr.bf16.mxu0 %v5933
        %6610 = vmatpush1.bf16.msra.mxu0 %v5932
        %6611 = vmatprep.subr.bf16.mxu0 %v5939
        %6612 = vmatpush1.bf16.msra.mxu0 %v5938
        %6613 = vmatprep.subr.bf16.mxu0 %v5945
        %6614 = vmatpush1.bf16.msra.mxu0 %v5944
        %6615 = vmatprep.subr.bf16.mxu0 %v5951
        %6616 = vmatpush1.bf16.msra.mxu0 %v5950
        %6617 = vmatprep.subr.bf16.mxu0 %v5957
        %6618 = vmatpush1.bf16.msra.mxu0 %v5956
        %6619 = vmatprep.subr.bf16.mxu0 %v5963
        %6620 = vmatpush1.bf16.msra.mxu0 %v5962
        %6621 = vmatprep.subr.bf16.mxu0 %v5969
        %6622 = vmatpush1.bf16.msra.mxu0 %v5968
        %6623 = vmatprep.subr.bf16.mxu0 %v5975
        %6624 = vmatpush1.bf16.msra.mxu0 %v5974
        %6625 = vmatprep.subr.bf16.mxu0 %v5981
        %6626 = vmatpush1.bf16.msra.mxu0 %v5980
        %6627 = vmatprep.subr.bf16.mxu0 %v5987
        %6628 = vmatpush1.bf16.msra.mxu0 %v5986
        %6629 = vmatprep.subr.bf16.mxu0 %v5993
        %6630 = vmatpush1.bf16.msra.mxu0 %v5992
        %6631 = vmatprep.mubr.bf16.mxu0 %v5025
        %6632 = vmatmul.mubr.bf16.gmra.mrb[0].mxu0 %v5024
        %v6633 = vpop.f32.mrb[0].mxu0
        %v6634 = vadd.f32 %v4996, %v6633
        %v6635 = vpop.f32.mrb[0].mxu0
        %v6636 = vadd.f32 %v5000, %v6635
        %v6637 = vpop.f32.mrb[0].mxu0
        %v6638 = vpop.f32.mrb[0].mxu0
        %6639 = vdwg.mxu0
        %6640 = vmatprep.subr.bf16.mxu0 %v5999
        %6641 = vmatpush1.bf16.msra.mxu0 %v5998
        %6642 = vmatprep.subr.bf16.mxu0 %v6005
        %6643 = vmatpush1.bf16.msra.mxu0 %v6004
        %6644 = vmatprep.subr.bf16.mxu0 %v6011
        %6645 = vmatpush1.bf16.msra.mxu0 %v6010
        %6646 = vmatprep.subr.bf16.mxu0 %v6017
        %6647 = vmatpush1.bf16.msra.mxu0 %v6016
        %6648 = vmatprep.subr.bf16.mxu0 %v6023
        %6649 = vmatpush1.bf16.msra.mxu0 %v6022
        %6650 = vmatprep.subr.bf16.mxu0 %v6029
        %6651 = vmatpush1.bf16.msra.mxu0 %v6028
        %6652 = vmatprep.subr.bf16.mxu0 %v6035
        %6653 = vmatpush1.bf16.msra.mxu0 %v6034
        %6654 = vmatprep.subr.bf16.mxu0 %v6041
        %6655 = vmatpush1.bf16.msra.mxu0 %v6040
        %6656 = vmatprep.subr.bf16.mxu0 %v6047
        %6657 = vmatpush1.bf16.msra.mxu0 %v6046
        %6658 = vmatprep.subr.bf16.mxu0 %v6053
        %6659 = vmatpush1.bf16.msra.mxu0 %v6052
        %6660 = vmatprep.subr.bf16.mxu0 %v6059
        %6661 = vmatpush1.bf16.msra.mxu0 %v6058
        %6662 = vmatprep.subr.bf16.mxu0 %v6065
        %6663 = vmatpush1.bf16.msra.mxu0 %v6064
        %6664 = vmatprep.subr.bf16.mxu0 %v6071
        %6665 = vmatpush1.bf16.msra.mxu0 %v6070
        %6666 = vmatprep.subr.bf16.mxu0 %v6077
        %6667 = vmatpush1.bf16.msra.mxu0 %v6076
        %6668 = vmatprep.subr.bf16.mxu0 %v6083
        %6669 = vmatpush1.bf16.msra.mxu0 %v6082
        %6670 = vmatprep.subr.bf16.mxu0 %v6089
        %6671 = vmatpush1.bf16.msra.mxu0 %v6088
        %6672 = vmatprep.mubr.bf16.mxu0 %v5027
        %6673 = vmatmul.mubr.bf16.gmra.mrb[0].mxu0 %v5026
        %v6674 = vpop.f32.mrb[0].mxu0
        %v6675 = vadd.f32 %v6634, %v6674
        %v6676 = vpop.f32.mrb[0].mxu0
        %v6677 = vadd.f32 %v6636, %v6676
        %v6678 = vpop.f32.mrb[0].mxu0
        %v6679 = vpop.f32.mrb[0].mxu0
        %6680 = vdwg.mxu0
        %6681 = vmatprep.subr.bf16.mxu0 %v6095
        %6682 = vmatpush1.bf16.msra.mxu0 %v6094
        %6683 = vmatprep.subr.bf16.mxu0 %v6101
        %6684 = vmatpush1.bf16.msra.mxu0 %v6100
        %6685 = vmatprep.subr.bf16.mxu0 %v6107
        %6686 = vmatpush1.bf16.msra.mxu0 %v6106
        %6687 = vmatprep.subr.bf16.mxu0 %v6113
        %6688 = vmatpush1.bf16.msra.mxu0 %v6112
        %6689 = vmatprep.subr.bf16.mxu0 %v6119
        %6690 = vmatpush1.bf16.msra.mxu0 %v6118
        %6691 = vmatprep.subr.bf16.mxu0 %v6125
        %6692 = vmatpush1.bf16.msra.mxu0 %v6124
        %6693 = vmatprep.subr.bf16.mxu0 %v6131
        %6694 = vmatpush1.bf16.msra.mxu0 %v6130
        %6695 = vmatprep.subr.bf16.mxu0 %v6137
        %6696 = vmatpush1.bf16.msra.mxu0 %v6136
        %6697 = vmatprep.subr.bf16.mxu0 %v6143
        %6698 = vmatpush1.bf16.msra.mxu0 %v6142
        %6699 = vmatprep.subr.bf16.mxu0 %v6149
        %6700 = vmatpush1.bf16.msra.mxu0 %v6148
        %6701 = vmatprep.subr.bf16.mxu0 %v6155
        %6702 = vmatpush1.bf16.msra.mxu0 %v6154
        %6703 = vmatprep.subr.bf16.mxu0 %v6161
        %6704 = vmatpush1.bf16.msra.mxu0 %v6160
        %6705 = vmatprep.subr.bf16.mxu0 %v6167
        %6706 = vmatpush1.bf16.msra.mxu0 %v6166
        %6707 = vmatprep.subr.bf16.mxu0 %v6173
        %6708 = vmatpush1.bf16.msra.mxu0 %v6172
        %6709 = vmatprep.subr.bf16.mxu0 %v6179
        %6710 = vmatpush1.bf16.msra.mxu0 %v6178
        %6711 = vmatprep.subr.bf16.mxu0 %v6185
        %6712 = vmatpush1.bf16.msra.mxu0 %v6184
        %6713 = vmatprep.mubr.bf16.mxu0 %v5029
        %6714 = vmatmul.mubr.bf16.gmra.mrb[0].mxu0 %v5028
        %v6715 = vpop.f32.mrb[0].mxu0
        %v6716 = vadd.f32 %v6675, %v6715
        %v6717 = vpop.f32.mrb[0].mxu0
        %v6718 = vadd.f32 %v6677, %v6717
        %v6719 = vpop.f32.mrb[0].mxu0
        %v6720 = vpop.f32.mrb[0].mxu0
        %6721 = vdwg.mxu0
        %6722 = vmatprep.subr.bf16.mxu0 %v5905
        %6723 = vmatpush1.bf16.msra.mxu0 %v5904
        %6724 = vmatprep.subr.bf16.mxu0 %v5911
        %6725 = vmatpush1.bf16.msra.mxu0 %v5910
        %6726 = vmatprep.subr.bf16.mxu0 %v5917
        %6727 = vmatpush1.bf16.msra.mxu0 %v5916
        %6728 = vmatprep.subr.bf16.mxu0 %v5923
        %6729 = vmatpush1.bf16.msra.mxu0 %v5922
        %6730 = vmatprep.subr.bf16.mxu0 %v5929
        %6731 = vmatpush1.bf16.msra.mxu0 %v5928
        %6732 = vmatprep.subr.bf16.mxu0 %v5935
        %6733 = vmatpush1.bf16.msra.mxu0 %v5934
        %6734 = vmatprep.subr.bf16.mxu0 %v5941
        %6735 = vmatpush1.bf16.msra.mxu0 %v5940
        %6736 = vmatprep.subr.bf16.mxu0 %v5947
        %6737 = vmatpush1.bf16.msra.mxu0 %v5946
        %6738 = vmatprep.subr.bf16.mxu0 %v5953
        %6739 = vmatpush1.bf16.msra.mxu0 %v5952
        %6740 = vmatprep.subr.bf16.mxu0 %v5959
        %6741 = vmatpush1.bf16.msra.mxu0 %v5958
        %6742 = vmatprep.subr.bf16.mxu0 %v5965
        %6743 = vmatpush1.bf16.msra.mxu0 %v5964
        %6744 = vmatprep.subr.bf16.mxu0 %v5971
        %6745 = vmatpush1.bf16.msra.mxu0 %v5970
        %6746 = vmatprep.subr.bf16.mxu0 %v5977
        %6747 = vmatpush1.bf16.msra.mxu0 %v5976
        %6748 = vmatprep.subr.bf16.mxu0 %v5983
        %6749 = vmatpush1.bf16.msra.mxu0 %v5982
        %6750 = vmatprep.subr.bf16.mxu0 %v5989
        %6751 = vmatpush1.bf16.msra.mxu0 %v5988
        %6752 = vmatprep.subr.bf16.mxu0 %v5995
        %6753 = vmatpush1.bf16.msra.mxu0 %v5994
        %6754 = vmatprep.mubr.bf16.mxu0 %v5025
        %6755 = vmatmul.mubr.bf16.gmra.mrb[0].mxu0 %v5024
        %v6756 = vpop.f32.mrb[0].mxu0
        %v6757 = vadd.f32 %v5004, %v6756
        %v6758 = vpop.f32.mrb[0].mxu0
        %v6759 = vadd.f32 %v5008, %v6758
        %v6760 = vpop.f32.mrb[0].mxu0
        %v6761 = vpop.f32.mrb[0].mxu0
        %6762 = vdwg.mxu0
        %6763 = vmatprep.subr.bf16.mxu0 %v6001
        %6764 = vmatpush1.bf16.msra.mxu0 %v6000
        %6765 = vmatprep.subr.bf16.mxu0 %v6007
        %6766 = vmatpush1.bf16.msra.mxu0 %v6006
        %6767 = vmatprep.subr.bf16.mxu0 %v6013
        %6768 = vmatpush1.bf16.msra.mxu0 %v6012
        %6769 = vmatprep.subr.bf16.mxu0 %v6019
        %6770 = vmatpush1.bf16.msra.mxu0 %v6018
        %6771 = vmatprep.subr.bf16.mxu0 %v6025
        %6772 = vmatpush1.bf16.msra.mxu0 %v6024
        %6773 = vmatprep.subr.bf16.mxu0 %v6031
        %6774 = vmatpush1.bf16.msra.mxu0 %v6030
        %6775 = vmatprep.subr.bf16.mxu0 %v6037
        %6776 = vmatpush1.bf16.msra.mxu0 %v6036
        %6777 = vmatprep.subr.bf16.mxu0 %v6043
        %6778 = vmatpush1.bf16.msra.mxu0 %v6042
        %6779 = vmatprep.subr.bf16.mxu0 %v6049
        %6780 = vmatpush1.bf16.msra.mxu0 %v6048
        %6781 = vmatprep.subr.bf16.mxu0 %v6055
        %6782 = vmatpush1.bf16.msra.mxu0 %v6054
        %6783 = vmatprep.subr.bf16.mxu0 %v6061
        %6784 = vmatpush1.bf16.msra.mxu0 %v6060
        %6785 = vmatprep.subr.bf16.mxu0 %v6067
        %6786 = vmatpush1.bf16.msra.mxu0 %v6066
        %6787 = vmatprep.subr.bf16.mxu0 %v6073
        %6788 = vmatpush1.bf16.msra.mxu0 %v6072
        %6789 = vmatprep.subr.bf16.mxu0 %v6079
        %6790 = vmatpush1.bf16.msra.mxu0 %v6078
        %6791 = vmatprep.subr.bf16.mxu0 %v6085
        %6792 = vmatpush1.bf16.msra.mxu0 %v6084
        %6793 = vmatprep.subr.bf16.mxu0 %v6091
        %6794 = vmatpush1.bf16.msra.mxu0 %v6090
        %6795 = vmatprep.mubr.bf16.mxu0 %v5027
        %6796 = vmatmul.mubr.bf16.gmra.mrb[0].mxu0 %v5026
        %v6797 = vpop.f32.mrb[0].mxu0
        %v6798 = vadd.f32 %v6757, %v6797
        %v6799 = vpop.f32.mrb[0].mxu0
        %v6800 = vadd.f32 %v6759, %v6799
        %v6801 = vpop.f32.mrb[0].mxu0
        %v6802 = vpop.f32.mrb[0].mxu0
        %6803 = vdwg.mxu0
        %6804 = vmatprep.subr.bf16.mxu0 %v6097
        %6805 = vmatpush1.bf16.msra.mxu0 %v6096
        %6806 = vmatprep.subr.bf16.mxu0 %v6103
        %6807 = vmatpush1.bf16.msra.mxu0 %v6102
        %6808 = vmatprep.subr.bf16.mxu0 %v6109
        %6809 = vmatpush1.bf16.msra.mxu0 %v6108
        %6810 = vmatprep.subr.bf16.mxu0 %v6115
        %6811 = vmatpush1.bf16.msra.mxu0 %v6114
        %6812 = vmatprep.subr.bf16.mxu0 %v6121
        %6813 = vmatpush1.bf16.msra.mxu0 %v6120
        %6814 = vmatprep.subr.bf16.mxu0 %v6127
        %6815 = vmatpush1.bf16.msra.mxu0 %v6126
        %6816 = vmatprep.subr.bf16.mxu0 %v6133
        %6817 = vmatpush1.bf16.msra.mxu0 %v6132
        %6818 = vmatprep.subr.bf16.mxu0 %v6139
        %6819 = vmatpush1.bf16.msra.mxu0 %v6138
        %6820 = vmatprep.subr.bf16.mxu0 %v6145
        %6821 = vmatpush1.bf16.msra.mxu0 %v6144
        %6822 = vmatprep.subr.bf16.mxu0 %v6151
        %6823 = vmatpush1.bf16.msra.mxu0 %v6150
        %6824 = vmatprep.subr.bf16.mxu0 %v6157
        %6825 = vmatpush1.bf16.msra.mxu0 %v6156
        %6826 = vmatprep.subr.bf16.mxu0 %v6163
        %6827 = vmatpush1.bf16.msra.mxu0 %v6162
        %6828 = vmatprep.subr.bf16.mxu0 %v6169
        %6829 = vmatpush1.bf16.msra.mxu0 %v6168
        %6830 = vmatprep.subr.bf16.mxu0 %v6175
        %6831 = vmatpush1.bf16.msra.mxu0 %v6174
        %6832 = vmatprep.subr.bf16.mxu0 %v6181
        %6833 = vmatpush1.bf16.msra.mxu0 %v6180
        %6834 = vmatprep.subr.bf16.mxu0 %v6187
        %6835 = vmatpush1.bf16.msra.mxu0 %v6186
        %6836 = vmatprep.mubr.bf16.mxu0 %v5029
        %6837 = vmatmul.mubr.bf16.gmra.mrb[0].mxu0 %v5028
        %v6838 = vpop.f32.mrb[0].mxu0
        %v6839 = vadd.f32 %v6798, %v6838
        %v6840 = vpop.f32.mrb[0].mxu0
        %v6841 = vadd.f32 %v6800, %v6840
        %v6842 = vpop.f32.mrb[0].mxu0
        %v6843 = vpop.f32.mrb[0].mxu0
        %6844 = vdwg.mxu0
        %v6845 = vpack.c.bf16 %v6593, %v6593
        %v6846 = vpack.c.bf16 %v6595, %v6595
        %v6847 = vpack.c.bf16 %v6716, %v6716
        %v6848 = vpack.c.bf16 %v6718, %v6718
        %v6849 = vpack.c.bf16 %v6839, %v6839
        %v6850 = vpack.c.bf16 %v6841, %v6841
        %v6851 = vld [vmem:[#allocation2] sm:$0xff]
        %v6852 = vld [vmem:[#allocation2 + $0x8] sm:$0xff]
        %v6853 = vld [vmem:[#allocation2 + $0x10] sm:$0xff]
        %v6857 = vunpack.c.l.b16 %v6851
        %v6858 = vunpack.c.h.b16 %v6851
        %v6859 = vunpack.c.l.b16 %v6852
        %v6860 = vunpack.c.h.b16 %v6852
        %v6861 = vunpack.c.l.b16 %v6853
        %v6862 = vunpack.c.h.b16 %v6853
        %v6863 = vpack.c.b16 %v6857, %v6857
        %v6864 = vpack.c.b16 %v6858, %v6858
        %v6865 = vpack.c.b16 %v6859, %v6859
        %v6866 = vpack.c.b16 %v6860, %v6860
        %v6867 = vpack.c.b16 %v6861, %v6861
        %v6868 = vpack.c.b16 %v6862, %v6862
        %6875 = vmatprep.subr.bf16.mxu0 %v6864
        %6876 = vmatpush1.bf16.xpose.msra.mxu0 %v6863
        %6877 = vmatprep.subr.bf16.mxu0 0
        %6878 = vmatpush1.bf16.xpose.msra.mxu0 0
        %6879 = vmatprep.subr.bf16.mxu0 0
        %6880 = vmatpush1.bf16.xpose.msra.mxu0 0
        %6881 = vmatprep.subr.bf16.mxu0 0
        %6882 = vmatpush1.bf16.xpose.msra.mxu0 0
        %6883 = vmatprep.subr.bf16.mxu0 0
        %6884 = vmatpush1.bf16.xpose.msra.mxu0 0
        %6885 = vmatprep.subr.bf16.mxu0 0
        %6886 = vmatpush1.bf16.xpose.msra.mxu0 0
        %6887 = vmatprep.subr.bf16.mxu0 0
        %6888 = vmatpush1.bf16.xpose.msra.mxu0 0
        %6889 = vmatprep.subr.bf16.mxu0 0
        %6890 = vmatpush1.bf16.xpose.msra.mxu0 0
        %6891 = vmatprep.subr.bf16.mxu0 0
        %6892 = vmatpush1.bf16.xpose.msra.mxu0 0
        %6893 = vmatprep.subr.bf16.mxu0 0
        %6894 = vmatpush1.bf16.xpose.msra.mxu0 0
        %6895 = vmatprep.subr.bf16.mxu0 0
        %6896 = vmatpush1.bf16.xpose.msra.mxu0 0
        %6897 = vmatprep.subr.bf16.mxu0 0
        %6898 = vmatpush1.bf16.xpose.msra.mxu0 0
        %6899 = vmatprep.subr.bf16.mxu0 0
        %6900 = vmatpush1.bf16.xpose.msra.mxu0 0
        %6901 = vmatprep.subr.bf16.mxu0 0
        %6902 = vmatpush1.bf16.xpose.msra.mxu0 0
        %6903 = vmatprep.subr.bf16.mxu0 0
        %6904 = vmatpush1.bf16.xpose.msra.mxu0 0
        %6905 = vmatprep.subr.bf16.mxu0 0
        %6906 = vmatpush1.bf16.xpose.msra.mxu0 0
        %6907 = vmatprep.mubr.bf16.mxu0 %v6846
        %6908 = vmatmul.mubr.bf16.gmra.mrb[0].mxu0 %v6845
        %v6909 = vpop.f32.mrb[0].mxu0
        %v6910 = vadd.f32 0.0, %v6909
        %v6911 = vpop.f32.mrb[0].mxu0
        %v6912 = vpop.f32.mrb[0].mxu0
        %v6913 = vpop.f32.mrb[0].mxu0
        %6914 = vdwg.mxu0
        %6915 = vmatprep.subr.bf16.mxu0 %v6866
        %6916 = vmatpush1.bf16.xpose.msra.mxu0 %v6865
        %6917 = vmatprep.subr.bf16.mxu0 0
        %6918 = vmatpush1.bf16.xpose.msra.mxu0 0
        %6919 = vmatprep.subr.bf16.mxu0 0
        %6920 = vmatpush1.bf16.xpose.msra.mxu0 0
        %6921 = vmatprep.subr.bf16.mxu0 0
        %6922 = vmatpush1.bf16.xpose.msra.mxu0 0
        %6923 = vmatprep.subr.bf16.mxu0 0
        %6924 = vmatpush1.bf16.xpose.msra.mxu0 0
        %6925 = vmatprep.subr.bf16.mxu0 0
        %6926 = vmatpush1.bf16.xpose.msra.mxu0 0
        %6927 = vmatprep.subr.bf16.mxu0 0
        %6928 = vmatpush1.bf16.xpose.msra.mxu0 0
        %6929 = vmatprep.subr.bf16.mxu0 0
        %6930 = vmatpush1.bf16.xpose.msra.mxu0 0
        %6931 = vmatprep.subr.bf16.mxu0 0
        %6932 = vmatpush1.bf16.xpose.msra.mxu0 0
        %6933 = vmatprep.subr.bf16.mxu0 0
        %6934 = vmatpush1.bf16.xpose.msra.mxu0 0
        %6935 = vmatprep.subr.bf16.mxu0 0
        %6936 = vmatpush1.bf16.xpose.msra.mxu0 0
        %6937 = vmatprep.subr.bf16.mxu0 0
        %6938 = vmatpush1.bf16.xpose.msra.mxu0 0
        %6939 = vmatprep.subr.bf16.mxu0 0
        %6940 = vmatpush1.bf16.xpose.msra.mxu0 0
        %6941 = vmatprep.subr.bf16.mxu0 0
        %6942 = vmatpush1.bf16.xpose.msra.mxu0 0
        %6943 = vmatprep.subr.bf16.mxu0 0
        %6944 = vmatpush1.bf16.xpose.msra.mxu0 0
        %6945 = vmatprep.subr.bf16.mxu0 0
        %6946 = vmatpush1.bf16.xpose.msra.mxu0 0
        %6947 = vmatprep.mubr.bf16.mxu0 %v6848
        %6948 = vmatmul.mubr.bf16.gmra.mrb[0].mxu0 %v6847
        %v6949 = vpop.f32.mrb[0].mxu0
        %v6950 = vadd.f32 %v6910, %v6949
        %v6951 = vpop.f32.mrb[0].mxu0
        %v6952 = vpop.f32.mrb[0].mxu0
        %v6953 = vpop.f32.mrb[0].mxu0
        %6954 = vdwg.mxu0
        %6955 = vmatprep.subr.bf16.mxu0 %v6868
        %6956 = vmatpush1.bf16.xpose.msra.mxu0 %v6867
        %6957 = vmatprep.subr.bf16.mxu0 0
        %6958 = vmatpush1.bf16.xpose.msra.mxu0 0
        %6959 = vmatprep.subr.bf16.mxu0 0
        %6960 = vmatpush1.bf16.xpose.msra.mxu0 0
        %6961 = vmatprep.subr.bf16.mxu0 0
        %6962 = vmatpush1.bf16.xpose.msra.mxu0 0
        %6963 = vmatprep.subr.bf16.mxu0 0
        %6964 = vmatpush1.bf16.xpose.msra.mxu0 0
        %6965 = vmatprep.subr.bf16.mxu0 0
        %6966 = vmatpush1.bf16.xpose.msra.mxu0 0
        %6967 = vmatprep.subr.bf16.mxu0 0
        %6968 = vmatpush1.bf16.xpose.msra.mxu0 0
        %6969 = vmatprep.subr.bf16.mxu0 0
        %6970 = vmatpush1.bf16.xpose.msra.mxu0 0
        %6971 = vmatprep.subr.bf16.mxu0 0
        %6972 = vmatpush1.bf16.xpose.msra.mxu0 0
        %6973 = vmatprep.subr.bf16.mxu0 0
        %6974 = vmatpush1.bf16.xpose.msra.mxu0 0
        %6975 = vmatprep.subr.bf16.mxu0 0
        %6976 = vmatpush1.bf16.xpose.msra.mxu0 0
        %6977 = vmatprep.subr.bf16.mxu0 0
        %6978 = vmatpush1.bf16.xpose.msra.mxu0 0
        %6979 = vmatprep.subr.bf16.mxu0 0
        %6980 = vmatpush1.bf16.xpose.msra.mxu0 0
        %6981 = vmatprep.subr.bf16.mxu0 0
        %6982 = vmatpush1.bf16.xpose.msra.mxu0 0
        %6983 = vmatprep.subr.bf16.mxu0 0
        %6984 = vmatpush1.bf16.xpose.msra.mxu0 0
        %6985 = vmatprep.subr.bf16.mxu0 0
        %6986 = vmatpush1.bf16.xpose.msra.mxu0 0
        %6987 = vmatprep.mubr.bf16.mxu0 %v6850
        %6988 = vmatmul.mubr.bf16.gmra.mrb[0].mxu0 %v6849
        %v6989 = vpop.f32.mrb[0].mxu0
        %v6990 = vadd.f32 %v6950, %v6989
        %v6991 = vpop.f32.mrb[0].mxu0
        %v6992 = vpop.f32.mrb[0].mxu0
        %v6993 = vpop.f32.mrb[0].mxu0
        %6994 = vdwg.mxu0
        %vm6995 = vcmask 64512
        %v6996 = vsel %vm6995, %v6990, -inf
        %6997 = vmax.xlane.f32.xlu0 %v6996
        %v6998 = vpop.xlane.xlu0 %6997
        %v6999 = vsub.f32 %v6990, %v6998
        %v7000 = vmul.f32 %v6999, 1.442695
        %v7001 = vpow.pop %v7000
        %v7002 = vsel %vm6995, %v7001, 0.0
        %7003 = vadd.xlane.f32.xlu0 %v7002
        %v7004 = vpop.xlane.xlu0 %7003
        %v7005 = vrcp.pop %v7004
        %v7006 = vmul.f32 %v7001, %v7005
        %v7007 = vpack.c.bf16 %v7006, %v7006
        %v7008 = vld [vmem:[#allocation3] sm:$0xff]
        %v7009 = vld [vmem:[#allocation3 + $0x8] sm:$0xff]
        %v7010 = vld [vmem:[#allocation3 + $0x10] sm:$0xff]
        %v7014 = vunpack.c.l.b16 %v7008
        %v7015 = vunpack.c.h.b16 %v7008
        %v7016 = vunpack.c.l.b16 %v7009
        %v7017 = vunpack.c.h.b16 %v7009
        %v7018 = vunpack.c.l.b16 %v7010
        %v7019 = vunpack.c.h.b16 %v7010
        %v7020 = vpack.c.b16 %v7014, %v7014
        %v7021 = vpack.c.b16 %v7015, %v7015
        %v7022 = vpack.c.b16 %v7016, %v7016
        %v7023 = vpack.c.b16 %v7017, %v7017
        %v7024 = vpack.c.b16 %v7018, %v7018
        %v7025 = vpack.c.b16 %v7019, %v7019
        %v7027 = vsel %vm6995, %v7007, 0
        %vm7029 = vcmask 1043456
        %v7031 = vsel %vm7029, %v7020, 0
        %v7034 = vsel %vm7029, %v7021, 0
        %v7037 = vsel %vm7029, %v7022, 0
        %v7040 = vsel %vm7029, %v7023, 0
        %v7043 = vsel %vm7029, %v7024, 0
        %v7046 = vsel %vm7029, %v7025, 0
        %7048 = vmatprep.subr.bf16.mxu0 %v7034
        %7049 = vmatpush1.bf16.msra.mxu0 %v7031
        %7050 = vmatprep.subr.bf16.mxu0 0
        %7051 = vmatpush1.bf16.msra.mxu0 0
        %7052 = vmatprep.subr.bf16.mxu0 0
        %7053 = vmatpush1.bf16.msra.mxu0 0
        %7054 = vmatprep.subr.bf16.mxu0 0
        %7055 = vmatpush1.bf16.msra.mxu0 0
        %7056 = vmatprep.subr.bf16.mxu0 0
        %7057 = vmatpush1.bf16.msra.mxu0 0
        %7058 = vmatprep.subr.bf16.mxu0 0
        %7059 = vmatpush1.bf16.msra.mxu0 0
        %7060 = vmatprep.subr.bf16.mxu0 0
        %7061 = vmatpush1.bf16.msra.mxu0 0
        %7062 = vmatprep.subr.bf16.mxu0 0
        %7063 = vmatpush1.bf16.msra.mxu0 0
        %7064 = vmatprep.subr.bf16.mxu0 0
        %7065 = vmatpush1.bf16.msra.mxu0 0
        %7066 = vmatprep.subr.bf16.mxu0 0
        %7067 = vmatpush1.bf16.msra.mxu0 0
        %7068 = vmatprep.subr.bf16.mxu0 0
        %7069 = vmatpush1.bf16.msra.mxu0 0
        %7070 = vmatprep.subr.bf16.mxu0 0
        %7071 = vmatpush1.bf16.msra.mxu0 0
        %7072 = vmatprep.subr.bf16.mxu0 0
        %7073 = vmatpush1.bf16.msra.mxu0 0
        %7074 = vmatprep.subr.bf16.mxu0 0
        %7075 = vmatpush1.bf16.msra.mxu0 0
        %7076 = vmatprep.subr.bf16.mxu0 0
        %7077 = vmatpush1.bf16.msra.mxu0 0
        %7078 = vmatprep.subr.bf16.mxu0 0
        %7079 = vmatpush1.bf16.msra.mxu0 0
        %7080 = vmatprep.mubr.bf16.mxu0 0
        %7081 = vmatmul.mubr.bf16.gmra.mrb[0].mxu0 %v7027
        %v7082 = vpop.f32.mrb[0].mxu0
        %v7083 = vadd.f32 0.0, %v7082
        %v7084 = vpop.f32.mrb[0].mxu0
        %v7085 = vadd.f32 0.0, %v7084
        %v7086 = vpop.f32.mrb[0].mxu0
        %v7087 = vpop.f32.mrb[0].mxu0
        %7088 = vdwg.mxu0
        %7089 = vmatprep.subr.bf16.mxu0 %v7040
        %7090 = vmatpush1.bf16.msra.mxu0 %v7037
        %7091 = vmatprep.subr.bf16.mxu0 0
        %7092 = vmatpush1.bf16.msra.mxu0 0
        %7093 = vmatprep.subr.bf16.mxu0 0
        %7094 = vmatpush1.bf16.msra.mxu0 0
        %7095 = vmatprep.subr.bf16.mxu0 0
        %7096 = vmatpush1.bf16.msra.mxu0 0
        %7097 = vmatprep.subr.bf16.mxu0 0
        %7098 = vmatpush1.bf16.msra.mxu0 0
        %7099 = vmatprep.subr.bf16.mxu0 0
        %7100 = vmatpush1.bf16.msra.mxu0 0
        %7101 = vmatprep.subr.bf16.mxu0 0
        %7102 = vmatpush1.bf16.msra.mxu0 0
        %7103 = vmatprep.subr.bf16.mxu0 0
        %7104 = vmatpush1.bf16.msra.mxu0 0
        %7105 = vmatprep.subr.bf16.mxu0 0
        %7106 = vmatpush1.bf16.msra.mxu0 0
        %7107 = vmatprep.subr.bf16.mxu0 0
        %7108 = vmatpush1.bf16.msra.mxu0 0
        %7109 = vmatprep.subr.bf16.mxu0 0
        %7110 = vmatpush1.bf16.msra.mxu0 0
        %7111 = vmatprep.subr.bf16.mxu0 0
        %7112 = vmatpush1.bf16.msra.mxu0 0
        %7113 = vmatprep.subr.bf16.mxu0 0
        %7114 = vmatpush1.bf16.msra.mxu0 0
        %7115 = vmatprep.subr.bf16.mxu0 0
        %7116 = vmatpush1.bf16.msra.mxu0 0
        %7117 = vmatprep.subr.bf16.mxu0 0
        %7118 = vmatpush1.bf16.msra.mxu0 0
        %7119 = vmatprep.subr.bf16.mxu0 0
        %7120 = vmatpush1.bf16.msra.mxu0 0
        %7121 = vmatprep.mubr.bf16.mxu0 0
        %7122 = vmatmul.mubr.bf16.gmra.mrb[0].mxu0 %v7027
        %v7123 = vpop.f32.mrb[0].mxu0
        %v7124 = vadd.f32 0.0, %v7123
        %v7125 = vpop.f32.mrb[0].mxu0
        %v7126 = vadd.f32 0.0, %v7125
        %v7127 = vpop.f32.mrb[0].mxu0
        %v7128 = vpop.f32.mrb[0].mxu0
        %7129 = vdwg.mxu0
        %7130 = vmatprep.subr.bf16.mxu0 %v7046
        %7131 = vmatpush1.bf16.msra.mxu0 %v7043
        %7132 = vmatprep.subr.bf16.mxu0 0
        %7133 = vmatpush1.bf16.msra.mxu0 0
        %7134 = vmatprep.subr.bf16.mxu0 0
        %7135 = vmatpush1.bf16.msra.mxu0 0
        %7136 = vmatprep.subr.bf16.mxu0 0
        %7137 = vmatpush1.bf16.msra.mxu0 0
        %7138 = vmatprep.subr.bf16.mxu0 0
        %7139 = vmatpush1.bf16.msra.mxu0 0
        %7140 = vmatprep.subr.bf16.mxu0 0
        %7141 = vmatpush1.bf16.msra.mxu0 0
        %7142 = vmatprep.subr.bf16.mxu0 0
        %7143 = vmatpush1.bf16.msra.mxu0 0
        %7144 = vmatprep.subr.bf16.mxu0 0
        %7145 = vmatpush1.bf16.msra.mxu0 0
        %7146 = vmatprep.subr.bf16.mxu0 0
        %7147 = vmatpush1.bf16.msra.mxu0 0
        %7148 = vmatprep.subr.bf16.mxu0 0
        %7149 = vmatpush1.bf16.msra.mxu0 0
        %7150 = vmatprep.subr.bf16.mxu0 0
        %7151 = vmatpush1.bf16.msra.mxu0 0
        %7152 = vmatprep.subr.bf16.mxu0 0
        %7153 = vmatpush1.bf16.msra.mxu0 0
        %7154 = vmatprep.subr.bf16.mxu0 0
        %7155 = vmatpush1.bf16.msra.mxu0 0
        %7156 = vmatprep.subr.bf16.mxu0 0
        %7157 = vmatpush1.bf16.msra.mxu0 0
        %7158 = vmatprep.subr.bf16.mxu0 0
        %7159 = vmatpush1.bf16.msra.mxu0 0
        %7160 = vmatprep.subr.bf16.mxu0 0
        %7161 = vmatpush1.bf16.msra.mxu0 0
        %7162 = vmatprep.mubr.bf16.mxu0 0
        %7163 = vmatmul.mubr.bf16.gmra.mrb[0].mxu0 %v7027
        %v7164 = vpop.f32.mrb[0].mxu0
        %v7165 = vadd.f32 0.0, %v7164
        %v7166 = vpop.f32.mrb[0].mxu0
        %v7167 = vadd.f32 0.0, %v7166
        %v7168 = vpop.f32.mrb[0].mxu0
        %v7169 = vpop.f32.mrb[0].mxu0
        %7170 = vdwg.mxu0
        %v7171 = vpack.c.bf16 %v7083, %v7083
        %v7172 = vpack.c.bf16 %v7085, %v7085
        %v7173 = vpack.c.bf16 %v7124, %v7124
        %v7174 = vpack.c.bf16 %v7126, %v7126
        %v7175 = vpack.c.bf16 %v7165, %v7165
        %v7176 = vpack.c.bf16 %v7167, %v7167
        %v7177 = vld [vmem:[%s4] sm:$0xff]
        %v7178 = vld [vmem:[%s4 + $0x8] sm:$0xff]
        %v7179 = vld [vmem:[%s4 + $0x10] sm:$0xff]
        %v7180 = vld [vmem:[%s4 + $0x18] sm:$0xff]
        %v7181 = vld [vmem:[%s4 + $0x20] sm:$0xff]
        %v7182 = vld [vmem:[%s4 + $0x28] sm:$0xff]
        %v7183 = vld [vmem:[%s4 + $0x30] sm:$0xff]
        %v7184 = vld [vmem:[%s4 + $0x38] sm:$0xff]
        %v7185 = vld [vmem:[%s4 + $0x40] sm:$0xff]
        %v7186 = vld [vmem:[%s4 + $0x48] sm:$0xff]
        %v7187 = vld [vmem:[%s4 + $0x50] sm:$0xff]
        %v7188 = vld [vmem:[%s4 + $0x58] sm:$0xff]
        %v7189 = vld [vmem:[%s4 + $0x60] sm:$0xff]
        %v7190 = vld [vmem:[%s4 + $0x68] sm:$0xff]
        %v7191 = vld [vmem:[%s4 + $0x70] sm:$0xff]
        %v7192 = vld [vmem:[%s4 + $0x78] sm:$0xff]
        %v7193 = vld [vmem:[%s4 + $0x80] sm:$0xff]
        %v7194 = vld [vmem:[%s4 + $0x88] sm:$0xff]
        %v7195 = vld [vmem:[%s4 + $0x90] sm:$0xff]
        %v7196 = vld [vmem:[%s4 + $0x98] sm:$0xff]
        %v7197 = vld [vmem:[%s4 + $0xa0] sm:$0xff]
        %v7198 = vld [vmem:[%s4 + $0xa8] sm:$0xff]
        %v7199 = vld [vmem:[%s4 + $0xb0] sm:$0xff]
        %v7200 = vld [vmem:[%s4 + $0xb8] sm:$0xff]
        %v7201 = vld [vmem:[%s4 + $0xc0] sm:$0xff]
        %v7202 = vld [vmem:[%s4 + $0xc8] sm:$0xff]
        %v7203 = vld [vmem:[%s4 + $0xd0] sm:$0xff]
        %v7204 = vld [vmem:[%s4 + $0xd8] sm:$0xff]
        %v7205 = vld [vmem:[%s4 + $0xe0] sm:$0xff]
        %v7206 = vld [vmem:[%s4 + $0xe8] sm:$0xff]
        %v7207 = vld [vmem:[%s4 + $0xf0] sm:$0xff]
        %v7208 = vld [vmem:[%s4 + $0xf8] sm:$0xff]
        %v7209 = vld [vmem:[%s4 + $0x100] sm:$0xff]
        %v7210 = vld [vmem:[%s4 + $0x108] sm:$0xff]
        %v7211 = vld [vmem:[%s4 + $0x110] sm:$0xff]
        %v7212 = vld [vmem:[%s4 + $0x118] sm:$0xff]
        %v7213 = vld [vmem:[%s4 + $0x120] sm:$0xff]
        %v7214 = vld [vmem:[%s4 + $0x128] sm:$0xff]
        %v7215 = vld [vmem:[%s4 + $0x130] sm:$0xff]
        %v7216 = vld [vmem:[%s4 + $0x138] sm:$0xff]
        %v7217 = vld [vmem:[%s4 + $0x140] sm:$0xff]
        %v7218 = vld [vmem:[%s4 + $0x148] sm:$0xff]
        %v7219 = vld [vmem:[%s4 + $0x150] sm:$0xff]
        %v7220 = vld [vmem:[%s4 + $0x158] sm:$0xff]
        %v7221 = vld [vmem:[%s4 + $0x160] sm:$0xff]
        %v7222 = vld [vmem:[%s4 + $0x168] sm:$0xff]
        %v7223 = vld [vmem:[%s4 + $0x170] sm:$0xff]
        %v7224 = vld [vmem:[%s4 + $0x178] sm:$0xff]
        %v7225 = vld [vmem:[%s4 + $0x180] sm:$0xff]
        %v7226 = vld [vmem:[%s4 + $0x188] sm:$0xff]
        %v7227 = vld [vmem:[%s4 + $0x190] sm:$0xff]
        %v7228 = vld [vmem:[%s4 + $0x198] sm:$0xff]
        %v7229 = vld [vmem:[%s4 + $0x1a0] sm:$0xff]
        %v7230 = vld [vmem:[%s4 + $0x1a8] sm:$0xff]
        %v7231 = vld [vmem:[%s4 + $0x1b0] sm:$0xff]
        %v7232 = vld [vmem:[%s4 + $0x1b8] sm:$0xff]
        %v7233 = vld [vmem:[%s4 + $0x1c0] sm:$0xff]
        %v7234 = vld [vmem:[%s4 + $0x1c8] sm:$0xff]
        %v7235 = vld [vmem:[%s4 + $0x1d0] sm:$0xff]
        %v7236 = vld [vmem:[%s4 + $0x1d8] sm:$0xff]
        %v7237 = vld [vmem:[%s4 + $0x1e0] sm:$0xff]
        %v7238 = vld [vmem:[%s4 + $0x1e8] sm:$0xff]
        %v7239 = vld [vmem:[%s4 + $0x1f0] sm:$0xff]
        %v7240 = vld [vmem:[%s4 + $0x1f8] sm:$0xff]
        %v7241 = vld [vmem:[%s4 + $0x200] sm:$0xff]
        %v7242 = vld [vmem:[%s4 + $0x208] sm:$0xff]
        %v7243 = vld [vmem:[%s4 + $0x210] sm:$0xff]
        %v7244 = vld [vmem:[%s4 + $0x218] sm:$0xff]
        %v7245 = vld [vmem:[%s4 + $0x220] sm:$0xff]
        %v7246 = vld [vmem:[%s4 + $0x228] sm:$0xff]
        %v7247 = vld [vmem:[%s4 + $0x230] sm:$0xff]
        %v7248 = vld [vmem:[%s4 + $0x238] sm:$0xff]
        %v7249 = vld [vmem:[%s4 + $0x240] sm:$0xff]
        %v7250 = vld [vmem:[%s4 + $0x248] sm:$0xff]
        %v7251 = vld [vmem:[%s4 + $0x250] sm:$0xff]
        %v7252 = vld [vmem:[%s4 + $0x258] sm:$0xff]
        %v7253 = vld [vmem:[%s4 + $0x260] sm:$0xff]
        %v7254 = vld [vmem:[%s4 + $0x268] sm:$0xff]
        %v7255 = vld [vmem:[%s4 + $0x270] sm:$0xff]
        %v7256 = vld [vmem:[%s4 + $0x278] sm:$0xff]
        %v7257 = vld [vmem:[%s4 + $0x280] sm:$0xff]
        %v7258 = vld [vmem:[%s4 + $0x288] sm:$0xff]
        %v7259 = vld [vmem:[%s4 + $0x290] sm:$0xff]
        %v7260 = vld [vmem:[%s4 + $0x298] sm:$0xff]
        %v7261 = vld [vmem:[%s4 + $0x2a0] sm:$0xff]
        %v7262 = vld [vmem:[%s4 + $0x2a8] sm:$0xff]
        %v7263 = vld [vmem:[%s4 + $0x2b0] sm:$0xff]
        %v7264 = vld [vmem:[%s4 + $0x2b8] sm:$0xff]
        %v7265 = vld [vmem:[%s4 + $0x2c0] sm:$0xff]
        %v7266 = vld [vmem:[%s4 + $0x2c8] sm:$0xff]
        %v7267 = vld [vmem:[%s4 + $0x2d0] sm:$0xff]
        %v7268 = vld [vmem:[%s4 + $0x2d8] sm:$0xff]
        %v7269 = vld [vmem:[%s4 + $0x2e0] sm:$0xff]
        %v7270 = vld [vmem:[%s4 + $0x2e8] sm:$0xff]
        %v7271 = vld [vmem:[%s4 + $0x2f0] sm:$0xff]
        %v7272 = vld [vmem:[%s4 + $0x2f8] sm:$0xff]
        %v7273 = vld [vmem:[%s4 + $0x300] sm:$0xff]
        %v7274 = vld [vmem:[%s4 + $0x308] sm:$0xff]
        %v7275 = vld [vmem:[%s4 + $0x310] sm:$0xff]
        %v7276 = vld [vmem:[%s4 + $0x318] sm:$0xff]
        %v7277 = vld [vmem:[%s4 + $0x320] sm:$0xff]
        %v7278 = vld [vmem:[%s4 + $0x328] sm:$0xff]
        %v7279 = vld [vmem:[%s4 + $0x330] sm:$0xff]
        %v7280 = vld [vmem:[%s4 + $0x338] sm:$0xff]
        %v7281 = vld [vmem:[%s4 + $0x340] sm:$0xff]
        %v7282 = vld [vmem:[%s4 + $0x348] sm:$0xff]
        %v7283 = vld [vmem:[%s4 + $0x350] sm:$0xff]
        %v7284 = vld [vmem:[%s4 + $0x358] sm:$0xff]
        %v7285 = vld [vmem:[%s4 + $0x360] sm:$0xff]
        %v7286 = vld [vmem:[%s4 + $0x368] sm:$0xff]
        %v7287 = vld [vmem:[%s4 + $0x370] sm:$0xff]
        %v7288 = vld [vmem:[%s4 + $0x378] sm:$0xff]
        %v7289 = vld [vmem:[%s4 + $0x380] sm:$0xff]
        %v7290 = vld [vmem:[%s4 + $0x388] sm:$0xff]
        %v7291 = vld [vmem:[%s4 + $0x390] sm:$0xff]
        %v7292 = vld [vmem:[%s4 + $0x398] sm:$0xff]
        %v7293 = vld [vmem:[%s4 + $0x3a0] sm:$0xff]
        %v7294 = vld [vmem:[%s4 + $0x3a8] sm:$0xff]
        %v7295 = vld [vmem:[%s4 + $0x3b0] sm:$0xff]
        %v7296 = vld [vmem:[%s4 + $0x3b8] sm:$0xff]
        %v7297 = vld [vmem:[%s4 + $0x3c0] sm:$0xff]
        %v7298 = vld [vmem:[%s4 + $0x3c8] sm:$0xff]
        %v7299 = vld [vmem:[%s4 + $0x3d0] sm:$0xff]
        %v7300 = vld [vmem:[%s4 + $0x3d8] sm:$0xff]
        %v7301 = vld [vmem:[%s4 + $0x3e0] sm:$0xff]
        %v7302 = vld [vmem:[%s4 + $0x3e8] sm:$0xff]
        %v7303 = vld [vmem:[%s4 + $0x3f0] sm:$0xff]
        %v7304 = vld [vmem:[%s4 + $0x3f8] sm:$0xff]
        %v7305 = vld [vmem:[%s4 + $0x400] sm:$0xff]
        %v7306 = vld [vmem:[%s4 + $0x408] sm:$0xff]
        %v7307 = vld [vmem:[%s4 + $0x410] sm:$0xff]
        %v7308 = vld [vmem:[%s4 + $0x418] sm:$0xff]
        %v7309 = vld [vmem:[%s4 + $0x420] sm:$0xff]
        %v7310 = vld [vmem:[%s4 + $0x428] sm:$0xff]
        %v7311 = vld [vmem:[%s4 + $0x430] sm:$0xff]
        %v7312 = vld [vmem:[%s4 + $0x438] sm:$0xff]
        %v7313 = vld [vmem:[%s4 + $0x440] sm:$0xff]
        %v7314 = vld [vmem:[%s4 + $0x448] sm:$0xff]
        %v7315 = vld [vmem:[%s4 + $0x450] sm:$0xff]
        %v7316 = vld [vmem:[%s4 + $0x458] sm:$0xff]
        %v7317 = vld [vmem:[%s4 + $0x460] sm:$0xff]
        %v7318 = vld [vmem:[%s4 + $0x468] sm:$0xff]
        %v7319 = vld [vmem:[%s4 + $0x470] sm:$0xff]
        %v7320 = vld [vmem:[%s4 + $0x478] sm:$0xff]
        %v7321 = vld [vmem:[%s4 + $0x480] sm:$0xff]
        %v7322 = vld [vmem:[%s4 + $0x488] sm:$0xff]
        %v7323 = vld [vmem:[%s4 + $0x490] sm:$0xff]
        %v7324 = vld [vmem:[%s4 + $0x498] sm:$0xff]
        %v7325 = vld [vmem:[%s4 + $0x4a0] sm:$0xff]
        %v7326 = vld [vmem:[%s4 + $0x4a8] sm:$0xff]
        %v7327 = vld [vmem:[%s4 + $0x4b0] sm:$0xff]
        %v7328 = vld [vmem:[%s4 + $0x4b8] sm:$0xff]
        %v7329 = vld [vmem:[%s4 + $0x4c0] sm:$0xff]
        %v7330 = vld [vmem:[%s4 + $0x4c8] sm:$0xff]
        %v7331 = vld [vmem:[%s4 + $0x4d0] sm:$0xff]
        %v7332 = vld [vmem:[%s4 + $0x4d8] sm:$0xff]
        %v7333 = vld [vmem:[%s4 + $0x4e0] sm:$0xff]
        %v7334 = vld [vmem:[%s4 + $0x4e8] sm:$0xff]
        %v7335 = vld [vmem:[%s4 + $0x4f0] sm:$0xff]
        %v7336 = vld [vmem:[%s4 + $0x4f8] sm:$0xff]
        %v7337 = vld [vmem:[%s4 + $0x500] sm:$0xff]
        %v7338 = vld [vmem:[%s4 + $0x508] sm:$0xff]
        %v7339 = vld [vmem:[%s4 + $0x510] sm:$0xff]
        %v7340 = vld [vmem:[%s4 + $0x518] sm:$0xff]
        %v7341 = vld [vmem:[%s4 + $0x520] sm:$0xff]
        %v7342 = vld [vmem:[%s4 + $0x528] sm:$0xff]
        %v7343 = vld [vmem:[%s4 + $0x530] sm:$0xff]
        %v7344 = vld [vmem:[%s4 + $0x538] sm:$0xff]
        %v7345 = vld [vmem:[%s4 + $0x540] sm:$0xff]
        %v7346 = vld [vmem:[%s4 + $0x548] sm:$0xff]
        %v7347 = vld [vmem:[%s4 + $0x550] sm:$0xff]
        %v7348 = vld [vmem:[%s4 + $0x558] sm:$0xff]
        %v7349 = vld [vmem:[%s4 + $0x560] sm:$0xff]
        %v7350 = vld [vmem:[%s4 + $0x568] sm:$0xff]
        %v7351 = vld [vmem:[%s4 + $0x570] sm:$0xff]
        %v7352 = vld [vmem:[%s4 + $0x578] sm:$0xff]
        %v7353 = vld [vmem:[%s4 + $0x580] sm:$0xff]
        %v7354 = vld [vmem:[%s4 + $0x588] sm:$0xff]
        %v7355 = vld [vmem:[%s4 + $0x590] sm:$0xff]
        %v7356 = vld [vmem:[%s4 + $0x598] sm:$0xff]
        %v7357 = vld [vmem:[%s4 + $0x5a0] sm:$0xff]
        %v7358 = vld [vmem:[%s4 + $0x5a8] sm:$0xff]
        %v7359 = vld [vmem:[%s4 + $0x5b0] sm:$0xff]
        %v7360 = vld [vmem:[%s4 + $0x5b8] sm:$0xff]
        %v7361 = vld [vmem:[%s4 + $0x5c0] sm:$0xff]
        %v7362 = vld [vmem:[%s4 + $0x5c8] sm:$0xff]
        %v7363 = vld [vmem:[%s4 + $0x5d0] sm:$0xff]
        %v7364 = vld [vmem:[%s4 + $0x5d8] sm:$0xff]
        %v7365 = vld [vmem:[%s4 + $0x5e0] sm:$0xff]
        %v7366 = vld [vmem:[%s4 + $0x5e8] sm:$0xff]
        %v7367 = vld [vmem:[%s4 + $0x5f0] sm:$0xff]
        %v7368 = vld [vmem:[%s4 + $0x5f8] sm:$0xff]
        %v7369 = vld [vmem:[%s4 + $0x600] sm:$0xff]
        %v7370 = vld [vmem:[%s4 + $0x608] sm:$0xff]
        %v7371 = vld [vmem:[%s4 + $0x610] sm:$0xff]
        %v7372 = vld [vmem:[%s4 + $0x618] sm:$0xff]
        %v7373 = vld [vmem:[%s4 + $0x620] sm:$0xff]
        %v7374 = vld [vmem:[%s4 + $0x628] sm:$0xff]
        %v7375 = vld [vmem:[%s4 + $0x630] sm:$0xff]
        %v7376 = vld [vmem:[%s4 + $0x638] sm:$0xff]
        %v7377 = vld [vmem:[%s4 + $0x640] sm:$0xff]
        %v7378 = vld [vmem:[%s4 + $0x648] sm:$0xff]
        %v7379 = vld [vmem:[%s4 + $0x650] sm:$0xff]
        %v7380 = vld [vmem:[%s4 + $0x658] sm:$0xff]
        %v7381 = vld [vmem:[%s4 + $0x660] sm:$0xff]
        %v7382 = vld [vmem:[%s4 + $0x668] sm:$0xff]
        %v7383 = vld [vmem:[%s4 + $0x670] sm:$0xff]
        %v7384 = vld [vmem:[%s4 + $0x678] sm:$0xff]
        %v7385 = vld [vmem:[%s4 + $0x680] sm:$0xff]
        %v7386 = vld [vmem:[%s4 + $0x688] sm:$0xff]
        %v7387 = vld [vmem:[%s4 + $0x690] sm:$0xff]
        %v7388 = vld [vmem:[%s4 + $0x698] sm:$0xff]
        %v7389 = vld [vmem:[%s4 + $0x6a0] sm:$0xff]
        %v7390 = vld [vmem:[%s4 + $0x6a8] sm:$0xff]
        %v7391 = vld [vmem:[%s4 + $0x6b0] sm:$0xff]
        %v7392 = vld [vmem:[%s4 + $0x6b8] sm:$0xff]
        %v7393 = vld [vmem:[%s4 + $0x6c0] sm:$0xff]
        %v7394 = vld [vmem:[%s4 + $0x6c8] sm:$0xff]
        %v7395 = vld [vmem:[%s4 + $0x6d0] sm:$0xff]
        %v7396 = vld [vmem:[%s4 + $0x6d8] sm:$0xff]
        %v7397 = vld [vmem:[%s4 + $0x6e0] sm:$0xff]
        %v7398 = vld [vmem:[%s4 + $0x6e8] sm:$0xff]
        %v7399 = vld [vmem:[%s4 + $0x6f0] sm:$0xff]
        %v7400 = vld [vmem:[%s4 + $0x6f8] sm:$0xff]
        %v7401 = vld [vmem:[%s4 + $0x700] sm:$0xff]
        %v7402 = vld [vmem:[%s4 + $0x708] sm:$0xff]
        %v7403 = vld [vmem:[%s4 + $0x710] sm:$0xff]
        %v7404 = vld [vmem:[%s4 + $0x718] sm:$0xff]
        %v7405 = vld [vmem:[%s4 + $0x720] sm:$0xff]
        %v7406 = vld [vmem:[%s4 + $0x728] sm:$0xff]
        %v7407 = vld [vmem:[%s4 + $0x730] sm:$0xff]
        %v7408 = vld [vmem:[%s4 + $0x738] sm:$0xff]
        %v7409 = vld [vmem:[%s4 + $0x740] sm:$0xff]
        %v7410 = vld [vmem:[%s4 + $0x748] sm:$0xff]
        %v7411 = vld [vmem:[%s4 + $0x750] sm:$0xff]
        %v7412 = vld [vmem:[%s4 + $0x758] sm:$0xff]
        %v7413 = vld [vmem:[%s4 + $0x760] sm:$0xff]
        %v7414 = vld [vmem:[%s4 + $0x768] sm:$0xff]
        %v7415 = vld [vmem:[%s4 + $0x770] sm:$0xff]
        %v7416 = vld [vmem:[%s4 + $0x778] sm:$0xff]
        %v7417 = vld [vmem:[%s4 + $0x780] sm:$0xff]
        %v7418 = vld [vmem:[%s4 + $0x788] sm:$0xff]
        %v7419 = vld [vmem:[%s4 + $0x790] sm:$0xff]
        %v7420 = vld [vmem:[%s4 + $0x798] sm:$0xff]
        %v7421 = vld [vmem:[%s4 + $0x7a0] sm:$0xff]
        %v7422 = vld [vmem:[%s4 + $0x7a8] sm:$0xff]
        %v7423 = vld [vmem:[%s4 + $0x7b0] sm:$0xff]
        %v7424 = vld [vmem:[%s4 + $0x7b8] sm:$0xff]
        %v7425 = vld [vmem:[%s4 + $0x7c0] sm:$0xff]
        %v7426 = vld [vmem:[%s4 + $0x7c8] sm:$0xff]
        %v7427 = vld [vmem:[%s4 + $0x7d0] sm:$0xff]
        %v7428 = vld [vmem:[%s4 + $0x7d8] sm:$0xff]
        %v7429 = vld [vmem:[%s4 + $0x7e0] sm:$0xff]
        %v7430 = vld [vmem:[%s4 + $0x7e8] sm:$0xff]
        %v7431 = vld [vmem:[%s4 + $0x7f0] sm:$0xff]
        %v7432 = vld [vmem:[%s4 + $0x7f8] sm:$0xff]
        %v7433 = vld [vmem:[%s4 + $0x800] sm:$0xff]
        %v7434 = vld [vmem:[%s4 + $0x808] sm:$0xff]
        %v7435 = vld [vmem:[%s4 + $0x810] sm:$0xff]
        %v7436 = vld [vmem:[%s4 + $0x818] sm:$0xff]
        %v7437 = vld [vmem:[%s4 + $0x820] sm:$0xff]
        %v7438 = vld [vmem:[%s4 + $0x828] sm:$0xff]
        %v7439 = vld [vmem:[%s4 + $0x830] sm:$0xff]
        %v7440 = vld [vmem:[%s4 + $0x838] sm:$0xff]
        %v7441 = vld [vmem:[%s4 + $0x840] sm:$0xff]
        %v7442 = vld [vmem:[%s4 + $0x848] sm:$0xff]
        %v7443 = vld [vmem:[%s4 + $0x850] sm:$0xff]
        %v7444 = vld [vmem:[%s4 + $0x858] sm:$0xff]
        %v7445 = vld [vmem:[%s4 + $0x860] sm:$0xff]
        %v7446 = vld [vmem:[%s4 + $0x868] sm:$0xff]
        %v7447 = vld [vmem:[%s4 + $0x870] sm:$0xff]
        %v7448 = vld [vmem:[%s4 + $0x878] sm:$0xff]
        %v7449 = vld [vmem:[%s4 + $0x880] sm:$0xff]
        %v7450 = vld [vmem:[%s4 + $0x888] sm:$0xff]
        %v7451 = vld [vmem:[%s4 + $0x890] sm:$0xff]
        %v7452 = vld [vmem:[%s4 + $0x898] sm:$0xff]
        %v7453 = vld [vmem:[%s4 + $0x8a0] sm:$0xff]
        %v7454 = vld [vmem:[%s4 + $0x8a8] sm:$0xff]
        %v7455 = vld [vmem:[%s4 + $0x8b0] sm:$0xff]
        %v7456 = vld [vmem:[%s4 + $0x8b8] sm:$0xff]
        %v7457 = vld [vmem:[%s4 + $0x8c0] sm:$0xff]
        %v7458 = vld [vmem:[%s4 + $0x8c8] sm:$0xff]
        %v7459 = vld [vmem:[%s4 + $0x8d0] sm:$0xff]
        %v7460 = vld [vmem:[%s4 + $0x8d8] sm:$0xff]
        %v7461 = vld [vmem:[%s4 + $0x8e0] sm:$0xff]
        %v7462 = vld [vmem:[%s4 + $0x8e8] sm:$0xff]
        %v7463 = vld [vmem:[%s4 + $0x8f0] sm:$0xff]
        %v7464 = vld [vmem:[%s4 + $0x8f8] sm:$0xff]
        %v7465 = vld [vmem:[%s8] sm:$0x3f]
        %v7467 = vlaneseq
        %v7468 = vshrl.u32 %v7467, 7
        %v7469 = vsub.s32 0, %v7468
        %v7470 = vrot.slane %v7465, %v7469
        %v7471 = vlaneseq
        %v7472 = vshrl.u32 %v7471, 7
        %v7473 = vsub.s32 1, %v7472
        %v7474 = vrot.slane %v7465, %v7473
        %v7475 = vlaneseq
        %v7476 = vshrl.u32 %v7475, 7
        %v7477 = vsub.s32 2, %v7476
        %v7478 = vrot.slane %v7465, %v7477
        %v7479 = vlaneseq
        %v7480 = vshrl.u32 %v7479, 7
        %v7481 = vsub.s32 3, %v7480
        %v7482 = vrot.slane %v7465, %v7481
        %v7483 = vlaneseq
        %v7484 = vshrl.u32 %v7483, 7
        %v7485 = vsub.s32 4, %v7484
        %v7486 = vrot.slane %v7465, %v7485
        %v7487 = vlaneseq
        %v7488 = vshrl.u32 %v7487, 7
        %v7489 = vsub.s32 5, %v7488
        %v7490 = vrot.slane %v7465, %v7489
        %v7785 = vunpack.c.l.b16 %v7177
        %v7786 = vunpack.c.h.b16 %v7177
        %v7787 = vunpack.c.l.b16 %v7178
        %v7788 = vunpack.c.h.b16 %v7178
        %v7789 = vunpack.c.l.b16 %v7179
        %v7790 = vunpack.c.h.b16 %v7179
        %v7791 = vunpack.c.l.b16 %v7180
        %v7792 = vunpack.c.h.b16 %v7180
        %v7793 = vunpack.c.l.b16 %v7181
        %v7794 = vunpack.c.h.b16 %v7181
        %v7795 = vunpack.c.l.b16 %v7182
        %v7796 = vunpack.c.h.b16 %v7182
        %v7797 = vunpack.c.l.b16 %v7183
        %v7798 = vunpack.c.h.b16 %v7183
        %v7799 = vunpack.c.l.b16 %v7184
        %v7800 = vunpack.c.h.b16 %v7184
        %v7801 = vunpack.c.l.b16 %v7185
        %v7802 = vunpack.c.h.b16 %v7185
        %v7803 = vunpack.c.l.b16 %v7186
        %v7804 = vunpack.c.h.b16 %v7186
        %v7805 = vunpack.c.l.b16 %v7187
        %v7806 = vunpack.c.h.b16 %v7187
        %v7807 = vunpack.c.l.b16 %v7188
        %v7808 = vunpack.c.h.b16 %v7188
        %v7809 = vunpack.c.l.b16 %v7189
        %v7810 = vunpack.c.h.b16 %v7189
        %v7811 = vunpack.c.l.b16 %v7190
        %v7812 = vunpack.c.h.b16 %v7190
        %v7813 = vunpack.c.l.b16 %v7191
        %v7814 = vunpack.c.h.b16 %v7191
        %v7815 = vunpack.c.l.b16 %v7192
        %v7816 = vunpack.c.h.b16 %v7192
        %v7817 = vunpack.c.l.b16 %v7193
        %v7818 = vunpack.c.h.b16 %v7193
        %v7819 = vunpack.c.l.b16 %v7194
        %v7820 = vunpack.c.h.b16 %v7194
        %v7821 = vunpack.c.l.b16 %v7195
        %v7822 = vunpack.c.h.b16 %v7195
        %v7823 = vunpack.c.l.b16 %v7196
        %v7824 = vunpack.c.h.b16 %v7196
        %v7825 = vunpack.c.l.b16 %v7197
        %v7826 = vunpack.c.h.b16 %v7197
        %v7827 = vunpack.c.l.b16 %v7198
        %v7828 = vunpack.c.h.b16 %v7198
        %v7829 = vunpack.c.l.b16 %v7199
        %v7830 = vunpack.c.h.b16 %v7199
        %v7831 = vunpack.c.l.b16 %v7200
        %v7832 = vunpack.c.h.b16 %v7200
        %v7833 = vunpack.c.l.b16 %v7201
        %v7834 = vunpack.c.h.b16 %v7201
        %v7835 = vunpack.c.l.b16 %v7202
        %v7836 = vunpack.c.h.b16 %v7202
        %v7837 = vunpack.c.l.b16 %v7203
        %v7838 = vunpack.c.h.b16 %v7203
        %v7839 = vunpack.c.l.b16 %v7204
        %v7840 = vunpack.c.h.b16 %v7204
        %v7841 = vunpack.c.l.b16 %v7205
        %v7842 = vunpack.c.h.b16 %v7205
        %v7843 = vunpack.c.l.b16 %v7206
        %v7844 = vunpack.c.h.b16 %v7206
        %v7845 = vunpack.c.l.b16 %v7207
        %v7846 = vunpack.c.h.b16 %v7207
        %v7847 = vunpack.c.l.b16 %v7208
        %v7848 = vunpack.c.h.b16 %v7208
        %v7849 = vunpack.c.l.b16 %v7209
        %v7850 = vunpack.c.h.b16 %v7209
        %v7851 = vunpack.c.l.b16 %v7210
        %v7852 = vunpack.c.h.b16 %v7210
        %v7853 = vunpack.c.l.b16 %v7211
        %v7854 = vunpack.c.h.b16 %v7211
        %v7855 = vunpack.c.l.b16 %v7212
        %v7856 = vunpack.c.h.b16 %v7212
        %v7857 = vunpack.c.l.b16 %v7213
        %v7858 = vunpack.c.h.b16 %v7213
        %v7859 = vunpack.c.l.b16 %v7214
        %v7860 = vunpack.c.h.b16 %v7214
        %v7861 = vunpack.c.l.b16 %v7215
        %v7862 = vunpack.c.h.b16 %v7215
        %v7863 = vunpack.c.l.b16 %v7216
        %v7864 = vunpack.c.h.b16 %v7216
        %v7865 = vunpack.c.l.b16 %v7217
        %v7866 = vunpack.c.h.b16 %v7217
        %v7867 = vunpack.c.l.b16 %v7218
        %v7868 = vunpack.c.h.b16 %v7218
        %v7869 = vunpack.c.l.b16 %v7219
        %v7870 = vunpack.c.h.b16 %v7219
        %v7871 = vunpack.c.l.b16 %v7220
        %v7872 = vunpack.c.h.b16 %v7220
        %v7873 = vunpack.c.l.b16 %v7221
        %v7874 = vunpack.c.h.b16 %v7221
        %v7875 = vunpack.c.l.b16 %v7222
        %v7876 = vunpack.c.h.b16 %v7222
        %v7877 = vunpack.c.l.b16 %v7223
        %v7878 = vunpack.c.h.b16 %v7223
        %v7879 = vunpack.c.l.b16 %v7224
        %v7880 = vunpack.c.h.b16 %v7224
        %v7881 = vunpack.c.l.b16 %v7225
        %v7882 = vunpack.c.h.b16 %v7225
        %v7883 = vunpack.c.l.b16 %v7226
        %v7884 = vunpack.c.h.b16 %v7226
        %v7885 = vunpack.c.l.b16 %v7227
        %v7886 = vunpack.c.h.b16 %v7227
        %v7887 = vunpack.c.l.b16 %v7228
        %v7888 = vunpack.c.h.b16 %v7228
        %v7889 = vunpack.c.l.b16 %v7229
        %v7890 = vunpack.c.h.b16 %v7229
        %v7891 = vunpack.c.l.b16 %v7230
        %v7892 = vunpack.c.h.b16 %v7230
        %v7893 = vunpack.c.l.b16 %v7231
        %v7894 = vunpack.c.h.b16 %v7231
        %v7895 = vunpack.c.l.b16 %v7232
        %v7896 = vunpack.c.h.b16 %v7232
        %v7897 = vunpack.c.l.b16 %v7233
        %v7898 = vunpack.c.h.b16 %v7233
        %v7899 = vunpack.c.l.b16 %v7234
        %v7900 = vunpack.c.h.b16 %v7234
        %v7901 = vunpack.c.l.b16 %v7235
        %v7902 = vunpack.c.h.b16 %v7235
        %v7903 = vunpack.c.l.b16 %v7236
        %v7904 = vunpack.c.h.b16 %v7236
        %v7905 = vunpack.c.l.b16 %v7237
        %v7906 = vunpack.c.h.b16 %v7237
        %v7907 = vunpack.c.l.b16 %v7238
        %v7908 = vunpack.c.h.b16 %v7238
        %v7909 = vunpack.c.l.b16 %v7239
        %v7910 = vunpack.c.h.b16 %v7239
        %v7911 = vunpack.c.l.b16 %v7240
        %v7912 = vunpack.c.h.b16 %v7240
        %v7913 = vunpack.c.l.b16 %v7241
        %v7914 = vunpack.c.h.b16 %v7241
        %v7915 = vunpack.c.l.b16 %v7242
        %v7916 = vunpack.c.h.b16 %v7242
        %v7917 = vunpack.c.l.b16 %v7243
        %v7918 = vunpack.c.h.b16 %v7243
        %v7919 = vunpack.c.l.b16 %v7244
        %v7920 = vunpack.c.h.b16 %v7244
        %v7921 = vunpack.c.l.b16 %v7245
        %v7922 = vunpack.c.h.b16 %v7245
        %v7923 = vunpack.c.l.b16 %v7246
        %v7924 = vunpack.c.h.b16 %v7246
        %v7925 = vunpack.c.l.b16 %v7247
        %v7926 = vunpack.c.h.b16 %v7247
        %v7927 = vunpack.c.l.b16 %v7248
        %v7928 = vunpack.c.h.b16 %v7248
        %v7929 = vunpack.c.l.b16 %v7249
        %v7930 = vunpack.c.h.b16 %v7249
        %v7931 = vunpack.c.l.b16 %v7250
        %v7932 = vunpack.c.h.b16 %v7250
        %v7933 = vunpack.c.l.b16 %v7251
        %v7934 = vunpack.c.h.b16 %v7251
        %v7935 = vunpack.c.l.b16 %v7252
        %v7936 = vunpack.c.h.b16 %v7252
        %v7937 = vunpack.c.l.b16 %v7253
        %v7938 = vunpack.c.h.b16 %v7253
        %v7939 = vunpack.c.l.b16 %v7254
        %v7940 = vunpack.c.h.b16 %v7254
        %v7941 = vunpack.c.l.b16 %v7255
        %v7942 = vunpack.c.h.b16 %v7255
        %v7943 = vunpack.c.l.b16 %v7256
        %v7944 = vunpack.c.h.b16 %v7256
        %v7945 = vunpack.c.l.b16 %v7257
        %v7946 = vunpack.c.h.b16 %v7257
        %v7947 = vunpack.c.l.b16 %v7258
        %v7948 = vunpack.c.h.b16 %v7258
        %v7949 = vunpack.c.l.b16 %v7259
        %v7950 = vunpack.c.h.b16 %v7259
        %v7951 = vunpack.c.l.b16 %v7260
        %v7952 = vunpack.c.h.b16 %v7260
        %v7953 = vunpack.c.l.b16 %v7261
        %v7954 = vunpack.c.h.b16 %v7261
        %v7955 = vunpack.c.l.b16 %v7262
        %v7956 = vunpack.c.h.b16 %v7262
        %v7957 = vunpack.c.l.b16 %v7263
        %v7958 = vunpack.c.h.b16 %v7263
        %v7959 = vunpack.c.l.b16 %v7264
        %v7960 = vunpack.c.h.b16 %v7264
        %v7961 = vunpack.c.l.b16 %v7265
        %v7962 = vunpack.c.h.b16 %v7265
        %v7963 = vunpack.c.l.b16 %v7266
        %v7964 = vunpack.c.h.b16 %v7266
        %v7965 = vunpack.c.l.b16 %v7267
        %v7966 = vunpack.c.h.b16 %v7267
        %v7967 = vunpack.c.l.b16 %v7268
        %v7968 = vunpack.c.h.b16 %v7268
        %v7969 = vunpack.c.l.b16 %v7269
        %v7970 = vunpack.c.h.b16 %v7269
        %v7971 = vunpack.c.l.b16 %v7270
        %v7972 = vunpack.c.h.b16 %v7270
        %v7973 = vunpack.c.l.b16 %v7271
        %v7974 = vunpack.c.h.b16 %v7271
        %v7975 = vunpack.c.l.b16 %v7272
        %v7976 = vunpack.c.h.b16 %v7272
        %v7977 = vunpack.c.l.b16 %v7273
        %v7978 = vunpack.c.h.b16 %v7273
        %v7979 = vunpack.c.l.b16 %v7274
        %v7980 = vunpack.c.h.b16 %v7274
        %v7981 = vunpack.c.l.b16 %v7275
        %v7982 = vunpack.c.h.b16 %v7275
        %v7983 = vunpack.c.l.b16 %v7276
        %v7984 = vunpack.c.h.b16 %v7276
        %v7985 = vunpack.c.l.b16 %v7277
        %v7986 = vunpack.c.h.b16 %v7277
        %v7987 = vunpack.c.l.b16 %v7278
        %v7988 = vunpack.c.h.b16 %v7278
        %v7989 = vunpack.c.l.b16 %v7279
        %v7990 = vunpack.c.h.b16 %v7279
        %v7991 = vunpack.c.l.b16 %v7280
        %v7992 = vunpack.c.h.b16 %v7280
        %v7993 = vunpack.c.l.b16 %v7281
        %v7994 = vunpack.c.h.b16 %v7281
        %v7995 = vunpack.c.l.b16 %v7282
        %v7996 = vunpack.c.h.b16 %v7282
        %v7997 = vunpack.c.l.b16 %v7283
        %v7998 = vunpack.c.h.b16 %v7283
        %v7999 = vunpack.c.l.b16 %v7284
        %v8000 = vunpack.c.h.b16 %v7284
        %v8001 = vunpack.c.l.b16 %v7285
        %v8002 = vunpack.c.h.b16 %v7285
        %v8003 = vunpack.c.l.b16 %v7286
        %v8004 = vunpack.c.h.b16 %v7286
        %v8005 = vunpack.c.l.b16 %v7287
        %v8006 = vunpack.c.h.b16 %v7287
        %v8007 = vunpack.c.l.b16 %v7288
        %v8008 = vunpack.c.h.b16 %v7288
        %v8009 = vunpack.c.l.b16 %v7289
        %v8010 = vunpack.c.h.b16 %v7289
        %v8011 = vunpack.c.l.b16 %v7290
        %v8012 = vunpack.c.h.b16 %v7290
        %v8013 = vunpack.c.l.b16 %v7291
        %v8014 = vunpack.c.h.b16 %v7291
        %v8015 = vunpack.c.l.b16 %v7292
        %v8016 = vunpack.c.h.b16 %v7292
        %v8017 = vunpack.c.l.b16 %v7293
        %v8018 = vunpack.c.h.b16 %v7293
        %v8019 = vunpack.c.l.b16 %v7294
        %v8020 = vunpack.c.h.b16 %v7294
        %v8021 = vunpack.c.l.b16 %v7295
        %v8022 = vunpack.c.h.b16 %v7295
        %v8023 = vunpack.c.l.b16 %v7296
        %v8024 = vunpack.c.h.b16 %v7296
        %v8025 = vunpack.c.l.b16 %v7297
        %v8026 = vunpack.c.h.b16 %v7297
        %v8027 = vunpack.c.l.b16 %v7298
        %v8028 = vunpack.c.h.b16 %v7298
        %v8029 = vunpack.c.l.b16 %v7299
        %v8030 = vunpack.c.h.b16 %v7299
        %v8031 = vunpack.c.l.b16 %v7300
        %v8032 = vunpack.c.h.b16 %v7300
        %v8033 = vunpack.c.l.b16 %v7301
        %v8034 = vunpack.c.h.b16 %v7301
        %v8035 = vunpack.c.l.b16 %v7302
        %v8036 = vunpack.c.h.b16 %v7302
        %v8037 = vunpack.c.l.b16 %v7303
        %v8038 = vunpack.c.h.b16 %v7303
        %v8039 = vunpack.c.l.b16 %v7304
        %v8040 = vunpack.c.h.b16 %v7304
        %v8041 = vunpack.c.l.b16 %v7305
        %v8042 = vunpack.c.h.b16 %v7305
        %v8043 = vunpack.c.l.b16 %v7306
        %v8044 = vunpack.c.h.b16 %v7306
        %v8045 = vunpack.c.l.b16 %v7307
        %v8046 = vunpack.c.h.b16 %v7307
        %v8047 = vunpack.c.l.b16 %v7308
        %v8048 = vunpack.c.h.b16 %v7308
        %v8049 = vunpack.c.l.b16 %v7309
        %v8050 = vunpack.c.h.b16 %v7309
        %v8051 = vunpack.c.l.b16 %v7310
        %v8052 = vunpack.c.h.b16 %v7310
        %v8053 = vunpack.c.l.b16 %v7311
        %v8054 = vunpack.c.h.b16 %v7311
        %v8055 = vunpack.c.l.b16 %v7312
        %v8056 = vunpack.c.h.b16 %v7312
        %v8057 = vunpack.c.l.b16 %v7313
        %v8058 = vunpack.c.h.b16 %v7313
        %v8059 = vunpack.c.l.b16 %v7314
        %v8060 = vunpack.c.h.b16 %v7314
        %v8061 = vunpack.c.l.b16 %v7315
        %v8062 = vunpack.c.h.b16 %v7315
        %v8063 = vunpack.c.l.b16 %v7316
        %v8064 = vunpack.c.h.b16 %v7316
        %v8065 = vunpack.c.l.b16 %v7317
        %v8066 = vunpack.c.h.b16 %v7317
        %v8067 = vunpack.c.l.b16 %v7318
        %v8068 = vunpack.c.h.b16 %v7318
        %v8069 = vunpack.c.l.b16 %v7319
        %v8070 = vunpack.c.h.b16 %v7319
        %v8071 = vunpack.c.l.b16 %v7320
        %v8072 = vunpack.c.h.b16 %v7320
        %v8073 = vunpack.c.l.b16 %v7321
        %v8074 = vunpack.c.h.b16 %v7321
        %v8075 = vunpack.c.l.b16 %v7322
        %v8076 = vunpack.c.h.b16 %v7322
        %v8077 = vunpack.c.l.b16 %v7323
        %v8078 = vunpack.c.h.b16 %v7323
        %v8079 = vunpack.c.l.b16 %v7324
        %v8080 = vunpack.c.h.b16 %v7324
        %v8081 = vunpack.c.l.b16 %v7325
        %v8082 = vunpack.c.h.b16 %v7325
        %v8083 = vunpack.c.l.b16 %v7326
        %v8084 = vunpack.c.h.b16 %v7326
        %v8085 = vunpack.c.l.b16 %v7327
        %v8086 = vunpack.c.h.b16 %v7327
        %v8087 = vunpack.c.l.b16 %v7328
        %v8088 = vunpack.c.h.b16 %v7328
        %v8089 = vunpack.c.l.b16 %v7329
        %v8090 = vunpack.c.h.b16 %v7329
        %v8091 = vunpack.c.l.b16 %v7330
        %v8092 = vunpack.c.h.b16 %v7330
        %v8093 = vunpack.c.l.b16 %v7331
        %v8094 = vunpack.c.h.b16 %v7331
        %v8095 = vunpack.c.l.b16 %v7332
        %v8096 = vunpack.c.h.b16 %v7332
        %v8097 = vunpack.c.l.b16 %v7333
        %v8098 = vunpack.c.h.b16 %v7333
        %v8099 = vunpack.c.l.b16 %v7334
        %v8100 = vunpack.c.h.b16 %v7334
        %v8101 = vunpack.c.l.b16 %v7335
        %v8102 = vunpack.c.h.b16 %v7335
        %v8103 = vunpack.c.l.b16 %v7336
        %v8104 = vunpack.c.h.b16 %v7336
        %v8105 = vunpack.c.l.b16 %v7337
        %v8106 = vunpack.c.h.b16 %v7337
        %v8107 = vunpack.c.l.b16 %v7338
        %v8108 = vunpack.c.h.b16 %v7338
        %v8109 = vunpack.c.l.b16 %v7339
        %v8110 = vunpack.c.h.b16 %v7339
        %v8111 = vunpack.c.l.b16 %v7340
        %v8112 = vunpack.c.h.b16 %v7340
        %v8113 = vunpack.c.l.b16 %v7341
        %v8114 = vunpack.c.h.b16 %v7341
        %v8115 = vunpack.c.l.b16 %v7342
        %v8116 = vunpack.c.h.b16 %v7342
        %v8117 = vunpack.c.l.b16 %v7343
        %v8118 = vunpack.c.h.b16 %v7343
        %v8119 = vunpack.c.l.b16 %v7344
        %v8120 = vunpack.c.h.b16 %v7344
        %v8121 = vunpack.c.l.b16 %v7345
        %v8122 = vunpack.c.h.b16 %v7345
        %v8123 = vunpack.c.l.b16 %v7346
        %v8124 = vunpack.c.h.b16 %v7346
        %v8125 = vunpack.c.l.b16 %v7347
        %v8126 = vunpack.c.h.b16 %v7347
        %v8127 = vunpack.c.l.b16 %v7348
        %v8128 = vunpack.c.h.b16 %v7348
        %v8129 = vunpack.c.l.b16 %v7349
        %v8130 = vunpack.c.h.b16 %v7349
        %v8131 = vunpack.c.l.b16 %v7350
        %v8132 = vunpack.c.h.b16 %v7350
        %v8133 = vunpack.c.l.b16 %v7351
        %v8134 = vunpack.c.h.b16 %v7351
        %v8135 = vunpack.c.l.b16 %v7352
        %v8136 = vunpack.c.h.b16 %v7352
        %v8137 = vunpack.c.l.b16 %v7353
        %v8138 = vunpack.c.h.b16 %v7353
        %v8139 = vunpack.c.l.b16 %v7354
        %v8140 = vunpack.c.h.b16 %v7354
        %v8141 = vunpack.c.l.b16 %v7355
        %v8142 = vunpack.c.h.b16 %v7355
        %v8143 = vunpack.c.l.b16 %v7356
        %v8144 = vunpack.c.h.b16 %v7356
        %v8145 = vunpack.c.l.b16 %v7357
        %v8146 = vunpack.c.h.b16 %v7357
        %v8147 = vunpack.c.l.b16 %v7358
        %v8148 = vunpack.c.h.b16 %v7358
        %v8149 = vunpack.c.l.b16 %v7359
        %v8150 = vunpack.c.h.b16 %v7359
        %v8151 = vunpack.c.l.b16 %v7360
        %v8152 = vunpack.c.h.b16 %v7360
        %v8153 = vunpack.c.l.b16 %v7361
        %v8154 = vunpack.c.h.b16 %v7361
        %v8155 = vunpack.c.l.b16 %v7362
        %v8156 = vunpack.c.h.b16 %v7362
        %v8157 = vunpack.c.l.b16 %v7363
        %v8158 = vunpack.c.h.b16 %v7363
        %v8159 = vunpack.c.l.b16 %v7364
        %v8160 = vunpack.c.h.b16 %v7364
        %v8161 = vunpack.c.l.b16 %v7365
        %v8162 = vunpack.c.h.b16 %v7365
        %v8163 = vunpack.c.l.b16 %v7366
        %v8164 = vunpack.c.h.b16 %v7366
        %v8165 = vunpack.c.l.b16 %v7367
        %v8166 = vunpack.c.h.b16 %v7367
        %v8167 = vunpack.c.l.b16 %v7368
        %v8168 = vunpack.c.h.b16 %v7368
        %v8169 = vunpack.c.l.b16 %v7369
        %v8170 = vunpack.c.h.b16 %v7369
        %v8171 = vunpack.c.l.b16 %v7370
        %v8172 = vunpack.c.h.b16 %v7370
        %v8173 = vunpack.c.l.b16 %v7371
        %v8174 = vunpack.c.h.b16 %v7371
        %v8175 = vunpack.c.l.b16 %v7372
        %v8176 = vunpack.c.h.b16 %v7372
        %v8177 = vunpack.c.l.b16 %v7373
        %v8178 = vunpack.c.h.b16 %v7373
        %v8179 = vunpack.c.l.b16 %v7374
        %v8180 = vunpack.c.h.b16 %v7374
        %v8181 = vunpack.c.l.b16 %v7375
        %v8182 = vunpack.c.h.b16 %v7375
        %v8183 = vunpack.c.l.b16 %v7376
        %v8184 = vunpack.c.h.b16 %v7376
        %v8185 = vunpack.c.l.b16 %v7377
        %v8186 = vunpack.c.h.b16 %v7377
        %v8187 = vunpack.c.l.b16 %v7378
        %v8188 = vunpack.c.h.b16 %v7378
        %v8189 = vunpack.c.l.b16 %v7379
        %v8190 = vunpack.c.h.b16 %v7379
        %v8191 = vunpack.c.l.b16 %v7380
        %v8192 = vunpack.c.h.b16 %v7380
        %v8193 = vunpack.c.l.b16 %v7381
        %v8194 = vunpack.c.h.b16 %v7381
        %v8195 = vunpack.c.l.b16 %v7382
        %v8196 = vunpack.c.h.b16 %v7382
        %v8197 = vunpack.c.l.b16 %v7383
        %v8198 = vunpack.c.h.b16 %v7383
        %v8199 = vunpack.c.l.b16 %v7384
        %v8200 = vunpack.c.h.b16 %v7384
        %v8201 = vunpack.c.l.b16 %v7385
        %v8202 = vunpack.c.h.b16 %v7385
        %v8203 = vunpack.c.l.b16 %v7386
        %v8204 = vunpack.c.h.b16 %v7386
        %v8205 = vunpack.c.l.b16 %v7387
        %v8206 = vunpack.c.h.b16 %v7387
        %v8207 = vunpack.c.l.b16 %v7388
        %v8208 = vunpack.c.h.b16 %v7388
        %v8209 = vunpack.c.l.b16 %v7389
        %v8210 = vunpack.c.h.b16 %v7389
        %v8211 = vunpack.c.l.b16 %v7390
        %v8212 = vunpack.c.h.b16 %v7390
        %v8213 = vunpack.c.l.b16 %v7391
        %v8214 = vunpack.c.h.b16 %v7391
        %v8215 = vunpack.c.l.b16 %v7392
        %v8216 = vunpack.c.h.b16 %v7392
        %v8217 = vunpack.c.l.b16 %v7393
        %v8218 = vunpack.c.h.b16 %v7393
        %v8219 = vunpack.c.l.b16 %v7394
        %v8220 = vunpack.c.h.b16 %v7394
        %v8221 = vunpack.c.l.b16 %v7395
        %v8222 = vunpack.c.h.b16 %v7395
        %v8223 = vunpack.c.l.b16 %v7396
        %v8224 = vunpack.c.h.b16 %v7396
        %v8225 = vunpack.c.l.b16 %v7397
        %v8226 = vunpack.c.h.b16 %v7397
        %v8227 = vunpack.c.l.b16 %v7398
        %v8228 = vunpack.c.h.b16 %v7398
        %v8229 = vunpack.c.l.b16 %v7399
        %v8230 = vunpack.c.h.b16 %v7399
        %v8231 = vunpack.c.l.b16 %v7400
        %v8232 = vunpack.c.h.b16 %v7400
        %v8233 = vunpack.c.l.b16 %v7401
        %v8234 = vunpack.c.h.b16 %v7401
        %v8235 = vunpack.c.l.b16 %v7402
        %v8236 = vunpack.c.h.b16 %v7402
        %v8237 = vunpack.c.l.b16 %v7403
        %v8238 = vunpack.c.h.b16 %v7403
        %v8239 = vunpack.c.l.b16 %v7404
        %v8240 = vunpack.c.h.b16 %v7404
        %v8241 = vunpack.c.l.b16 %v7405
        %v8242 = vunpack.c.h.b16 %v7405
        %v8243 = vunpack.c.l.b16 %v7406
        %v8244 = vunpack.c.h.b16 %v7406
        %v8245 = vunpack.c.l.b16 %v7407
        %v8246 = vunpack.c.h.b16 %v7407
        %v8247 = vunpack.c.l.b16 %v7408
        %v8248 = vunpack.c.h.b16 %v7408
        %v8249 = vunpack.c.l.b16 %v7409
        %v8250 = vunpack.c.h.b16 %v7409
        %v8251 = vunpack.c.l.b16 %v7410
        %v8252 = vunpack.c.h.b16 %v7410
        %v8253 = vunpack.c.l.b16 %v7411
        %v8254 = vunpack.c.h.b16 %v7411
        %v8255 = vunpack.c.l.b16 %v7412
        %v8256 = vunpack.c.h.b16 %v7412
        %v8257 = vunpack.c.l.b16 %v7413
        %v8258 = vunpack.c.h.b16 %v7413
        %v8259 = vunpack.c.l.b16 %v7414
        %v8260 = vunpack.c.h.b16 %v7414
        %v8261 = vunpack.c.l.b16 %v7415
        %v8262 = vunpack.c.h.b16 %v7415
        %v8263 = vunpack.c.l.b16 %v7416
        %v8264 = vunpack.c.h.b16 %v7416
        %v8265 = vunpack.c.l.b16 %v7417
        %v8266 = vunpack.c.h.b16 %v7417
        %v8267 = vunpack.c.l.b16 %v7418
        %v8268 = vunpack.c.h.b16 %v7418
        %v8269 = vunpack.c.l.b16 %v7419
        %v8270 = vunpack.c.h.b16 %v7419
        %v8271 = vunpack.c.l.b16 %v7420
        %v8272 = vunpack.c.h.b16 %v7420
        %v8273 = vunpack.c.l.b16 %v7421
        %v8274 = vunpack.c.h.b16 %v7421
        %v8275 = vunpack.c.l.b16 %v7422
        %v8276 = vunpack.c.h.b16 %v7422
        %v8277 = vunpack.c.l.b16 %v7423
        %v8278 = vunpack.c.h.b16 %v7423
        %v8279 = vunpack.c.l.b16 %v7424
        %v8280 = vunpack.c.h.b16 %v7424
        %v8281 = vunpack.c.l.b16 %v7425
        %v8282 = vunpack.c.h.b16 %v7425
        %v8283 = vunpack.c.l.b16 %v7426
        %v8284 = vunpack.c.h.b16 %v7426
        %v8285 = vunpack.c.l.b16 %v7427
        %v8286 = vunpack.c.h.b16 %v7427
        %v8287 = vunpack.c.l.b16 %v7428
        %v8288 = vunpack.c.h.b16 %v7428
        %v8289 = vunpack.c.l.b16 %v7429
        %v8290 = vunpack.c.h.b16 %v7429
        %v8291 = vunpack.c.l.b16 %v7430
        %v8292 = vunpack.c.h.b16 %v7430
        %v8293 = vunpack.c.l.b16 %v7431
        %v8294 = vunpack.c.h.b16 %v7431
        %v8295 = vunpack.c.l.b16 %v7432
        %v8296 = vunpack.c.h.b16 %v7432
        %v8297 = vunpack.c.l.b16 %v7433
        %v8298 = vunpack.c.h.b16 %v7433
        %v8299 = vunpack.c.l.b16 %v7434
        %v8300 = vunpack.c.h.b16 %v7434
        %v8301 = vunpack.c.l.b16 %v7435
        %v8302 = vunpack.c.h.b16 %v7435
        %v8303 = vunpack.c.l.b16 %v7436
        %v8304 = vunpack.c.h.b16 %v7436
        %v8305 = vunpack.c.l.b16 %v7437
        %v8306 = vunpack.c.h.b16 %v7437
        %v8307 = vunpack.c.l.b16 %v7438
        %v8308 = vunpack.c.h.b16 %v7438
        %v8309 = vunpack.c.l.b16 %v7439
        %v8310 = vunpack.c.h.b16 %v7439
        %v8311 = vunpack.c.l.b16 %v7440
        %v8312 = vunpack.c.h.b16 %v7440
        %v8313 = vunpack.c.l.b16 %v7441
        %v8314 = vunpack.c.h.b16 %v7441
        %v8315 = vunpack.c.l.b16 %v7442
        %v8316 = vunpack.c.h.b16 %v7442
        %v8317 = vunpack.c.l.b16 %v7443
        %v8318 = vunpack.c.h.b16 %v7443
        %v8319 = vunpack.c.l.b16 %v7444
        %v8320 = vunpack.c.h.b16 %v7444
        %v8321 = vunpack.c.l.b16 %v7445
        %v8322 = vunpack.c.h.b16 %v7445
        %v8323 = vunpack.c.l.b16 %v7446
        %v8324 = vunpack.c.h.b16 %v7446
        %v8325 = vunpack.c.l.b16 %v7447
        %v8326 = vunpack.c.h.b16 %v7447
        %v8327 = vunpack.c.l.b16 %v7448
        %v8328 = vunpack.c.h.b16 %v7448
        %v8329 = vunpack.c.l.b16 %v7449
        %v8330 = vunpack.c.h.b16 %v7449
        %v8331 = vunpack.c.l.b16 %v7450
        %v8332 = vunpack.c.h.b16 %v7450
        %v8333 = vunpack.c.l.b16 %v7451
        %v8334 = vunpack.c.h.b16 %v7451
        %v8335 = vunpack.c.l.b16 %v7452
        %v8336 = vunpack.c.h.b16 %v7452
        %v8337 = vunpack.c.l.b16 %v7453
        %v8338 = vunpack.c.h.b16 %v7453
        %v8339 = vunpack.c.l.b16 %v7454
        %v8340 = vunpack.c.h.b16 %v7454
        %v8341 = vunpack.c.l.b16 %v7455
        %v8342 = vunpack.c.h.b16 %v7455
        %v8343 = vunpack.c.l.b16 %v7456
        %v8344 = vunpack.c.h.b16 %v7456
        %v8345 = vunpack.c.l.b16 %v7457
        %v8346 = vunpack.c.h.b16 %v7457
        %v8347 = vunpack.c.l.b16 %v7458
        %v8348 = vunpack.c.h.b16 %v7458
        %v8349 = vunpack.c.l.b16 %v7459
        %v8350 = vunpack.c.h.b16 %v7459
        %v8351 = vunpack.c.l.b16 %v7460
        %v8352 = vunpack.c.h.b16 %v7460
        %v8353 = vunpack.c.l.b16 %v7461
        %v8354 = vunpack.c.h.b16 %v7461
        %v8355 = vunpack.c.l.b16 %v7462
        %v8356 = vunpack.c.h.b16 %v7462
        %v8357 = vunpack.c.l.b16 %v7463
        %v8358 = vunpack.c.h.b16 %v7463
        %v8359 = vunpack.c.l.b16 %v7464
        %v8360 = vunpack.c.h.b16 %v7464
        %v8361 = vpack.c.b16 %v7791, %v7785
        %v8362 = vpack.c.b16 %v7792, %v7786
        %v8363 = vpack.c.b16 %v7793, %v7787
        %v8364 = vpack.c.b16 %v7794, %v7788
        %v8365 = vpack.c.b16 %v7795, %v7789
        %v8366 = vpack.c.b16 %v7796, %v7790
        %v8367 = vpack.c.b16 %v7803, %v7797
        %v8368 = vpack.c.b16 %v7804, %v7798
        %v8369 = vpack.c.b16 %v7805, %v7799
        %v8370 = vpack.c.b16 %v7806, %v7800
        %v8371 = vpack.c.b16 %v7807, %v7801
        %v8372 = vpack.c.b16 %v7808, %v7802
        %v8373 = vpack.c.b16 %v7815, %v7809
        %v8374 = vpack.c.b16 %v7816, %v7810
        %v8375 = vpack.c.b16 %v7817, %v7811
        %v8376 = vpack.c.b16 %v7818, %v7812
        %v8377 = vpack.c.b16 %v7819, %v7813
        %v8378 = vpack.c.b16 %v7820, %v7814
        %v8379 = vpack.c.b16 %v7827, %v7821
        %v8380 = vpack.c.b16 %v7828, %v7822
        %v8381 = vpack.c.b16 %v7829, %v7823
        %v8382 = vpack.c.b16 %v7830, %v7824
        %v8383 = vpack.c.b16 %v7831, %v7825
        %v8384 = vpack.c.b16 %v7832, %v7826
        %v8385 = vpack.c.b16 %v7839, %v7833
        %v8386 = vpack.c.b16 %v7840, %v7834
        %v8387 = vpack.c.b16 %v7841, %v7835
        %v8388 = vpack.c.b16 %v7842, %v7836
        %v8389 = vpack.c.b16 %v7843, %v7837
        %v8390 = vpack.c.b16 %v7844, %v7838
        %v8391 = vpack.c.b16 %v7851, %v7845
        %v8392 = vpack.c.b16 %v7852, %v7846
        %v8393 = vpack.c.b16 %v7853, %v7847
        %v8394 = vpack.c.b16 %v7854, %v7848
        %v8395 = vpack.c.b16 %v7855, %v7849
        %v8396 = vpack.c.b16 %v7856, %v7850
        %v8397 = vpack.c.b16 %v7863, %v7857
        %v8398 = vpack.c.b16 %v7864, %v7858
        %v8399 = vpack.c.b16 %v7865, %v7859
        %v8400 = vpack.c.b16 %v7866, %v7860
        %v8401 = vpack.c.b16 %v7867, %v7861
        %v8402 = vpack.c.b16 %v7868, %v7862
        %v8403 = vpack.c.b16 %v7875, %v7869
        %v8404 = vpack.c.b16 %v7876, %v7870
        %v8405 = vpack.c.b16 %v7877, %v7871
        %v8406 = vpack.c.b16 %v7878, %v7872
        %v8407 = vpack.c.b16 %v7879, %v7873
        %v8408 = vpack.c.b16 %v7880, %v7874
        %v8409 = vpack.c.b16 %v7887, %v7881
        %v8410 = vpack.c.b16 %v7888, %v7882
        %v8411 = vpack.c.b16 %v7889, %v7883
        %v8412 = vpack.c.b16 %v7890, %v7884
        %v8413 = vpack.c.b16 %v7891, %v7885
        %v8414 = vpack.c.b16 %v7892, %v7886
        %v8415 = vpack.c.b16 %v7899, %v7893
        %v8416 = vpack.c.b16 %v7900, %v7894
        %v8417 = vpack.c.b16 %v7901, %v7895
        %v8418 = vpack.c.b16 %v7902, %v7896
        %v8419 = vpack.c.b16 %v7903, %v7897
        %v8420 = vpack.c.b16 %v7904, %v7898
        %v8421 = vpack.c.b16 %v7911, %v7905
        %v8422 = vpack.c.b16 %v7912, %v7906
        %v8423 = vpack.c.b16 %v7913, %v7907
        %v8424 = vpack.c.b16 %v7914, %v7908
        %v8425 = vpack.c.b16 %v7915, %v7909
        %v8426 = vpack.c.b16 %v7916, %v7910
        %v8427 = vpack.c.b16 %v7923, %v7917
        %v8428 = vpack.c.b16 %v7924, %v7918
        %v8429 = vpack.c.b16 %v7925, %v7919
        %v8430 = vpack.c.b16 %v7926, %v7920
        %v8431 = vpack.c.b16 %v7927, %v7921
        %v8432 = vpack.c.b16 %v7928, %v7922
        %v8433 = vpack.c.b16 %v7935, %v7929
        %v8434 = vpack.c.b16 %v7936, %v7930
        %v8435 = vpack.c.b16 %v7937, %v7931
        %v8436 = vpack.c.b16 %v7938, %v7932
        %v8437 = vpack.c.b16 %v7939, %v7933
        %v8438 = vpack.c.b16 %v7940, %v7934
        %v8439 = vpack.c.b16 %v7947, %v7941
        %v8440 = vpack.c.b16 %v7948, %v7942
        %v8441 = vpack.c.b16 %v7949, %v7943
        %v8442 = vpack.c.b16 %v7950, %v7944
        %v8443 = vpack.c.b16 %v7951, %v7945
        %v8444 = vpack.c.b16 %v7952, %v7946
        %v8445 = vpack.c.b16 %v7959, %v7953
        %v8446 = vpack.c.b16 %v7960, %v7954
        %v8447 = vpack.c.b16 %v7961, %v7955
        %v8448 = vpack.c.b16 %v7962, %v7956
        %v8449 = vpack.c.b16 %v7963, %v7957
        %v8450 = vpack.c.b16 %v7964, %v7958
        %v8451 = vpack.c.b16 %v7971, %v7965
        %v8452 = vpack.c.b16 %v7972, %v7966
        %v8453 = vpack.c.b16 %v7973, %v7967
        %v8454 = vpack.c.b16 %v7974, %v7968
        %v8455 = vpack.c.b16 %v7975, %v7969
        %v8456 = vpack.c.b16 %v7976, %v7970
        %v8457 = vpack.c.b16 %v7983, %v7977
        %v8458 = vpack.c.b16 %v7984, %v7978
        %v8459 = vpack.c.b16 %v7985, %v7979
        %v8460 = vpack.c.b16 %v7986, %v7980
        %v8461 = vpack.c.b16 %v7987, %v7981
        %v8462 = vpack.c.b16 %v7988, %v7982
        %v8463 = vpack.c.b16 %v7995, %v7989
        %v8464 = vpack.c.b16 %v7996, %v7990
        %v8465 = vpack.c.b16 %v7997, %v7991
        %v8466 = vpack.c.b16 %v7998, %v7992
        %v8467 = vpack.c.b16 %v7999, %v7993
        %v8468 = vpack.c.b16 %v8000, %v7994
        %v8469 = vpack.c.b16 %v8007, %v8001
        %v8470 = vpack.c.b16 %v8008, %v8002
        %v8471 = vpack.c.b16 %v8009, %v8003
        %v8472 = vpack.c.b16 %v8010, %v8004
        %v8473 = vpack.c.b16 %v8011, %v8005
        %v8474 = vpack.c.b16 %v8012, %v8006
        %v8475 = vpack.c.b16 %v8019, %v8013
        %v8476 = vpack.c.b16 %v8020, %v8014
        %v8477 = vpack.c.b16 %v8021, %v8015
        %v8478 = vpack.c.b16 %v8022, %v8016
        %v8479 = vpack.c.b16 %v8023, %v8017
        %v8480 = vpack.c.b16 %v8024, %v8018
        %v8481 = vpack.c.b16 %v8031, %v8025
        %v8482 = vpack.c.b16 %v8032, %v8026
        %v8483 = vpack.c.b16 %v8033, %v8027
        %v8484 = vpack.c.b16 %v8034, %v8028
        %v8485 = vpack.c.b16 %v8035, %v8029
        %v8486 = vpack.c.b16 %v8036, %v8030
        %v8487 = vpack.c.b16 %v8043, %v8037
        %v8488 = vpack.c.b16 %v8044, %v8038
        %v8489 = vpack.c.b16 %v8045, %v8039
        %v8490 = vpack.c.b16 %v8046, %v8040
        %v8491 = vpack.c.b16 %v8047, %v8041
        %v8492 = vpack.c.b16 %v8048, %v8042
        %v8493 = vpack.c.b16 %v8055, %v8049
        %v8494 = vpack.c.b16 %v8056, %v8050
        %v8495 = vpack.c.b16 %v8057, %v8051
        %v8496 = vpack.c.b16 %v8058, %v8052
        %v8497 = vpack.c.b16 %v8059, %v8053
        %v8498 = vpack.c.b16 %v8060, %v8054
        %v8499 = vpack.c.b16 %v8067, %v8061
        %v8500 = vpack.c.b16 %v8068, %v8062
        %v8501 = vpack.c.b16 %v8069, %v8063
        %v8502 = vpack.c.b16 %v8070, %v8064
        %v8503 = vpack.c.b16 %v8071, %v8065
        %v8504 = vpack.c.b16 %v8072, %v8066
        %v8505 = vpack.c.b16 %v8079, %v8073
        %v8506 = vpack.c.b16 %v8080, %v8074
        %v8507 = vpack.c.b16 %v8081, %v8075
        %v8508 = vpack.c.b16 %v8082, %v8076
        %v8509 = vpack.c.b16 %v8083, %v8077
        %v8510 = vpack.c.b16 %v8084, %v8078
        %v8511 = vpack.c.b16 %v8091, %v8085
        %v8512 = vpack.c.b16 %v8092, %v8086
        %v8513 = vpack.c.b16 %v8093, %v8087
        %v8514 = vpack.c.b16 %v8094, %v8088
        %v8515 = vpack.c.b16 %v8095, %v8089
        %v8516 = vpack.c.b16 %v8096, %v8090
        %v8517 = vpack.c.b16 %v8103, %v8097
        %v8518 = vpack.c.b16 %v8104, %v8098
        %v8519 = vpack.c.b16 %v8105, %v8099
        %v8520 = vpack.c.b16 %v8106, %v8100
        %v8521 = vpack.c.b16 %v8107, %v8101
        %v8522 = vpack.c.b16 %v8108, %v8102
        %v8523 = vpack.c.b16 %v8115, %v8109
        %v8524 = vpack.c.b16 %v8116, %v8110
        %v8525 = vpack.c.b16 %v8117, %v8111
        %v8526 = vpack.c.b16 %v8118, %v8112
        %v8527 = vpack.c.b16 %v8119, %v8113
        %v8528 = vpack.c.b16 %v8120, %v8114
        %v8529 = vpack.c.b16 %v8127, %v8121
        %v8530 = vpack.c.b16 %v8128, %v8122
        %v8531 = vpack.c.b16 %v8129, %v8123
        %v8532 = vpack.c.b16 %v8130, %v8124
        %v8533 = vpack.c.b16 %v8131, %v8125
        %v8534 = vpack.c.b16 %v8132, %v8126
        %v8535 = vpack.c.b16 %v8139, %v8133
        %v8536 = vpack.c.b16 %v8140, %v8134
        %v8537 = vpack.c.b16 %v8141, %v8135
        %v8538 = vpack.c.b16 %v8142, %v8136
        %v8539 = vpack.c.b16 %v8143, %v8137
        %v8540 = vpack.c.b16 %v8144, %v8138
        %v8541 = vpack.c.b16 %v8151, %v8145
        %v8542 = vpack.c.b16 %v8152, %v8146
        %v8543 = vpack.c.b16 %v8153, %v8147
        %v8544 = vpack.c.b16 %v8154, %v8148
        %v8545 = vpack.c.b16 %v8155, %v8149
        %v8546 = vpack.c.b16 %v8156, %v8150
        %v8547 = vpack.c.b16 %v8163, %v8157
        %v8548 = vpack.c.b16 %v8164, %v8158
        %v8549 = vpack.c.b16 %v8165, %v8159
        %v8550 = vpack.c.b16 %v8166, %v8160
        %v8551 = vpack.c.b16 %v8167, %v8161
        %v8552 = vpack.c.b16 %v8168, %v8162
        %v8553 = vpack.c.b16 %v8175, %v8169
        %v8554 = vpack.c.b16 %v8176, %v8170
        %v8555 = vpack.c.b16 %v8177, %v8171
        %v8556 = vpack.c.b16 %v8178, %v8172
        %v8557 = vpack.c.b16 %v8179, %v8173
        %v8558 = vpack.c.b16 %v8180, %v8174
        %v8559 = vpack.c.b16 %v8187, %v8181
        %v8560 = vpack.c.b16 %v8188, %v8182
        %v8561 = vpack.c.b16 %v8189, %v8183
        %v8562 = vpack.c.b16 %v8190, %v8184
        %v8563 = vpack.c.b16 %v8191, %v8185
        %v8564 = vpack.c.b16 %v8192, %v8186
        %v8565 = vpack.c.b16 %v8199, %v8193
        %v8566 = vpack.c.b16 %v8200, %v8194
        %v8567 = vpack.c.b16 %v8201, %v8195
        %v8568 = vpack.c.b16 %v8202, %v8196
        %v8569 = vpack.c.b16 %v8203, %v8197
        %v8570 = vpack.c.b16 %v8204, %v8198
        %v8571 = vpack.c.b16 %v8211, %v8205
        %v8572 = vpack.c.b16 %v8212, %v8206
        %v8573 = vpack.c.b16 %v8213, %v8207
        %v8574 = vpack.c.b16 %v8214, %v8208
        %v8575 = vpack.c.b16 %v8215, %v8209
        %v8576 = vpack.c.b16 %v8216, %v8210
        %v8577 = vpack.c.b16 %v8223, %v8217
        %v8578 = vpack.c.b16 %v8224, %v8218
        %v8579 = vpack.c.b16 %v8225, %v8219
        %v8580 = vpack.c.b16 %v8226, %v8220
        %v8581 = vpack.c.b16 %v8227, %v8221
        %v8582 = vpack.c.b16 %v8228, %v8222
        %v8583 = vpack.c.b16 %v8235, %v8229
        %v8584 = vpack.c.b16 %v8236, %v8230
        %v8585 = vpack.c.b16 %v8237, %v8231
        %v8586 = vpack.c.b16 %v8238, %v8232
        %v8587 = vpack.c.b16 %v8239, %v8233
        %v8588 = vpack.c.b16 %v8240, %v8234
        %v8589 = vpack.c.b16 %v8247, %v8241
        %v8590 = vpack.c.b16 %v8248, %v8242
        %v8591 = vpack.c.b16 %v8249, %v8243
        %v8592 = vpack.c.b16 %v8250, %v8244
        %v8593 = vpack.c.b16 %v8251, %v8245
        %v8594 = vpack.c.b16 %v8252, %v8246
        %v8595 = vpack.c.b16 %v8259, %v8253
        %v8596 = vpack.c.b16 %v8260, %v8254
        %v8597 = vpack.c.b16 %v8261, %v8255
        %v8598 = vpack.c.b16 %v8262, %v8256
        %v8599 = vpack.c.b16 %v8263, %v8257
        %v8600 = vpack.c.b16 %v8264, %v8258
        %v8601 = vpack.c.b16 %v8271, %v8265
        %v8602 = vpack.c.b16 %v8272, %v8266
        %v8603 = vpack.c.b16 %v8273, %v8267
        %v8604 = vpack.c.b16 %v8274, %v8268
        %v8605 = vpack.c.b16 %v8275, %v8269
        %v8606 = vpack.c.b16 %v8276, %v8270
        %v8607 = vpack.c.b16 %v8283, %v8277
        %v8608 = vpack.c.b16 %v8284, %v8278
        %v8609 = vpack.c.b16 %v8285, %v8279
        %v8610 = vpack.c.b16 %v8286, %v8280
        %v8611 = vpack.c.b16 %v8287, %v8281
        %v8612 = vpack.c.b16 %v8288, %v8282
        %v8613 = vpack.c.b16 %v8295, %v8289
        %v8614 = vpack.c.b16 %v8296, %v8290
        %v8615 = vpack.c.b16 %v8297, %v8291
        %v8616 = vpack.c.b16 %v8298, %v8292
        %v8617 = vpack.c.b16 %v8299, %v8293
        %v8618 = vpack.c.b16 %v8300, %v8294
        %v8619 = vpack.c.b16 %v8307, %v8301
        %v8620 = vpack.c.b16 %v8308, %v8302
        %v8621 = vpack.c.b16 %v8309, %v8303
        %v8622 = vpack.c.b16 %v8310, %v8304
        %v8623 = vpack.c.b16 %v8311, %v8305
        %v8624 = vpack.c.b16 %v8312, %v8306
        %v8625 = vpack.c.b16 %v8319, %v8313
        %v8626 = vpack.c.b16 %v8320, %v8314
        %v8627 = vpack.c.b16 %v8321, %v8315
        %v8628 = vpack.c.b16 %v8322, %v8316
        %v8629 = vpack.c.b16 %v8323, %v8317
        %v8630 = vpack.c.b16 %v8324, %v8318
        %v8631 = vpack.c.b16 %v8331, %v8325
        %v8632 = vpack.c.b16 %v8332, %v8326
        %v8633 = vpack.c.b16 %v8333, %v8327
        %v8634 = vpack.c.b16 %v8334, %v8328
        %v8635 = vpack.c.b16 %v8335, %v8329
        %v8636 = vpack.c.b16 %v8336, %v8330
        %v8637 = vpack.c.b16 %v8343, %v8337
        %v8638 = vpack.c.b16 %v8344, %v8338
        %v8639 = vpack.c.b16 %v8345, %v8339
        %v8640 = vpack.c.b16 %v8346, %v8340
        %v8641 = vpack.c.b16 %v8347, %v8341
        %v8642 = vpack.c.b16 %v8348, %v8342
        %v8643 = vpack.c.b16 %v8355, %v8349
        %v8644 = vpack.c.b16 %v8356, %v8350
        %v8645 = vpack.c.b16 %v8357, %v8351
        %v8646 = vpack.c.b16 %v8358, %v8352
        %v8647 = vpack.c.b16 %v8359, %v8353
        %v8648 = vpack.c.b16 %v8360, %v8354
        %8937 = vmatprep.subr.bf16.mxu0 %v8362
        %8938 = vmatpush1.bf16.msra.mxu0 %v8361
        %8939 = vmatprep.subr.bf16.mxu0 %v8368
        %8940 = vmatpush1.bf16.msra.mxu0 %v8367
        %8941 = vmatprep.subr.bf16.mxu0 %v8374
        %8942 = vmatpush1.bf16.msra.mxu0 %v8373
        %8943 = vmatprep.subr.bf16.mxu0 %v8380
        %8944 = vmatpush1.bf16.msra.mxu0 %v8379
        %8945 = vmatprep.subr.bf16.mxu0 %v8386
        %8946 = vmatpush1.bf16.msra.mxu0 %v8385
        %8947 = vmatprep.subr.bf16.mxu0 %v8392
        %8948 = vmatpush1.bf16.msra.mxu0 %v8391
        %8949 = vmatprep.subr.bf16.mxu0 %v8398
        %8950 = vmatpush1.bf16.msra.mxu0 %v8397
        %8951 = vmatprep.subr.bf16.mxu0 %v8404
        %8952 = vmatpush1.bf16.msra.mxu0 %v8403
        %8953 = vmatprep.subr.bf16.mxu0 %v8410
        %8954 = vmatpush1.bf16.msra.mxu0 %v8409
        %8955 = vmatprep.subr.bf16.mxu0 %v8416
        %8956 = vmatpush1.bf16.msra.mxu0 %v8415
        %8957 = vmatprep.subr.bf16.mxu0 %v8422
        %8958 = vmatpush1.bf16.msra.mxu0 %v8421
        %8959 = vmatprep.subr.bf16.mxu0 %v8428
        %8960 = vmatpush1.bf16.msra.mxu0 %v8427
        %8961 = vmatprep.subr.bf16.mxu0 %v8434
        %8962 = vmatpush1.bf16.msra.mxu0 %v8433
        %8963 = vmatprep.subr.bf16.mxu0 %v8440
        %8964 = vmatpush1.bf16.msra.mxu0 %v8439
        %8965 = vmatprep.subr.bf16.mxu0 %v8446
        %8966 = vmatpush1.bf16.msra.mxu0 %v8445
        %8967 = vmatprep.subr.bf16.mxu0 %v8452
        %8968 = vmatpush1.bf16.msra.mxu0 %v8451
        %8969 = vmatprep.mubr.bf16.mxu0 %v7172
        %8970 = vmatmul.mubr.bf16.gmra.mrb[0].mxu0 %v7171
        %v8971 = vpop.f32.mrb[0].mxu0
        %v8972 = vadd.f32 %v7470, %v8971
        %v8973 = vpop.f32.mrb[0].mxu0
        %v8974 = vadd.f32 %v7474, %v8973
        %v8975 = vpop.f32.mrb[0].mxu0
        %v8976 = vpop.f32.mrb[0].mxu0
        %8977 = vdwg.mxu0
        %8978 = vmatprep.subr.bf16.mxu0 %v8458
        %8979 = vmatpush1.bf16.msra.mxu0 %v8457
        %8980 = vmatprep.subr.bf16.mxu0 %v8464
        %8981 = vmatpush1.bf16.msra.mxu0 %v8463
        %8982 = vmatprep.subr.bf16.mxu0 %v8470
        %8983 = vmatpush1.bf16.msra.mxu0 %v8469
        %8984 = vmatprep.subr.bf16.mxu0 %v8476
        %8985 = vmatpush1.bf16.msra.mxu0 %v8475
        %8986 = vmatprep.subr.bf16.mxu0 %v8482
        %8987 = vmatpush1.bf16.msra.mxu0 %v8481
        %8988 = vmatprep.subr.bf16.mxu0 %v8488
        %8989 = vmatpush1.bf16.msra.mxu0 %v8487
        %8990 = vmatprep.subr.bf16.mxu0 %v8494
        %8991 = vmatpush1.bf16.msra.mxu0 %v8493
        %8992 = vmatprep.subr.bf16.mxu0 %v8500
        %8993 = vmatpush1.bf16.msra.mxu0 %v8499
        %8994 = vmatprep.subr.bf16.mxu0 %v8506
        %8995 = vmatpush1.bf16.msra.mxu0 %v8505
        %8996 = vmatprep.subr.bf16.mxu0 %v8512
        %8997 = vmatpush1.bf16.msra.mxu0 %v8511
        %8998 = vmatprep.subr.bf16.mxu0 %v8518
        %8999 = vmatpush1.bf16.msra.mxu0 %v8517
        %9000 = vmatprep.subr.bf16.mxu0 %v8524
        %9001 = vmatpush1.bf16.msra.mxu0 %v8523
        %9002 = vmatprep.subr.bf16.mxu0 %v8530
        %9003 = vmatpush1.bf16.msra.mxu0 %v8529
        %9004 = vmatprep.subr.bf16.mxu0 %v8536
        %9005 = vmatpush1.bf16.msra.mxu0 %v8535
        %9006 = vmatprep.subr.bf16.mxu0 %v8542
        %9007 = vmatpush1.bf16.msra.mxu0 %v8541
        %9008 = vmatprep.subr.bf16.mxu0 %v8548
        %9009 = vmatpush1.bf16.msra.mxu0 %v8547
        %9010 = vmatprep.mubr.bf16.mxu0 %v7174
        %9011 = vmatmul.mubr.bf16.gmra.mrb[0].mxu0 %v7173
        %v9012 = vpop.f32.mrb[0].mxu0
        %v9013 = vadd.f32 %v8972, %v9012
        %v9014 = vpop.f32.mrb[0].mxu0
        %v9015 = vadd.f32 %v8974, %v9014
        %v9016 = vpop.f32.mrb[0].mxu0
        %v9017 = vpop.f32.mrb[0].mxu0
        %9018 = vdwg.mxu0
        %9019 = vmatprep.subr.bf16.mxu0 %v8554
        %9020 = vmatpush1.bf16.msra.mxu0 %v8553
        %9021 = vmatprep.subr.bf16.mxu0 %v8560
        %9022 = vmatpush1.bf16.msra.mxu0 %v8559
        %9023 = vmatprep.subr.bf16.mxu0 %v8566
        %9024 = vmatpush1.bf16.msra.mxu0 %v8565
        %9025 = vmatprep.subr.bf16.mxu0 %v8572
        %9026 = vmatpush1.bf16.msra.mxu0 %v8571
        %9027 = vmatprep.subr.bf16.mxu0 %v8578
        %9028 = vmatpush1.bf16.msra.mxu0 %v8577
        %9029 = vmatprep.subr.bf16.mxu0 %v8584
        %9030 = vmatpush1.bf16.msra.mxu0 %v8583
        %9031 = vmatprep.subr.bf16.mxu0 %v8590
        %9032 = vmatpush1.bf16.msra.mxu0 %v8589
        %9033 = vmatprep.subr.bf16.mxu0 %v8596
        %9034 = vmatpush1.bf16.msra.mxu0 %v8595
        %9035 = vmatprep.subr.bf16.mxu0 %v8602
        %9036 = vmatpush1.bf16.msra.mxu0 %v8601
        %9037 = vmatprep.subr.bf16.mxu0 %v8608
        %9038 = vmatpush1.bf16.msra.mxu0 %v8607
        %9039 = vmatprep.subr.bf16.mxu0 %v8614
        %9040 = vmatpush1.bf16.msra.mxu0 %v8613
        %9041 = vmatprep.subr.bf16.mxu0 %v8620
        %9042 = vmatpush1.bf16.msra.mxu0 %v8619
        %9043 = vmatprep.subr.bf16.mxu0 %v8626
        %9044 = vmatpush1.bf16.msra.mxu0 %v8625
        %9045 = vmatprep.subr.bf16.mxu0 %v8632
        %9046 = vmatpush1.bf16.msra.mxu0 %v8631
        %9047 = vmatprep.subr.bf16.mxu0 %v8638
        %9048 = vmatpush1.bf16.msra.mxu0 %v8637
        %9049 = vmatprep.subr.bf16.mxu0 %v8644
        %9050 = vmatpush1.bf16.msra.mxu0 %v8643
        %9051 = vmatprep.mubr.bf16.mxu0 %v7176
        %9052 = vmatmul.mubr.bf16.gmra.mrb[0].mxu0 %v7175
        %v9053 = vpop.f32.mrb[0].mxu0
        %v9054 = vadd.f32 %v9013, %v9053
        %v9055 = vpop.f32.mrb[0].mxu0
        %v9056 = vadd.f32 %v9015, %v9055
        %v9057 = vpop.f32.mrb[0].mxu0
        %v9058 = vpop.f32.mrb[0].mxu0
        %9059 = vdwg.mxu0
        %9060 = vmatprep.subr.bf16.mxu0 %v8364
        %9061 = vmatpush1.bf16.msra.mxu0 %v8363
        %9062 = vmatprep.subr.bf16.mxu0 %v8370
        %9063 = vmatpush1.bf16.msra.mxu0 %v8369
        %9064 = vmatprep.subr.bf16.mxu0 %v8376
        %9065 = vmatpush1.bf16.msra.mxu0 %v8375
        %9066 = vmatprep.subr.bf16.mxu0 %v8382
        %9067 = vmatpush1.bf16.msra.mxu0 %v8381
        %9068 = vmatprep.subr.bf16.mxu0 %v8388
        %9069 = vmatpush1.bf16.msra.mxu0 %v8387
        %9070 = vmatprep.subr.bf16.mxu0 %v8394
        %9071 = vmatpush1.bf16.msra.mxu0 %v8393
        %9072 = vmatprep.subr.bf16.mxu0 %v8400
        %9073 = vmatpush1.bf16.msra.mxu0 %v8399
        %9074 = vmatprep.subr.bf16.mxu0 %v8406
        %9075 = vmatpush1.bf16.msra.mxu0 %v8405
        %9076 = vmatprep.subr.bf16.mxu0 %v8412
        %9077 = vmatpush1.bf16.msra.mxu0 %v8411
        %9078 = vmatprep.subr.bf16.mxu0 %v8418
        %9079 = vmatpush1.bf16.msra.mxu0 %v8417
        %9080 = vmatprep.subr.bf16.mxu0 %v8424
        %9081 = vmatpush1.bf16.msra.mxu0 %v8423
        %9082 = vmatprep.subr.bf16.mxu0 %v8430
        %9083 = vmatpush1.bf16.msra.mxu0 %v8429
        %9084 = vmatprep.subr.bf16.mxu0 %v8436
        %9085 = vmatpush1.bf16.msra.mxu0 %v8435
        %9086 = vmatprep.subr.bf16.mxu0 %v8442
        %9087 = vmatpush1.bf16.msra.mxu0 %v8441
        %9088 = vmatprep.subr.bf16.mxu0 %v8448
        %9089 = vmatpush1.bf16.msra.mxu0 %v8447
        %9090 = vmatprep.subr.bf16.mxu0 %v8454
        %9091 = vmatpush1.bf16.msra.mxu0 %v8453
        %9092 = vmatprep.mubr.bf16.mxu0 %v7172
        %9093 = vmatmul.mubr.bf16.gmra.mrb[0].mxu0 %v7171
        %v9094 = vpop.f32.mrb[0].mxu0
        %v9095 = vadd.f32 %v7478, %v9094
        %v9096 = vpop.f32.mrb[0].mxu0
        %v9097 = vadd.f32 %v7482, %v9096
        %v9098 = vpop.f32.mrb[0].mxu0
        %v9099 = vpop.f32.mrb[0].mxu0
        %9100 = vdwg.mxu0
        %9101 = vmatprep.subr.bf16.mxu0 %v8460
        %9102 = vmatpush1.bf16.msra.mxu0 %v8459
        %9103 = vmatprep.subr.bf16.mxu0 %v8466
        %9104 = vmatpush1.bf16.msra.mxu0 %v8465
        %9105 = vmatprep.subr.bf16.mxu0 %v8472
        %9106 = vmatpush1.bf16.msra.mxu0 %v8471
        %9107 = vmatprep.subr.bf16.mxu0 %v8478
        %9108 = vmatpush1.bf16.msra.mxu0 %v8477
        %9109 = vmatprep.subr.bf16.mxu0 %v8484
        %9110 = vmatpush1.bf16.msra.mxu0 %v8483
        %9111 = vmatprep.subr.bf16.mxu0 %v8490
        %9112 = vmatpush1.bf16.msra.mxu0 %v8489
        %9113 = vmatprep.subr.bf16.mxu0 %v8496
        %9114 = vmatpush1.bf16.msra.mxu0 %v8495
        %9115 = vmatprep.subr.bf16.mxu0 %v8502
        %9116 = vmatpush1.bf16.msra.mxu0 %v8501
        %9117 = vmatprep.subr.bf16.mxu0 %v8508
        %9118 = vmatpush1.bf16.msra.mxu0 %v8507
        %9119 = vmatprep.subr.bf16.mxu0 %v8514
        %9120 = vmatpush1.bf16.msra.mxu0 %v8513
        %9121 = vmatprep.subr.bf16.mxu0 %v8520
        %9122 = vmatpush1.bf16.msra.mxu0 %v8519
        %9123 = vmatprep.subr.bf16.mxu0 %v8526
        %9124 = vmatpush1.bf16.msra.mxu0 %v8525
        %9125 = vmatprep.subr.bf16.mxu0 %v8532
        %9126 = vmatpush1.bf16.msra.mxu0 %v8531
        %9127 = vmatprep.subr.bf16.mxu0 %v8538
        %9128 = vmatpush1.bf16.msra.mxu0 %v8537
        %9129 = vmatprep.subr.bf16.mxu0 %v8544
        %9130 = vmatpush1.bf16.msra.mxu0 %v8543
        %9131 = vmatprep.subr.bf16.mxu0 %v8550
        %9132 = vmatpush1.bf16.msra.mxu0 %v8549
        %9133 = vmatprep.mubr.bf16.mxu0 %v7174
        %9134 = vmatmul.mubr.bf16.gmra.mrb[0].mxu0 %v7173
        %v9135 = vpop.f32.mrb[0].mxu0
        %v9136 = vadd.f32 %v9095, %v9135
        %v9137 = vpop.f32.mrb[0].mxu0
        %v9138 = vadd.f32 %v9097, %v9137
        %v9139 = vpop.f32.mrb[0].mxu0
        %v9140 = vpop.f32.mrb[0].mxu0
        %9141 = vdwg.mxu0
        %9142 = vmatprep.subr.bf16.mxu0 %v8556
        %9143 = vmatpush1.bf16.msra.mxu0 %v8555
        %9144 = vmatprep.subr.bf16.mxu0 %v8562
        %9145 = vmatpush1.bf16.msra.mxu0 %v8561
        %9146 = vmatprep.subr.bf16.mxu0 %v8568
        %9147 = vmatpush1.bf16.msra.mxu0 %v8567
        %9148 = vmatprep.subr.bf16.mxu0 %v8574
        %9149 = vmatpush1.bf16.msra.mxu0 %v8573
        %9150 = vmatprep.subr.bf16.mxu0 %v8580
        %9151 = vmatpush1.bf16.msra.mxu0 %v8579
        %9152 = vmatprep.subr.bf16.mxu0 %v8586
        %9153 = vmatpush1.bf16.msra.mxu0 %v8585
        %9154 = vmatprep.subr.bf16.mxu0 %v8592
        %9155 = vmatpush1.bf16.msra.mxu0 %v8591
        %9156 = vmatprep.subr.bf16.mxu0 %v8598
        %9157 = vmatpush1.bf16.msra.mxu0 %v8597
        %9158 = vmatprep.subr.bf16.mxu0 %v8604
        %9159 = vmatpush1.bf16.msra.mxu0 %v8603
        %9160 = vmatprep.subr.bf16.mxu0 %v8610
        %9161 = vmatpush1.bf16.msra.mxu0 %v8609
        %9162 = vmatprep.subr.bf16.mxu0 %v8616
        %9163 = vmatpush1.bf16.msra.mxu0 %v8615
        %9164 = vmatprep.subr.bf16.mxu0 %v8622
        %9165 = vmatpush1.bf16.msra.mxu0 %v8621
        %9166 = vmatprep.subr.bf16.mxu0 %v8628
        %9167 = vmatpush1.bf16.msra.mxu0 %v8627
        %9168 = vmatprep.subr.bf16.mxu0 %v8634
        %9169 = vmatpush1.bf16.msra.mxu0 %v8633
        %9170 = vmatprep.subr.bf16.mxu0 %v8640
        %9171 = vmatpush1.bf16.msra.mxu0 %v8639
        %9172 = vmatprep.subr.bf16.mxu0 %v8646
        %9173 = vmatpush1.bf16.msra.mxu0 %v8645
        %9174 = vmatprep.mubr.bf16.mxu0 %v7176
        %9175 = vmatmul.mubr.bf16.gmra.mrb[0].mxu0 %v7175
        %v9176 = vpop.f32.mrb[0].mxu0
        %v9177 = vadd.f32 %v9136, %v9176
        %v9178 = vpop.f32.mrb[0].mxu0
        %v9179 = vadd.f32 %v9138, %v9178
        %v9180 = vpop.f32.mrb[0].mxu0
        %v9181 = vpop.f32.mrb[0].mxu0
        %9182 = vdwg.mxu0
        %9183 = vmatprep.subr.bf16.mxu0 %v8366
        %9184 = vmatpush1.bf16.msra.mxu0 %v8365
        %9185 = vmatprep.subr.bf16.mxu0 %v8372
        %9186 = vmatpush1.bf16.msra.mxu0 %v8371
        %9187 = vmatprep.subr.bf16.mxu0 %v8378
        %9188 = vmatpush1.bf16.msra.mxu0 %v8377
        %9189 = vmatprep.subr.bf16.mxu0 %v8384
        %9190 = vmatpush1.bf16.msra.mxu0 %v8383
        %9191 = vmatprep.subr.bf16.mxu0 %v8390
        %9192 = vmatpush1.bf16.msra.mxu0 %v8389
        %9193 = vmatprep.subr.bf16.mxu0 %v8396
        %9194 = vmatpush1.bf16.msra.mxu0 %v8395
        %9195 = vmatprep.subr.bf16.mxu0 %v8402
        %9196 = vmatpush1.bf16.msra.mxu0 %v8401
        %9197 = vmatprep.subr.bf16.mxu0 %v8408
        %9198 = vmatpush1.bf16.msra.mxu0 %v8407
        %9199 = vmatprep.subr.bf16.mxu0 %v8414
        %9200 = vmatpush1.bf16.msra.mxu0 %v8413
        %9201 = vmatprep.subr.bf16.mxu0 %v8420
        %9202 = vmatpush1.bf16.msra.mxu0 %v8419
        %9203 = vmatprep.subr.bf16.mxu0 %v8426
        %9204 = vmatpush1.bf16.msra.mxu0 %v8425
        %9205 = vmatprep.subr.bf16.mxu0 %v8432
        %9206 = vmatpush1.bf16.msra.mxu0 %v8431
        %9207 = vmatprep.subr.bf16.mxu0 %v8438
        %9208 = vmatpush1.bf16.msra.mxu0 %v8437
        %9209 = vmatprep.subr.bf16.mxu0 %v8444
        %9210 = vmatpush1.bf16.msra.mxu0 %v8443
        %9211 = vmatprep.subr.bf16.mxu0 %v8450
        %9212 = vmatpush1.bf16.msra.mxu0 %v8449
        %9213 = vmatprep.subr.bf16.mxu0 %v8456
        %9214 = vmatpush1.bf16.msra.mxu0 %v8455
        %9215 = vmatprep.mubr.bf16.mxu0 %v7172
        %9216 = vmatmul.mubr.bf16.gmra.mrb[0].mxu0 %v7171
        %v9217 = vpop.f32.mrb[0].mxu0
        %v9218 = vadd.f32 %v7486, %v9217
        %v9219 = vpop.f32.mrb[0].mxu0
        %v9220 = vadd.f32 %v7490, %v9219
        %v9221 = vpop.f32.mrb[0].mxu0
        %v9222 = vpop.f32.mrb[0].mxu0
        %9223 = vdwg.mxu0
        %9224 = vmatprep.subr.bf16.mxu0 %v8462
        %9225 = vmatpush1.bf16.msra.mxu0 %v8461
        %9226 = vmatprep.subr.bf16.mxu0 %v8468
        %9227 = vmatpush1.bf16.msra.mxu0 %v8467
        %9228 = vmatprep.subr.bf16.mxu0 %v8474
        %9229 = vmatpush1.bf16.msra.mxu0 %v8473
        %9230 = vmatprep.subr.bf16.mxu0 %v8480
        %9231 = vmatpush1.bf16.msra.mxu0 %v8479
        %9232 = vmatprep.subr.bf16.mxu0 %v8486
        %9233 = vmatpush1.bf16.msra.mxu0 %v8485
        %9234 = vmatprep.subr.bf16.mxu0 %v8492
        %9235 = vmatpush1.bf16.msra.mxu0 %v8491
        %9236 = vmatprep.subr.bf16.mxu0 %v8498
        %9237 = vmatpush1.bf16.msra.mxu0 %v8497
        %9238 = vmatprep.subr.bf16.mxu0 %v8504
        %9239 = vmatpush1.bf16.msra.mxu0 %v8503
        %9240 = vmatprep.subr.bf16.mxu0 %v8510
        %9241 = vmatpush1.bf16.msra.mxu0 %v8509
        %9242 = vmatprep.subr.bf16.mxu0 %v8516
        %9243 = vmatpush1.bf16.msra.mxu0 %v8515
        %9244 = vmatprep.subr.bf16.mxu0 %v8522
        %9245 = vmatpush1.bf16.msra.mxu0 %v8521
        %9246 = vmatprep.subr.bf16.mxu0 %v8528
        %9247 = vmatpush1.bf16.msra.mxu0 %v8527
        %9248 = vmatprep.subr.bf16.mxu0 %v8534
        %9249 = vmatpush1.bf16.msra.mxu0 %v8533
        %9250 = vmatprep.subr.bf16.mxu0 %v8540
        %9251 = vmatpush1.bf16.msra.mxu0 %v8539
        %9252 = vmatprep.subr.bf16.mxu0 %v8546
        %9253 = vmatpush1.bf16.msra.mxu0 %v8545
        %9254 = vmatprep.subr.bf16.mxu0 %v8552
        %9255 = vmatpush1.bf16.msra.mxu0 %v8551
        %9256 = vmatprep.mubr.bf16.mxu0 %v7174
        %9257 = vmatmul.mubr.bf16.gmra.mrb[0].mxu0 %v7173
        %v9258 = vpop.f32.mrb[0].mxu0
        %v9259 = vadd.f32 %v9218, %v9258
        %v9260 = vpop.f32.mrb[0].mxu0
        %v9261 = vadd.f32 %v9220, %v9260
        %v9262 = vpop.f32.mrb[0].mxu0
        %v9263 = vpop.f32.mrb[0].mxu0
        %9264 = vdwg.mxu0
        %9265 = vmatprep.subr.bf16.mxu0 %v8558
        %9266 = vmatpush1.bf16.msra.mxu0 %v8557
        %9267 = vmatprep.subr.bf16.mxu0 %v8564
        %9268 = vmatpush1.bf16.msra.mxu0 %v8563
        %9269 = vmatprep.subr.bf16.mxu0 %v8570
        %9270 = vmatpush1.bf16.msra.mxu0 %v8569
        %9271 = vmatprep.subr.bf16.mxu0 %v8576
        %9272 = vmatpush1.bf16.msra.mxu0 %v8575
        %9273 = vmatprep.subr.bf16.mxu0 %v8582
        %9274 = vmatpush1.bf16.msra.mxu0 %v8581
        %9275 = vmatprep.subr.bf16.mxu0 %v8588
        %9276 = vmatpush1.bf16.msra.mxu0 %v8587
        %9277 = vmatprep.subr.bf16.mxu0 %v8594
        %9278 = vmatpush1.bf16.msra.mxu0 %v8593
        %9279 = vmatprep.subr.bf16.mxu0 %v8600
        %9280 = vmatpush1.bf16.msra.mxu0 %v8599
        %9281 = vmatprep.subr.bf16.mxu0 %v8606
        %9282 = vmatpush1.bf16.msra.mxu0 %v8605
        %9283 = vmatprep.subr.bf16.mxu0 %v8612
        %9284 = vmatpush1.bf16.msra.mxu0 %v8611
        %9285 = vmatprep.subr.bf16.mxu0 %v8618
        %9286 = vmatpush1.bf16.msra.mxu0 %v8617
        %9287 = vmatprep.subr.bf16.mxu0 %v8624
        %9288 = vmatpush1.bf16.msra.mxu0 %v8623
        %9289 = vmatprep.subr.bf16.mxu0 %v8630
        %9290 = vmatpush1.bf16.msra.mxu0 %v8629
        %9291 = vmatprep.subr.bf16.mxu0 %v8636
        %9292 = vmatpush1.bf16.msra.mxu0 %v8635
        %9293 = vmatprep.subr.bf16.mxu0 %v8642
        %9294 = vmatpush1.bf16.msra.mxu0 %v8641
        %9295 = vmatprep.subr.bf16.mxu0 %v8648
        %9296 = vmatpush1.bf16.msra.mxu0 %v8647
        %9297 = vmatprep.mubr.bf16.mxu0 %v7176
        %9298 = vmatmul.mubr.bf16.gmra.mrb[0].mxu0 %v7175
        %v9299 = vpop.f32.mrb[0].mxu0
        %v9300 = vadd.f32 %v9259, %v9299
        %v9301 = vpop.f32.mrb[0].mxu0
        %v9302 = vadd.f32 %v9261, %v9301
        %v9303 = vpop.f32.mrb[0].mxu0
        %v9304 = vpop.f32.mrb[0].mxu0
        %9305 = vdwg.mxu0
        %9306 = vst [vmem:[%s339] sm:$0xff] %v9054
        %9307 = vst [vmem:[%s339 + $0x8] sm:$0xff] %v9056
        %9308 = vst [vmem:[%s339 + $0x10] sm:$0xff] %v9177
        %9309 = vst [vmem:[%s339 + $0x18] sm:$0xff] %v9179
        %9310 = vst [vmem:[%s339 + $0x20] sm:$0xff] %v9300
        %9311 = vst [vmem:[%s339 + $0x28] sm:$0xff] %v9302
        %s9312 = sand.u32 %s239, 1
        %s9313 = scalar_lea.sflag [#allocation5], %s9312
        %s9314 = sand.u32 %s239, 1
        %s9315 = smul.addr %s9314, 48
        %s9316 = scalar_lea.vmem [#allocation4], %s9315
        // Predicated region
        $region61: #{gathered_attention.1} parent=55 // pred_check
          %p9317 = pneg %p249
        $region62: #{gathered_attention.1} parent=55 // pred_check_branch
          %9319 = sbr.rel (%p9317) target = $region64
        $region63: #{gathered_attention.1} parent=55 // pred_region
          %s9321 = ssub.s32 768, 768
          %9322 = vsyncadd %s9313, %s9321
          %s9323 = smul.addr %s28, 6
          %s9324 = smul.addr %s27, 6
          %s9325 = sadd.s32 %s9323, %s9324
          %s9326 = smul.addr %s9325, 128
          %s9327 = scalar_lea.hbm %s9, %s9326
          %s9329 = sshll.u32 %s9316, 4
          %s9330 = int_to_ptr.vmem [resolvable:$true] %s9329
          %9332 = dma.vmem_to_hbm [thread:$0]  %s9330, 768, %s9327, %s9313
        $region64: #{gathered_attention.1} parent=55 // pred_fallthru
          _
      $region56: #{gathered_attention.1} parent=5 // pred_fallthru
        _
      %p9333 = scmp.le.s32.totalorder 2, %s18
      // Predicated region
      $region65: #{gathered_attention.1} parent=5 // pred_check
        %p9334 = pneg %p9333
      $region66: #{gathered_attention.1} parent=5 // pred_check_branch
        %9336 = sbr.rel (%p9334) target = $region68
      $region67: #{gathered_attention.1} parent=5 // pred_region
        %s9337 = ssub.s32 %s18, 2
        // Predicated region
        $region69: #{gathered_attention.1} parent=67 // pred_check
          %p9338 = pneg %p255
        $region70: #{gathered_attention.1} parent=67 // pred_check_branch
          %9340 = sbr.rel (%p9338) target = $region72
        $region71: #{gathered_attention.1} parent=67 // pred_region
          %s9341 = sand.u32 %s240, 1
          %s9342 = scalar_lea.sflag [#allocation5], %s9341
          %s9343 = sand.u32 %s240, 1
          %s9344 = smul.addr %s9343, 48
          %s9345 = scalar_lea.vmem [#allocation4], %s9344
          %9346 = dma.done %s9342, 768
        $region72: #{gathered_attention.1} parent=67 // pred_fallthru
          _
      $region68: #{gathered_attention.1} parent=5 // pred_fallthru
        _
    $region6: #{gathered_attention.1} parent=1 // loop_footer
      %s22 = sadd.s32 1, %s18
    $region7: #{gathered_attention.1} parent=1 // loop_footer_branch
      %17 = sbr.rel target = $region3
    $region8: #{gathered_attention.1} parent=1 // loop_exit
      _
    %9347 = vsyncpa [#allocation5], 1
    %s9348 = scalar_lea.sflag [#allocation5], 1
    %9349 = vsyncpa %s9348, 1

</llo_original>
